<compile_context>
chip_gen: v6e
topology: v6e:2x2x1
jax: 0.10.0
libtpu: 0.0.40
codegen_flags: <defaults>
</compile_context>

<pallas_src>
import functools

import jax
import jax.numpy as jnp
from jax.experimental import pallas as pl
from jax.experimental.pallas import tpu as pltpu

# ---------------- model hyperparameters (small, consistent with module) ------
VOCAB = 50          # stands in for the pretrained Tencent embedding table rows
EMBED = 32          # embedding_pretrained.size(1)  (file not available)
HIDDEN = 128        # hidden_size
NUM_LAYERS = 2
NUM_CLASSES = 2
B, T = 2, 8         # batch, sequence length
BP = 8              # batch padded to sublane width so vector ops/stores are dense
FC_PAD = 128        # FC output padded to a lane-dense width
# TODO(synk): nn.LSTM's inter-layer dropout (p=0.5) is only active in training
# mode; this kernel implements the deterministic inference forward (no dropout).


# ---------------- Pallas kernel ----------------------------------------------
def _lstm_cell(gates, c_prev, H):
    i = jax.nn.sigmoid(gates[:, 0:H])
    f = jax.nn.sigmoid(gates[:, H:2 * H])
    g = jnp.tanh(gates[:, 2 * H:3 * H])
    o = jax.nn.sigmoid(gates[:, 3 * H:4 * H])
    c = f * c_prev + i * g
    h = o * jnp.tanh(c)
    return h, c


def _bidir_recurrence(Tn, Bp, H, whh_f, whh_b, gx_ref, y_ref):
    """Fused fwd + bwd recurrence off precomputed input gates.

    gx_ref: (T*Bp, 8H) f32 scratch; [:, :4H] = fwd gates at time t,
            [:, 4H:] = bwd gates at time t (both stored in original time order).
    y_ref:  (T*Bp, 2H) f32 scratch; [:, :H] = fwd hidden, [:, H:] = bwd hidden,
            written in original time order (bwd uses index T-1-t).
    whh_f / whh_b are bf16 values hoisted (loaded once) out of the unrolled loop.
    Only h @ W_hh remains on the serial per-step critical path.
    """
    h_f = jnp.zeros((Bp, H), jnp.bfloat16)
    c_f = jnp.zeros((Bp, H), jnp.float32)
    h_b = jnp.zeros((Bp, H), jnp.bfloat16)
    c_b = jnp.zeros((Bp, H), jnp.float32)
    for t in range(Tn):                      # statically unrolled, T is small
        tb = Tn - 1 - t
        g_f = gx_ref[t * Bp:(t + 1) * Bp, 0:4 * H] + jnp.dot(
            h_f, whh_f, preferred_element_type=jnp.float32)
        g_b = gx_ref[tb * Bp:(tb + 1) * Bp, 4 * H:8 * H] + jnp.dot(
            h_b, whh_b, preferred_element_type=jnp.float32)
        hf32, c_f = _lstm_cell(g_f, c_f, H)
        hb32, c_b = _lstm_cell(g_b, c_b, H)
        h_f = hf32.astype(jnp.bfloat16)      # bf16 for next step's MXU matmul
        h_b = hb32.astype(jnp.bfloat16)
        y_ref[t * Bp:(t + 1) * Bp, 0:H] = hf32
        y_ref[tb * Bp:(tb + 1) * Bp, H:2 * H] = hb32


def fused_model_kernel(x_ref, w0_ref, w1_hbm, bias_ref, fcw_ref,
                       out_ref,
                       w1_vmem, gx_ref, y_ref, dma_sem,
                       *, seq_len, batch, embed, hidden):
    Tn, Bp, E, H = seq_len, batch, embed, hidden

    # ---- layer-1 weight slab: start HBM->VMEM DMA now, hide it behind layer 0
    w1_copy = pltpu.make_async_copy(w1_hbm, w1_vmem, dma_sem)
    w1_copy.start()

    # ---- layer 0: input projection hoisted out of the recurrence (one matmul)
    gx_ref[...] = jnp.dot(x_ref[...], w0_ref[0:E, :],
                          preferred_element_type=jnp.float32) + bias_ref[0:1, :]
    w0hh_f = w0_ref[E:E + H, 0:4 * H]        # bf16, loaded once (hoisted)
    w0hh_b = w0_ref[E:E + H, 4 * H:8 * H]
    _bidir_recurrence(Tn, Bp, H, w0hh_f, w0hh_b, gx_ref, y_ref)

    # ---- layer 1: wait for its weights (DMA overlapped with layer-0 chain) ---
    w1_copy.wait()
    y0 = y_ref[...].astype(jnp.bfloat16)                         # (T*Bp, 2H)
    gx_ref[...] = jnp.dot(y0, w1_vmem[0:2 * H, :],
                          preferred_element_type=jnp.float32) + bias_ref[1:2, :]
    w1hh_f = w1_vmem[2 * H:3 * H, 0:4 * H]
    w1hh_b = w1_vmem[2 * H:3 * H, 4 * H:8 * H]
    _bidir_recurrence(Tn, Bp, H, w1hh_f, w1hh_b, gx_ref, y_ref)

    # ---- FC head on last timestep's concat(fwd, bwd) hidden (lane-dense out) -
    h_last = y_ref[(Tn - 1) * Bp:Tn * Bp, :].astype(jnp.bfloat16)   # (Bp, 2H)
    out_ref[...] = (jnp.dot(h_last, fcw_ref[...],
                            preferred_element_type=jnp.float32)
                    + bias_ref[2:3, 0:FC_PAD])


# ---------------- full forward pass (one Pallas call + JAX glue) -------------
def model_forward(params, ids):
    # embedding lookup (gather) -- plain JAX glue
    emb = jnp.take(params["embedding"], ids, axis=0)            # (B, T, E)
    x = jnp.transpose(emb, (1, 0, 2))                           # (T, B, E) time-major
    x = jnp.pad(x, ((0, 0), (0, BP - B), (0, 0)))               # pad batch to 8
    x = x.reshape(T * BP, EMBED).astype(jnp.bfloat16)           # flat (T*BP, E) bf16

    p0, p1 = params["lstm"]
    # Layer-0 slab (bf16): rows [0:E] = [wih_f | wih_b], rows [E:E+H] = [whh_f | whh_b]
    w0_slab = jnp.concatenate(
        [jnp.concatenate([p0["wih_f"], p0["wih_b"]], axis=1),
         jnp.concatenate([p0["whh_f"], p0["whh_b"]], axis=1)], axis=0
    ).astype(jnp.bfloat16)                                      # (E+H, 8H)
    # Layer-1 slab (bf16): rows [0:2H] = [wih_f | wih_b], rows [2H:3H] = [whh_f | whh_b]
    w1_slab = jnp.concatenate(
        [jnp.concatenate([p1["wih_f"], p1["wih_b"]], axis=1),
         jnp.concatenate([p1["whh_f"], p1["whh_b"]], axis=1)], axis=0
    ).astype(jnp.bfloat16)                                      # (3H, 8H), stays in HBM
    # Bias slab (f32): row 0 = layer-0 [b_f|b_b], row 1 = layer-1, row 2 = fc bias (padded)
    bias_slab = jnp.concatenate(
        [jnp.concatenate([p0["b_f"], p0["b_b"]], axis=1),
         jnp.concatenate([p1["b_f"], p1["b_b"]], axis=1),
         jnp.pad(params["fc_b"], ((0, 0), (0, 8 * HIDDEN - NUM_CLASSES)))],
        axis=0).astype(jnp.float32)                             # (3, 8H)
    # FC weight padded to a lane-dense 128-wide output
    fcw_pad = jnp.pad(params["fc_w"],
                      ((0, 0), (0, FC_PAD - NUM_CLASSES))).astype(jnp.bfloat16)

    vmem = pl.BlockSpec(memory_space=pltpu.MemorySpace.VMEM)
    kernel = functools.partial(fused_model_kernel, seq_len=T, batch=BP,
                               embed=EMBED, hidden=HIDDEN)
    out = pl.pallas_call(
        kernel,
        out_shape=jax.ShapeDtypeStruct((BP, FC_PAD), jnp.float32),
        in_specs=[vmem,                                  # x
                  vmem,                                  # layer-0 weight slab
                  pl.BlockSpec(memory_space=pl.ANY),     # layer-1 weight slab (HBM)
                  vmem,                                  # bias slab
                  vmem],                                 # fc weight (padded)
        out_specs=vmem,
        scratch_shapes=[
            pltpu.VMEM((3 * HIDDEN, 8 * HIDDEN), jnp.bfloat16),  # layer-1 weight landing buf
            pltpu.VMEM((T * BP, 8 * HIDDEN), jnp.float32),       # gx (input gates, fwd|bwd)
            pltpu.VMEM((T * BP, 2 * HIDDEN), jnp.float32),       # y  (hidden states, fwd|bwd)
            pltpu.SemaphoreType.DMA(()),                          # DMA completion semaphore
        ],
    )(x, w0_slab, w1_slab, bias_slab, fcw_pad)
    return out[:B, :NUM_CLASSES]                                # drop batch/lane padding


# ---------------- pure-JAX reference (for correctness check) -----------------
def lstm_dir_ref(x_seq, wih_t, whh_t, bias):
    Tn, Bn, _ = x_seq.shape
    H = whh_t.shape[0]
    h = jnp.zeros((Bn, H), jnp.float32)
    c = jnp.zeros((Bn, H), jnp.float32)
    outs = []
    for t in range(Tn):
        gates = x_seq[t] @ wih_t + h @ whh_t + bias
        i = jax.nn.sigmoid(gates[:, :H])
        f = jax.nn.sigmoid(gates[:, H:2 * H])
        g = jnp.tanh(gates[:, 2 * H:3 * H])
        o = jax.nn.sigmoid(gates[:, 3 * H:])
        c = f * c + i * g
        h = o * jnp.tanh(c)
        outs.append(h)
    return jnp.stack(outs)


def model_forward_ref(params, ids):
    emb = jnp.take(params["embedding"], ids, axis=0)
    x = jnp.transpose(emb, (1, 0, 2)).astype(jnp.float32)
    for layer in range(NUM_LAYERS):
        p = params["lstm"][layer]
        fwd = lstm_dir_ref(x, p["wih_f"], p["whh_f"], p["b_f"])
        bwd = lstm_dir_ref(x[::-1], p["wih_b"], p["whh_b"], p["b_b"])[::-1]
        x = jnp.concatenate([fwd, bwd], axis=-1)
    return x[-1] @ params["fc_w"] + params["fc_b"]


# ---------------- deterministic parameter init --------------------------------
def init_params(key):
    ks = iter(jax.random.split(key, 64))
    scale = 1.0 / jnp.sqrt(HIDDEN)

    def u(k, shape):
        return jax.random.uniform(k, shape, jnp.float32, -scale, scale)

    params = {"embedding": jax.random.normal(next(ks), (VOCAB, EMBED), jnp.float32)}
    lstm = []
    for layer in range(NUM_LAYERS):
        d_in = EMBED if layer == 0 else 2 * HIDDEN
        layer_p = {}
        for tag in ("f", "b"):  # forward / backward direction
            layer_p[f"wih_{tag}"] = u(next(ks), (d_in, 4 * HIDDEN))        # W_ih^T
            layer_p[f"whh_{tag}"] = u(next(ks), (HIDDEN, 4 * HIDDEN))      # W_hh^T
            layer_p[f"b_{tag}"] = (u(next(ks), (1, 4 * HIDDEN))
                                   + u(next(ks), (1, 4 * HIDDEN)))         # b_ih + b_hh
        lstm.append(layer_p)
    params["lstm"] = lstm
    params["fc_w"] = u(next(ks), (2 * HIDDEN, NUM_CLASSES))
    params["fc_b"] = u(next(ks), (1, NUM_CLASSES))
    return params


if __name__ == "__main__":
    key = jax.random.PRNGKey(0)
    k_param, k_ids = jax.random.split(key)
    params = init_params(k_param)
    ids = jax.random.randint(k_ids, (B, T), 0, VOCAB, dtype=jnp.int32)

    out = jax.jit(functools.partial(model_forward, params))(ids)
    out = jax.block_until_ready(out)

    ref = model_forward_ref(params, ids)
    assert out.shape == (B, NUM_CLASSES)
    # bf16 weights/activations on the MXU path -> relaxed tolerance vs f32 reference
    assert jnp.allclose(out, ref, atol=2e-2, rtol=2e-2), (out, ref)
    print("KERNEL_OK")
</pallas_src>

<mosaic_0001>
module attributes {stable_mosaic.version = 11 : i64} {
  func.func @fused_model_kernel(%arg0: memref<64x32xbf16, #tpu.memory_space<vmem>>, %arg1: memref<160x1024xbf16, #tpu.memory_space<vmem>>, %arg2: memref<384x1024xbf16, #tpu.memory_space<any>>, %arg3: memref<3x1024xf32, #tpu.memory_space<vmem>>, %arg4: memref<256x128xbf16, #tpu.memory_space<vmem>>, %arg5: memref<8x128xf32, #tpu.memory_space<vmem>>, %arg6: memref<384x1024xbf16, #tpu.memory_space<vmem>>, %arg7: memref<64x1024xf32, #tpu.memory_space<vmem>>, %arg8: memref<64x256xf32, #tpu.memory_space<vmem>>, %arg9: memref<!tpu.dma_semaphore, #tpu.memory_space<semaphore_mem>>) attributes {dimension_semantics = [], scalar_prefetch = 0 : i64, scratch_operands = 4 : i64, tpu.core_type = #tpu.core_type<tc>} {
    tpu.enqueue_dma source(%arg2 : memref<384x1024xbf16, #tpu.memory_space<any>>) target(%arg6 : memref<384x1024xbf16, #tpu.memory_space<vmem>>) target_semaphore(%arg9 : memref<!tpu.dma_semaphore, #tpu.memory_space<semaphore_mem>>)
    %c0 = arith.constant 0 : index
    %c0_0 = arith.constant 0 : index
    %0 = vector.load %arg0[%c0, %c0_0] : memref<64x32xbf16, #tpu.memory_space<vmem>>, vector<64x32xbf16>
    %c0_1 = arith.constant 0 : index
    %c0_2 = arith.constant 0 : index
    %1 = vector.load %arg1[%c0_1, %c0_2] : memref<160x1024xbf16, #tpu.memory_space<vmem>>, vector<32x1024xbf16>
    %cst = arith.constant dense<0.000000e+00> : vector<64x1024xf32>
    %2 = tpu.matmul %0, %1, %cst {dimension_numbers = #tpu.dot_dimension_numbers<[1], [0], [0], [1], [0, 0, 1, 1], [], []>} : vector<64x32xbf16>, vector<32x1024xbf16>, vector<64x1024xf32> -> vector<64x1024xf32>
    %c0_3 = arith.constant 0 : index
    %c0_4 = arith.constant 0 : index
    %3 = vector.load %arg3[%c0_3, %c0_4] : memref<3x1024xf32, #tpu.memory_space<vmem>>, vector<1x1024xf32>
    %4 = vector.broadcast %3 : vector<1x1024xf32> to vector<64x1024xf32>
    %5 = arith.addf %2, %4 : vector<64x1024xf32>
    %c0_5 = arith.constant 0 : index
    %c0_6 = arith.constant 0 : index
    %6 = vector.load %arg7[%c0_5, %c0_6] : memref<64x1024xf32, #tpu.memory_space<vmem>>, vector<64x1024xf32>
    tpu.vector_store %arg7[%c0_5, %c0_6], %5 {strides = array<i32>} : memref<64x1024xf32, #tpu.memory_space<vmem>>, vector<64x1024xf32>,
    %c32 = arith.constant 32 : index
    %c0_7 = arith.constant 0 : index
    %7 = vector.load %arg1[%c32, %c0_7] : memref<160x1024xbf16, #tpu.memory_space<vmem>>, vector<128x512xbf16>
    %c32_8 = arith.constant 32 : index
    %c512 = arith.constant 512 : index
    %8 = vector.load %arg1[%c32_8, %c512] : memref<160x1024xbf16, #tpu.memory_space<vmem>>, vector<128x512xbf16>
    %cst_9 = arith.constant 0.000000e+00 : bf16
    %9 = vector.broadcast %cst_9 : bf16 to vector<8x128xbf16>
    %cst_10 = arith.constant 0.000000e+00 : f32
    %10 = vector.broadcast %cst_10 : f32 to vector<8x128xf32>
    %cst_11 = arith.constant 0.000000e+00 : bf16
    %11 = vector.broadcast %cst_11 : bf16 to vector<8x128xbf16>
    %cst_12 = arith.constant 0.000000e+00 : f32
    %12 = vector.broadcast %cst_12 : f32 to vector<8x128xf32>
    %c0_13 = arith.constant 0 : index
    %c0_14 = arith.constant 0 : index
    %13 = vector.load %arg7[%c0_13, %c0_14] : memref<64x1024xf32, #tpu.memory_space<vmem>>, vector<8x512xf32>
    %cst_15 = arith.constant dense<0.000000e+00> : vector<8x512xf32>
    %14 = tpu.matmul %9, %7, %cst_15 {dimension_numbers = #tpu.dot_dimension_numbers<[1], [0], [0], [1], [0, 0, 1, 1], [], []>} : vector<8x128xbf16>, vector<128x512xbf16>, vector<8x512xf32> -> vector<8x512xf32>
    %15 = arith.addf %13, %14 : vector<8x512xf32>
    %c56 = arith.constant 56 : index
    %c512_16 = arith.constant 512 : index
    %16 = vector.load %arg7[%c56, %c512_16] : memref<64x1024xf32, #tpu.memory_space<vmem>>, vector<8x512xf32>
    %cst_17 = arith.constant dense<0.000000e+00> : vector<8x512xf32>
    %17 = tpu.matmul %11, %8, %cst_17 {dimension_numbers = #tpu.dot_dimension_numbers<[1], [0], [0], [1], [0, 0, 1, 1], [], []>} : vector<8x128xbf16>, vector<128x512xbf16>, vector<8x512xf32> -> vector<8x512xf32>
    %18 = arith.addf %16, %17 : vector<8x512xf32>
    %19 = vector.extract_strided_slice %15 {offsets = [0, 0], sizes = [8, 128], strides = [1, 1]} : vector<8x512xf32> to vector<8x128xf32>
    %20 = arith.negf %19 : vector<8x128xf32>
    %21 = math.exp %20 : vector<8x128xf32>
    %cst_18 = arith.constant 1.000000e+00 : f32
    %22 = vector.broadcast %cst_18 : f32 to vector<8x128xf32>
    %23 = arith.addf %22, %21 : vector<8x128xf32>
    %24 = arith.divf %22, %23 : vector<8x128xf32>
    %25 = vector.extract_strided_slice %15 {offsets = [0, 128], sizes = [8, 128], strides = [1, 1]} : vector<8x512xf32> to vector<8x128xf32>
    %26 = arith.negf %25 : vector<8x128xf32>
    %27 = math.exp %26 : vector<8x128xf32>
    %cst_19 = arith.constant 1.000000e+00 : f32
    %28 = vector.broadcast %cst_19 : f32 to vector<8x128xf32>
    %29 = arith.addf %28, %27 : vector<8x128xf32>
    %30 = arith.divf %28, %29 : vector<8x128xf32>
    %31 = vector.extract_strided_slice %15 {offsets = [0, 256], sizes = [8, 128], strides = [1, 1]} : vector<8x512xf32> to vector<8x128xf32>
    %32 = math.tanh %31 : vector<8x128xf32>
    %33 = vector.extract_strided_slice %15 {offsets = [0, 384], sizes = [8, 128], strides = [1, 1]} : vector<8x512xf32> to vector<8x128xf32>
    %34 = arith.negf %33 : vector<8x128xf32>
    %35 = math.exp %34 : vector<8x128xf32>
    %cst_20 = arith.constant 1.000000e+00 : f32
    %36 = vector.broadcast %cst_20 : f32 to vector<8x128xf32>
    %37 = arith.addf %36, %35 : vector<8x128xf32>
    %38 = arith.divf %36, %37 : vector<8x128xf32>
    %39 = arith.mulf %30, %10 : vector<8x128xf32>
    %40 = arith.mulf %24, %32 : vector<8x128xf32>
    %41 = arith.addf %39, %40 : vector<8x128xf32>
    %42 = math.tanh %41 : vector<8x128xf32>
    %43 = arith.mulf %38, %42 : vector<8x128xf32>
    %44 = vector.extract_strided_slice %18 {offsets = [0, 0], sizes = [8, 128], strides = [1, 1]} : vector<8x512xf32> to vector<8x128xf32>
    %45 = arith.negf %44 : vector<8x128xf32>
    %46 = math.exp %45 : vector<8x128xf32>
    %cst_21 = arith.constant 1.000000e+00 : f32
    %47 = vector.broadcast %cst_21 : f32 to vector<8x128xf32>
    %48 = arith.addf %47, %46 : vector<8x128xf32>
    %49 = arith.divf %47, %48 : vector<8x128xf32>
    %50 = vector.extract_strided_slice %18 {offsets = [0, 128], sizes = [8, 128], strides = [1, 1]} : vector<8x512xf32> to vector<8x128xf32>
    %51 = arith.negf %50 : vector<8x128xf32>
    %52 = math.exp %51 : vector<8x128xf32>
    %cst_22 = arith.constant 1.000000e+00 : f32
    %53 = vector.broadcast %cst_22 : f32 to vector<8x128xf32>
    %54 = arith.addf %53, %52 : vector<8x128xf32>
    %55 = arith.divf %53, %54 : vector<8x128xf32>
    %56 = vector.extract_strided_slice %18 {offsets = [0, 256], sizes = [8, 128], strides = [1, 1]} : vector<8x512xf32> to vector<8x128xf32>
    %57 = math.tanh %56 : vector<8x128xf32>
    %58 = vector.extract_strided_slice %18 {offsets = [0, 384], sizes = [8, 128], strides = [1, 1]} : vector<8x512xf32> to vector<8x128xf32>
    %59 = arith.negf %58 : vector<8x128xf32>
    %60 = math.exp %59 : vector<8x128xf32>
    %cst_23 = arith.constant 1.000000e+00 : f32
    %61 = vector.broadcast %cst_23 : f32 to vector<8x128xf32>
    %62 = arith.addf %61, %60 : vector<8x128xf32>
    %63 = arith.divf %61, %62 : vector<8x128xf32>
    %64 = arith.mulf %55, %12 : vector<8x128xf32>
    %65 = arith.mulf %49, %57 : vector<8x128xf32>
    %66 = arith.addf %64, %65 : vector<8x128xf32>
    %67 = math.tanh %66 : vector<8x128xf32>
    %68 = arith.mulf %63, %67 : vector<8x128xf32>
    %69 = arith.truncf %43 : vector<8x128xf32> to vector<8x128xbf16>
    %70 = arith.truncf %68 : vector<8x128xf32> to vector<8x128xbf16>
    %c0_24 = arith.constant 0 : index
    %c0_25 = arith.constant 0 : index
    %71 = vector.load %arg8[%c0_24, %c0_25] : memref<64x256xf32, #tpu.memory_space<vmem>>, vector<8x128xf32>
    tpu.vector_store %arg8[%c0_24, %c0_25], %43 {strides = array<i32>} : memref<64x256xf32, #tpu.memory_space<vmem>>, vector<8x128xf32>,
    %c56_26 = arith.constant 56 : index
    %c128 = arith.constant 128 : index
    %72 = vector.load %arg8[%c56_26, %c128] : memref<64x256xf32, #tpu.memory_space<vmem>>, vector<8x128xf32>
    tpu.vector_store %arg8[%c56_26, %c128], %68 {strides = array<i32>} : memref<64x256xf32, #tpu.memory_space<vmem>>, vector<8x128xf32>,
    %c8 = arith.constant 8 : index
    %c0_27 = arith.constant 0 : index
    %73 = vector.load %arg7[%c8, %c0_27] : memref<64x1024xf32, #tpu.memory_space<vmem>>, vector<8x512xf32>
    %cst_28 = arith.constant dense<0.000000e+00> : vector<8x512xf32>
    %74 = tpu.matmul %69, %7, %cst_28 {dimension_numbers = #tpu.dot_dimension_numbers<[1], [0], [0], [1], [0, 0, 1, 1], [], []>} : vector<8x128xbf16>, vector<128x512xbf16>, vector<8x512xf32> -> vector<8x512xf32>
    %75 = arith.addf %73, %74 : vector<8x512xf32>
    %c48 = arith.constant 48 : index
    %c512_29 = arith.constant 512 : index
    %76 = vector.load %arg7[%c48, %c512_29] : memref<64x1024xf32, #tpu.memory_space<vmem>>, vector<8x512xf32>
    %cst_30 = arith.constant dense<0.000000e+00> : vector<8x512xf32>
    %77 = tpu.matmul %70, %8, %cst_30 {dimension_numbers = #tpu.dot_dimension_numbers<[1], [0], [0], [1], [0, 0, 1, 1], [], []>} : vector<8x128xbf16>, vector<128x512xbf16>, vector<8x512xf32> -> vector<8x512xf32>
    %78 = arith.addf %76, %77 : vector<8x512xf32>
    %79 = vector.extract_strided_slice %75 {offsets = [0, 0], sizes = [8, 128], strides = [1, 1]} : vector<8x512xf32> to vector<8x128xf32>
    %80 = arith.negf %79 : vector<8x128xf32>
    %81 = math.exp %80 : vector<8x128xf32>
    %cst_31 = arith.constant 1.000000e+00 : f32
    %82 = vector.broadcast %cst_31 : f32 to vector<8x128xf32>
    %83 = arith.addf %82, %81 : vector<8x128xf32>
    %84 = arith.divf %82, %83 : vector<8x128xf32>
    %85 = vector.extract_strided_slice %75 {offsets = [0, 128], sizes = [8, 128], strides = [1, 1]} : vector<8x512xf32> to vector<8x128xf32>
    %86 = arith.negf %85 : vector<8x128xf32>
    %87 = math.exp %86 : vector<8x128xf32>
    %cst_32 = arith.constant 1.000000e+00 : f32
    %88 = vector.broadcast %cst_32 : f32 to vector<8x128xf32>
    %89 = arith.addf %88, %87 : vector<8x128xf32>
    %90 = arith.divf %88, %89 : vector<8x128xf32>
    %91 = vector.extract_strided_slice %75 {offsets = [0, 256], sizes = [8, 128], strides = [1, 1]} : vector<8x512xf32> to vector<8x128xf32>
    %92 = math.tanh %91 : vector<8x128xf32>
    %93 = vector.extract_strided_slice %75 {offsets = [0, 384], sizes = [8, 128], strides = [1, 1]} : vector<8x512xf32> to vector<8x128xf32>
    %94 = arith.negf %93 : vector<8x128xf32>
    %95 = math.exp %94 : vector<8x128xf32>
    %cst_33 = arith.constant 1.000000e+00 : f32
    %96 = vector.broadcast %cst_33 : f32 to vector<8x128xf32>
    %97 = arith.addf %96, %95 : vector<8x128xf32>
    %98 = arith.divf %96, %97 : vector<8x128xf32>
    %99 = arith.mulf %90, %41 : vector<8x128xf32>
    %100 = arith.mulf %84, %92 : vector<8x128xf32>
    %101 = arith.addf %99, %100 : vector<8x128xf32>
    %102 = math.tanh %101 : vector<8x128xf32>
    %103 = arith.mulf %98, %102 : vector<8x128xf32>
    %104 = vector.extract_strided_slice %78 {offsets = [0, 0], sizes = [8, 128], strides = [1, 1]} : vector<8x512xf32> to vector<8x128xf32>
    %105 = arith.negf %104 : vector<8x128xf32>
    %106 = math.exp %105 : vector<8x128xf32>
    %cst_34 = arith.constant 1.000000e+00 : f32
    %107 = vector.broadcast %cst_34 : f32 to vector<8x128xf32>
    %108 = arith.addf %107, %106 : vector<8x128xf32>
    %109 = arith.divf %107, %108 : vector<8x128xf32>
    %110 = vector.extract_strided_slice %78 {offsets = [0, 128], sizes = [8, 128], strides = [1, 1]} : vector<8x512xf32> to vector<8x128xf32>
    %111 = arith.negf %110 : vector<8x128xf32>
    %112 = math.exp %111 : vector<8x128xf32>
    %cst_35 = arith.constant 1.000000e+00 : f32
    %113 = vector.broadcast %cst_35 : f32 to vector<8x128xf32>
    %114 = arith.addf %113, %112 : vector<8x128xf32>
    %115 = arith.divf %113, %114 : vector<8x128xf32>
    %116 = vector.extract_strided_slice %78 {offsets = [0, 256], sizes = [8, 128], strides = [1, 1]} : vector<8x512xf32> to vector<8x128xf32>
    %117 = math.tanh %116 : vector<8x128xf32>
    %118 = vector.extract_strided_slice %78 {offsets = [0, 384], sizes = [8, 128], strides = [1, 1]} : vector<8x512xf32> to vector<8x128xf32>
    %119 = arith.negf %118 : vector<8x128xf32>
    %120 = math.exp %119 : vector<8x128xf32>
    %cst_36 = arith.constant 1.000000e+00 : f32
    %121 = vector.broadcast %cst_36 : f32 to vector<8x128xf32>
    %122 = arith.addf %121, %120 : vector<8x128xf32>
    %123 = arith.divf %121, %122 : vector<8x128xf32>
    %124 = arith.mulf %115, %66 : vector<8x128xf32>
    %125 = arith.mulf %109, %117 : vector<8x128xf32>
    %126 = arith.addf %124, %125 : vector<8x128xf32>
    %127 = math.tanh %126 : vector<8x128xf32>
    %128 = arith.mulf %123, %127 : vector<8x128xf32>
    %129 = arith.truncf %103 : vector<8x128xf32> to vector<8x128xbf16>
    %130 = arith.truncf %128 : vector<8x128xf32> to vector<8x128xbf16>
    %c8_37 = arith.constant 8 : index
    %c0_38 = arith.constant 0 : index
    %131 = vector.load %arg8[%c8_37, %c0_38] : memref<64x256xf32, #tpu.memory_space<vmem>>, vector<8x128xf32>
    tpu.vector_store %arg8[%c8_37, %c0_38], %103 {strides = array<i32>} : memref<64x256xf32, #tpu.memory_space<vmem>>, vector<8x128xf32>,
    %c48_39 = arith.constant 48 : index
    %c128_40 = arith.constant 128 : index
    %132 = vector.load %arg8[%c48_39, %c128_40] : memref<64x256xf32, #tpu.memory_space<vmem>>, vector<8x128xf32>
    tpu.vector_store %arg8[%c48_39, %c128_40], %128 {strides = array<i32>} : memref<64x256xf32, #tpu.memory_space<vmem>>, vector<8x128xf32>,
    %c16 = arith.constant 16 : index
    %c0_41 = arith.constant 0 : index
    %133 = vector.load %arg7[%c16, %c0_41] : memref<64x1024xf32, #tpu.memory_space<vmem>>, vector<8x512xf32>
    %cst_42 = arith.constant dense<0.000000e+00> : vector<8x512xf32>
    %134 = tpu.matmul %129, %7, %cst_42 {dimension_numbers = #tpu.dot_dimension_numbers<[1], [0], [0], [1], [0, 0, 1, 1], [], []>} : vector<8x128xbf16>, vector<128x512xbf16>, vector<8x512xf32> -> vector<8x512xf32>
    %135 = arith.addf %133, %134 : vector<8x512xf32>
    %c40 = arith.constant 40 : index
    %c512_43 = arith.constant 512 : index
    %136 = vector.load %arg7[%c40, %c512_43] : memref<64x1024xf32, #tpu.memory_space<vmem>>, vector<8x512xf32>
    %cst_44 = arith.constant dense<0.000000e+00> : vector<8x512xf32>
    %137 = tpu.matmul %130, %8, %cst_44 {dimension_numbers = #tpu.dot_dimension_numbers<[1], [0], [0], [1], [0, 0, 1, 1], [], []>} : vector<8x128xbf16>, vector<128x512xbf16>, vector<8x512xf32> -> vector<8x512xf32>
    %138 = arith.addf %136, %137 : vector<8x512xf32>
    %139 = vector.extract_strided_slice %135 {offsets = [0, 0], sizes = [8, 128], strides = [1, 1]} : vector<8x512xf32> to vector<8x128xf32>
    %140 = arith.negf %139 : vector<8x128xf32>
    %141 = math.exp %140 : vector<8x128xf32>
    %cst_45 = arith.constant 1.000000e+00 : f32
    %142 = vector.broadcast %cst_45 : f32 to vector<8x128xf32>
    %143 = arith.addf %142, %141 : vector<8x128xf32>
    %144 = arith.divf %142, %143 : vector<8x128xf32>
    %145 = vector.extract_strided_slice %135 {offsets = [0, 128], sizes = [8, 128], strides = [1, 1]} : vector<8x512xf32> to vector<8x128xf32>
    %146 = arith.negf %145 : vector<8x128xf32>
    %147 = math.exp %146 : vector<8x128xf32>
    %cst_46 = arith.constant 1.000000e+00 : f32
    %148 = vector.broadcast %cst_46 : f32 to vector<8x128xf32>
    %149 = arith.addf %148, %147 : vector<8x128xf32>
    %150 = arith.divf %148, %149 : vector<8x128xf32>
    %151 = vector.extract_strided_slice %135 {offsets = [0, 256], sizes = [8, 128], strides = [1, 1]} : vector<8x512xf32> to vector<8x128xf32>
    %152 = math.tanh %151 : vector<8x128xf32>
    %153 = vector.extract_strided_slice %135 {offsets = [0, 384], sizes = [8, 128], strides = [1, 1]} : vector<8x512xf32> to vector<8x128xf32>
    %154 = arith.negf %153 : vector<8x128xf32>
    %155 = math.exp %154 : vector<8x128xf32>
    %cst_47 = arith.constant 1.000000e+00 : f32
    %156 = vector.broadcast %cst_47 : f32 to vector<8x128xf32>
    %157 = arith.addf %156, %155 : vector<8x128xf32>
    %158 = arith.divf %156, %157 : vector<8x128xf32>
    %159 = arith.mulf %150, %101 : vector<8x128xf32>
    %160 = arith.mulf %144, %152 : vector<8x128xf32>
    %161 = arith.addf %159, %160 : vector<8x128xf32>
    %162 = math.tanh %161 : vector<8x128xf32>
    %163 = arith.mulf %158, %162 : vector<8x128xf32>
    %164 = vector.extract_strided_slice %138 {offsets = [0, 0], sizes = [8, 128], strides = [1, 1]} : vector<8x512xf32> to vector<8x128xf32>
    %165 = arith.negf %164 : vector<8x128xf32>
    %166 = math.exp %165 : vector<8x128xf32>
    %cst_48 = arith.constant 1.000000e+00 : f32
    %167 = vector.broadcast %cst_48 : f32 to vector<8x128xf32>
    %168 = arith.addf %167, %166 : vector<8x128xf32>
    %169 = arith.divf %167, %168 : vector<8x128xf32>
    %170 = vector.extract_strided_slice %138 {offsets = [0, 128], sizes = [8, 128], strides = [1, 1]} : vector<8x512xf32> to vector<8x128xf32>
    %171 = arith.negf %170 : vector<8x128xf32>
    %172 = math.exp %171 : vector<8x128xf32>
    %cst_49 = arith.constant 1.000000e+00 : f32
    %173 = vector.broadcast %cst_49 : f32 to vector<8x128xf32>
    %174 = arith.addf %173, %172 : vector<8x128xf32>
    %175 = arith.divf %173, %174 : vector<8x128xf32>
    %176 = vector.extract_strided_slice %138 {offsets = [0, 256], sizes = [8, 128], strides = [1, 1]} : vector<8x512xf32> to vector<8x128xf32>
    %177 = math.tanh %176 : vector<8x128xf32>
    %178 = vector.extract_strided_slice %138 {offsets = [0, 384], sizes = [8, 128], strides = [1, 1]} : vector<8x512xf32> to vector<8x128xf32>
    %179 = arith.negf %178 : vector<8x128xf32>
    %180 = math.exp %179 : vector<8x128xf32>
    %cst_50 = arith.constant 1.000000e+00 : f32
    %181 = vector.broadcast %cst_50 : f32 to vector<8x128xf32>
    %182 = arith.addf %181, %180 : vector<8x128xf32>
    %183 = arith.divf %181, %182 : vector<8x128xf32>
    %184 = arith.mulf %175, %126 : vector<8x128xf32>
    %185 = arith.mulf %169, %177 : vector<8x128xf32>
    %186 = arith.addf %184, %185 : vector<8x128xf32>
    %187 = math.tanh %186 : vector<8x128xf32>
    %188 = arith.mulf %183, %187 : vector<8x128xf32>
    %189 = arith.truncf %163 : vector<8x128xf32> to vector<8x128xbf16>
    %190 = arith.truncf %188 : vector<8x128xf32> to vector<8x128xbf16>
    %c16_51 = arith.constant 16 : index
    %c0_52 = arith.constant 0 : index
    %191 = vector.load %arg8[%c16_51, %c0_52] : memref<64x256xf32, #tpu.memory_space<vmem>>, vector<8x128xf32>
    tpu.vector_store %arg8[%c16_51, %c0_52], %163 {strides = array<i32>} : memref<64x256xf32, #tpu.memory_space<vmem>>, vector<8x128xf32>,
    %c40_53 = arith.constant 40 : index
    %c128_54 = arith.constant 128 : index
    %192 = vector.load %arg8[%c40_53, %c128_54] : memref<64x256xf32, #tpu.memory_space<vmem>>, vector<8x128xf32>
    tpu.vector_store %arg8[%c40_53, %c128_54], %188 {strides = array<i32>} : memref<64x256xf32, #tpu.memory_space<vmem>>, vector<8x128xf32>,
    %c24 = arith.constant 24 : index
    %c0_55 = arith.constant 0 : index
    %193 = vector.load %arg7[%c24, %c0_55] : memref<64x1024xf32, #tpu.memory_space<vmem>>, vector<8x512xf32>
    %cst_56 = arith.constant dense<0.000000e+00> : vector<8x512xf32>
    %194 = tpu.matmul %189, %7, %cst_56 {dimension_numbers = #tpu.dot_dimension_numbers<[1], [0], [0], [1], [0, 0, 1, 1], [], []>} : vector<8x128xbf16>, vector<128x512xbf16>, vector<8x512xf32> -> vector<8x512xf32>
    %195 = arith.addf %193, %194 : vector<8x512xf32>
    %c32_57 = arith.constant 32 : index
    %c512_58 = arith.constant 512 : index
    %196 = vector.load %arg7[%c32_57, %c512_58] : memref<64x1024xf32, #tpu.memory_space<vmem>>, vector<8x512xf32>
    %cst_59 = arith.constant dense<0.000000e+00> : vector<8x512xf32>
    %197 = tpu.matmul %190, %8, %cst_59 {dimension_numbers = #tpu.dot_dimension_numbers<[1], [0], [0], [1], [0, 0, 1, 1], [], []>} : vector<8x128xbf16>, vector<128x512xbf16>, vector<8x512xf32> -> vector<8x512xf32>
    %198 = arith.addf %196, %197 : vector<8x512xf32>
    %199 = vector.extract_strided_slice %195 {offsets = [0, 0], sizes = [8, 128], strides = [1, 1]} : vector<8x512xf32> to vector<8x128xf32>
    %200 = arith.negf %199 : vector<8x128xf32>
    %201 = math.exp %200 : vector<8x128xf32>
    %cst_60 = arith.constant 1.000000e+00 : f32
    %202 = vector.broadcast %cst_60 : f32 to vector<8x128xf32>
    %203 = arith.addf %202, %201 : vector<8x128xf32>
    %204 = arith.divf %202, %203 : vector<8x128xf32>
    %205 = vector.extract_strided_slice %195 {offsets = [0, 128], sizes = [8, 128], strides = [1, 1]} : vector<8x512xf32> to vector<8x128xf32>
    %206 = arith.negf %205 : vector<8x128xf32>
    %207 = math.exp %206 : vector<8x128xf32>
    %cst_61 = arith.constant 1.000000e+00 : f32
    %208 = vector.broadcast %cst_61 : f32 to vector<8x128xf32>
    %209 = arith.addf %208, %207 : vector<8x128xf32>
    %210 = arith.divf %208, %209 : vector<8x128xf32>
    %211 = vector.extract_strided_slice %195 {offsets = [0, 256], sizes = [8, 128], strides = [1, 1]} : vector<8x512xf32> to vector<8x128xf32>
    %212 = math.tanh %211 : vector<8x128xf32>
    %213 = vector.extract_strided_slice %195 {offsets = [0, 384], sizes = [8, 128], strides = [1, 1]} : vector<8x512xf32> to vector<8x128xf32>
    %214 = arith.negf %213 : vector<8x128xf32>
    %215 = math.exp %214 : vector<8x128xf32>
    %cst_62 = arith.constant 1.000000e+00 : f32
    %216 = vector.broadcast %cst_62 : f32 to vector<8x128xf32>
    %217 = arith.addf %216, %215 : vector<8x128xf32>
    %218 = arith.divf %216, %217 : vector<8x128xf32>
    %219 = arith.mulf %210, %161 : vector<8x128xf32>
    %220 = arith.mulf %204, %212 : vector<8x128xf32>
    %221 = arith.addf %219, %220 : vector<8x128xf32>
    %222 = math.tanh %221 : vector<8x128xf32>
    %223 = arith.mulf %218, %222 : vector<8x128xf32>
    %224 = vector.extract_strided_slice %198 {offsets = [0, 0], sizes = [8, 128], strides = [1, 1]} : vector<8x512xf32> to vector<8x128xf32>
    %225 = arith.negf %224 : vector<8x128xf32>
    %226 = math.exp %225 : vector<8x128xf32>
    %cst_63 = arith.constant 1.000000e+00 : f32
    %227 = vector.broadcast %cst_63 : f32 to vector<8x128xf32>
    %228 = arith.addf %227, %226 : vector<8x128xf32>
    %229 = arith.divf %227, %228 : vector<8x128xf32>
    %230 = vector.extract_strided_slice %198 {offsets = [0, 128], sizes = [8, 128], strides = [1, 1]} : vector<8x512xf32> to vector<8x128xf32>
    %231 = arith.negf %230 : vector<8x128xf32>
    %232 = math.exp %231 : vector<8x128xf32>
    %cst_64 = arith.constant 1.000000e+00 : f32
    %233 = vector.broadcast %cst_64 : f32 to vector<8x128xf32>
    %234 = arith.addf %233, %232 : vector<8x128xf32>
    %235 = arith.divf %233, %234 : vector<8x128xf32>
    %236 = vector.extract_strided_slice %198 {offsets = [0, 256], sizes = [8, 128], strides = [1, 1]} : vector<8x512xf32> to vector<8x128xf32>
    %237 = math.tanh %236 : vector<8x128xf32>
    %238 = vector.extract_strided_slice %198 {offsets = [0, 384], sizes = [8, 128], strides = [1, 1]} : vector<8x512xf32> to vector<8x128xf32>
    %239 = arith.negf %238 : vector<8x128xf32>
    %240 = math.exp %239 : vector<8x128xf32>
    %cst_65 = arith.constant 1.000000e+00 : f32
    %241 = vector.broadcast %cst_65 : f32 to vector<8x128xf32>
    %242 = arith.addf %241, %240 : vector<8x128xf32>
    %243 = arith.divf %241, %242 : vector<8x128xf32>
    %244 = arith.mulf %235, %186 : vector<8x128xf32>
    %245 = arith.mulf %229, %237 : vector<8x128xf32>
    %246 = arith.addf %244, %245 : vector<8x128xf32>
    %247 = math.tanh %246 : vector<8x128xf32>
    %248 = arith.mulf %243, %247 : vector<8x128xf32>
    %249 = arith.truncf %223 : vector<8x128xf32> to vector<8x128xbf16>
    %250 = arith.truncf %248 : vector<8x128xf32> to vector<8x128xbf16>
    %c24_66 = arith.constant 24 : index
    %c0_67 = arith.constant 0 : index
    %251 = vector.load %arg8[%c24_66, %c0_67] : memref<64x256xf32, #tpu.memory_space<vmem>>, vector<8x128xf32>
    tpu.vector_store %arg8[%c24_66, %c0_67], %223 {strides = array<i32>} : memref<64x256xf32, #tpu.memory_space<vmem>>, vector<8x128xf32>,
    %c32_68 = arith.constant 32 : index
    %c128_69 = arith.constant 128 : index
    %252 = vector.load %arg8[%c32_68, %c128_69] : memref<64x256xf32, #tpu.memory_space<vmem>>, vector<8x128xf32>
    tpu.vector_store %arg8[%c32_68, %c128_69], %248 {strides = array<i32>} : memref<64x256xf32, #tpu.memory_space<vmem>>, vector<8x128xf32>,
    %c32_70 = arith.constant 32 : index
    %c0_71 = arith.constant 0 : index
    %253 = vector.load %arg7[%c32_70, %c0_71] : memref<64x1024xf32, #tpu.memory_space<vmem>>, vector<8x512xf32>
    %cst_72 = arith.constant dense<0.000000e+00> : vector<8x512xf32>
    %254 = tpu.matmul %249, %7, %cst_72 {dimension_numbers = #tpu.dot_dimension_numbers<[1], [0], [0], [1], [0, 0, 1, 1], [], []>} : vector<8x128xbf16>, vector<128x512xbf16>, vector<8x512xf32> -> vector<8x512xf32>
    %255 = arith.addf %253, %254 : vector<8x512xf32>
    %c24_73 = arith.constant 24 : index
    %c512_74 = arith.constant 512 : index
    %256 = vector.load %arg7[%c24_73, %c512_74] : memref<64x1024xf32, #tpu.memory_space<vmem>>, vector<8x512xf32>
    %cst_75 = arith.constant dense<0.000000e+00> : vector<8x512xf32>
    %257 = tpu.matmul %250, %8, %cst_75 {dimension_numbers = #tpu.dot_dimension_numbers<[1], [0], [0], [1], [0, 0, 1, 1], [], []>} : vector<8x128xbf16>, vector<128x512xbf16>, vector<8x512xf32> -> vector<8x512xf32>
    %258 = arith.addf %256, %257 : vector<8x512xf32>
    %259 = vector.extract_strided_slice %255 {offsets = [0, 0], sizes = [8, 128], strides = [1, 1]} : vector<8x512xf32> to vector<8x128xf32>
    %260 = arith.negf %259 : vector<8x128xf32>
    %261 = math.exp %260 : vector<8x128xf32>
    %cst_76 = arith.constant 1.000000e+00 : f32
    %262 = vector.broadcast %cst_76 : f32 to vector<8x128xf32>
    %263 = arith.addf %262, %261 : vector<8x128xf32>
    %264 = arith.divf %262, %263 : vector<8x128xf32>
    %265 = vector.extract_strided_slice %255 {offsets = [0, 128], sizes = [8, 128], strides = [1, 1]} : vector<8x512xf32> to vector<8x128xf32>
    %266 = arith.negf %265 : vector<8x128xf32>
    %267 = math.exp %266 : vector<8x128xf32>
    %cst_77 = arith.constant 1.000000e+00 : f32
    %268 = vector.broadcast %cst_77 : f32 to vector<8x128xf32>
    %269 = arith.addf %268, %267 : vector<8x128xf32>
    %270 = arith.divf %268, %269 : vector<8x128xf32>
    %271 = vector.extract_strided_slice %255 {offsets = [0, 256], sizes = [8, 128], strides = [1, 1]} : vector<8x512xf32> to vector<8x128xf32>
    %272 = math.tanh %271 : vector<8x128xf32>
    %273 = vector.extract_strided_slice %255 {offsets = [0, 384], sizes = [8, 128], strides = [1, 1]} : vector<8x512xf32> to vector<8x128xf32>
    %274 = arith.negf %273 : vector<8x128xf32>
    %275 = math.exp %274 : vector<8x128xf32>
    %cst_78 = arith.constant 1.000000e+00 : f32
    %276 = vector.broadcast %cst_78 : f32 to vector<8x128xf32>
    %277 = arith.addf %276, %275 : vector<8x128xf32>
    %278 = arith.divf %276, %277 : vector<8x128xf32>
    %279 = arith.mulf %270, %221 : vector<8x128xf32>
    %280 = arith.mulf %264, %272 : vector<8x128xf32>
    %281 = arith.addf %279, %280 : vector<8x128xf32>
    %282 = math.tanh %281 : vector<8x128xf32>
    %283 = arith.mulf %278, %282 : vector<8x128xf32>
    %284 = vector.extract_strided_slice %258 {offsets = [0, 0], sizes = [8, 128], strides = [1, 1]} : vector<8x512xf32> to vector<8x128xf32>
    %285 = arith.negf %284 : vector<8x128xf32>
    %286 = math.exp %285 : vector<8x128xf32>
    %cst_79 = arith.constant 1.000000e+00 : f32
    %287 = vector.broadcast %cst_79 : f32 to vector<8x128xf32>
    %288 = arith.addf %287, %286 : vector<8x128xf32>
    %289 = arith.divf %287, %288 : vector<8x128xf32>
    %290 = vector.extract_strided_slice %258 {offsets = [0, 128], sizes = [8, 128], strides = [1, 1]} : vector<8x512xf32> to vector<8x128xf32>
    %291 = arith.negf %290 : vector<8x128xf32>
    %292 = math.exp %291 : vector<8x128xf32>
    %cst_80 = arith.constant 1.000000e+00 : f32
    %293 = vector.broadcast %cst_80 : f32 to vector<8x128xf32>
    %294 = arith.addf %293, %292 : vector<8x128xf32>
    %295 = arith.divf %293, %294 : vector<8x128xf32>
    %296 = vector.extract_strided_slice %258 {offsets = [0, 256], sizes = [8, 128], strides = [1, 1]} : vector<8x512xf32> to vector<8x128xf32>
    %297 = math.tanh %296 : vector<8x128xf32>
    %298 = vector.extract_strided_slice %258 {offsets = [0, 384], sizes = [8, 128], strides = [1, 1]} : vector<8x512xf32> to vector<8x128xf32>
    %299 = arith.negf %298 : vector<8x128xf32>
    %300 = math.exp %299 : vector<8x128xf32>
    %cst_81 = arith.constant 1.000000e+00 : f32
    %301 = vector.broadcast %cst_81 : f32 to vector<8x128xf32>
    %302 = arith.addf %301, %300 : vector<8x128xf32>
    %303 = arith.divf %301, %302 : vector<8x128xf32>
    %304 = arith.mulf %295, %246 : vector<8x128xf32>
    %305 = arith.mulf %289, %297 : vector<8x128xf32>
    %306 = arith.addf %304, %305 : vector<8x128xf32>
    %307 = math.tanh %306 : vector<8x128xf32>
    %308 = arith.mulf %303, %307 : vector<8x128xf32>
    %309 = arith.truncf %283 : vector<8x128xf32> to vector<8x128xbf16>
    %310 = arith.truncf %308 : vector<8x128xf32> to vector<8x128xbf16>
    %c32_82 = arith.constant 32 : index
    %c0_83 = arith.constant 0 : index
    %311 = vector.load %arg8[%c32_82, %c0_83] : memref<64x256xf32, #tpu.memory_space<vmem>>, vector<8x128xf32>
    tpu.vector_store %arg8[%c32_82, %c0_83], %283 {strides = array<i32>} : memref<64x256xf32, #tpu.memory_space<vmem>>, vector<8x128xf32>,
    %c24_84 = arith.constant 24 : index
    %c128_85 = arith.constant 128 : index
    %312 = vector.load %arg8[%c24_84, %c128_85] : memref<64x256xf32, #tpu.memory_space<vmem>>, vector<8x128xf32>
    tpu.vector_store %arg8[%c24_84, %c128_85], %308 {strides = array<i32>} : memref<64x256xf32, #tpu.memory_space<vmem>>, vector<8x128xf32>,
    %c40_86 = arith.constant 40 : index
    %c0_87 = arith.constant 0 : index
    %313 = vector.load %arg7[%c40_86, %c0_87] : memref<64x1024xf32, #tpu.memory_space<vmem>>, vector<8x512xf32>
    %cst_88 = arith.constant dense<0.000000e+00> : vector<8x512xf32>
    %314 = tpu.matmul %309, %7, %cst_88 {dimension_numbers = #tpu.dot_dimension_numbers<[1], [0], [0], [1], [0, 0, 1, 1], [], []>} : vector<8x128xbf16>, vector<128x512xbf16>, vector<8x512xf32> -> vector<8x512xf32>
    %315 = arith.addf %313, %314 : vector<8x512xf32>
    %c16_89 = arith.constant 16 : index
    %c512_90 = arith.constant 512 : index
    %316 = vector.load %arg7[%c16_89, %c512_90] : memref<64x1024xf32, #tpu.memory_space<vmem>>, vector<8x512xf32>
    %cst_91 = arith.constant dense<0.000000e+00> : vector<8x512xf32>
    %317 = tpu.matmul %310, %8, %cst_91 {dimension_numbers = #tpu.dot_dimension_numbers<[1], [0], [0], [1], [0, 0, 1, 1], [], []>} : vector<8x128xbf16>, vector<128x512xbf16>, vector<8x512xf32> -> vector<8x512xf32>
    %318 = arith.addf %316, %317 : vector<8x512xf32>
    %319 = vector.extract_strided_slice %315 {offsets = [0, 0], sizes = [8, 128], strides = [1, 1]} : vector<8x512xf32> to vector<8x128xf32>
    %320 = arith.negf %319 : vector<8x128xf32>
    %321 = math.exp %320 : vector<8x128xf32>
    %cst_92 = arith.constant 1.000000e+00 : f32
    %322 = vector.broadcast %cst_92 : f32 to vector<8x128xf32>
    %323 = arith.addf %322, %321 : vector<8x128xf32>
    %324 = arith.divf %322, %323 : vector<8x128xf32>
    %325 = vector.extract_strided_slice %315 {offsets = [0, 128], sizes = [8, 128], strides = [1, 1]} : vector<8x512xf32> to vector<8x128xf32>
    %326 = arith.negf %325 : vector<8x128xf32>
    %327 = math.exp %326 : vector<8x128xf32>
    %cst_93 = arith.constant 1.000000e+00 : f32
    %328 = vector.broadcast %cst_93 : f32 to vector<8x128xf32>
    %329 = arith.addf %328, %327 : vector<8x128xf32>
    %330 = arith.divf %328, %329 : vector<8x128xf32>
    %331 = vector.extract_strided_slice %315 {offsets = [0, 256], sizes = [8, 128], strides = [1, 1]} : vector<8x512xf32> to vector<8x128xf32>
    %332 = math.tanh %331 : vector<8x128xf32>
    %333 = vector.extract_strided_slice %315 {offsets = [0, 384], sizes = [8, 128], strides = [1, 1]} : vector<8x512xf32> to vector<8x128xf32>
    %334 = arith.negf %333 : vector<8x128xf32>
    %335 = math.exp %334 : vector<8x128xf32>
    %cst_94 = arith.constant 1.000000e+00 : f32
    %336 = vector.broadcast %cst_94 : f32 to vector<8x128xf32>
    %337 = arith.addf %336, %335 : vector<8x128xf32>
    %338 = arith.divf %336, %337 : vector<8x128xf32>
    %339 = arith.mulf %330, %281 : vector<8x128xf32>
    %340 = arith.mulf %324, %332 : vector<8x128xf32>
    %341 = arith.addf %339, %340 : vector<8x128xf32>
    %342 = math.tanh %341 : vector<8x128xf32>
    %343 = arith.mulf %338, %342 : vector<8x128xf32>
    %344 = vector.extract_strided_slice %318 {offsets = [0, 0], sizes = [8, 128], strides = [1, 1]} : vector<8x512xf32> to vector<8x128xf32>
    %345 = arith.negf %344 : vector<8x128xf32>
    %346 = math.exp %345 : vector<8x128xf32>
    %cst_95 = arith.constant 1.000000e+00 : f32
    %347 = vector.broadcast %cst_95 : f32 to vector<8x128xf32>
    %348 = arith.addf %347, %346 : vector<8x128xf32>
    %349 = arith.divf %347, %348 : vector<8x128xf32>
    %350 = vector.extract_strided_slice %318 {offsets = [0, 128], sizes = [8, 128], strides = [1, 1]} : vector<8x512xf32> to vector<8x128xf32>
    %351 = arith.negf %350 : vector<8x128xf32>
    %352 = math.exp %351 : vector<8x128xf32>
    %cst_96 = arith.constant 1.000000e+00 : f32
    %353 = vector.broadcast %cst_96 : f32 to vector<8x128xf32>
    %354 = arith.addf %353, %352 : vector<8x128xf32>
    %355 = arith.divf %353, %354 : vector<8x128xf32>
    %356 = vector.extract_strided_slice %318 {offsets = [0, 256], sizes = [8, 128], strides = [1, 1]} : vector<8x512xf32> to vector<8x128xf32>
    %357 = math.tanh %356 : vector<8x128xf32>
    %358 = vector.extract_strided_slice %318 {offsets = [0, 384], sizes = [8, 128], strides = [1, 1]} : vector<8x512xf32> to vector<8x128xf32>
    %359 = arith.negf %358 : vector<8x128xf32>
    %360 = math.exp %359 : vector<8x128xf32>
    %cst_97 = arith.constant 1.000000e+00 : f32
    %361 = vector.broadcast %cst_97 : f32 to vector<8x128xf32>
    %362 = arith.addf %361, %360 : vector<8x128xf32>
    %363 = arith.divf %361, %362 : vector<8x128xf32>
    %364 = arith.mulf %355, %306 : vector<8x128xf32>
    %365 = arith.mulf %349, %357 : vector<8x128xf32>
    %366 = arith.addf %364, %365 : vector<8x128xf32>
    %367 = math.tanh %366 : vector<8x128xf32>
    %368 = arith.mulf %363, %367 : vector<8x128xf32>
    %369 = arith.truncf %343 : vector<8x128xf32> to vector<8x128xbf16>
    %370 = arith.truncf %368 : vector<8x128xf32> to vector<8x128xbf16>
    %c40_98 = arith.constant 40 : index
    %c0_99 = arith.constant 0 : index
    %371 = vector.load %arg8[%c40_98, %c0_99] : memref<64x256xf32, #tpu.memory_space<vmem>>, vector<8x128xf32>
    tpu.vector_store %arg8[%c40_98, %c0_99], %343 {strides = array<i32>} : memref<64x256xf32, #tpu.memory_space<vmem>>, vector<8x128xf32>,
    %c16_100 = arith.constant 16 : index
    %c128_101 = arith.constant 128 : index
    %372 = vector.load %arg8[%c16_100, %c128_101] : memref<64x256xf32, #tpu.memory_space<vmem>>, vector<8x128xf32>
    tpu.vector_store %arg8[%c16_100, %c128_101], %368 {strides = array<i32>} : memref<64x256xf32, #tpu.memory_space<vmem>>, vector<8x128xf32>,
    %c48_102 = arith.constant 48 : index
    %c0_103 = arith.constant 0 : index
    %373 = vector.load %arg7[%c48_102, %c0_103] : memref<64x1024xf32, #tpu.memory_space<vmem>>, vector<8x512xf32>
    %cst_104 = arith.constant dense<0.000000e+00> : vector<8x512xf32>
    %374 = tpu.matmul %369, %7, %cst_104 {dimension_numbers = #tpu.dot_dimension_numbers<[1], [0], [0], [1], [0, 0, 1, 1], [], []>} : vector<8x128xbf16>, vector<128x512xbf16>, vector<8x512xf32> -> vector<8x512xf32>
    %375 = arith.addf %373, %374 : vector<8x512xf32>
    %c8_105 = arith.constant 8 : index
    %c512_106 = arith.constant 512 : index
    %376 = vector.load %arg7[%c8_105, %c512_106] : memref<64x1024xf32, #tpu.memory_space<vmem>>, vector<8x512xf32>
    %cst_107 = arith.constant dense<0.000000e+00> : vector<8x512xf32>
    %377 = tpu.matmul %370, %8, %cst_107 {dimension_numbers = #tpu.dot_dimension_numbers<[1], [0], [0], [1], [0, 0, 1, 1], [], []>} : vector<8x128xbf16>, vector<128x512xbf16>, vector<8x512xf32> -> vector<8x512xf32>
    %378 = arith.addf %376, %377 : vector<8x512xf32>
    %379 = vector.extract_strided_slice %375 {offsets = [0, 0], sizes = [8, 128], strides = [1, 1]} : vector<8x512xf32> to vector<8x128xf32>
    %380 = arith.negf %379 : vector<8x128xf32>
    %381 = math.exp %380 : vector<8x128xf32>
    %cst_108 = arith.constant 1.000000e+00 : f32
    %382 = vector.broadcast %cst_108 : f32 to vector<8x128xf32>
    %383 = arith.addf %382, %381 : vector<8x128xf32>
    %384 = arith.divf %382, %383 : vector<8x128xf32>
    %385 = vector.extract_strided_slice %375 {offsets = [0, 128], sizes = [8, 128], strides = [1, 1]} : vector<8x512xf32> to vector<8x128xf32>
    %386 = arith.negf %385 : vector<8x128xf32>
    %387 = math.exp %386 : vector<8x128xf32>
    %cst_109 = arith.constant 1.000000e+00 : f32
    %388 = vector.broadcast %cst_109 : f32 to vector<8x128xf32>
    %389 = arith.addf %388, %387 : vector<8x128xf32>
    %390 = arith.divf %388, %389 : vector<8x128xf32>
    %391 = vector.extract_strided_slice %375 {offsets = [0, 256], sizes = [8, 128], strides = [1, 1]} : vector<8x512xf32> to vector<8x128xf32>
    %392 = math.tanh %391 : vector<8x128xf32>
    %393 = vector.extract_strided_slice %375 {offsets = [0, 384], sizes = [8, 128], strides = [1, 1]} : vector<8x512xf32> to vector<8x128xf32>
    %394 = arith.negf %393 : vector<8x128xf32>
    %395 = math.exp %394 : vector<8x128xf32>
    %cst_110 = arith.constant 1.000000e+00 : f32
    %396 = vector.broadcast %cst_110 : f32 to vector<8x128xf32>
    %397 = arith.addf %396, %395 : vector<8x128xf32>
    %398 = arith.divf %396, %397 : vector<8x128xf32>
    %399 = arith.mulf %390, %341 : vector<8x128xf32>
    %400 = arith.mulf %384, %392 : vector<8x128xf32>
    %401 = arith.addf %399, %400 : vector<8x128xf32>
    %402 = math.tanh %401 : vector<8x128xf32>
    %403 = arith.mulf %398, %402 : vector<8x128xf32>
    %404 = vector.extract_strided_slice %378 {offsets = [0, 0], sizes = [8, 128], strides = [1, 1]} : vector<8x512xf32> to vector<8x128xf32>
    %405 = arith.negf %404 : vector<8x128xf32>
    %406 = math.exp %405 : vector<8x128xf32>
    %cst_111 = arith.constant 1.000000e+00 : f32
    %407 = vector.broadcast %cst_111 : f32 to vector<8x128xf32>
    %408 = arith.addf %407, %406 : vector<8x128xf32>
    %409 = arith.divf %407, %408 : vector<8x128xf32>
    %410 = vector.extract_strided_slice %378 {offsets = [0, 128], sizes = [8, 128], strides = [1, 1]} : vector<8x512xf32> to vector<8x128xf32>
    %411 = arith.negf %410 : vector<8x128xf32>
    %412 = math.exp %411 : vector<8x128xf32>
    %cst_112 = arith.constant 1.000000e+00 : f32
    %413 = vector.broadcast %cst_112 : f32 to vector<8x128xf32>
    %414 = arith.addf %413, %412 : vector<8x128xf32>
    %415 = arith.divf %413, %414 : vector<8x128xf32>
    %416 = vector.extract_strided_slice %378 {offsets = [0, 256], sizes = [8, 128], strides = [1, 1]} : vector<8x512xf32> to vector<8x128xf32>
    %417 = math.tanh %416 : vector<8x128xf32>
    %418 = vector.extract_strided_slice %378 {offsets = [0, 384], sizes = [8, 128], strides = [1, 1]} : vector<8x512xf32> to vector<8x128xf32>
    %419 = arith.negf %418 : vector<8x128xf32>
    %420 = math.exp %419 : vector<8x128xf32>
    %cst_113 = arith.constant 1.000000e+00 : f32
    %421 = vector.broadcast %cst_113 : f32 to vector<8x128xf32>
    %422 = arith.addf %421, %420 : vector<8x128xf32>
    %423 = arith.divf %421, %422 : vector<8x128xf32>
    %424 = arith.mulf %415, %366 : vector<8x128xf32>
    %425 = arith.mulf %409, %417 : vector<8x128xf32>
    %426 = arith.addf %424, %425 : vector<8x128xf32>
    %427 = math.tanh %426 : vector<8x128xf32>
    %428 = arith.mulf %423, %427 : vector<8x128xf32>
    %429 = arith.truncf %403 : vector<8x128xf32> to vector<8x128xbf16>
    %430 = arith.truncf %428 : vector<8x128xf32> to vector<8x128xbf16>
    %c48_114 = arith.constant 48 : index
    %c0_115 = arith.constant 0 : index
    %431 = vector.load %arg8[%c48_114, %c0_115] : memref<64x256xf32, #tpu.memory_space<vmem>>, vector<8x128xf32>
    tpu.vector_store %arg8[%c48_114, %c0_115], %403 {strides = array<i32>} : memref<64x256xf32, #tpu.memory_space<vmem>>, vector<8x128xf32>,
    %c8_116 = arith.constant 8 : index
    %c128_117 = arith.constant 128 : index
    %432 = vector.load %arg8[%c8_116, %c128_117] : memref<64x256xf32, #tpu.memory_space<vmem>>, vector<8x128xf32>
    tpu.vector_store %arg8[%c8_116, %c128_117], %428 {strides = array<i32>} : memref<64x256xf32, #tpu.memory_space<vmem>>, vector<8x128xf32>,
    %c56_118 = arith.constant 56 : index
    %c0_119 = arith.constant 0 : index
    %433 = vector.load %arg7[%c56_118, %c0_119] : memref<64x1024xf32, #tpu.memory_space<vmem>>, vector<8x512xf32>
    %cst_120 = arith.constant dense<0.000000e+00> : vector<8x512xf32>
    %434 = tpu.matmul %429, %7, %cst_120 {dimension_numbers = #tpu.dot_dimension_numbers<[1], [0], [0], [1], [0, 0, 1, 1], [], []>} : vector<8x128xbf16>, vector<128x512xbf16>, vector<8x512xf32> -> vector<8x512xf32>
    %435 = arith.addf %433, %434 : vector<8x512xf32>
    %c0_121 = arith.constant 0 : index
    %c512_122 = arith.constant 512 : index
    %436 = vector.load %arg7[%c0_121, %c512_122] : memref<64x1024xf32, #tpu.memory_space<vmem>>, vector<8x512xf32>
    %cst_123 = arith.constant dense<0.000000e+00> : vector<8x512xf32>
    %437 = tpu.matmul %430, %8, %cst_123 {dimension_numbers = #tpu.dot_dimension_numbers<[1], [0], [0], [1], [0, 0, 1, 1], [], []>} : vector<8x128xbf16>, vector<128x512xbf16>, vector<8x512xf32> -> vector<8x512xf32>
    %438 = arith.addf %436, %437 : vector<8x512xf32>
    %439 = vector.extract_strided_slice %435 {offsets = [0, 0], sizes = [8, 128], strides = [1, 1]} : vector<8x512xf32> to vector<8x128xf32>
    %440 = arith.negf %439 : vector<8x128xf32>
    %441 = math.exp %440 : vector<8x128xf32>
    %cst_124 = arith.constant 1.000000e+00 : f32
    %442 = vector.broadcast %cst_124 : f32 to vector<8x128xf32>
    %443 = arith.addf %442, %441 : vector<8x128xf32>
    %444 = arith.divf %442, %443 : vector<8x128xf32>
    %445 = vector.extract_strided_slice %435 {offsets = [0, 128], sizes = [8, 128], strides = [1, 1]} : vector<8x512xf32> to vector<8x128xf32>
    %446 = arith.negf %445 : vector<8x128xf32>
    %447 = math.exp %446 : vector<8x128xf32>
    %cst_125 = arith.constant 1.000000e+00 : f32
    %448 = vector.broadcast %cst_125 : f32 to vector<8x128xf32>
    %449 = arith.addf %448, %447 : vector<8x128xf32>
    %450 = arith.divf %448, %449 : vector<8x128xf32>
    %451 = vector.extract_strided_slice %435 {offsets = [0, 256], sizes = [8, 128], strides = [1, 1]} : vector<8x512xf32> to vector<8x128xf32>
    %452 = math.tanh %451 : vector<8x128xf32>
    %453 = vector.extract_strided_slice %435 {offsets = [0, 384], sizes = [8, 128], strides = [1, 1]} : vector<8x512xf32> to vector<8x128xf32>
    %454 = arith.negf %453 : vector<8x128xf32>
    %455 = math.exp %454 : vector<8x128xf32>
    %cst_126 = arith.constant 1.000000e+00 : f32
    %456 = vector.broadcast %cst_126 : f32 to vector<8x128xf32>
    %457 = arith.addf %456, %455 : vector<8x128xf32>
    %458 = arith.divf %456, %457 : vector<8x128xf32>
    %459 = arith.mulf %450, %401 : vector<8x128xf32>
    %460 = arith.mulf %444, %452 : vector<8x128xf32>
    %461 = arith.addf %459, %460 : vector<8x128xf32>
    %462 = math.tanh %461 : vector<8x128xf32>
    %463 = arith.mulf %458, %462 : vector<8x128xf32>
    %464 = vector.extract_strided_slice %438 {offsets = [0, 0], sizes = [8, 128], strides = [1, 1]} : vector<8x512xf32> to vector<8x128xf32>
    %465 = arith.negf %464 : vector<8x128xf32>
    %466 = math.exp %465 : vector<8x128xf32>
    %cst_127 = arith.constant 1.000000e+00 : f32
    %467 = vector.broadcast %cst_127 : f32 to vector<8x128xf32>
    %468 = arith.addf %467, %466 : vector<8x128xf32>
    %469 = arith.divf %467, %468 : vector<8x128xf32>
    %470 = vector.extract_strided_slice %438 {offsets = [0, 128], sizes = [8, 128], strides = [1, 1]} : vector<8x512xf32> to vector<8x128xf32>
    %471 = arith.negf %470 : vector<8x128xf32>
    %472 = math.exp %471 : vector<8x128xf32>
    %cst_128 = arith.constant 1.000000e+00 : f32
    %473 = vector.broadcast %cst_128 : f32 to vector<8x128xf32>
    %474 = arith.addf %473, %472 : vector<8x128xf32>
    %475 = arith.divf %473, %474 : vector<8x128xf32>
    %476 = vector.extract_strided_slice %438 {offsets = [0, 256], sizes = [8, 128], strides = [1, 1]} : vector<8x512xf32> to vector<8x128xf32>
    %477 = math.tanh %476 : vector<8x128xf32>
    %478 = vector.extract_strided_slice %438 {offsets = [0, 384], sizes = [8, 128], strides = [1, 1]} : vector<8x512xf32> to vector<8x128xf32>
    %479 = arith.negf %478 : vector<8x128xf32>
    %480 = math.exp %479 : vector<8x128xf32>
    %cst_129 = arith.constant 1.000000e+00 : f32
    %481 = vector.broadcast %cst_129 : f32 to vector<8x128xf32>
    %482 = arith.addf %481, %480 : vector<8x128xf32>
    %483 = arith.divf %481, %482 : vector<8x128xf32>
    %484 = arith.mulf %475, %426 : vector<8x128xf32>
    %485 = arith.mulf %469, %477 : vector<8x128xf32>
    %486 = arith.addf %484, %485 : vector<8x128xf32>
    %487 = math.tanh %486 : vector<8x128xf32>
    %488 = arith.mulf %483, %487 : vector<8x128xf32>
    %c56_130 = arith.constant 56 : index
    %c0_131 = arith.constant 0 : index
    %489 = vector.load %arg8[%c56_130, %c0_131] : memref<64x256xf32, #tpu.memory_space<vmem>>, vector<8x128xf32>
    tpu.vector_store %arg8[%c56_130, %c0_131], %463 {strides = array<i32>} : memref<64x256xf32, #tpu.memory_space<vmem>>, vector<8x128xf32>,
    %c0_132 = arith.constant 0 : index
    %c128_133 = arith.constant 128 : index
    %490 = vector.load %arg8[%c0_132, %c128_133] : memref<64x256xf32, #tpu.memory_space<vmem>>, vector<8x128xf32>
    tpu.vector_store %arg8[%c0_132, %c128_133], %488 {strides = array<i32>} : memref<64x256xf32, #tpu.memory_space<vmem>>, vector<8x128xf32>,
    tpu.wait_dma2 semaphore(%arg9 : memref<!tpu.dma_semaphore, #tpu.memory_space<semaphore_mem>>) src(%arg2 : memref<384x1024xbf16, #tpu.memory_space<any>>) dst(%arg6 : memref<384x1024xbf16, #tpu.memory_space<vmem>>)
    %c0_134 = arith.constant 0 : index
    %c0_135 = arith.constant 0 : index
    %491 = vector.load %arg8[%c0_134, %c0_135] : memref<64x256xf32, #tpu.memory_space<vmem>>, vector<64x256xf32>
    %492 = arith.truncf %491 : vector<64x256xf32> to vector<64x256xbf16>
    %c0_136 = arith.constant 0 : index
    %c0_137 = arith.constant 0 : index
    %493 = vector.load %arg6[%c0_136, %c0_137] : memref<384x1024xbf16, #tpu.memory_space<vmem>>, vector<256x1024xbf16>
    %cst_138 = arith.constant dense<0.000000e+00> : vector<64x1024xf32>
    %494 = tpu.matmul %492, %493, %cst_138 {dimension_numbers = #tpu.dot_dimension_numbers<[1], [0], [0], [1], [0, 0, 1, 1], [], []>} : vector<64x256xbf16>, vector<256x1024xbf16>, vector<64x1024xf32> -> vector<64x1024xf32>
    %c1 = arith.constant 1 : index
    %c0_139 = arith.constant 0 : index
    %495 = vector.load %arg3[%c1, %c0_139] : memref<3x1024xf32, #tpu.memory_space<vmem>>, vector<1x1024xf32>
    %496 = vector.broadcast %495 : vector<1x1024xf32> to vector<64x1024xf32>
    %497 = arith.addf %494, %496 : vector<64x1024xf32>
    %c0_140 = arith.constant 0 : index
    %c0_141 = arith.constant 0 : index
    %498 = vector.load %arg7[%c0_140, %c0_141] : memref<64x1024xf32, #tpu.memory_space<vmem>>, vector<64x1024xf32>
    tpu.vector_store %arg7[%c0_140, %c0_141], %497 {strides = array<i32>} : memref<64x1024xf32, #tpu.memory_space<vmem>>, vector<64x1024xf32>,
    %c256 = arith.constant 256 : index
    %c0_142 = arith.constant 0 : index
    %499 = vector.load %arg6[%c256, %c0_142] : memref<384x1024xbf16, #tpu.memory_space<vmem>>, vector<128x512xbf16>
    %c256_143 = arith.constant 256 : index
    %c512_144 = arith.constant 512 : index
    %500 = vector.load %arg6[%c256_143, %c512_144] : memref<384x1024xbf16, #tpu.memory_space<vmem>>, vector<128x512xbf16>
    %cst_145 = arith.constant 0.000000e+00 : bf16
    %501 = vector.broadcast %cst_145 : bf16 to vector<8x128xbf16>
    %cst_146 = arith.constant 0.000000e+00 : f32
    %502 = vector.broadcast %cst_146 : f32 to vector<8x128xf32>
    %cst_147 = arith.constant 0.000000e+00 : bf16
    %503 = vector.broadcast %cst_147 : bf16 to vector<8x128xbf16>
    %cst_148 = arith.constant 0.000000e+00 : f32
    %504 = vector.broadcast %cst_148 : f32 to vector<8x128xf32>
    %c0_149 = arith.constant 0 : index
    %c0_150 = arith.constant 0 : index
    %505 = vector.load %arg7[%c0_149, %c0_150] : memref<64x1024xf32, #tpu.memory_space<vmem>>, vector<8x512xf32>
    %cst_151 = arith.constant dense<0.000000e+00> : vector<8x512xf32>
    %506 = tpu.matmul %501, %499, %cst_151 {dimension_numbers = #tpu.dot_dimension_numbers<[1], [0], [0], [1], [0, 0, 1, 1], [], []>} : vector<8x128xbf16>, vector<128x512xbf16>, vector<8x512xf32> -> vector<8x512xf32>
    %507 = arith.addf %505, %506 : vector<8x512xf32>
    %c56_152 = arith.constant 56 : index
    %c512_153 = arith.constant 512 : index
    %508 = vector.load %arg7[%c56_152, %c512_153] : memref<64x1024xf32, #tpu.memory_space<vmem>>, vector<8x512xf32>
    %cst_154 = arith.constant dense<0.000000e+00> : vector<8x512xf32>
    %509 = tpu.matmul %503, %500, %cst_154 {dimension_numbers = #tpu.dot_dimension_numbers<[1], [0], [0], [1], [0, 0, 1, 1], [], []>} : vector<8x128xbf16>, vector<128x512xbf16>, vector<8x512xf32> -> vector<8x512xf32>
    %510 = arith.addf %508, %509 : vector<8x512xf32>
    %511 = vector.extract_strided_slice %507 {offsets = [0, 0], sizes = [8, 128], strides = [1, 1]} : vector<8x512xf32> to vector<8x128xf32>
    %512 = arith.negf %511 : vector<8x128xf32>
    %513 = math.exp %512 : vector<8x128xf32>
    %cst_155 = arith.constant 1.000000e+00 : f32
    %514 = vector.broadcast %cst_155 : f32 to vector<8x128xf32>
    %515 = arith.addf %514, %513 : vector<8x128xf32>
    %516 = arith.divf %514, %515 : vector<8x128xf32>
    %517 = vector.extract_strided_slice %507 {offsets = [0, 128], sizes = [8, 128], strides = [1, 1]} : vector<8x512xf32> to vector<8x128xf32>
    %518 = arith.negf %517 : vector<8x128xf32>
    %519 = math.exp %518 : vector<8x128xf32>
    %cst_156 = arith.constant 1.000000e+00 : f32
    %520 = vector.broadcast %cst_156 : f32 to vector<8x128xf32>
    %521 = arith.addf %520, %519 : vector<8x128xf32>
    %522 = arith.divf %520, %521 : vector<8x128xf32>
    %523 = vector.extract_strided_slice %507 {offsets = [0, 256], sizes = [8, 128], strides = [1, 1]} : vector<8x512xf32> to vector<8x128xf32>
    %524 = math.tanh %523 : vector<8x128xf32>
    %525 = vector.extract_strided_slice %507 {offsets = [0, 384], sizes = [8, 128], strides = [1, 1]} : vector<8x512xf32> to vector<8x128xf32>
    %526 = arith.negf %525 : vector<8x128xf32>
    %527 = math.exp %526 : vector<8x128xf32>
    %cst_157 = arith.constant 1.000000e+00 : f32
    %528 = vector.broadcast %cst_157 : f32 to vector<8x128xf32>
    %529 = arith.addf %528, %527 : vector<8x128xf32>
    %530 = arith.divf %528, %529 : vector<8x128xf32>
    %531 = arith.mulf %522, %502 : vector<8x128xf32>
    %532 = arith.mulf %516, %524 : vector<8x128xf32>
    %533 = arith.addf %531, %532 : vector<8x128xf32>
    %534 = math.tanh %533 : vector<8x128xf32>
    %535 = arith.mulf %530, %534 : vector<8x128xf32>
    %536 = vector.extract_strided_slice %510 {offsets = [0, 0], sizes = [8, 128], strides = [1, 1]} : vector<8x512xf32> to vector<8x128xf32>
    %537 = arith.negf %536 : vector<8x128xf32>
    %538 = math.exp %537 : vector<8x128xf32>
    %cst_158 = arith.constant 1.000000e+00 : f32
    %539 = vector.broadcast %cst_158 : f32 to vector<8x128xf32>
    %540 = arith.addf %539, %538 : vector<8x128xf32>
    %541 = arith.divf %539, %540 : vector<8x128xf32>
    %542 = vector.extract_strided_slice %510 {offsets = [0, 128], sizes = [8, 128], strides = [1, 1]} : vector<8x512xf32> to vector<8x128xf32>
    %543 = arith.negf %542 : vector<8x128xf32>
    %544 = math.exp %543 : vector<8x128xf32>
    %cst_159 = arith.constant 1.000000e+00 : f32
    %545 = vector.broadcast %cst_159 : f32 to vector<8x128xf32>
    %546 = arith.addf %545, %544 : vector<8x128xf32>
    %547 = arith.divf %545, %546 : vector<8x128xf32>
    %548 = vector.extract_strided_slice %510 {offsets = [0, 256], sizes = [8, 128], strides = [1, 1]} : vector<8x512xf32> to vector<8x128xf32>
    %549 = math.tanh %548 : vector<8x128xf32>
    %550 = vector.extract_strided_slice %510 {offsets = [0, 384], sizes = [8, 128], strides = [1, 1]} : vector<8x512xf32> to vector<8x128xf32>
    %551 = arith.negf %550 : vector<8x128xf32>
    %552 = math.exp %551 : vector<8x128xf32>
    %cst_160 = arith.constant 1.000000e+00 : f32
    %553 = vector.broadcast %cst_160 : f32 to vector<8x128xf32>
    %554 = arith.addf %553, %552 : vector<8x128xf32>
    %555 = arith.divf %553, %554 : vector<8x128xf32>
    %556 = arith.mulf %547, %504 : vector<8x128xf32>
    %557 = arith.mulf %541, %549 : vector<8x128xf32>
    %558 = arith.addf %556, %557 : vector<8x128xf32>
    %559 = math.tanh %558 : vector<8x128xf32>
    %560 = arith.mulf %555, %559 : vector<8x128xf32>
    %561 = arith.truncf %535 : vector<8x128xf32> to vector<8x128xbf16>
    %562 = arith.truncf %560 : vector<8x128xf32> to vector<8x128xbf16>
    %c0_161 = arith.constant 0 : index
    %c0_162 = arith.constant 0 : index
    %563 = vector.load %arg8[%c0_161, %c0_162] : memref<64x256xf32, #tpu.memory_space<vmem>>, vector<8x128xf32>
    tpu.vector_store %arg8[%c0_161, %c0_162], %535 {strides = array<i32>} : memref<64x256xf32, #tpu.memory_space<vmem>>, vector<8x128xf32>,
    %c56_163 = arith.constant 56 : index
    %c128_164 = arith.constant 128 : index
    %564 = vector.load %arg8[%c56_163, %c128_164] : memref<64x256xf32, #tpu.memory_space<vmem>>, vector<8x128xf32>
    tpu.vector_store %arg8[%c56_163, %c128_164], %560 {strides = array<i32>} : memref<64x256xf32, #tpu.memory_space<vmem>>, vector<8x128xf32>,
    %c8_165 = arith.constant 8 : index
    %c0_166 = arith.constant 0 : index
    %565 = vector.load %arg7[%c8_165, %c0_166] : memref<64x1024xf32, #tpu.memory_space<vmem>>, vector<8x512xf32>
    %cst_167 = arith.constant dense<0.000000e+00> : vector<8x512xf32>
    %566 = tpu.matmul %561, %499, %cst_167 {dimension_numbers = #tpu.dot_dimension_numbers<[1], [0], [0], [1], [0, 0, 1, 1], [], []>} : vector<8x128xbf16>, vector<128x512xbf16>, vector<8x512xf32> -> vector<8x512xf32>
    %567 = arith.addf %565, %566 : vector<8x512xf32>
    %c48_168 = arith.constant 48 : index
    %c512_169 = arith.constant 512 : index
    %568 = vector.load %arg7[%c48_168, %c512_169] : memref<64x1024xf32, #tpu.memory_space<vmem>>, vector<8x512xf32>
    %cst_170 = arith.constant dense<0.000000e+00> : vector<8x512xf32>
    %569 = tpu.matmul %562, %500, %cst_170 {dimension_numbers = #tpu.dot_dimension_numbers<[1], [0], [0], [1], [0, 0, 1, 1], [], []>} : vector<8x128xbf16>, vector<128x512xbf16>, vector<8x512xf32> -> vector<8x512xf32>
    %570 = arith.addf %568, %569 : vector<8x512xf32>
    %571 = vector.extract_strided_slice %567 {offsets = [0, 0], sizes = [8, 128], strides = [1, 1]} : vector<8x512xf32> to vector<8x128xf32>
    %572 = arith.negf %571 : vector<8x128xf32>
    %573 = math.exp %572 : vector<8x128xf32>
    %cst_171 = arith.constant 1.000000e+00 : f32
    %574 = vector.broadcast %cst_171 : f32 to vector<8x128xf32>
    %575 = arith.addf %574, %573 : vector<8x128xf32>
    %576 = arith.divf %574, %575 : vector<8x128xf32>
    %577 = vector.extract_strided_slice %567 {offsets = [0, 128], sizes = [8, 128], strides = [1, 1]} : vector<8x512xf32> to vector<8x128xf32>
    %578 = arith.negf %577 : vector<8x128xf32>
    %579 = math.exp %578 : vector<8x128xf32>
    %cst_172 = arith.constant 1.000000e+00 : f32
    %580 = vector.broadcast %cst_172 : f32 to vector<8x128xf32>
    %581 = arith.addf %580, %579 : vector<8x128xf32>
    %582 = arith.divf %580, %581 : vector<8x128xf32>
    %583 = vector.extract_strided_slice %567 {offsets = [0, 256], sizes = [8, 128], strides = [1, 1]} : vector<8x512xf32> to vector<8x128xf32>
    %584 = math.tanh %583 : vector<8x128xf32>
    %585 = vector.extract_strided_slice %567 {offsets = [0, 384], sizes = [8, 128], strides = [1, 1]} : vector<8x512xf32> to vector<8x128xf32>
    %586 = arith.negf %585 : vector<8x128xf32>
    %587 = math.exp %586 : vector<8x128xf32>
    %cst_173 = arith.constant 1.000000e+00 : f32
    %588 = vector.broadcast %cst_173 : f32 to vector<8x128xf32>
    %589 = arith.addf %588, %587 : vector<8x128xf32>
    %590 = arith.divf %588, %589 : vector<8x128xf32>
    %591 = arith.mulf %582, %533 : vector<8x128xf32>
    %592 = arith.mulf %576, %584 : vector<8x128xf32>
    %593 = arith.addf %591, %592 : vector<8x128xf32>
    %594 = math.tanh %593 : vector<8x128xf32>
    %595 = arith.mulf %590, %594 : vector<8x128xf32>
    %596 = vector.extract_strided_slice %570 {offsets = [0, 0], sizes = [8, 128], strides = [1, 1]} : vector<8x512xf32> to vector<8x128xf32>
    %597 = arith.negf %596 : vector<8x128xf32>
    %598 = math.exp %597 : vector<8x128xf32>
    %cst_174 = arith.constant 1.000000e+00 : f32
    %599 = vector.broadcast %cst_174 : f32 to vector<8x128xf32>
    %600 = arith.addf %599, %598 : vector<8x128xf32>
    %601 = arith.divf %599, %600 : vector<8x128xf32>
    %602 = vector.extract_strided_slice %570 {offsets = [0, 128], sizes = [8, 128], strides = [1, 1]} : vector<8x512xf32> to vector<8x128xf32>
    %603 = arith.negf %602 : vector<8x128xf32>
    %604 = math.exp %603 : vector<8x128xf32>
    %cst_175 = arith.constant 1.000000e+00 : f32
    %605 = vector.broadcast %cst_175 : f32 to vector<8x128xf32>
    %606 = arith.addf %605, %604 : vector<8x128xf32>
    %607 = arith.divf %605, %606 : vector<8x128xf32>
    %608 = vector.extract_strided_slice %570 {offsets = [0, 256], sizes = [8, 128], strides = [1, 1]} : vector<8x512xf32> to vector<8x128xf32>
    %609 = math.tanh %608 : vector<8x128xf32>
    %610 = vector.extract_strided_slice %570 {offsets = [0, 384], sizes = [8, 128], strides = [1, 1]} : vector<8x512xf32> to vector<8x128xf32>
    %611 = arith.negf %610 : vector<8x128xf32>
    %612 = math.exp %611 : vector<8x128xf32>
    %cst_176 = arith.constant 1.000000e+00 : f32
    %613 = vector.broadcast %cst_176 : f32 to vector<8x128xf32>
    %614 = arith.addf %613, %612 : vector<8x128xf32>
    %615 = arith.divf %613, %614 : vector<8x128xf32>
    %616 = arith.mulf %607, %558 : vector<8x128xf32>
    %617 = arith.mulf %601, %609 : vector<8x128xf32>
    %618 = arith.addf %616, %617 : vector<8x128xf32>
    %619 = math.tanh %618 : vector<8x128xf32>
    %620 = arith.mulf %615, %619 : vector<8x128xf32>
    %621 = arith.truncf %595 : vector<8x128xf32> to vector<8x128xbf16>
    %622 = arith.truncf %620 : vector<8x128xf32> to vector<8x128xbf16>
    %c8_177 = arith.constant 8 : index
    %c0_178 = arith.constant 0 : index
    %623 = vector.load %arg8[%c8_177, %c0_178] : memref<64x256xf32, #tpu.memory_space<vmem>>, vector<8x128xf32>
    tpu.vector_store %arg8[%c8_177, %c0_178], %595 {strides = array<i32>} : memref<64x256xf32, #tpu.memory_space<vmem>>, vector<8x128xf32>,
    %c48_179 = arith.constant 48 : index
    %c128_180 = arith.constant 128 : index
    %624 = vector.load %arg8[%c48_179, %c128_180] : memref<64x256xf32, #tpu.memory_space<vmem>>, vector<8x128xf32>
    tpu.vector_store %arg8[%c48_179, %c128_180], %620 {strides = array<i32>} : memref<64x256xf32, #tpu.memory_space<vmem>>, vector<8x128xf32>,
    %c16_181 = arith.constant 16 : index
    %c0_182 = arith.constant 0 : index
    %625 = vector.load %arg7[%c16_181, %c0_182] : memref<64x1024xf32, #tpu.memory_space<vmem>>, vector<8x512xf32>
    %cst_183 = arith.constant dense<0.000000e+00> : vector<8x512xf32>
    %626 = tpu.matmul %621, %499, %cst_183 {dimension_numbers = #tpu.dot_dimension_numbers<[1], [0], [0], [1], [0, 0, 1, 1], [], []>} : vector<8x128xbf16>, vector<128x512xbf16>, vector<8x512xf32> -> vector<8x512xf32>
    %627 = arith.addf %625, %626 : vector<8x512xf32>
    %c40_184 = arith.constant 40 : index
    %c512_185 = arith.constant 512 : index
    %628 = vector.load %arg7[%c40_184, %c512_185] : memref<64x1024xf32, #tpu.memory_space<vmem>>, vector<8x512xf32>
    %cst_186 = arith.constant dense<0.000000e+00> : vector<8x512xf32>
    %629 = tpu.matmul %622, %500, %cst_186 {dimension_numbers = #tpu.dot_dimension_numbers<[1], [0], [0], [1], [0, 0, 1, 1], [], []>} : vector<8x128xbf16>, vector<128x512xbf16>, vector<8x512xf32> -> vector<8x512xf32>
    %630 = arith.addf %628, %629 : vector<8x512xf32>
    %631 = vector.extract_strided_slice %627 {offsets = [0, 0], sizes = [8, 128], strides = [1, 1]} : vector<8x512xf32> to vector<8x128xf32>
    %632 = arith.negf %631 : vector<8x128xf32>
    %633 = math.exp %632 : vector<8x128xf32>
    %cst_187 = arith.constant 1.000000e+00 : f32
    %634 = vector.broadcast %cst_187 : f32 to vector<8x128xf32>
    %635 = arith.addf %634, %633 : vector<8x128xf32>
    %636 = arith.divf %634, %635 : vector<8x128xf32>
    %637 = vector.extract_strided_slice %627 {offsets = [0, 128], sizes = [8, 128], strides = [1, 1]} : vector<8x512xf32> to vector<8x128xf32>
    %638 = arith.negf %637 : vector<8x128xf32>
    %639 = math.exp %638 : vector<8x128xf32>
    %cst_188 = arith.constant 1.000000e+00 : f32
    %640 = vector.broadcast %cst_188 : f32 to vector<8x128xf32>
    %641 = arith.addf %640, %639 : vector<8x128xf32>
    %642 = arith.divf %640, %641 : vector<8x128xf32>
    %643 = vector.extract_strided_slice %627 {offsets = [0, 256], sizes = [8, 128], strides = [1, 1]} : vector<8x512xf32> to vector<8x128xf32>
    %644 = math.tanh %643 : vector<8x128xf32>
    %645 = vector.extract_strided_slice %627 {offsets = [0, 384], sizes = [8, 128], strides = [1, 1]} : vector<8x512xf32> to vector<8x128xf32>
    %646 = arith.negf %645 : vector<8x128xf32>
    %647 = math.exp %646 : vector<8x128xf32>
    %cst_189 = arith.constant 1.000000e+00 : f32
    %648 = vector.broadcast %cst_189 : f32 to vector<8x128xf32>
    %649 = arith.addf %648, %647 : vector<8x128xf32>
    %650 = arith.divf %648, %649 : vector<8x128xf32>
    %651 = arith.mulf %642, %593 : vector<8x128xf32>
    %652 = arith.mulf %636, %644 : vector<8x128xf32>
    %653 = arith.addf %651, %652 : vector<8x128xf32>
    %654 = math.tanh %653 : vector<8x128xf32>
    %655 = arith.mulf %650, %654 : vector<8x128xf32>
    %656 = vector.extract_strided_slice %630 {offsets = [0, 0], sizes = [8, 128], strides = [1, 1]} : vector<8x512xf32> to vector<8x128xf32>
    %657 = arith.negf %656 : vector<8x128xf32>
    %658 = math.exp %657 : vector<8x128xf32>
    %cst_190 = arith.constant 1.000000e+00 : f32
    %659 = vector.broadcast %cst_190 : f32 to vector<8x128xf32>
    %660 = arith.addf %659, %658 : vector<8x128xf32>
    %661 = arith.divf %659, %660 : vector<8x128xf32>
    %662 = vector.extract_strided_slice %630 {offsets = [0, 128], sizes = [8, 128], strides = [1, 1]} : vector<8x512xf32> to vector<8x128xf32>
    %663 = arith.negf %662 : vector<8x128xf32>
    %664 = math.exp %663 : vector<8x128xf32>
    %cst_191 = arith.constant 1.000000e+00 : f32
    %665 = vector.broadcast %cst_191 : f32 to vector<8x128xf32>
    %666 = arith.addf %665, %664 : vector<8x128xf32>
    %667 = arith.divf %665, %666 : vector<8x128xf32>
    %668 = vector.extract_strided_slice %630 {offsets = [0, 256], sizes = [8, 128], strides = [1, 1]} : vector<8x512xf32> to vector<8x128xf32>
    %669 = math.tanh %668 : vector<8x128xf32>
    %670 = vector.extract_strided_slice %630 {offsets = [0, 384], sizes = [8, 128], strides = [1, 1]} : vector<8x512xf32> to vector<8x128xf32>
    %671 = arith.negf %670 : vector<8x128xf32>
    %672 = math.exp %671 : vector<8x128xf32>
    %cst_192 = arith.constant 1.000000e+00 : f32
    %673 = vector.broadcast %cst_192 : f32 to vector<8x128xf32>
    %674 = arith.addf %673, %672 : vector<8x128xf32>
    %675 = arith.divf %673, %674 : vector<8x128xf32>
    %676 = arith.mulf %667, %618 : vector<8x128xf32>
    %677 = arith.mulf %661, %669 : vector<8x128xf32>
    %678 = arith.addf %676, %677 : vector<8x128xf32>
    %679 = math.tanh %678 : vector<8x128xf32>
    %680 = arith.mulf %675, %679 : vector<8x128xf32>
    %681 = arith.truncf %655 : vector<8x128xf32> to vector<8x128xbf16>
    %682 = arith.truncf %680 : vector<8x128xf32> to vector<8x128xbf16>
    %c16_193 = arith.constant 16 : index
    %c0_194 = arith.constant 0 : index
    %683 = vector.load %arg8[%c16_193, %c0_194] : memref<64x256xf32, #tpu.memory_space<vmem>>, vector<8x128xf32>
    tpu.vector_store %arg8[%c16_193, %c0_194], %655 {strides = array<i32>} : memref<64x256xf32, #tpu.memory_space<vmem>>, vector<8x128xf32>,
    %c40_195 = arith.constant 40 : index
    %c128_196 = arith.constant 128 : index
    %684 = vector.load %arg8[%c40_195, %c128_196] : memref<64x256xf32, #tpu.memory_space<vmem>>, vector<8x128xf32>
    tpu.vector_store %arg8[%c40_195, %c128_196], %680 {strides = array<i32>} : memref<64x256xf32, #tpu.memory_space<vmem>>, vector<8x128xf32>,
    %c24_197 = arith.constant 24 : index
    %c0_198 = arith.constant 0 : index
    %685 = vector.load %arg7[%c24_197, %c0_198] : memref<64x1024xf32, #tpu.memory_space<vmem>>, vector<8x512xf32>
    %cst_199 = arith.constant dense<0.000000e+00> : vector<8x512xf32>
    %686 = tpu.matmul %681, %499, %cst_199 {dimension_numbers = #tpu.dot_dimension_numbers<[1], [0], [0], [1], [0, 0, 1, 1], [], []>} : vector<8x128xbf16>, vector<128x512xbf16>, vector<8x512xf32> -> vector<8x512xf32>
    %687 = arith.addf %685, %686 : vector<8x512xf32>
    %c32_200 = arith.constant 32 : index
    %c512_201 = arith.constant 512 : index
    %688 = vector.load %arg7[%c32_200, %c512_201] : memref<64x1024xf32, #tpu.memory_space<vmem>>, vector<8x512xf32>
    %cst_202 = arith.constant dense<0.000000e+00> : vector<8x512xf32>
    %689 = tpu.matmul %682, %500, %cst_202 {dimension_numbers = #tpu.dot_dimension_numbers<[1], [0], [0], [1], [0, 0, 1, 1], [], []>} : vector<8x128xbf16>, vector<128x512xbf16>, vector<8x512xf32> -> vector<8x512xf32>
    %690 = arith.addf %688, %689 : vector<8x512xf32>
    %691 = vector.extract_strided_slice %687 {offsets = [0, 0], sizes = [8, 128], strides = [1, 1]} : vector<8x512xf32> to vector<8x128xf32>
    %692 = arith.negf %691 : vector<8x128xf32>
    %693 = math.exp %692 : vector<8x128xf32>
    %cst_203 = arith.constant 1.000000e+00 : f32
    %694 = vector.broadcast %cst_203 : f32 to vector<8x128xf32>
    %695 = arith.addf %694, %693 : vector<8x128xf32>
    %696 = arith.divf %694, %695 : vector<8x128xf32>
    %697 = vector.extract_strided_slice %687 {offsets = [0, 128], sizes = [8, 128], strides = [1, 1]} : vector<8x512xf32> to vector<8x128xf32>
    %698 = arith.negf %697 : vector<8x128xf32>
    %699 = math.exp %698 : vector<8x128xf32>
    %cst_204 = arith.constant 1.000000e+00 : f32
    %700 = vector.broadcast %cst_204 : f32 to vector<8x128xf32>
    %701 = arith.addf %700, %699 : vector<8x128xf32>
    %702 = arith.divf %700, %701 : vector<8x128xf32>
    %703 = vector.extract_strided_slice %687 {offsets = [0, 256], sizes = [8, 128], strides = [1, 1]} : vector<8x512xf32> to vector<8x128xf32>
    %704 = math.tanh %703 : vector<8x128xf32>
    %705 = vector.extract_strided_slice %687 {offsets = [0, 384], sizes = [8, 128], strides = [1, 1]} : vector<8x512xf32> to vector<8x128xf32>
    %706 = arith.negf %705 : vector<8x128xf32>
    %707 = math.exp %706 : vector<8x128xf32>
    %cst_205 = arith.constant 1.000000e+00 : f32
    %708 = vector.broadcast %cst_205 : f32 to vector<8x128xf32>
    %709 = arith.addf %708, %707 : vector<8x128xf32>
    %710 = arith.divf %708, %709 : vector<8x128xf32>
    %711 = arith.mulf %702, %653 : vector<8x128xf32>
    %712 = arith.mulf %696, %704 : vector<8x128xf32>
    %713 = arith.addf %711, %712 : vector<8x128xf32>
    %714 = math.tanh %713 : vector<8x128xf32>
    %715 = arith.mulf %710, %714 : vector<8x128xf32>
    %716 = vector.extract_strided_slice %690 {offsets = [0, 0], sizes = [8, 128], strides = [1, 1]} : vector<8x512xf32> to vector<8x128xf32>
    %717 = arith.negf %716 : vector<8x128xf32>
    %718 = math.exp %717 : vector<8x128xf32>
    %cst_206 = arith.constant 1.000000e+00 : f32
    %719 = vector.broadcast %cst_206 : f32 to vector<8x128xf32>
    %720 = arith.addf %719, %718 : vector<8x128xf32>
    %721 = arith.divf %719, %720 : vector<8x128xf32>
    %722 = vector.extract_strided_slice %690 {offsets = [0, 128], sizes = [8, 128], strides = [1, 1]} : vector<8x512xf32> to vector<8x128xf32>
    %723 = arith.negf %722 : vector<8x128xf32>
    %724 = math.exp %723 : vector<8x128xf32>
    %cst_207 = arith.constant 1.000000e+00 : f32
    %725 = vector.broadcast %cst_207 : f32 to vector<8x128xf32>
    %726 = arith.addf %725, %724 : vector<8x128xf32>
    %727 = arith.divf %725, %726 : vector<8x128xf32>
    %728 = vector.extract_strided_slice %690 {offsets = [0, 256], sizes = [8, 128], strides = [1, 1]} : vector<8x512xf32> to vector<8x128xf32>
    %729 = math.tanh %728 : vector<8x128xf32>
    %730 = vector.extract_strided_slice %690 {offsets = [0, 384], sizes = [8, 128], strides = [1, 1]} : vector<8x512xf32> to vector<8x128xf32>
    %731 = arith.negf %730 : vector<8x128xf32>
    %732 = math.exp %731 : vector<8x128xf32>
    %cst_208 = arith.constant 1.000000e+00 : f32
    %733 = vector.broadcast %cst_208 : f32 to vector<8x128xf32>
    %734 = arith.addf %733, %732 : vector<8x128xf32>
    %735 = arith.divf %733, %734 : vector<8x128xf32>
    %736 = arith.mulf %727, %678 : vector<8x128xf32>
    %737 = arith.mulf %721, %729 : vector<8x128xf32>
    %738 = arith.addf %736, %737 : vector<8x128xf32>
    %739 = math.tanh %738 : vector<8x128xf32>
    %740 = arith.mulf %735, %739 : vector<8x128xf32>
    %741 = arith.truncf %715 : vector<8x128xf32> to vector<8x128xbf16>
    %742 = arith.truncf %740 : vector<8x128xf32> to vector<8x128xbf16>
    %c24_209 = arith.constant 24 : index
    %c0_210 = arith.constant 0 : index
    %743 = vector.load %arg8[%c24_209, %c0_210] : memref<64x256xf32, #tpu.memory_space<vmem>>, vector<8x128xf32>
    tpu.vector_store %arg8[%c24_209, %c0_210], %715 {strides = array<i32>} : memref<64x256xf32, #tpu.memory_space<vmem>>, vector<8x128xf32>,
    %c32_211 = arith.constant 32 : index
    %c128_212 = arith.constant 128 : index
    %744 = vector.load %arg8[%c32_211, %c128_212] : memref<64x256xf32, #tpu.memory_space<vmem>>, vector<8x128xf32>
    tpu.vector_store %arg8[%c32_211, %c128_212], %740 {strides = array<i32>} : memref<64x256xf32, #tpu.memory_space<vmem>>, vector<8x128xf32>,
    %c32_213 = arith.constant 32 : index
    %c0_214 = arith.constant 0 : index
    %745 = vector.load %arg7[%c32_213, %c0_214] : memref<64x1024xf32, #tpu.memory_space<vmem>>, vector<8x512xf32>
    %cst_215 = arith.constant dense<0.000000e+00> : vector<8x512xf32>
    %746 = tpu.matmul %741, %499, %cst_215 {dimension_numbers = #tpu.dot_dimension_numbers<[1], [0], [0], [1], [0, 0, 1, 1], [], []>} : vector<8x128xbf16>, vector<128x512xbf16>, vector<8x512xf32> -> vector<8x512xf32>
    %747 = arith.addf %745, %746 : vector<8x512xf32>
    %c24_216 = arith.constant 24 : index
    %c512_217 = arith.constant 512 : index
    %748 = vector.load %arg7[%c24_216, %c512_217] : memref<64x1024xf32, #tpu.memory_space<vmem>>, vector<8x512xf32>
    %cst_218 = arith.constant dense<0.000000e+00> : vector<8x512xf32>
    %749 = tpu.matmul %742, %500, %cst_218 {dimension_numbers = #tpu.dot_dimension_numbers<[1], [0], [0], [1], [0, 0, 1, 1], [], []>} : vector<8x128xbf16>, vector<128x512xbf16>, vector<8x512xf32> -> vector<8x512xf32>
    %750 = arith.addf %748, %749 : vector<8x512xf32>
    %751 = vector.extract_strided_slice %747 {offsets = [0, 0], sizes = [8, 128], strides = [1, 1]} : vector<8x512xf32> to vector<8x128xf32>
    %752 = arith.negf %751 : vector<8x128xf32>
    %753 = math.exp %752 : vector<8x128xf32>
    %cst_219 = arith.constant 1.000000e+00 : f32
    %754 = vector.broadcast %cst_219 : f32 to vector<8x128xf32>
    %755 = arith.addf %754, %753 : vector<8x128xf32>
    %756 = arith.divf %754, %755 : vector<8x128xf32>
    %757 = vector.extract_strided_slice %747 {offsets = [0, 128], sizes = [8, 128], strides = [1, 1]} : vector<8x512xf32> to vector<8x128xf32>
    %758 = arith.negf %757 : vector<8x128xf32>
    %759 = math.exp %758 : vector<8x128xf32>
    %cst_220 = arith.constant 1.000000e+00 : f32
    %760 = vector.broadcast %cst_220 : f32 to vector<8x128xf32>
    %761 = arith.addf %760, %759 : vector<8x128xf32>
    %762 = arith.divf %760, %761 : vector<8x128xf32>
    %763 = vector.extract_strided_slice %747 {offsets = [0, 256], sizes = [8, 128], strides = [1, 1]} : vector<8x512xf32> to vector<8x128xf32>
    %764 = math.tanh %763 : vector<8x128xf32>
    %765 = vector.extract_strided_slice %747 {offsets = [0, 384], sizes = [8, 128], strides = [1, 1]} : vector<8x512xf32> to vector<8x128xf32>
    %766 = arith.negf %765 : vector<8x128xf32>
    %767 = math.exp %766 : vector<8x128xf32>
    %cst_221 = arith.constant 1.000000e+00 : f32
    %768 = vector.broadcast %cst_221 : f32 to vector<8x128xf32>
    %769 = arith.addf %768, %767 : vector<8x128xf32>
    %770 = arith.divf %768, %769 : vector<8x128xf32>
    %771 = arith.mulf %762, %713 : vector<8x128xf32>
    %772 = arith.mulf %756, %764 : vector<8x128xf32>
    %773 = arith.addf %771, %772 : vector<8x128xf32>
    %774 = math.tanh %773 : vector<8x128xf32>
    %775 = arith.mulf %770, %774 : vector<8x128xf32>
    %776 = vector.extract_strided_slice %750 {offsets = [0, 0], sizes = [8, 128], strides = [1, 1]} : vector<8x512xf32> to vector<8x128xf32>
    %777 = arith.negf %776 : vector<8x128xf32>
    %778 = math.exp %777 : vector<8x128xf32>
    %cst_222 = arith.constant 1.000000e+00 : f32
    %779 = vector.broadcast %cst_222 : f32 to vector<8x128xf32>
    %780 = arith.addf %779, %778 : vector<8x128xf32>
    %781 = arith.divf %779, %780 : vector<8x128xf32>
    %782 = vector.extract_strided_slice %750 {offsets = [0, 128], sizes = [8, 128], strides = [1, 1]} : vector<8x512xf32> to vector<8x128xf32>
    %783 = arith.negf %782 : vector<8x128xf32>
    %784 = math.exp %783 : vector<8x128xf32>
    %cst_223 = arith.constant 1.000000e+00 : f32
    %785 = vector.broadcast %cst_223 : f32 to vector<8x128xf32>
    %786 = arith.addf %785, %784 : vector<8x128xf32>
    %787 = arith.divf %785, %786 : vector<8x128xf32>
    %788 = vector.extract_strided_slice %750 {offsets = [0, 256], sizes = [8, 128], strides = [1, 1]} : vector<8x512xf32> to vector<8x128xf32>
    %789 = math.tanh %788 : vector<8x128xf32>
    %790 = vector.extract_strided_slice %750 {offsets = [0, 384], sizes = [8, 128], strides = [1, 1]} : vector<8x512xf32> to vector<8x128xf32>
    %791 = arith.negf %790 : vector<8x128xf32>
    %792 = math.exp %791 : vector<8x128xf32>
    %cst_224 = arith.constant 1.000000e+00 : f32
    %793 = vector.broadcast %cst_224 : f32 to vector<8x128xf32>
    %794 = arith.addf %793, %792 : vector<8x128xf32>
    %795 = arith.divf %793, %794 : vector<8x128xf32>
    %796 = arith.mulf %787, %738 : vector<8x128xf32>
    %797 = arith.mulf %781, %789 : vector<8x128xf32>
    %798 = arith.addf %796, %797 : vector<8x128xf32>
    %799 = math.tanh %798 : vector<8x128xf32>
    %800 = arith.mulf %795, %799 : vector<8x128xf32>
    %801 = arith.truncf %775 : vector<8x128xf32> to vector<8x128xbf16>
    %802 = arith.truncf %800 : vector<8x128xf32> to vector<8x128xbf16>
    %c32_225 = arith.constant 32 : index
    %c0_226 = arith.constant 0 : index
    %803 = vector.load %arg8[%c32_225, %c0_226] : memref<64x256xf32, #tpu.memory_space<vmem>>, vector<8x128xf32>
    tpu.vector_store %arg8[%c32_225, %c0_226], %775 {strides = array<i32>} : memref<64x256xf32, #tpu.memory_space<vmem>>, vector<8x128xf32>,
    %c24_227 = arith.constant 24 : index
    %c128_228 = arith.constant 128 : index
    %804 = vector.load %arg8[%c24_227, %c128_228] : memref<64x256xf32, #tpu.memory_space<vmem>>, vector<8x128xf32>
    tpu.vector_store %arg8[%c24_227, %c128_228], %800 {strides = array<i32>} : memref<64x256xf32, #tpu.memory_space<vmem>>, vector<8x128xf32>,
    %c40_229 = arith.constant 40 : index
    %c0_230 = arith.constant 0 : index
    %805 = vector.load %arg7[%c40_229, %c0_230] : memref<64x1024xf32, #tpu.memory_space<vmem>>, vector<8x512xf32>
    %cst_231 = arith.constant dense<0.000000e+00> : vector<8x512xf32>
    %806 = tpu.matmul %801, %499, %cst_231 {dimension_numbers = #tpu.dot_dimension_numbers<[1], [0], [0], [1], [0, 0, 1, 1], [], []>} : vector<8x128xbf16>, vector<128x512xbf16>, vector<8x512xf32> -> vector<8x512xf32>
    %807 = arith.addf %805, %806 : vector<8x512xf32>
    %c16_232 = arith.constant 16 : index
    %c512_233 = arith.constant 512 : index
    %808 = vector.load %arg7[%c16_232, %c512_233] : memref<64x1024xf32, #tpu.memory_space<vmem>>, vector<8x512xf32>
    %cst_234 = arith.constant dense<0.000000e+00> : vector<8x512xf32>
    %809 = tpu.matmul %802, %500, %cst_234 {dimension_numbers = #tpu.dot_dimension_numbers<[1], [0], [0], [1], [0, 0, 1, 1], [], []>} : vector<8x128xbf16>, vector<128x512xbf16>, vector<8x512xf32> -> vector<8x512xf32>
    %810 = arith.addf %808, %809 : vector<8x512xf32>
    %811 = vector.extract_strided_slice %807 {offsets = [0, 0], sizes = [8, 128], strides = [1, 1]} : vector<8x512xf32> to vector<8x128xf32>
    %812 = arith.negf %811 : vector<8x128xf32>
    %813 = math.exp %812 : vector<8x128xf32>
    %cst_235 = arith.constant 1.000000e+00 : f32
    %814 = vector.broadcast %cst_235 : f32 to vector<8x128xf32>
    %815 = arith.addf %814, %813 : vector<8x128xf32>
    %816 = arith.divf %814, %815 : vector<8x128xf32>
    %817 = vector.extract_strided_slice %807 {offsets = [0, 128], sizes = [8, 128], strides = [1, 1]} : vector<8x512xf32> to vector<8x128xf32>
    %818 = arith.negf %817 : vector<8x128xf32>
    %819 = math.exp %818 : vector<8x128xf32>
    %cst_236 = arith.constant 1.000000e+00 : f32
    %820 = vector.broadcast %cst_236 : f32 to vector<8x128xf32>
    %821 = arith.addf %820, %819 : vector<8x128xf32>
    %822 = arith.divf %820, %821 : vector<8x128xf32>
    %823 = vector.extract_strided_slice %807 {offsets = [0, 256], sizes = [8, 128], strides = [1, 1]} : vector<8x512xf32> to vector<8x128xf32>
    %824 = math.tanh %823 : vector<8x128xf32>
    %825 = vector.extract_strided_slice %807 {offsets = [0, 384], sizes = [8, 128], strides = [1, 1]} : vector<8x512xf32> to vector<8x128xf32>
    %826 = arith.negf %825 : vector<8x128xf32>
    %827 = math.exp %826 : vector<8x128xf32>
    %cst_237 = arith.constant 1.000000e+00 : f32
    %828 = vector.broadcast %cst_237 : f32 to vector<8x128xf32>
    %829 = arith.addf %828, %827 : vector<8x128xf32>
    %830 = arith.divf %828, %829 : vector<8x128xf32>
    %831 = arith.mulf %822, %773 : vector<8x128xf32>
    %832 = arith.mulf %816, %824 : vector<8x128xf32>
    %833 = arith.addf %831, %832 : vector<8x128xf32>
    %834 = math.tanh %833 : vector<8x128xf32>
    %835 = arith.mulf %830, %834 : vector<8x128xf32>
    %836 = vector.extract_strided_slice %810 {offsets = [0, 0], sizes = [8, 128], strides = [1, 1]} : vector<8x512xf32> to vector<8x128xf32>
    %837 = arith.negf %836 : vector<8x128xf32>
    %838 = math.exp %837 : vector<8x128xf32>
    %cst_238 = arith.constant 1.000000e+00 : f32
    %839 = vector.broadcast %cst_238 : f32 to vector<8x128xf32>
    %840 = arith.addf %839, %838 : vector<8x128xf32>
    %841 = arith.divf %839, %840 : vector<8x128xf32>
    %842 = vector.extract_strided_slice %810 {offsets = [0, 128], sizes = [8, 128], strides = [1, 1]} : vector<8x512xf32> to vector<8x128xf32>
    %843 = arith.negf %842 : vector<8x128xf32>
    %844 = math.exp %843 : vector<8x128xf32>
    %cst_239 = arith.constant 1.000000e+00 : f32
    %845 = vector.broadcast %cst_239 : f32 to vector<8x128xf32>
    %846 = arith.addf %845, %844 : vector<8x128xf32>
    %847 = arith.divf %845, %846 : vector<8x128xf32>
    %848 = vector.extract_strided_slice %810 {offsets = [0, 256], sizes = [8, 128], strides = [1, 1]} : vector<8x512xf32> to vector<8x128xf32>
    %849 = math.tanh %848 : vector<8x128xf32>
    %850 = vector.extract_strided_slice %810 {offsets = [0, 384], sizes = [8, 128], strides = [1, 1]} : vector<8x512xf32> to vector<8x128xf32>
    %851 = arith.negf %850 : vector<8x128xf32>
    %852 = math.exp %851 : vector<8x128xf32>
    %cst_240 = arith.constant 1.000000e+00 : f32
    %853 = vector.broadcast %cst_240 : f32 to vector<8x128xf32>
    %854 = arith.addf %853, %852 : vector<8x128xf32>
    %855 = arith.divf %853, %854 : vector<8x128xf32>
    %856 = arith.mulf %847, %798 : vector<8x128xf32>
    %857 = arith.mulf %841, %849 : vector<8x128xf32>
    %858 = arith.addf %856, %857 : vector<8x128xf32>
    %859 = math.tanh %858 : vector<8x128xf32>
    %860 = arith.mulf %855, %859 : vector<8x128xf32>
    %861 = arith.truncf %835 : vector<8x128xf32> to vector<8x128xbf16>
    %862 = arith.truncf %860 : vector<8x128xf32> to vector<8x128xbf16>
    %c40_241 = arith.constant 40 : index
    %c0_242 = arith.constant 0 : index
    %863 = vector.load %arg8[%c40_241, %c0_242] : memref<64x256xf32, #tpu.memory_space<vmem>>, vector<8x128xf32>
    tpu.vector_store %arg8[%c40_241, %c0_242], %835 {strides = array<i32>} : memref<64x256xf32, #tpu.memory_space<vmem>>, vector<8x128xf32>,
    %c16_243 = arith.constant 16 : index
    %c128_244 = arith.constant 128 : index
    %864 = vector.load %arg8[%c16_243, %c128_244] : memref<64x256xf32, #tpu.memory_space<vmem>>, vector<8x128xf32>
    tpu.vector_store %arg8[%c16_243, %c128_244], %860 {strides = array<i32>} : memref<64x256xf32, #tpu.memory_space<vmem>>, vector<8x128xf32>,
    %c48_245 = arith.constant 48 : index
    %c0_246 = arith.constant 0 : index
    %865 = vector.load %arg7[%c48_245, %c0_246] : memref<64x1024xf32, #tpu.memory_space<vmem>>, vector<8x512xf32>
    %cst_247 = arith.constant dense<0.000000e+00> : vector<8x512xf32>
    %866 = tpu.matmul %861, %499, %cst_247 {dimension_numbers = #tpu.dot_dimension_numbers<[1], [0], [0], [1], [0, 0, 1, 1], [], []>} : vector<8x128xbf16>, vector<128x512xbf16>, vector<8x512xf32> -> vector<8x512xf32>
    %867 = arith.addf %865, %866 : vector<8x512xf32>
    %c8_248 = arith.constant 8 : index
    %c512_249 = arith.constant 512 : index
    %868 = vector.load %arg7[%c8_248, %c512_249] : memref<64x1024xf32, #tpu.memory_space<vmem>>, vector<8x512xf32>
    %cst_250 = arith.constant dense<0.000000e+00> : vector<8x512xf32>
    %869 = tpu.matmul %862, %500, %cst_250 {dimension_numbers = #tpu.dot_dimension_numbers<[1], [0], [0], [1], [0, 0, 1, 1], [], []>} : vector<8x128xbf16>, vector<128x512xbf16>, vector<8x512xf32> -> vector<8x512xf32>
    %870 = arith.addf %868, %869 : vector<8x512xf32>
    %871 = vector.extract_strided_slice %867 {offsets = [0, 0], sizes = [8, 128], strides = [1, 1]} : vector<8x512xf32> to vector<8x128xf32>
    %872 = arith.negf %871 : vector<8x128xf32>
    %873 = math.exp %872 : vector<8x128xf32>
    %cst_251 = arith.constant 1.000000e+00 : f32
    %874 = vector.broadcast %cst_251 : f32 to vector<8x128xf32>
    %875 = arith.addf %874, %873 : vector<8x128xf32>
    %876 = arith.divf %874, %875 : vector<8x128xf32>
    %877 = vector.extract_strided_slice %867 {offsets = [0, 128], sizes = [8, 128], strides = [1, 1]} : vector<8x512xf32> to vector<8x128xf32>
    %878 = arith.negf %877 : vector<8x128xf32>
    %879 = math.exp %878 : vector<8x128xf32>
    %cst_252 = arith.constant 1.000000e+00 : f32
    %880 = vector.broadcast %cst_252 : f32 to vector<8x128xf32>
    %881 = arith.addf %880, %879 : vector<8x128xf32>
    %882 = arith.divf %880, %881 : vector<8x128xf32>
    %883 = vector.extract_strided_slice %867 {offsets = [0, 256], sizes = [8, 128], strides = [1, 1]} : vector<8x512xf32> to vector<8x128xf32>
    %884 = math.tanh %883 : vector<8x128xf32>
    %885 = vector.extract_strided_slice %867 {offsets = [0, 384], sizes = [8, 128], strides = [1, 1]} : vector<8x512xf32> to vector<8x128xf32>
    %886 = arith.negf %885 : vector<8x128xf32>
    %887 = math.exp %886 : vector<8x128xf32>
    %cst_253 = arith.constant 1.000000e+00 : f32
    %888 = vector.broadcast %cst_253 : f32 to vector<8x128xf32>
    %889 = arith.addf %888, %887 : vector<8x128xf32>
    %890 = arith.divf %888, %889 : vector<8x128xf32>
    %891 = arith.mulf %882, %833 : vector<8x128xf32>
    %892 = arith.mulf %876, %884 : vector<8x128xf32>
    %893 = arith.addf %891, %892 : vector<8x128xf32>
    %894 = math.tanh %893 : vector<8x128xf32>
    %895 = arith.mulf %890, %894 : vector<8x128xf32>
    %896 = vector.extract_strided_slice %870 {offsets = [0, 0], sizes = [8, 128], strides = [1, 1]} : vector<8x512xf32> to vector<8x128xf32>
    %897 = arith.negf %896 : vector<8x128xf32>
    %898 = math.exp %897 : vector<8x128xf32>
    %cst_254 = arith.constant 1.000000e+00 : f32
    %899 = vector.broadcast %cst_254 : f32 to vector<8x128xf32>
    %900 = arith.addf %899, %898 : vector<8x128xf32>
    %901 = arith.divf %899, %900 : vector<8x128xf32>
    %902 = vector.extract_strided_slice %870 {offsets = [0, 128], sizes = [8, 128], strides = [1, 1]} : vector<8x512xf32> to vector<8x128xf32>
    %903 = arith.negf %902 : vector<8x128xf32>
    %904 = math.exp %903 : vector<8x128xf32>
    %cst_255 = arith.constant 1.000000e+00 : f32
    %905 = vector.broadcast %cst_255 : f32 to vector<8x128xf32>
    %906 = arith.addf %905, %904 : vector<8x128xf32>
    %907 = arith.divf %905, %906 : vector<8x128xf32>
    %908 = vector.extract_strided_slice %870 {offsets = [0, 256], sizes = [8, 128], strides = [1, 1]} : vector<8x512xf32> to vector<8x128xf32>
    %909 = math.tanh %908 : vector<8x128xf32>
    %910 = vector.extract_strided_slice %870 {offsets = [0, 384], sizes = [8, 128], strides = [1, 1]} : vector<8x512xf32> to vector<8x128xf32>
    %911 = arith.negf %910 : vector<8x128xf32>
    %912 = math.exp %911 : vector<8x128xf32>
    %cst_256 = arith.constant 1.000000e+00 : f32
    %913 = vector.broadcast %cst_256 : f32 to vector<8x128xf32>
    %914 = arith.addf %913, %912 : vector<8x128xf32>
    %915 = arith.divf %913, %914 : vector<8x128xf32>
    %916 = arith.mulf %907, %858 : vector<8x128xf32>
    %917 = arith.mulf %901, %909 : vector<8x128xf32>
    %918 = arith.addf %916, %917 : vector<8x128xf32>
    %919 = math.tanh %918 : vector<8x128xf32>
    %920 = arith.mulf %915, %919 : vector<8x128xf32>
    %921 = arith.truncf %895 : vector<8x128xf32> to vector<8x128xbf16>
    %922 = arith.truncf %920 : vector<8x128xf32> to vector<8x128xbf16>
    %c48_257 = arith.constant 48 : index
    %c0_258 = arith.constant 0 : index
    %923 = vector.load %arg8[%c48_257, %c0_258] : memref<64x256xf32, #tpu.memory_space<vmem>>, vector<8x128xf32>
    tpu.vector_store %arg8[%c48_257, %c0_258], %895 {strides = array<i32>} : memref<64x256xf32, #tpu.memory_space<vmem>>, vector<8x128xf32>,
    %c8_259 = arith.constant 8 : index
    %c128_260 = arith.constant 128 : index
    %924 = vector.load %arg8[%c8_259, %c128_260] : memref<64x256xf32, #tpu.memory_space<vmem>>, vector<8x128xf32>
    tpu.vector_store %arg8[%c8_259, %c128_260], %920 {strides = array<i32>} : memref<64x256xf32, #tpu.memory_space<vmem>>, vector<8x128xf32>,
    %c56_261 = arith.constant 56 : index
    %c0_262 = arith.constant 0 : index
    %925 = vector.load %arg7[%c56_261, %c0_262] : memref<64x1024xf32, #tpu.memory_space<vmem>>, vector<8x512xf32>
    %cst_263 = arith.constant dense<0.000000e+00> : vector<8x512xf32>
    %926 = tpu.matmul %921, %499, %cst_263 {dimension_numbers = #tpu.dot_dimension_numbers<[1], [0], [0], [1], [0, 0, 1, 1], [], []>} : vector<8x128xbf16>, vector<128x512xbf16>, vector<8x512xf32> -> vector<8x512xf32>
    %927 = arith.addf %925, %926 : vector<8x512xf32>
    %c0_264 = arith.constant 0 : index
    %c512_265 = arith.constant 512 : index
    %928 = vector.load %arg7[%c0_264, %c512_265] : memref<64x1024xf32, #tpu.memory_space<vmem>>, vector<8x512xf32>
    %cst_266 = arith.constant dense<0.000000e+00> : vector<8x512xf32>
    %929 = tpu.matmul %922, %500, %cst_266 {dimension_numbers = #tpu.dot_dimension_numbers<[1], [0], [0], [1], [0, 0, 1, 1], [], []>} : vector<8x128xbf16>, vector<128x512xbf16>, vector<8x512xf32> -> vector<8x512xf32>
    %930 = arith.addf %928, %929 : vector<8x512xf32>
    %931 = vector.extract_strided_slice %927 {offsets = [0, 0], sizes = [8, 128], strides = [1, 1]} : vector<8x512xf32> to vector<8x128xf32>
    %932 = arith.negf %931 : vector<8x128xf32>
    %933 = math.exp %932 : vector<8x128xf32>
    %cst_267 = arith.constant 1.000000e+00 : f32
    %934 = vector.broadcast %cst_267 : f32 to vector<8x128xf32>
    %935 = arith.addf %934, %933 : vector<8x128xf32>
    %936 = arith.divf %934, %935 : vector<8x128xf32>
    %937 = vector.extract_strided_slice %927 {offsets = [0, 128], sizes = [8, 128], strides = [1, 1]} : vector<8x512xf32> to vector<8x128xf32>
    %938 = arith.negf %937 : vector<8x128xf32>
    %939 = math.exp %938 : vector<8x128xf32>
    %cst_268 = arith.constant 1.000000e+00 : f32
    %940 = vector.broadcast %cst_268 : f32 to vector<8x128xf32>
    %941 = arith.addf %940, %939 : vector<8x128xf32>
    %942 = arith.divf %940, %941 : vector<8x128xf32>
    %943 = vector.extract_strided_slice %927 {offsets = [0, 256], sizes = [8, 128], strides = [1, 1]} : vector<8x512xf32> to vector<8x128xf32>
    %944 = math.tanh %943 : vector<8x128xf32>
    %945 = vector.extract_strided_slice %927 {offsets = [0, 384], sizes = [8, 128], strides = [1, 1]} : vector<8x512xf32> to vector<8x128xf32>
    %946 = arith.negf %945 : vector<8x128xf32>
    %947 = math.exp %946 : vector<8x128xf32>
    %cst_269 = arith.constant 1.000000e+00 : f32
    %948 = vector.broadcast %cst_269 : f32 to vector<8x128xf32>
    %949 = arith.addf %948, %947 : vector<8x128xf32>
    %950 = arith.divf %948, %949 : vector<8x128xf32>
    %951 = arith.mulf %942, %893 : vector<8x128xf32>
    %952 = arith.mulf %936, %944 : vector<8x128xf32>
    %953 = arith.addf %951, %952 : vector<8x128xf32>
    %954 = math.tanh %953 : vector<8x128xf32>
    %955 = arith.mulf %950, %954 : vector<8x128xf32>
    %956 = vector.extract_strided_slice %930 {offsets = [0, 0], sizes = [8, 128], strides = [1, 1]} : vector<8x512xf32> to vector<8x128xf32>
    %957 = arith.negf %956 : vector<8x128xf32>
    %958 = math.exp %957 : vector<8x128xf32>
    %cst_270 = arith.constant 1.000000e+00 : f32
    %959 = vector.broadcast %cst_270 : f32 to vector<8x128xf32>
    %960 = arith.addf %959, %958 : vector<8x128xf32>
    %961 = arith.divf %959, %960 : vector<8x128xf32>
    %962 = vector.extract_strided_slice %930 {offsets = [0, 128], sizes = [8, 128], strides = [1, 1]} : vector<8x512xf32> to vector<8x128xf32>
    %963 = arith.negf %962 : vector<8x128xf32>
    %964 = math.exp %963 : vector<8x128xf32>
    %cst_271 = arith.constant 1.000000e+00 : f32
    %965 = vector.broadcast %cst_271 : f32 to vector<8x128xf32>
    %966 = arith.addf %965, %964 : vector<8x128xf32>
    %967 = arith.divf %965, %966 : vector<8x128xf32>
    %968 = vector.extract_strided_slice %930 {offsets = [0, 256], sizes = [8, 128], strides = [1, 1]} : vector<8x512xf32> to vector<8x128xf32>
    %969 = math.tanh %968 : vector<8x128xf32>
    %970 = vector.extract_strided_slice %930 {offsets = [0, 384], sizes = [8, 128], strides = [1, 1]} : vector<8x512xf32> to vector<8x128xf32>
    %971 = arith.negf %970 : vector<8x128xf32>
    %972 = math.exp %971 : vector<8x128xf32>
    %cst_272 = arith.constant 1.000000e+00 : f32
    %973 = vector.broadcast %cst_272 : f32 to vector<8x128xf32>
    %974 = arith.addf %973, %972 : vector<8x128xf32>
    %975 = arith.divf %973, %974 : vector<8x128xf32>
    %976 = arith.mulf %967, %918 : vector<8x128xf32>
    %977 = arith.mulf %961, %969 : vector<8x128xf32>
    %978 = arith.addf %976, %977 : vector<8x128xf32>
    %979 = math.tanh %978 : vector<8x128xf32>
    %980 = arith.mulf %975, %979 : vector<8x128xf32>
    %c56_273 = arith.constant 56 : index
    %c0_274 = arith.constant 0 : index
    %981 = vector.load %arg8[%c56_273, %c0_274] : memref<64x256xf32, #tpu.memory_space<vmem>>, vector<8x128xf32>
    tpu.vector_store %arg8[%c56_273, %c0_274], %955 {strides = array<i32>} : memref<64x256xf32, #tpu.memory_space<vmem>>, vector<8x128xf32>,
    %c0_275 = arith.constant 0 : index
    %c128_276 = arith.constant 128 : index
    %982 = vector.load %arg8[%c0_275, %c128_276] : memref<64x256xf32, #tpu.memory_space<vmem>>, vector<8x128xf32>
    tpu.vector_store %arg8[%c0_275, %c128_276], %980 {strides = array<i32>} : memref<64x256xf32, #tpu.memory_space<vmem>>, vector<8x128xf32>,
    %c56_277 = arith.constant 56 : index
    %c0_278 = arith.constant 0 : index
    %983 = vector.load %arg8[%c56_277, %c0_278] : memref<64x256xf32, #tpu.memory_space<vmem>>, vector<8x256xf32>
    %984 = arith.truncf %983 : vector<8x256xf32> to vector<8x256xbf16>
    %c0_279 = arith.constant 0 : index
    %c0_280 = arith.constant 0 : index
    %985 = vector.load %arg4[%c0_279, %c0_280] : memref<256x128xbf16, #tpu.memory_space<vmem>>, vector<256x128xbf16>
    %cst_281 = arith.constant dense<0.000000e+00> : vector<8x128xf32>
    %986 = tpu.matmul %984, %985, %cst_281 {dimension_numbers = #tpu.dot_dimension_numbers<[1], [0], [0], [1], [0, 0, 1, 1], [], []>} : vector<8x256xbf16>, vector<256x128xbf16>, vector<8x128xf32> -> vector<8x128xf32>
    %c2 = arith.constant 2 : index
    %c0_282 = arith.constant 0 : index
    %987 = vector.load %arg3[%c2, %c0_282] : memref<3x1024xf32, #tpu.memory_space<vmem>>, vector<1x128xf32>
    %988 = vector.broadcast %987 : vector<1x128xf32> to vector<8x128xf32>
    %989 = arith.addf %986, %988 : vector<8x128xf32>
    %c0_283 = arith.constant 0 : index
    %c0_284 = arith.constant 0 : index
    %990 = vector.load %arg5[%c0_283, %c0_284] : memref<8x128xf32, #tpu.memory_space<vmem>>, vector<8x128xf32>
    tpu.vector_store %arg5[%c0_283, %c0_284], %989 {strides = array<i32>} : memref<8x128xf32, #tpu.memory_space<vmem>>, vector<8x128xf32>,
    return
  }
}

</mosaic_0001>

<llo_original>
// kernel: model_forward.1
$region0: #{model_forward.1}
  #allocation0 [shape = 'u32[]', space=smem, size = 0x4, offset = 0x4, fixed_abs, tag = 'smem constant byte address 0x4 - core index']
  #allocation1 [shape = 'u32[144,128]{1,0:T(1,128)}', space=vmem, size = 0x12000, scoped, tag = 'internal scratch']
  #allocation2 [shape = 'bf16[384,1024]{1,0:T(8,128)(2,1)}', space=vmem, size = 0xc0000, scoped, tag = 'scratch operand']
  #allocation3 [shape = 'f32[64,1024]{1,0:T(8,128)}', space=vmem, size = 0x40000, scoped, tag = 'scratch operand']
  #allocation4 [shape = 'f32[64,256]{1,0:T(8,128)}', space=vmem, size = 0x10000, scoped, tag = 'scratch operand']
  #allocation5 [shape = 's32[1]{0}', space=sflag, size = 0x4, scoped, tag = 'scratch operand']
  #allocation10 [shape = 's32[]', space=sflag, size = 0x4, offset = 0, fixed_abs, tag = 'sflag constant byte address 0x0 - dummy sync flag']
  #allocation11 [shape = 's32[]', space=sflag, size = 0x4, offset = 0, fixed_abs, tag = 'sflag constant byte address 0x0 - dummy sync flag']
  #allocation12 [shape = 'u32[]', space=smem, size = 0x4, offset = 0x44, fixed_abs, tag = 'smem constant byte address 0x44 - assertion arg 0']
  #allocation13 [shape = 'u32[]', space=smem, size = 0x4, offset = 0x48, fixed_abs, tag = 'smem constant byte address 0x48 - assertion arg 1']
  %s0 = inlined_call_operand.vmem [shape: bf16[64,32], index: 0, kind: input, shape index: {}]
  %s1 = inlined_call_operand.hbm [shape: bf16[160,1024], index: 1, kind: input, shape index: {}]
  %s2 = inlined_call_operand.hbm [shape: bf16[384,1024], index: 2, kind: input, shape index: {}]
  %s3 = inlined_call_operand.hbm [shape: f32[3,1024], index: 3, kind: input, shape index: {}]
  %s4 = inlined_call_operand.vmem [shape: bf16[256,128], index: 4, kind: input, shape index: {}]
  %s5 = inlined_call_operand.vmem [shape: f32[8,128], index: 5, kind: output, shape index: {}]
  %s6 = sld [smem:[#allocation0]]
  $region38: #{model_forward.1} parent=0
    _
  %s8 = ssub.s32 1, %s6
  %s9 = scalar_select 0, %s8, %s6
  $region1: #{model_forward.1} parent=0
    #allocation6 [shape = 'u8[327680]{0}', space=vmem, size = 0x50000, scoped, tag = 'input window, operand 1, single buffered']
    #allocation7 [shape = 's32[1]{0}', space=sflag, size = 0x4, scoped, tag = 'scoped memory for model_forward.1']
    #allocation8 [shape = 'u8[16384]{0}', space=vmem, size = 0x4000, scoped, tag = 'input window, operand 3, single buffered']
    #allocation9 [shape = 's32[1]{0}', space=sflag, size = 0x4, scoped, tag = 'scoped memory for model_forward.1']
    %10 = vsyncpa [#allocation7], 0
    %11 = vsyncpa [#allocation9], 0
    // Predicated region
    $region2: #{model_forward.1} parent=1 // pred_check
      _
    $region3: #{model_forward.1} parent=1 // pred_check_branch
      %13 = sbr.rel (0) target = $region5
    $region4: #{model_forward.1} parent=1 // pred_region
      _
    $region5: #{model_forward.1} parent=1 // pred_fallthru
      _
    // Predicated region
    $region6: #{model_forward.1} parent=1 // pred_check
      _
    $region7: #{model_forward.1} parent=1 // pred_check_branch
      %15 = sbr.rel (0) target = $region9
    $region8: #{model_forward.1} parent=1 // pred_region
      %s17 = ssub.s32 10240, 10240
      %18 = vsyncadd [#allocation7], %s17
      %s19 = sshll.u32 [#allocation6], 4
      %s20 = int_to_ptr.vmem [resolvable:$true] %s19
      %25 = dma.hbm_to_vmem [thread:$0]  %s1, 10240, %s20, [#allocation7], 512, 512, 32
    $region9: #{model_forward.1} parent=1 // pred_fallthru
      _
    // Predicated region
    $region10: #{model_forward.1} parent=1 // pred_check
      _
    $region11: #{model_forward.1} parent=1 // pred_check_branch
      %27 = sbr.rel (0) target = $region13
    $region12: #{model_forward.1} parent=1 // pred_region
      %s29 = ssub.s32 512, 512
      %30 = vsyncadd [#allocation9], %s29
      %s32 = sshll.u32 [#allocation8], 4
      %s33 = int_to_ptr.vmem [resolvable:$true] %s32
      %35 = dma.hbm_to_vmem [thread:$0]  %s3, 512, %s33, [#allocation9]
    $region13: #{model_forward.1} parent=1 // pred_fallthru
      _
    // Predicated region
    $region14: #{model_forward.1} parent=1 // pred_check
      _
    $region15: #{model_forward.1} parent=1 // pred_check_branch
      %37 = sbr.rel (0) target = $region17
    $region16: #{model_forward.1} parent=1 // pred_region
      _
    $region17: #{model_forward.1} parent=1 // pred_fallthru
      _
    // Predicated region
    $region18: #{model_forward.1} parent=1 // pred_check
      _
    $region19: #{model_forward.1} parent=1 // pred_check_branch
      %39 = sbr.rel (0) target = $region21
    $region20: #{model_forward.1} parent=1 // pred_region
      %40 = dma.done [#allocation7], 10240
    $region21: #{model_forward.1} parent=1 // pred_fallthru
      _
    // Predicated region
    $region22: #{model_forward.1} parent=1 // pred_check
      _
    $region23: #{model_forward.1} parent=1 // pred_check_branch
      %42 = sbr.rel (0) target = $region25
    $region24: #{model_forward.1} parent=1 // pred_region
      %43 = dma.done [#allocation9], 512
    $region25: #{model_forward.1} parent=1 // pred_fallthru
      _
    // Predicated region
    $region26: #{model_forward.1} parent=1 // pred_check
      _
    $region27: #{model_forward.1} parent=1 // pred_check_branch
      %46 = sbr.rel target = $region29
    $region28: #{model_forward.1} parent=1 // pred_region
      %47 = sst [smem:[#allocation12]] [#allocation11]
      %48 = sst [smem:[#allocation13]] [#allocation10]
    $region29: #{model_forward.1} parent=1 // pred_fallthru
      _
    %50 = shalt.err (0)
    %s52 = sshll.u32 [#allocation2], 4
    %s53 = int_to_ptr.vmem [resolvable:$true] %s52
    %55 = dma.hbm_to_vmem [thread:$0]  %s2, 24576, %s53, [#allocation5]
    %v56 = vld [vmem:[%s0] sm:$0xf]
    %v57 = vld [vmem:[%s0 + $0x4] sm:$0xf]
    %v58 = vld [vmem:[%s0 + $0x8] sm:$0xf]
    %v59 = vld [vmem:[%s0 + $0xc] sm:$0xf]
    %v60 = vld [vmem:[%s0 + $0x10] sm:$0xf]
    %v61 = vld [vmem:[%s0 + $0x14] sm:$0xf]
    %v62 = vld [vmem:[%s0 + $0x18] sm:$0xf]
    %v63 = vld [vmem:[%s0 + $0x1c] sm:$0xf]
    %v64 = vld [vmem:[#allocation6] sm:$0xff]
    %v65 = vld [vmem:[#allocation6 + $0x8] sm:$0xff]
    %v66 = vld [vmem:[#allocation6 + $0x10] sm:$0xff]
    %v67 = vld [vmem:[#allocation6 + $0x18] sm:$0xff]
    %v68 = vld [vmem:[#allocation6 + $0x20] sm:$0xff]
    %v69 = vld [vmem:[#allocation6 + $0x28] sm:$0xff]
    %v70 = vld [vmem:[#allocation6 + $0x30] sm:$0xff]
    %v71 = vld [vmem:[#allocation6 + $0x38] sm:$0xff]
    %v72 = vld [vmem:[#allocation6 + $0x40] sm:$0xff]
    %v73 = vld [vmem:[#allocation6 + $0x48] sm:$0xff]
    %v74 = vld [vmem:[#allocation6 + $0x50] sm:$0xff]
    %v75 = vld [vmem:[#allocation6 + $0x58] sm:$0xff]
    %v76 = vld [vmem:[#allocation6 + $0x60] sm:$0xff]
    %v77 = vld [vmem:[#allocation6 + $0x68] sm:$0xff]
    %v78 = vld [vmem:[#allocation6 + $0x70] sm:$0xff]
    %v79 = vld [vmem:[#allocation6 + $0x78] sm:$0xff]
    %v80 = vld [vmem:[#allocation8] ss:$4 sm:$0xff]
    %v82 = vlaneseq
    %v83 = vshrl.u32 %v82, 7
    %v84 = vsub.s32 0, %v83
    %v85 = vrot.slane %v80, %v84
    %v86 = vlaneseq
    %v87 = vshrl.u32 %v86, 7
    %v88 = vsub.s32 1, %v87
    %v89 = vrot.slane %v80, %v88
    %v90 = vlaneseq
    %v91 = vshrl.u32 %v90, 7
    %v92 = vsub.s32 2, %v91
    %v93 = vrot.slane %v80, %v92
    %v94 = vlaneseq
    %v95 = vshrl.u32 %v94, 7
    %v96 = vsub.s32 3, %v95
    %v97 = vrot.slane %v80, %v96
    %v98 = vlaneseq
    %v99 = vshrl.u32 %v98, 7
    %v100 = vsub.s32 4, %v99
    %v101 = vrot.slane %v80, %v100
    %v102 = vlaneseq
    %v103 = vshrl.u32 %v102, 7
    %v104 = vsub.s32 5, %v103
    %v105 = vrot.slane %v80, %v104
    %v106 = vlaneseq
    %v107 = vshrl.u32 %v106, 7
    %v108 = vsub.s32 6, %v107
    %v109 = vrot.slane %v80, %v108
    %v110 = vlaneseq
    %v111 = vshrl.u32 %v110, 7
    %v112 = vsub.s32 7, %v111
    %v113 = vrot.slane %v80, %v112
    %v130 = vunpack.c.l.b16 %v56
    %v131 = vunpack.c.l.b16 %v57
    %v132 = vunpack.c.l.b16 %v58
    %v133 = vunpack.c.l.b16 %v59
    %v134 = vunpack.c.l.b16 %v60
    %v135 = vunpack.c.l.b16 %v61
    %v136 = vunpack.c.l.b16 %v62
    %v137 = vunpack.c.l.b16 %v63
    %v138 = vpack.c.b16 %v131, %v130
    %v139 = vpack.c.b16 %v133, %v132
    %v140 = vpack.c.b16 %v135, %v134
    %v141 = vpack.c.b16 %v137, %v136
    %v158 = vunpack.c.l.b16 %v64
    %v159 = vunpack.c.h.b16 %v64
    %v160 = vunpack.c.l.b16 %v65
    %v161 = vunpack.c.h.b16 %v65
    %v162 = vunpack.c.l.b16 %v66
    %v163 = vunpack.c.h.b16 %v66
    %v164 = vunpack.c.l.b16 %v67
    %v165 = vunpack.c.h.b16 %v67
    %v166 = vunpack.c.l.b16 %v68
    %v167 = vunpack.c.h.b16 %v68
    %v168 = vunpack.c.l.b16 %v69
    %v169 = vunpack.c.h.b16 %v69
    %v170 = vunpack.c.l.b16 %v70
    %v171 = vunpack.c.h.b16 %v70
    %v172 = vunpack.c.l.b16 %v71
    %v173 = vunpack.c.h.b16 %v71
    %v174 = vunpack.c.l.b16 %v72
    %v175 = vunpack.c.h.b16 %v72
    %v176 = vunpack.c.l.b16 %v73
    %v177 = vunpack.c.h.b16 %v73
    %v178 = vunpack.c.l.b16 %v74
    %v179 = vunpack.c.h.b16 %v74
    %v180 = vunpack.c.l.b16 %v75
    %v181 = vunpack.c.h.b16 %v75
    %v182 = vunpack.c.l.b16 %v76
    %v183 = vunpack.c.h.b16 %v76
    %v184 = vunpack.c.l.b16 %v77
    %v185 = vunpack.c.h.b16 %v77
    %v186 = vunpack.c.l.b16 %v78
    %v187 = vunpack.c.h.b16 %v78
    %v188 = vunpack.c.l.b16 %v79
    %v189 = vunpack.c.h.b16 %v79
    %v190 = vpack.c.b16 %v166, %v158
    %v191 = vpack.c.b16 %v167, %v159
    %v192 = vpack.c.b16 %v168, %v160
    %v193 = vpack.c.b16 %v169, %v161
    %v194 = vpack.c.b16 %v170, %v162
    %v195 = vpack.c.b16 %v171, %v163
    %v196 = vpack.c.b16 %v172, %v164
    %v197 = vpack.c.b16 %v173, %v165
    %v198 = vpack.c.b16 %v182, %v174
    %v199 = vpack.c.b16 %v183, %v175
    %v200 = vpack.c.b16 %v184, %v176
    %v201 = vpack.c.b16 %v185, %v177
    %v202 = vpack.c.b16 %v186, %v178
    %v203 = vpack.c.b16 %v187, %v179
    %v204 = vpack.c.b16 %v188, %v180
    %v205 = vpack.c.b16 %v189, %v181
    %vm222 = vcmask 261120
    %v224 = vsel %vm222, %v138, 0
    %v227 = vsel %vm222, %v139, 0
    %v230 = vsel %vm222, %v140, 0
    %v233 = vsel %vm222, %v141, 0
    %235 = vmatprep.subr.bf16.mxu0 0
    %236 = vmatpush1.bf16.msra.mxu0 0
    %237 = vmatprep.subr.bf16.mxu0 0
    %238 = vmatpush1.bf16.msra.mxu0 0
    %239 = vmatprep.subr.bf16.mxu0 0
    %240 = vmatpush1.bf16.msra.mxu0 0
    %241 = vmatprep.subr.bf16.mxu0 0
    %242 = vmatpush1.bf16.msra.mxu0 0
    %243 = vmatprep.subr.bf16.mxu0 0
    %244 = vmatpush1.bf16.msra.mxu0 0
    %245 = vmatprep.subr.bf16.mxu0 0
    %246 = vmatpush1.bf16.msra.mxu0 0
    %247 = vmatprep.subr.bf16.mxu0 %v199
    %248 = vmatpush1.bf16.msra.mxu0 %v198
    %249 = vmatprep.subr.bf16.mxu0 %v191
    %250 = vmatpush1.bf16.msra.mxu0 %v190
    %251 = vmatprep.subr.bf16.mxu0 0
    %252 = vmatpush2.bf16.msra.mxu0 0
    %253 = vmatprep.subr.bf16.mxu0 0
    %254 = vmatpush2.bf16.msra.mxu0 0
    %255 = vmatprep.subr.bf16.mxu0 0
    %256 = vmatpush2.bf16.msra.mxu0 0
    %257 = vmatprep.subr.bf16.mxu0 0
    %258 = vmatpush2.bf16.msra.mxu0 0
    %259 = vmatprep.subr.bf16.mxu0 0
    %260 = vmatpush2.bf16.msra.mxu0 0
    %261 = vmatprep.subr.bf16.mxu0 0
    %262 = vmatpush2.bf16.msra.mxu0 0
    %263 = vmatprep.subr.bf16.mxu0 0
    %264 = vmatpush2.bf16.msra.mxu0 0
    %265 = vmatprep.subr.bf16.mxu0 0
    %266 = vmatpush2.bf16.msra.mxu0 0
    %267 = vmatprep.mubr.bf16.mxu0 0
    %268 = vmatmul.mubr.bf16.gmra.mxu0 %v224
    %v269 = vpop.f32.mrf.mxu0
    %v270 = vadd.f32 %v85, %v269
    %v271 = vpop.f32.mrf.mxu0
    %v272 = vadd.f32 %v89, %v271
    %v273 = vpop.f32.mrf.mxu0
    %v274 = vadd.f32 %v85, %v273
    %v275 = vpop.f32.mrf.mxu0
    %v276 = vadd.f32 %v89, %v275
    %277 = vmatprep.mubr.bf16.mxu0 0
    %278 = vmatmul.mubr.bf16.gmra.mxu0 %v227
    %v279 = vpop.f32.mrf.mxu0
    %v280 = vadd.f32 %v85, %v279
    %v281 = vpop.f32.mrf.mxu0
    %v282 = vadd.f32 %v89, %v281
    %v283 = vpop.f32.mrf.mxu0
    %v284 = vadd.f32 %v85, %v283
    %v285 = vpop.f32.mrf.mxu0
    %v286 = vadd.f32 %v89, %v285
    %287 = vmatprep.mubr.bf16.mxu0 0
    %288 = vmatmul.mubr.bf16.gmra.mxu0 %v230
    %v289 = vpop.f32.mrf.mxu0
    %v290 = vadd.f32 %v85, %v289
    %v291 = vpop.f32.mrf.mxu0
    %v292 = vadd.f32 %v89, %v291
    %v293 = vpop.f32.mrf.mxu0
    %v294 = vadd.f32 %v85, %v293
    %v295 = vpop.f32.mrf.mxu0
    %v296 = vadd.f32 %v89, %v295
    %297 = vmatprep.mubr.bf16.mxu0 0
    %298 = vmatmul.mubr.bf16.gmra.mxu0 %v233
    %v299 = vpop.f32.mrf.mxu0
    %v300 = vadd.f32 %v85, %v299
    %v301 = vpop.f32.mrf.mxu0
    %v302 = vadd.f32 %v89, %v301
    %v303 = vpop.f32.mrf.mxu0
    %v304 = vadd.f32 %v85, %v303
    %v305 = vpop.f32.mrf.mxu0
    %v306 = vadd.f32 %v89, %v305
    %307 = vdwg.mxu0
    %308 = vmatprep.subr.bf16.mxu0 0
    %309 = vmatpush1.bf16.msra.mxu0 0
    %310 = vmatprep.subr.bf16.mxu0 0
    %311 = vmatpush1.bf16.msra.mxu0 0
    %312 = vmatprep.subr.bf16.mxu0 0
    %313 = vmatpush1.bf16.msra.mxu0 0
    %314 = vmatprep.subr.bf16.mxu0 0
    %315 = vmatpush1.bf16.msra.mxu0 0
    %316 = vmatprep.subr.bf16.mxu0 0
    %317 = vmatpush1.bf16.msra.mxu0 0
    %318 = vmatprep.subr.bf16.mxu0 0
    %319 = vmatpush1.bf16.msra.mxu0 0
    %320 = vmatprep.subr.bf16.mxu0 %v201
    %321 = vmatpush1.bf16.msra.mxu0 %v200
    %322 = vmatprep.subr.bf16.mxu0 %v193
    %323 = vmatpush1.bf16.msra.mxu0 %v192
    %324 = vmatprep.subr.bf16.mxu0 0
    %325 = vmatpush2.bf16.msra.mxu0 0
    %326 = vmatprep.subr.bf16.mxu0 0
    %327 = vmatpush2.bf16.msra.mxu0 0
    %328 = vmatprep.subr.bf16.mxu0 0
    %329 = vmatpush2.bf16.msra.mxu0 0
    %330 = vmatprep.subr.bf16.mxu0 0
    %331 = vmatpush2.bf16.msra.mxu0 0
    %332 = vmatprep.subr.bf16.mxu0 0
    %333 = vmatpush2.bf16.msra.mxu0 0
    %334 = vmatprep.subr.bf16.mxu0 0
    %335 = vmatpush2.bf16.msra.mxu0 0
    %336 = vmatprep.subr.bf16.mxu0 0
    %337 = vmatpush2.bf16.msra.mxu0 0
    %338 = vmatprep.subr.bf16.mxu0 0
    %339 = vmatpush2.bf16.msra.mxu0 0
    %340 = vmatprep.mubr.bf16.mxu0 0
    %341 = vmatmul.mubr.bf16.gmra.mxu0 %v224
    %v342 = vpop.f32.mrf.mxu0
    %v343 = vadd.f32 %v93, %v342
    %v344 = vpop.f32.mrf.mxu0
    %v345 = vadd.f32 %v97, %v344
    %v346 = vpop.f32.mrf.mxu0
    %v347 = vadd.f32 %v93, %v346
    %v348 = vpop.f32.mrf.mxu0
    %v349 = vadd.f32 %v97, %v348
    %350 = vmatprep.mubr.bf16.mxu0 0
    %351 = vmatmul.mubr.bf16.gmra.mxu0 %v227
    %v352 = vpop.f32.mrf.mxu0
    %v353 = vadd.f32 %v93, %v352
    %v354 = vpop.f32.mrf.mxu0
    %v355 = vadd.f32 %v97, %v354
    %v356 = vpop.f32.mrf.mxu0
    %v357 = vadd.f32 %v93, %v356
    %v358 = vpop.f32.mrf.mxu0
    %v359 = vadd.f32 %v97, %v358
    %360 = vmatprep.mubr.bf16.mxu0 0
    %361 = vmatmul.mubr.bf16.gmra.mxu0 %v230
    %v362 = vpop.f32.mrf.mxu0
    %v363 = vadd.f32 %v93, %v362
    %v364 = vpop.f32.mrf.mxu0
    %v365 = vadd.f32 %v97, %v364
    %v366 = vpop.f32.mrf.mxu0
    %v367 = vadd.f32 %v93, %v366
    %v368 = vpop.f32.mrf.mxu0
    %v369 = vadd.f32 %v97, %v368
    %370 = vmatprep.mubr.bf16.mxu0 0
    %371 = vmatmul.mubr.bf16.gmra.mxu0 %v233
    %v372 = vpop.f32.mrf.mxu0
    %v373 = vadd.f32 %v93, %v372
    %v374 = vpop.f32.mrf.mxu0
    %v375 = vadd.f32 %v97, %v374
    %v376 = vpop.f32.mrf.mxu0
    %v377 = vadd.f32 %v93, %v376
    %v378 = vpop.f32.mrf.mxu0
    %v379 = vadd.f32 %v97, %v378
    %380 = vdwg.mxu0
    %381 = vmatprep.subr.bf16.mxu0 0
    %382 = vmatpush1.bf16.msra.mxu0 0
    %383 = vmatprep.subr.bf16.mxu0 0
    %384 = vmatpush1.bf16.msra.mxu0 0
    %385 = vmatprep.subr.bf16.mxu0 0
    %386 = vmatpush1.bf16.msra.mxu0 0
    %387 = vmatprep.subr.bf16.mxu0 0
    %388 = vmatpush1.bf16.msra.mxu0 0
    %389 = vmatprep.subr.bf16.mxu0 0
    %390 = vmatpush1.bf16.msra.mxu0 0
    %391 = vmatprep.subr.bf16.mxu0 0
    %392 = vmatpush1.bf16.msra.mxu0 0
    %393 = vmatprep.subr.bf16.mxu0 %v203
    %394 = vmatpush1.bf16.msra.mxu0 %v202
    %395 = vmatprep.subr.bf16.mxu0 %v195
    %396 = vmatpush1.bf16.msra.mxu0 %v194
    %397 = vmatprep.subr.bf16.mxu0 0
    %398 = vmatpush2.bf16.msra.mxu0 0
    %399 = vmatprep.subr.bf16.mxu0 0
    %400 = vmatpush2.bf16.msra.mxu0 0
    %401 = vmatprep.subr.bf16.mxu0 0
    %402 = vmatpush2.bf16.msra.mxu0 0
    %403 = vmatprep.subr.bf16.mxu0 0
    %404 = vmatpush2.bf16.msra.mxu0 0
    %405 = vmatprep.subr.bf16.mxu0 0
    %406 = vmatpush2.bf16.msra.mxu0 0
    %407 = vmatprep.subr.bf16.mxu0 0
    %408 = vmatpush2.bf16.msra.mxu0 0
    %409 = vmatprep.subr.bf16.mxu0 0
    %410 = vmatpush2.bf16.msra.mxu0 0
    %411 = vmatprep.subr.bf16.mxu0 0
    %412 = vmatpush2.bf16.msra.mxu0 0
    %413 = vmatprep.mubr.bf16.mxu0 0
    %414 = vmatmul.mubr.bf16.gmra.mxu0 %v224
    %v415 = vpop.f32.mrf.mxu0
    %v416 = vadd.f32 %v101, %v415
    %v417 = vpop.f32.mrf.mxu0
    %v418 = vadd.f32 %v105, %v417
    %v419 = vpop.f32.mrf.mxu0
    %v420 = vadd.f32 %v101, %v419
    %v421 = vpop.f32.mrf.mxu0
    %v422 = vadd.f32 %v105, %v421
    %423 = vmatprep.mubr.bf16.mxu0 0
    %424 = vmatmul.mubr.bf16.gmra.mxu0 %v227
    %v425 = vpop.f32.mrf.mxu0
    %v426 = vadd.f32 %v101, %v425
    %v427 = vpop.f32.mrf.mxu0
    %v428 = vadd.f32 %v105, %v427
    %v429 = vpop.f32.mrf.mxu0
    %v430 = vadd.f32 %v101, %v429
    %v431 = vpop.f32.mrf.mxu0
    %v432 = vadd.f32 %v105, %v431
    %433 = vmatprep.mubr.bf16.mxu0 0
    %434 = vmatmul.mubr.bf16.gmra.mxu0 %v230
    %v435 = vpop.f32.mrf.mxu0
    %v436 = vadd.f32 %v101, %v435
    %v437 = vpop.f32.mrf.mxu0
    %v438 = vadd.f32 %v105, %v437
    %v439 = vpop.f32.mrf.mxu0
    %v440 = vadd.f32 %v101, %v439
    %v441 = vpop.f32.mrf.mxu0
    %v442 = vadd.f32 %v105, %v441
    %443 = vmatprep.mubr.bf16.mxu0 0
    %444 = vmatmul.mubr.bf16.gmra.mxu0 %v233
    %v445 = vpop.f32.mrf.mxu0
    %v446 = vadd.f32 %v101, %v445
    %v447 = vpop.f32.mrf.mxu0
    %v448 = vadd.f32 %v105, %v447
    %v449 = vpop.f32.mrf.mxu0
    %v450 = vadd.f32 %v101, %v449
    %v451 = vpop.f32.mrf.mxu0
    %v452 = vadd.f32 %v105, %v451
    %453 = vdwg.mxu0
    %454 = vmatprep.subr.bf16.mxu0 0
    %455 = vmatpush1.bf16.msra.mxu0 0
    %456 = vmatprep.subr.bf16.mxu0 0
    %457 = vmatpush1.bf16.msra.mxu0 0
    %458 = vmatprep.subr.bf16.mxu0 0
    %459 = vmatpush1.bf16.msra.mxu0 0
    %460 = vmatprep.subr.bf16.mxu0 0
    %461 = vmatpush1.bf16.msra.mxu0 0
    %462 = vmatprep.subr.bf16.mxu0 0
    %463 = vmatpush1.bf16.msra.mxu0 0
    %464 = vmatprep.subr.bf16.mxu0 0
    %465 = vmatpush1.bf16.msra.mxu0 0
    %466 = vmatprep.subr.bf16.mxu0 %v205
    %467 = vmatpush1.bf16.msra.mxu0 %v204
    %468 = vmatprep.subr.bf16.mxu0 %v197
    %469 = vmatpush1.bf16.msra.mxu0 %v196
    %470 = vmatprep.subr.bf16.mxu0 0
    %471 = vmatpush2.bf16.msra.mxu0 0
    %472 = vmatprep.subr.bf16.mxu0 0
    %473 = vmatpush2.bf16.msra.mxu0 0
    %474 = vmatprep.subr.bf16.mxu0 0
    %475 = vmatpush2.bf16.msra.mxu0 0
    %476 = vmatprep.subr.bf16.mxu0 0
    %477 = vmatpush2.bf16.msra.mxu0 0
    %478 = vmatprep.subr.bf16.mxu0 0
    %479 = vmatpush2.bf16.msra.mxu0 0
    %480 = vmatprep.subr.bf16.mxu0 0
    %481 = vmatpush2.bf16.msra.mxu0 0
    %482 = vmatprep.subr.bf16.mxu0 0
    %483 = vmatpush2.bf16.msra.mxu0 0
    %484 = vmatprep.subr.bf16.mxu0 0
    %485 = vmatpush2.bf16.msra.mxu0 0
    %486 = vmatprep.mubr.bf16.mxu0 0
    %487 = vmatmul.mubr.bf16.gmra.mxu0 %v224
    %v488 = vpop.f32.mrf.mxu0
    %v489 = vadd.f32 %v109, %v488
    %v490 = vpop.f32.mrf.mxu0
    %v491 = vadd.f32 %v113, %v490
    %v492 = vpop.f32.mrf.mxu0
    %v493 = vadd.f32 %v109, %v492
    %v494 = vpop.f32.mrf.mxu0
    %v495 = vadd.f32 %v113, %v494
    %496 = vmatprep.mubr.bf16.mxu0 0
    %497 = vmatmul.mubr.bf16.gmra.mxu0 %v227
    %v498 = vpop.f32.mrf.mxu0
    %v499 = vadd.f32 %v109, %v498
    %v500 = vpop.f32.mrf.mxu0
    %v501 = vadd.f32 %v113, %v500
    %v502 = vpop.f32.mrf.mxu0
    %v503 = vadd.f32 %v109, %v502
    %v504 = vpop.f32.mrf.mxu0
    %v505 = vadd.f32 %v113, %v504
    %506 = vmatprep.mubr.bf16.mxu0 0
    %507 = vmatmul.mubr.bf16.gmra.mxu0 %v230
    %v508 = vpop.f32.mrf.mxu0
    %v509 = vadd.f32 %v109, %v508
    %v510 = vpop.f32.mrf.mxu0
    %v511 = vadd.f32 %v113, %v510
    %v512 = vpop.f32.mrf.mxu0
    %v513 = vadd.f32 %v109, %v512
    %v514 = vpop.f32.mrf.mxu0
    %v515 = vadd.f32 %v113, %v514
    %516 = vmatprep.mubr.bf16.mxu0 0
    %517 = vmatmul.mubr.bf16.gmra.mxu0 %v233
    %v518 = vpop.f32.mrf.mxu0
    %v519 = vadd.f32 %v109, %v518
    %v520 = vpop.f32.mrf.mxu0
    %v521 = vadd.f32 %v113, %v520
    %v522 = vpop.f32.mrf.mxu0
    %v523 = vadd.f32 %v109, %v522
    %v524 = vpop.f32.mrf.mxu0
    %v525 = vadd.f32 %v113, %v524
    %526 = vdwg.mxu0
    %527 = vst [vmem:[#allocation3] sm:$0xff] %v270
    %528 = vst [vmem:[#allocation3 + $0x8] sm:$0xff] %v272
    %529 = vst [vmem:[#allocation3 + $0x10] sm:$0xff] %v343
    %530 = vst [vmem:[#allocation3 + $0x18] sm:$0xff] %v345
    %531 = vst [vmem:[#allocation3 + $0x20] sm:$0xff] %v416
    %532 = vst [vmem:[#allocation3 + $0x28] sm:$0xff] %v418
    %533 = vst [vmem:[#allocation3 + $0x30] sm:$0xff] %v489
    %534 = vst [vmem:[#allocation3 + $0x38] sm:$0xff] %v491
    %535 = vst [vmem:[#allocation3 + $0x40] sm:$0xff] %v274
    %536 = vst [vmem:[#allocation3 + $0x48] sm:$0xff] %v276
    %537 = vst [vmem:[#allocation3 + $0x50] sm:$0xff] %v347
    %538 = vst [vmem:[#allocation3 + $0x58] sm:$0xff] %v349
    %539 = vst [vmem:[#allocation3 + $0x60] sm:$0xff] %v420
    %540 = vst [vmem:[#allocation3 + $0x68] sm:$0xff] %v422
    %541 = vst [vmem:[#allocation3 + $0x70] sm:$0xff] %v493
    %542 = vst [vmem:[#allocation3 + $0x78] sm:$0xff] %v495
    %543 = vst [vmem:[#allocation3 + $0x80] sm:$0xff] %v280
    %544 = vst [vmem:[#allocation3 + $0x88] sm:$0xff] %v282
    %545 = vst [vmem:[#allocation3 + $0x90] sm:$0xff] %v353
    %546 = vst [vmem:[#allocation3 + $0x98] sm:$0xff] %v355
    %547 = vst [vmem:[#allocation3 + $0xa0] sm:$0xff] %v426
    %548 = vst [vmem:[#allocation3 + $0xa8] sm:$0xff] %v428
    %549 = vst [vmem:[#allocation3 + $0xb0] sm:$0xff] %v499
    %550 = vst [vmem:[#allocation3 + $0xb8] sm:$0xff] %v501
    %551 = vst [vmem:[#allocation3 + $0xc0] sm:$0xff] %v284
    %552 = vst [vmem:[#allocation3 + $0xc8] sm:$0xff] %v286
    %553 = vst [vmem:[#allocation3 + $0xd0] sm:$0xff] %v357
    %554 = vst [vmem:[#allocation3 + $0xd8] sm:$0xff] %v359
    %555 = vst [vmem:[#allocation3 + $0xe0] sm:$0xff] %v430
    %556 = vst [vmem:[#allocation3 + $0xe8] sm:$0xff] %v432
    %557 = vst [vmem:[#allocation3 + $0xf0] sm:$0xff] %v503
    %558 = vst [vmem:[#allocation3 + $0xf8] sm:$0xff] %v505
    %559 = vst [vmem:[#allocation3 + $0x100] sm:$0xff] %v290
    %560 = vst [vmem:[#allocation3 + $0x108] sm:$0xff] %v292
    %561 = vst [vmem:[#allocation3 + $0x110] sm:$0xff] %v363
    %562 = vst [vmem:[#allocation3 + $0x118] sm:$0xff] %v365
    %563 = vst [vmem:[#allocation3 + $0x120] sm:$0xff] %v436
    %564 = vst [vmem:[#allocation3 + $0x128] sm:$0xff] %v438
    %565 = vst [vmem:[#allocation3 + $0x130] sm:$0xff] %v509
    %566 = vst [vmem:[#allocation3 + $0x138] sm:$0xff] %v511
    %567 = vst [vmem:[#allocation3 + $0x140] sm:$0xff] %v294
    %568 = vst [vmem:[#allocation3 + $0x148] sm:$0xff] %v296
    %569 = vst [vmem:[#allocation3 + $0x150] sm:$0xff] %v367
    %570 = vst [vmem:[#allocation3 + $0x158] sm:$0xff] %v369
    %571 = vst [vmem:[#allocation3 + $0x160] sm:$0xff] %v440
    %572 = vst [vmem:[#allocation3 + $0x168] sm:$0xff] %v442
    %573 = vst [vmem:[#allocation3 + $0x170] sm:$0xff] %v513
    %574 = vst [vmem:[#allocation3 + $0x178] sm:$0xff] %v515
    %575 = vst [vmem:[#allocation3 + $0x180] sm:$0xff] %v300
    %576 = vst [vmem:[#allocation3 + $0x188] sm:$0xff] %v302
    %577 = vst [vmem:[#allocation3 + $0x190] sm:$0xff] %v373
    %578 = vst [vmem:[#allocation3 + $0x198] sm:$0xff] %v375
    %579 = vst [vmem:[#allocation3 + $0x1a0] sm:$0xff] %v446
    %580 = vst [vmem:[#allocation3 + $0x1a8] sm:$0xff] %v448
    %581 = vst [vmem:[#allocation3 + $0x1b0] sm:$0xff] %v519
    %582 = vst [vmem:[#allocation3 + $0x1b8] sm:$0xff] %v521
    %583 = vst [vmem:[#allocation3 + $0x1c0] sm:$0xff] %v304
    %584 = vst [vmem:[#allocation3 + $0x1c8] sm:$0xff] %v306
    %585 = vst [vmem:[#allocation3 + $0x1d0] sm:$0xff] %v377
    %586 = vst [vmem:[#allocation3 + $0x1d8] sm:$0xff] %v379
    %587 = vst [vmem:[#allocation3 + $0x1e0] sm:$0xff] %v450
    %588 = vst [vmem:[#allocation3 + $0x1e8] sm:$0xff] %v452
    %589 = vst [vmem:[#allocation3 + $0x1f0] sm:$0xff] %v523
    %590 = vst [vmem:[#allocation3 + $0x1f8] sm:$0xff] %v525
    %v591 = vld [vmem:[#allocation6 + $0x80] sm:$0xff]
    %v592 = vld [vmem:[#allocation6 + $0x88] sm:$0xff]
    %v593 = vld [vmem:[#allocation6 + $0xa0] sm:$0xff]
    %v594 = vld [vmem:[#allocation6 + $0xa8] sm:$0xff]
    %v595 = vld [vmem:[#allocation6 + $0xc0] sm:$0xff]
    %v596 = vld [vmem:[#allocation6 + $0xc8] sm:$0xff]
    %v597 = vld [vmem:[#allocation6 + $0xe0] sm:$0xff]
    %v598 = vld [vmem:[#allocation6 + $0xe8] sm:$0xff]
    %v599 = vld [vmem:[#allocation6 + $0x100] sm:$0xff]
    %v600 = vld [vmem:[#allocation6 + $0x108] sm:$0xff]
    %v601 = vld [vmem:[#allocation6 + $0x120] sm:$0xff]
    %v602 = vld [vmem:[#allocation6 + $0x128] sm:$0xff]
    %v603 = vld [vmem:[#allocation6 + $0x140] sm:$0xff]
    %v604 = vld [vmem:[#allocation6 + $0x148] sm:$0xff]
    %v605 = vld [vmem:[#allocation6 + $0x160] sm:$0xff]
    %v606 = vld [vmem:[#allocation6 + $0x168] sm:$0xff]
    %v607 = vld [vmem:[#allocation6 + $0x180] sm:$0xff]
    %v608 = vld [vmem:[#allocation6 + $0x188] sm:$0xff]
    %v609 = vld [vmem:[#allocation6 + $0x1a0] sm:$0xff]
    %v610 = vld [vmem:[#allocation6 + $0x1a8] sm:$0xff]
    %v611 = vld [vmem:[#allocation6 + $0x1c0] sm:$0xff]
    %v612 = vld [vmem:[#allocation6 + $0x1c8] sm:$0xff]
    %v613 = vld [vmem:[#allocation6 + $0x1e0] sm:$0xff]
    %v614 = vld [vmem:[#allocation6 + $0x1e8] sm:$0xff]
    %v615 = vld [vmem:[#allocation6 + $0x200] sm:$0xff]
    %v616 = vld [vmem:[#allocation6 + $0x208] sm:$0xff]
    %v617 = vld [vmem:[#allocation6 + $0x220] sm:$0xff]
    %v618 = vld [vmem:[#allocation6 + $0x228] sm:$0xff]
    %v619 = vld [vmem:[#allocation6 + $0x240] sm:$0xff]
    %v620 = vld [vmem:[#allocation6 + $0x248] sm:$0xff]
    %v621 = vld [vmem:[#allocation6 + $0x260] sm:$0xff]
    %v622 = vld [vmem:[#allocation6 + $0x268] sm:$0xff]
    %v623 = vld [vmem:[#allocation6 + $0x90] sm:$0xff]
    %v624 = vld [vmem:[#allocation6 + $0x98] sm:$0xff]
    %v625 = vld [vmem:[#allocation6 + $0xb0] sm:$0xff]
    %v626 = vld [vmem:[#allocation6 + $0xb8] sm:$0xff]
    %v627 = vld [vmem:[#allocation6 + $0xd0] sm:$0xff]
    %v628 = vld [vmem:[#allocation6 + $0xd8] sm:$0xff]
    %v629 = vld [vmem:[#allocation6 + $0xf0] sm:$0xff]
    %v630 = vld [vmem:[#allocation6 + $0xf8] sm:$0xff]
    %v631 = vld [vmem:[#allocation6 + $0x110] sm:$0xff]
    %v632 = vld [vmem:[#allocation6 + $0x118] sm:$0xff]
    %v633 = vld [vmem:[#allocation6 + $0x130] sm:$0xff]
    %v634 = vld [vmem:[#allocation6 + $0x138] sm:$0xff]
    %v635 = vld [vmem:[#allocation6 + $0x150] sm:$0xff]
    %v636 = vld [vmem:[#allocation6 + $0x158] sm:$0xff]
    %v637 = vld [vmem:[#allocation6 + $0x170] sm:$0xff]
    %v638 = vld [vmem:[#allocation6 + $0x178] sm:$0xff]
    %v639 = vld [vmem:[#allocation6 + $0x190] sm:$0xff]
    %v640 = vld [vmem:[#allocation6 + $0x198] sm:$0xff]
    %v641 = vld [vmem:[#allocation6 + $0x1b0] sm:$0xff]
    %v642 = vld [vmem:[#allocation6 + $0x1b8] sm:$0xff]
    %v643 = vld [vmem:[#allocation6 + $0x1d0] sm:$0xff]
    %v644 = vld [vmem:[#allocation6 + $0x1d8] sm:$0xff]
    %v645 = vld [vmem:[#allocation6 + $0x1f0] sm:$0xff]
    %v646 = vld [vmem:[#allocation6 + $0x1f8] sm:$0xff]
    %v647 = vld [vmem:[#allocation6 + $0x210] sm:$0xff]
    %v648 = vld [vmem:[#allocation6 + $0x218] sm:$0xff]
    %v649 = vld [vmem:[#allocation6 + $0x230] sm:$0xff]
    %v650 = vld [vmem:[#allocation6 + $0x238] sm:$0xff]
    %v651 = vld [vmem:[#allocation6 + $0x250] sm:$0xff]
    %v652 = vld [vmem:[#allocation6 + $0x258] sm:$0xff]
    %v653 = vld [vmem:[#allocation6 + $0x270] sm:$0xff]
    %v654 = vld [vmem:[#allocation6 + $0x278] sm:$0xff]
    %v655 = vld [vmem:[#allocation3] sm:$0xff]
    %v656 = vld [vmem:[#allocation3 + $0x8] sm:$0xff]
    %v657 = vld [vmem:[#allocation3 + $0x10] sm:$0xff]
    %v658 = vld [vmem:[#allocation3 + $0x18] sm:$0xff]
    %v691 = vunpack.c.l.b16 %v591
    %v692 = vunpack.c.h.b16 %v591
    %v693 = vunpack.c.l.b16 %v592
    %v694 = vunpack.c.h.b16 %v592
    %v695 = vunpack.c.l.b16 %v593
    %v696 = vunpack.c.h.b16 %v593
    %v697 = vunpack.c.l.b16 %v594
    %v698 = vunpack.c.h.b16 %v594
    %v699 = vunpack.c.l.b16 %v595
    %v700 = vunpack.c.h.b16 %v595
    %v701 = vunpack.c.l.b16 %v596
    %v702 = vunpack.c.h.b16 %v596
    %v703 = vunpack.c.l.b16 %v597
    %v704 = vunpack.c.h.b16 %v597
    %v705 = vunpack.c.l.b16 %v598
    %v706 = vunpack.c.h.b16 %v598
    %v707 = vunpack.c.l.b16 %v599
    %v708 = vunpack.c.h.b16 %v599
    %v709 = vunpack.c.l.b16 %v600
    %v710 = vunpack.c.h.b16 %v600
    %v711 = vunpack.c.l.b16 %v601
    %v712 = vunpack.c.h.b16 %v601
    %v713 = vunpack.c.l.b16 %v602
    %v714 = vunpack.c.h.b16 %v602
    %v715 = vunpack.c.l.b16 %v603
    %v716 = vunpack.c.h.b16 %v603
    %v717 = vunpack.c.l.b16 %v604
    %v718 = vunpack.c.h.b16 %v604
    %v719 = vunpack.c.l.b16 %v605
    %v720 = vunpack.c.h.b16 %v605
    %v721 = vunpack.c.l.b16 %v606
    %v722 = vunpack.c.h.b16 %v606
    %v723 = vunpack.c.l.b16 %v607
    %v724 = vunpack.c.h.b16 %v607
    %v725 = vunpack.c.l.b16 %v608
    %v726 = vunpack.c.h.b16 %v608
    %v727 = vunpack.c.l.b16 %v609
    %v728 = vunpack.c.h.b16 %v609
    %v729 = vunpack.c.l.b16 %v610
    %v730 = vunpack.c.h.b16 %v610
    %v731 = vunpack.c.l.b16 %v611
    %v732 = vunpack.c.h.b16 %v611
    %v733 = vunpack.c.l.b16 %v612
    %v734 = vunpack.c.h.b16 %v612
    %v735 = vunpack.c.l.b16 %v613
    %v736 = vunpack.c.h.b16 %v613
    %v737 = vunpack.c.l.b16 %v614
    %v738 = vunpack.c.h.b16 %v614
    %v739 = vunpack.c.l.b16 %v615
    %v740 = vunpack.c.h.b16 %v615
    %v741 = vunpack.c.l.b16 %v616
    %v742 = vunpack.c.h.b16 %v616
    %v743 = vunpack.c.l.b16 %v617
    %v744 = vunpack.c.h.b16 %v617
    %v745 = vunpack.c.l.b16 %v618
    %v746 = vunpack.c.h.b16 %v618
    %v747 = vunpack.c.l.b16 %v619
    %v748 = vunpack.c.h.b16 %v619
    %v749 = vunpack.c.l.b16 %v620
    %v750 = vunpack.c.h.b16 %v620
    %v751 = vunpack.c.l.b16 %v621
    %v752 = vunpack.c.h.b16 %v621
    %v753 = vunpack.c.l.b16 %v622
    %v754 = vunpack.c.h.b16 %v622
    %v755 = vpack.c.b16 %v695, %v691
    %v756 = vpack.c.b16 %v696, %v692
    %v757 = vpack.c.b16 %v697, %v693
    %v758 = vpack.c.b16 %v698, %v694
    %v759 = vpack.c.b16 %v703, %v699
    %v760 = vpack.c.b16 %v704, %v700
    %v761 = vpack.c.b16 %v705, %v701
    %v762 = vpack.c.b16 %v706, %v702
    %v763 = vpack.c.b16 %v711, %v707
    %v764 = vpack.c.b16 %v712, %v708
    %v765 = vpack.c.b16 %v713, %v709
    %v766 = vpack.c.b16 %v714, %v710
    %v767 = vpack.c.b16 %v719, %v715
    %v768 = vpack.c.b16 %v720, %v716
    %v769 = vpack.c.b16 %v721, %v717
    %v770 = vpack.c.b16 %v722, %v718
    %v771 = vpack.c.b16 %v727, %v723
    %v772 = vpack.c.b16 %v728, %v724
    %v773 = vpack.c.b16 %v729, %v725
    %v774 = vpack.c.b16 %v730, %v726
    %v775 = vpack.c.b16 %v735, %v731
    %v776 = vpack.c.b16 %v736, %v732
    %v777 = vpack.c.b16 %v737, %v733
    %v778 = vpack.c.b16 %v738, %v734
    %v779 = vpack.c.b16 %v743, %v739
    %v780 = vpack.c.b16 %v744, %v740
    %v781 = vpack.c.b16 %v745, %v741
    %v782 = vpack.c.b16 %v746, %v742
    %v783 = vpack.c.b16 %v751, %v747
    %v784 = vpack.c.b16 %v752, %v748
    %v785 = vpack.c.b16 %v753, %v749
    %v786 = vpack.c.b16 %v754, %v750
    %819 = vmatprep.subr.bf16.mxu0 %v784
    %820 = vmatpush1.bf16.msra.mxu0 %v783
    %821 = vmatprep.subr.bf16.mxu0 %v780
    %822 = vmatpush1.bf16.msra.mxu0 %v779
    %823 = vmatprep.subr.bf16.mxu0 %v776
    %824 = vmatpush1.bf16.msra.mxu0 %v775
    %825 = vmatprep.subr.bf16.mxu0 %v772
    %826 = vmatpush1.bf16.msra.mxu0 %v771
    %827 = vmatprep.subr.bf16.mxu0 %v768
    %828 = vmatpush1.bf16.msra.mxu0 %v767
    %829 = vmatprep.subr.bf16.mxu0 %v764
    %830 = vmatpush1.bf16.msra.mxu0 %v763
    %831 = vmatprep.subr.bf16.mxu0 %v760
    %832 = vmatpush1.bf16.msra.mxu0 %v759
    %833 = vmatprep.subr.bf16.mxu0 %v756
    %834 = vmatpush1.bf16.msra.mxu0 %v755
    %835 = vmatprep.subr.bf16.mxu0 0
    %836 = vmatpush2.bf16.msra.mxu0 0
    %837 = vmatprep.subr.bf16.mxu0 0
    %838 = vmatpush2.bf16.msra.mxu0 0
    %839 = vmatprep.subr.bf16.mxu0 0
    %840 = vmatpush2.bf16.msra.mxu0 0
    %841 = vmatprep.subr.bf16.mxu0 0
    %842 = vmatpush2.bf16.msra.mxu0 0
    %843 = vmatprep.subr.bf16.mxu0 0
    %844 = vmatpush2.bf16.msra.mxu0 0
    %845 = vmatprep.subr.bf16.mxu0 0
    %846 = vmatpush2.bf16.msra.mxu0 0
    %847 = vmatprep.subr.bf16.mxu0 0
    %848 = vmatpush2.bf16.msra.mxu0 0
    %849 = vmatprep.subr.bf16.mxu0 0
    %850 = vmatpush2.bf16.msra.mxu0 0
    %851 = vmatprep.mubr.bf16.mxu0 0
    %852 = vmatmul.mubr.bf16.gmra.mxu0 0
    %v853 = vpop.f32.mrf.mxu0
    %v854 = vadd.f32 0.0, %v853
    %v855 = vpop.f32.mrf.mxu0
    %v856 = vadd.f32 0.0, %v855
    %v857 = vpop.f32.mrf.mxu0
    %v858 = vpop.f32.mrf.mxu0
    %859 = vdwg.mxu0
    %860 = vmatprep.subr.bf16.mxu0 %v786
    %861 = vmatpush1.bf16.msra.mxu0 %v785
    %862 = vmatprep.subr.bf16.mxu0 %v782
    %863 = vmatpush1.bf16.msra.mxu0 %v781
    %864 = vmatprep.subr.bf16.mxu0 %v778
    %865 = vmatpush1.bf16.msra.mxu0 %v777
    %866 = vmatprep.subr.bf16.mxu0 %v774
    %867 = vmatpush1.bf16.msra.mxu0 %v773
    %868 = vmatprep.subr.bf16.mxu0 %v770
    %869 = vmatpush1.bf16.msra.mxu0 %v769
    %870 = vmatprep.subr.bf16.mxu0 %v766
    %871 = vmatpush1.bf16.msra.mxu0 %v765
    %872 = vmatprep.subr.bf16.mxu0 %v762
    %873 = vmatpush1.bf16.msra.mxu0 %v761
    %874 = vmatprep.subr.bf16.mxu0 %v758
    %875 = vmatpush1.bf16.msra.mxu0 %v757
    %876 = vmatprep.subr.bf16.mxu0 0
    %877 = vmatpush2.bf16.msra.mxu0 0
    %878 = vmatprep.subr.bf16.mxu0 0
    %879 = vmatpush2.bf16.msra.mxu0 0
    %880 = vmatprep.subr.bf16.mxu0 0
    %881 = vmatpush2.bf16.msra.mxu0 0
    %882 = vmatprep.subr.bf16.mxu0 0
    %883 = vmatpush2.bf16.msra.mxu0 0
    %884 = vmatprep.subr.bf16.mxu0 0
    %885 = vmatpush2.bf16.msra.mxu0 0
    %886 = vmatprep.subr.bf16.mxu0 0
    %887 = vmatpush2.bf16.msra.mxu0 0
    %888 = vmatprep.subr.bf16.mxu0 0
    %889 = vmatpush2.bf16.msra.mxu0 0
    %890 = vmatprep.subr.bf16.mxu0 0
    %891 = vmatpush2.bf16.msra.mxu0 0
    %892 = vmatprep.mubr.bf16.mxu0 0
    %893 = vmatmul.mubr.bf16.gmra.mxu0 0
    %v894 = vpop.f32.mrf.mxu0
    %v895 = vadd.f32 0.0, %v894
    %v896 = vpop.f32.mrf.mxu0
    %v897 = vadd.f32 0.0, %v896
    %v898 = vpop.f32.mrf.mxu0
    %v899 = vpop.f32.mrf.mxu0
    %900 = vdwg.mxu0
    %v901 = vadd.f32 %v655, %v854
    %v902 = vadd.f32 %v656, %v856
    %v903 = vadd.f32 %v657, %v895
    %v904 = vadd.f32 %v658, %v897
    %v905 = vld [vmem:[#allocation3 + $0x1e0] sm:$0xff]
    %v906 = vld [vmem:[#allocation3 + $0x1e8] sm:$0xff]
    %v907 = vld [vmem:[#allocation3 + $0x1f0] sm:$0xff]
    %v908 = vld [vmem:[#allocation3 + $0x1f8] sm:$0xff]
    %v941 = vunpack.c.l.b16 %v623
    %v942 = vunpack.c.h.b16 %v623
    %v943 = vunpack.c.l.b16 %v624
    %v944 = vunpack.c.h.b16 %v624
    %v945 = vunpack.c.l.b16 %v625
    %v946 = vunpack.c.h.b16 %v625
    %v947 = vunpack.c.l.b16 %v626
    %v948 = vunpack.c.h.b16 %v626
    %v949 = vunpack.c.l.b16 %v627
    %v950 = vunpack.c.h.b16 %v627
    %v951 = vunpack.c.l.b16 %v628
    %v952 = vunpack.c.h.b16 %v628
    %v953 = vunpack.c.l.b16 %v629
    %v954 = vunpack.c.h.b16 %v629
    %v955 = vunpack.c.l.b16 %v630
    %v956 = vunpack.c.h.b16 %v630
    %v957 = vunpack.c.l.b16 %v631
    %v958 = vunpack.c.h.b16 %v631
    %v959 = vunpack.c.l.b16 %v632
    %v960 = vunpack.c.h.b16 %v632
    %v961 = vunpack.c.l.b16 %v633
    %v962 = vunpack.c.h.b16 %v633
    %v963 = vunpack.c.l.b16 %v634
    %v964 = vunpack.c.h.b16 %v634
    %v965 = vunpack.c.l.b16 %v635
    %v966 = vunpack.c.h.b16 %v635
    %v967 = vunpack.c.l.b16 %v636
    %v968 = vunpack.c.h.b16 %v636
    %v969 = vunpack.c.l.b16 %v637
    %v970 = vunpack.c.h.b16 %v637
    %v971 = vunpack.c.l.b16 %v638
    %v972 = vunpack.c.h.b16 %v638
    %v973 = vunpack.c.l.b16 %v639
    %v974 = vunpack.c.h.b16 %v639
    %v975 = vunpack.c.l.b16 %v640
    %v976 = vunpack.c.h.b16 %v640
    %v977 = vunpack.c.l.b16 %v641
    %v978 = vunpack.c.h.b16 %v641
    %v979 = vunpack.c.l.b16 %v642
    %v980 = vunpack.c.h.b16 %v642
    %v981 = vunpack.c.l.b16 %v643
    %v982 = vunpack.c.h.b16 %v643
    %v983 = vunpack.c.l.b16 %v644
    %v984 = vunpack.c.h.b16 %v644
    %v985 = vunpack.c.l.b16 %v645
    %v986 = vunpack.c.h.b16 %v645
    %v987 = vunpack.c.l.b16 %v646
    %v988 = vunpack.c.h.b16 %v646
    %v989 = vunpack.c.l.b16 %v647
    %v990 = vunpack.c.h.b16 %v647
    %v991 = vunpack.c.l.b16 %v648
    %v992 = vunpack.c.h.b16 %v648
    %v993 = vunpack.c.l.b16 %v649
    %v994 = vunpack.c.h.b16 %v649
    %v995 = vunpack.c.l.b16 %v650
    %v996 = vunpack.c.h.b16 %v650
    %v997 = vunpack.c.l.b16 %v651
    %v998 = vunpack.c.h.b16 %v651
    %v999 = vunpack.c.l.b16 %v652
    %v1000 = vunpack.c.h.b16 %v652
    %v1001 = vunpack.c.l.b16 %v653
    %v1002 = vunpack.c.h.b16 %v653
    %v1003 = vunpack.c.l.b16 %v654
    %v1004 = vunpack.c.h.b16 %v654
    %v1005 = vpack.c.b16 %v945, %v941
    %v1006 = vpack.c.b16 %v946, %v942
    %v1007 = vpack.c.b16 %v947, %v943
    %v1008 = vpack.c.b16 %v948, %v944
    %v1009 = vpack.c.b16 %v953, %v949
    %v1010 = vpack.c.b16 %v954, %v950
    %v1011 = vpack.c.b16 %v955, %v951
    %v1012 = vpack.c.b16 %v956, %v952
    %v1013 = vpack.c.b16 %v961, %v957
    %v1014 = vpack.c.b16 %v962, %v958
    %v1015 = vpack.c.b16 %v963, %v959
    %v1016 = vpack.c.b16 %v964, %v960
    %v1017 = vpack.c.b16 %v969, %v965
    %v1018 = vpack.c.b16 %v970, %v966
    %v1019 = vpack.c.b16 %v971, %v967
    %v1020 = vpack.c.b16 %v972, %v968
    %v1021 = vpack.c.b16 %v977, %v973
    %v1022 = vpack.c.b16 %v978, %v974
    %v1023 = vpack.c.b16 %v979, %v975
    %v1024 = vpack.c.b16 %v980, %v976
    %v1025 = vpack.c.b16 %v985, %v981
    %v1026 = vpack.c.b16 %v986, %v982
    %v1027 = vpack.c.b16 %v987, %v983
    %v1028 = vpack.c.b16 %v988, %v984
    %v1029 = vpack.c.b16 %v993, %v989
    %v1030 = vpack.c.b16 %v994, %v990
    %v1031 = vpack.c.b16 %v995, %v991
    %v1032 = vpack.c.b16 %v996, %v992
    %v1033 = vpack.c.b16 %v1001, %v997
    %v1034 = vpack.c.b16 %v1002, %v998
    %v1035 = vpack.c.b16 %v1003, %v999
    %v1036 = vpack.c.b16 %v1004, %v1000
    %1069 = vmatprep.subr.bf16.mxu0 %v1034
    %1070 = vmatpush1.bf16.msra.mxu0 %v1033
    %1071 = vmatprep.subr.bf16.mxu0 %v1030
    %1072 = vmatpush1.bf16.msra.mxu0 %v1029
    %1073 = vmatprep.subr.bf16.mxu0 %v1026
    %1074 = vmatpush1.bf16.msra.mxu0 %v1025
    %1075 = vmatprep.subr.bf16.mxu0 %v1022
    %1076 = vmatpush1.bf16.msra.mxu0 %v1021
    %1077 = vmatprep.subr.bf16.mxu0 %v1018
    %1078 = vmatpush1.bf16.msra.mxu0 %v1017
    %1079 = vmatprep.subr.bf16.mxu0 %v1014
    %1080 = vmatpush1.bf16.msra.mxu0 %v1013
    %1081 = vmatprep.subr.bf16.mxu0 %v1010
    %1082 = vmatpush1.bf16.msra.mxu0 %v1009
    %1083 = vmatprep.subr.bf16.mxu0 %v1006
    %1084 = vmatpush1.bf16.msra.mxu0 %v1005
    %1085 = vmatprep.subr.bf16.mxu0 0
    %1086 = vmatpush2.bf16.msra.mxu0 0
    %1087 = vmatprep.subr.bf16.mxu0 0
    %1088 = vmatpush2.bf16.msra.mxu0 0
    %1089 = vmatprep.subr.bf16.mxu0 0
    %1090 = vmatpush2.bf16.msra.mxu0 0
    %1091 = vmatprep.subr.bf16.mxu0 0
    %1092 = vmatpush2.bf16.msra.mxu0 0
    %1093 = vmatprep.subr.bf16.mxu0 0
    %1094 = vmatpush2.bf16.msra.mxu0 0
    %1095 = vmatprep.subr.bf16.mxu0 0
    %1096 = vmatpush2.bf16.msra.mxu0 0
    %1097 = vmatprep.subr.bf16.mxu0 0
    %1098 = vmatpush2.bf16.msra.mxu0 0
    %1099 = vmatprep.subr.bf16.mxu0 0
    %1100 = vmatpush2.bf16.msra.mxu0 0
    %1101 = vmatprep.mubr.bf16.mxu0 0
    %1102 = vmatmul.mubr.bf16.gmra.mxu0 0
    %v1103 = vpop.f32.mrf.mxu0
    %v1104 = vadd.f32 0.0, %v1103
    %v1105 = vpop.f32.mrf.mxu0
    %v1106 = vadd.f32 0.0, %v1105
    %v1107 = vpop.f32.mrf.mxu0
    %v1108 = vpop.f32.mrf.mxu0
    %1109 = vdwg.mxu0
    %1110 = vmatprep.subr.bf16.mxu0 %v1036
    %1111 = vmatpush1.bf16.msra.mxu0 %v1035
    %1112 = vmatprep.subr.bf16.mxu0 %v1032
    %1113 = vmatpush1.bf16.msra.mxu0 %v1031
    %1114 = vmatprep.subr.bf16.mxu0 %v1028
    %1115 = vmatpush1.bf16.msra.mxu0 %v1027
    %1116 = vmatprep.subr.bf16.mxu0 %v1024
    %1117 = vmatpush1.bf16.msra.mxu0 %v1023
    %1118 = vmatprep.subr.bf16.mxu0 %v1020
    %1119 = vmatpush1.bf16.msra.mxu0 %v1019
    %1120 = vmatprep.subr.bf16.mxu0 %v1016
    %1121 = vmatpush1.bf16.msra.mxu0 %v1015
    %1122 = vmatprep.subr.bf16.mxu0 %v1012
    %1123 = vmatpush1.bf16.msra.mxu0 %v1011
    %1124 = vmatprep.subr.bf16.mxu0 %v1008
    %1125 = vmatpush1.bf16.msra.mxu0 %v1007
    %1126 = vmatprep.subr.bf16.mxu0 0
    %1127 = vmatpush2.bf16.msra.mxu0 0
    %1128 = vmatprep.subr.bf16.mxu0 0
    %1129 = vmatpush2.bf16.msra.mxu0 0
    %1130 = vmatprep.subr.bf16.mxu0 0
    %1131 = vmatpush2.bf16.msra.mxu0 0
    %1132 = vmatprep.subr.bf16.mxu0 0
    %1133 = vmatpush2.bf16.msra.mxu0 0
    %1134 = vmatprep.subr.bf16.mxu0 0
    %1135 = vmatpush2.bf16.msra.mxu0 0
    %1136 = vmatprep.subr.bf16.mxu0 0
    %1137 = vmatpush2.bf16.msra.mxu0 0
    %1138 = vmatprep.subr.bf16.mxu0 0
    %1139 = vmatpush2.bf16.msra.mxu0 0
    %1140 = vmatprep.subr.bf16.mxu0 0
    %1141 = vmatpush2.bf16.msra.mxu0 0
    %1142 = vmatprep.mubr.bf16.mxu0 0
    %1143 = vmatmul.mubr.bf16.gmra.mxu0 0
    %v1144 = vpop.f32.mrf.mxu0
    %v1145 = vadd.f32 0.0, %v1144
    %v1146 = vpop.f32.mrf.mxu0
    %v1147 = vadd.f32 0.0, %v1146
    %v1148 = vpop.f32.mrf.mxu0
    %v1149 = vpop.f32.mrf.mxu0
    %1150 = vdwg.mxu0
    %v1151 = vadd.f32 %v905, %v1104
    %v1152 = vadd.f32 %v906, %v1106
    %v1153 = vadd.f32 %v907, %v1145
    %v1154 = vadd.f32 %v908, %v1147
    %v1155 = vxor.u32 %v901, 2147483648
    %v1156 = vmul.f32 %v1155, 1.442695
    %v1157 = vpow.pop %v1156
    %v1158 = vadd.f32 %v1157, 1.0
    %v1159 = vrcp.pop %v1158
    %v1160 = vmul.f32 1.0, %v1159
    %v1161 = vxor.u32 %v902, 2147483648
    %v1162 = vmul.f32 %v1161, 1.442695
    %v1163 = vpow.pop %v1162
    %v1164 = vadd.f32 %v1163, 1.0
    %v1165 = vrcp.pop %v1164
    %v1166 = vmul.f32 1.0, %v1165
    %v1167 = vtanh.pop %v903
    %v1168 = vxor.u32 %v904, 2147483648
    %v1169 = vmul.f32 %v1168, 1.442695
    %v1170 = vpow.pop %v1169
    %v1171 = vadd.f32 %v1170, 1.0
    %v1172 = vrcp.pop %v1171
    %v1173 = vmul.f32 1.0, %v1172
    %v1174 = vmul.f32 %v1166, 0.0
    %v1175 = vmul.f32 %v1160, %v1167
    %v1176 = vadd.f32 %v1174, %v1175
    %v1177 = vtanh.pop %v1176
    %v1178 = vmul.f32 %v1173, %v1177
    %v1179 = vxor.u32 %v1151, 2147483648
    %v1180 = vmul.f32 %v1179, 1.442695
    %v1181 = vpow.pop %v1180
    %v1182 = vadd.f32 %v1181, 1.0
    %v1183 = vrcp.pop %v1182
    %v1184 = vmul.f32 1.0, %v1183
    %v1185 = vxor.u32 %v1152, 2147483648
    %v1186 = vmul.f32 %v1185, 1.442695
    %v1187 = vpow.pop %v1186
    %v1188 = vadd.f32 %v1187, 1.0
    %v1189 = vrcp.pop %v1188
    %v1190 = vmul.f32 1.0, %v1189
    %v1191 = vtanh.pop %v1153
    %v1192 = vxor.u32 %v1154, 2147483648
    %v1193 = vmul.f32 %v1192, 1.442695
    %v1194 = vpow.pop %v1193
    %v1195 = vadd.f32 %v1194, 1.0
    %v1196 = vrcp.pop %v1195
    %v1197 = vmul.f32 1.0, %v1196
    %v1198 = vmul.f32 %v1190, 0.0
    %v1199 = vmul.f32 %v1184, %v1191
    %v1200 = vadd.f32 %v1198, %v1199
    %v1201 = vtanh.pop %v1200
    %v1202 = vmul.f32 %v1197, %v1201
    %v1203 = vpack.c.bf16 %v1178, %v1178
    %v1204 = vpack.c.bf16 %v1202, %v1202
    %1205 = vst [vmem:[#allocation4] sm:$0xff] %v1178
    %1206 = vst [vmem:[#allocation4 + $0x78] sm:$0xff] %v1202
    %v1207 = vld [vmem:[#allocation3 + $0x40] sm:$0xff]
    %v1208 = vld [vmem:[#allocation3 + $0x48] sm:$0xff]
    %v1209 = vld [vmem:[#allocation3 + $0x50] sm:$0xff]
    %v1210 = vld [vmem:[#allocation3 + $0x58] sm:$0xff]
    %1211 = vmatprep.subr.bf16.mxu0 %v784
    %1212 = vmatpush1.bf16.msra.mxu0 %v783
    %1213 = vmatprep.subr.bf16.mxu0 %v780
    %1214 = vmatpush1.bf16.msra.mxu0 %v779
    %1215 = vmatprep.subr.bf16.mxu0 %v776
    %1216 = vmatpush1.bf16.msra.mxu0 %v775
    %1217 = vmatprep.subr.bf16.mxu0 %v772
    %1218 = vmatpush1.bf16.msra.mxu0 %v771
    %1219 = vmatprep.subr.bf16.mxu0 %v768
    %1220 = vmatpush1.bf16.msra.mxu0 %v767
    %1221 = vmatprep.subr.bf16.mxu0 %v764
    %1222 = vmatpush1.bf16.msra.mxu0 %v763
    %1223 = vmatprep.subr.bf16.mxu0 %v760
    %1224 = vmatpush1.bf16.msra.mxu0 %v759
    %1225 = vmatprep.subr.bf16.mxu0 %v756
    %1226 = vmatpush1.bf16.msra.mxu0 %v755
    %1227 = vmatprep.subr.bf16.mxu0 0
    %1228 = vmatpush2.bf16.msra.mxu0 0
    %1229 = vmatprep.subr.bf16.mxu0 0
    %1230 = vmatpush2.bf16.msra.mxu0 0
    %1231 = vmatprep.subr.bf16.mxu0 0
    %1232 = vmatpush2.bf16.msra.mxu0 0
    %1233 = vmatprep.subr.bf16.mxu0 0
    %1234 = vmatpush2.bf16.msra.mxu0 0
    %1235 = vmatprep.subr.bf16.mxu0 0
    %1236 = vmatpush2.bf16.msra.mxu0 0
    %1237 = vmatprep.subr.bf16.mxu0 0
    %1238 = vmatpush2.bf16.msra.mxu0 0
    %1239 = vmatprep.subr.bf16.mxu0 0
    %1240 = vmatpush2.bf16.msra.mxu0 0
    %1241 = vmatprep.subr.bf16.mxu0 0
    %1242 = vmatpush2.bf16.msra.mxu0 0
    %1243 = vmatprep.mubr.bf16.mxu0 0
    %1244 = vmatmul.mubr.bf16.gmra.mxu0 %v1203
    %v1245 = vpop.f32.mrf.mxu0
    %v1246 = vadd.f32 0.0, %v1245
    %v1247 = vpop.f32.mrf.mxu0
    %v1248 = vadd.f32 0.0, %v1247
    %v1249 = vpop.f32.mrf.mxu0
    %v1250 = vpop.f32.mrf.mxu0
    %1251 = vdwg.mxu0
    %1252 = vmatprep.subr.bf16.mxu0 %v786
    %1253 = vmatpush1.bf16.msra.mxu0 %v785
    %1254 = vmatprep.subr.bf16.mxu0 %v782
    %1255 = vmatpush1.bf16.msra.mxu0 %v781
    %1256 = vmatprep.subr.bf16.mxu0 %v778
    %1257 = vmatpush1.bf16.msra.mxu0 %v777
    %1258 = vmatprep.subr.bf16.mxu0 %v774
    %1259 = vmatpush1.bf16.msra.mxu0 %v773
    %1260 = vmatprep.subr.bf16.mxu0 %v770
    %1261 = vmatpush1.bf16.msra.mxu0 %v769
    %1262 = vmatprep.subr.bf16.mxu0 %v766
    %1263 = vmatpush1.bf16.msra.mxu0 %v765
    %1264 = vmatprep.subr.bf16.mxu0 %v762
    %1265 = vmatpush1.bf16.msra.mxu0 %v761
    %1266 = vmatprep.subr.bf16.mxu0 %v758
    %1267 = vmatpush1.bf16.msra.mxu0 %v757
    %1268 = vmatprep.subr.bf16.mxu0 0
    %1269 = vmatpush2.bf16.msra.mxu0 0
    %1270 = vmatprep.subr.bf16.mxu0 0
    %1271 = vmatpush2.bf16.msra.mxu0 0
    %1272 = vmatprep.subr.bf16.mxu0 0
    %1273 = vmatpush2.bf16.msra.mxu0 0
    %1274 = vmatprep.subr.bf16.mxu0 0
    %1275 = vmatpush2.bf16.msra.mxu0 0
    %1276 = vmatprep.subr.bf16.mxu0 0
    %1277 = vmatpush2.bf16.msra.mxu0 0
    %1278 = vmatprep.subr.bf16.mxu0 0
    %1279 = vmatpush2.bf16.msra.mxu0 0
    %1280 = vmatprep.subr.bf16.mxu0 0
    %1281 = vmatpush2.bf16.msra.mxu0 0
    %1282 = vmatprep.subr.bf16.mxu0 0
    %1283 = vmatpush2.bf16.msra.mxu0 0
    %1284 = vmatprep.mubr.bf16.mxu0 0
    %1285 = vmatmul.mubr.bf16.gmra.mxu0 %v1203
    %v1286 = vpop.f32.mrf.mxu0
    %v1287 = vadd.f32 0.0, %v1286
    %v1288 = vpop.f32.mrf.mxu0
    %v1289 = vadd.f32 0.0, %v1288
    %v1290 = vpop.f32.mrf.mxu0
    %v1291 = vpop.f32.mrf.mxu0
    %1292 = vdwg.mxu0
    %v1293 = vadd.f32 %v1207, %v1246
    %v1294 = vadd.f32 %v1208, %v1248
    %v1295 = vadd.f32 %v1209, %v1287
    %v1296 = vadd.f32 %v1210, %v1289
    %v1297 = vld [vmem:[#allocation3 + $0x1a0] sm:$0xff]
    %v1298 = vld [vmem:[#allocation3 + $0x1a8] sm:$0xff]
    %v1299 = vld [vmem:[#allocation3 + $0x1b0] sm:$0xff]
    %v1300 = vld [vmem:[#allocation3 + $0x1b8] sm:$0xff]
    %1301 = vmatprep.subr.bf16.mxu0 %v1034
    %1302 = vmatpush1.bf16.msra.mxu0 %v1033
    %1303 = vmatprep.subr.bf16.mxu0 %v1030
    %1304 = vmatpush1.bf16.msra.mxu0 %v1029
    %1305 = vmatprep.subr.bf16.mxu0 %v1026
    %1306 = vmatpush1.bf16.msra.mxu0 %v1025
    %1307 = vmatprep.subr.bf16.mxu0 %v1022
    %1308 = vmatpush1.bf16.msra.mxu0 %v1021
    %1309 = vmatprep.subr.bf16.mxu0 %v1018
    %1310 = vmatpush1.bf16.msra.mxu0 %v1017
    %1311 = vmatprep.subr.bf16.mxu0 %v1014
    %1312 = vmatpush1.bf16.msra.mxu0 %v1013
    %1313 = vmatprep.subr.bf16.mxu0 %v1010
    %1314 = vmatpush1.bf16.msra.mxu0 %v1009
    %1315 = vmatprep.subr.bf16.mxu0 %v1006
    %1316 = vmatpush1.bf16.msra.mxu0 %v1005
    %1317 = vmatprep.subr.bf16.mxu0 0
    %1318 = vmatpush2.bf16.msra.mxu0 0
    %1319 = vmatprep.subr.bf16.mxu0 0
    %1320 = vmatpush2.bf16.msra.mxu0 0
    %1321 = vmatprep.subr.bf16.mxu0 0
    %1322 = vmatpush2.bf16.msra.mxu0 0
    %1323 = vmatprep.subr.bf16.mxu0 0
    %1324 = vmatpush2.bf16.msra.mxu0 0
    %1325 = vmatprep.subr.bf16.mxu0 0
    %1326 = vmatpush2.bf16.msra.mxu0 0
    %1327 = vmatprep.subr.bf16.mxu0 0
    %1328 = vmatpush2.bf16.msra.mxu0 0
    %1329 = vmatprep.subr.bf16.mxu0 0
    %1330 = vmatpush2.bf16.msra.mxu0 0
    %1331 = vmatprep.subr.bf16.mxu0 0
    %1332 = vmatpush2.bf16.msra.mxu0 0
    %1333 = vmatprep.mubr.bf16.mxu0 0
    %1334 = vmatmul.mubr.bf16.gmra.mxu0 %v1204
    %v1335 = vpop.f32.mrf.mxu0
    %v1336 = vadd.f32 0.0, %v1335
    %v1337 = vpop.f32.mrf.mxu0
    %v1338 = vadd.f32 0.0, %v1337
    %v1339 = vpop.f32.mrf.mxu0
    %v1340 = vpop.f32.mrf.mxu0
    %1341 = vdwg.mxu0
    %1342 = vmatprep.subr.bf16.mxu0 %v1036
    %1343 = vmatpush1.bf16.msra.mxu0 %v1035
    %1344 = vmatprep.subr.bf16.mxu0 %v1032
    %1345 = vmatpush1.bf16.msra.mxu0 %v1031
    %1346 = vmatprep.subr.bf16.mxu0 %v1028
    %1347 = vmatpush1.bf16.msra.mxu0 %v1027
    %1348 = vmatprep.subr.bf16.mxu0 %v1024
    %1349 = vmatpush1.bf16.msra.mxu0 %v1023
    %1350 = vmatprep.subr.bf16.mxu0 %v1020
    %1351 = vmatpush1.bf16.msra.mxu0 %v1019
    %1352 = vmatprep.subr.bf16.mxu0 %v1016
    %1353 = vmatpush1.bf16.msra.mxu0 %v1015
    %1354 = vmatprep.subr.bf16.mxu0 %v1012
    %1355 = vmatpush1.bf16.msra.mxu0 %v1011
    %1356 = vmatprep.subr.bf16.mxu0 %v1008
    %1357 = vmatpush1.bf16.msra.mxu0 %v1007
    %1358 = vmatprep.subr.bf16.mxu0 0
    %1359 = vmatpush2.bf16.msra.mxu0 0
    %1360 = vmatprep.subr.bf16.mxu0 0
    %1361 = vmatpush2.bf16.msra.mxu0 0
    %1362 = vmatprep.subr.bf16.mxu0 0
    %1363 = vmatpush2.bf16.msra.mxu0 0
    %1364 = vmatprep.subr.bf16.mxu0 0
    %1365 = vmatpush2.bf16.msra.mxu0 0
    %1366 = vmatprep.subr.bf16.mxu0 0
    %1367 = vmatpush2.bf16.msra.mxu0 0
    %1368 = vmatprep.subr.bf16.mxu0 0
    %1369 = vmatpush2.bf16.msra.mxu0 0
    %1370 = vmatprep.subr.bf16.mxu0 0
    %1371 = vmatpush2.bf16.msra.mxu0 0
    %1372 = vmatprep.subr.bf16.mxu0 0
    %1373 = vmatpush2.bf16.msra.mxu0 0
    %1374 = vmatprep.mubr.bf16.mxu0 0
    %1375 = vmatmul.mubr.bf16.gmra.mxu0 %v1204
    %v1376 = vpop.f32.mrf.mxu0
    %v1377 = vadd.f32 0.0, %v1376
    %v1378 = vpop.f32.mrf.mxu0
    %v1379 = vadd.f32 0.0, %v1378
    %v1380 = vpop.f32.mrf.mxu0
    %v1381 = vpop.f32.mrf.mxu0
    %1382 = vdwg.mxu0
    %v1383 = vadd.f32 %v1297, %v1336
    %v1384 = vadd.f32 %v1298, %v1338
    %v1385 = vadd.f32 %v1299, %v1377
    %v1386 = vadd.f32 %v1300, %v1379
    %v1387 = vxor.u32 %v1293, 2147483648
    %v1388 = vmul.f32 %v1387, 1.442695
    %v1389 = vpow.pop %v1388
    %v1390 = vadd.f32 %v1389, 1.0
    %v1391 = vrcp.pop %v1390
    %v1392 = vmul.f32 1.0, %v1391
    %v1393 = vxor.u32 %v1294, 2147483648
    %v1394 = vmul.f32 %v1393, 1.442695
    %v1395 = vpow.pop %v1394
    %v1396 = vadd.f32 %v1395, 1.0
    %v1397 = vrcp.pop %v1396
    %v1398 = vmul.f32 1.0, %v1397
    %v1399 = vtanh.pop %v1295
    %v1400 = vxor.u32 %v1296, 2147483648
    %v1401 = vmul.f32 %v1400, 1.442695
    %v1402 = vpow.pop %v1401
    %v1403 = vadd.f32 %v1402, 1.0
    %v1404 = vrcp.pop %v1403
    %v1405 = vmul.f32 1.0, %v1404
    %v1406 = vmul.f32 %v1398, %v1176
    %v1407 = vmul.f32 %v1392, %v1399
    %v1408 = vadd.f32 %v1406, %v1407
    %v1409 = vtanh.pop %v1408
    %v1410 = vmul.f32 %v1405, %v1409
    %v1411 = vxor.u32 %v1383, 2147483648
    %v1412 = vmul.f32 %v1411, 1.442695
    %v1413 = vpow.pop %v1412
    %v1414 = vadd.f32 %v1413, 1.0
    %v1415 = vrcp.pop %v1414
    %v1416 = vmul.f32 1.0, %v1415
    %v1417 = vxor.u32 %v1384, 2147483648
    %v1418 = vmul.f32 %v1417, 1.442695
    %v1419 = vpow.pop %v1418
    %v1420 = vadd.f32 %v1419, 1.0
    %v1421 = vrcp.pop %v1420
    %v1422 = vmul.f32 1.0, %v1421
    %v1423 = vtanh.pop %v1385
    %v1424 = vxor.u32 %v1386, 2147483648
    %v1425 = vmul.f32 %v1424, 1.442695
    %v1426 = vpow.pop %v1425
    %v1427 = vadd.f32 %v1426, 1.0
    %v1428 = vrcp.pop %v1427
    %v1429 = vmul.f32 1.0, %v1428
    %v1430 = vmul.f32 %v1422, %v1200
    %v1431 = vmul.f32 %v1416, %v1423
    %v1432 = vadd.f32 %v1430, %v1431
    %v1433 = vtanh.pop %v1432
    %v1434 = vmul.f32 %v1429, %v1433
    %v1435 = vpack.c.bf16 %v1410, %v1410
    %v1436 = vpack.c.bf16 %v1434, %v1434
    %1437 = vst [vmem:[#allocation4 + $0x10] sm:$0xff] %v1410
    %1438 = vst [vmem:[#allocation4 + $0x68] sm:$0xff] %v1434
    %v1439 = vld [vmem:[#allocation3 + $0x80] sm:$0xff]
    %v1440 = vld [vmem:[#allocation3 + $0x88] sm:$0xff]
    %v1441 = vld [vmem:[#allocation3 + $0x90] sm:$0xff]
    %v1442 = vld [vmem:[#allocation3 + $0x98] sm:$0xff]
    %1443 = vmatprep.subr.bf16.mxu0 %v784
    %1444 = vmatpush1.bf16.msra.mxu0 %v783
    %1445 = vmatprep.subr.bf16.mxu0 %v780
    %1446 = vmatpush1.bf16.msra.mxu0 %v779
    %1447 = vmatprep.subr.bf16.mxu0 %v776
    %1448 = vmatpush1.bf16.msra.mxu0 %v775
    %1449 = vmatprep.subr.bf16.mxu0 %v772
    %1450 = vmatpush1.bf16.msra.mxu0 %v771
    %1451 = vmatprep.subr.bf16.mxu0 %v768
    %1452 = vmatpush1.bf16.msra.mxu0 %v767
    %1453 = vmatprep.subr.bf16.mxu0 %v764
    %1454 = vmatpush1.bf16.msra.mxu0 %v763
    %1455 = vmatprep.subr.bf16.mxu0 %v760
    %1456 = vmatpush1.bf16.msra.mxu0 %v759
    %1457 = vmatprep.subr.bf16.mxu0 %v756
    %1458 = vmatpush1.bf16.msra.mxu0 %v755
    %1459 = vmatprep.subr.bf16.mxu0 0
    %1460 = vmatpush2.bf16.msra.mxu0 0
    %1461 = vmatprep.subr.bf16.mxu0 0
    %1462 = vmatpush2.bf16.msra.mxu0 0
    %1463 = vmatprep.subr.bf16.mxu0 0
    %1464 = vmatpush2.bf16.msra.mxu0 0
    %1465 = vmatprep.subr.bf16.mxu0 0
    %1466 = vmatpush2.bf16.msra.mxu0 0
    %1467 = vmatprep.subr.bf16.mxu0 0
    %1468 = vmatpush2.bf16.msra.mxu0 0
    %1469 = vmatprep.subr.bf16.mxu0 0
    %1470 = vmatpush2.bf16.msra.mxu0 0
    %1471 = vmatprep.subr.bf16.mxu0 0
    %1472 = vmatpush2.bf16.msra.mxu0 0
    %1473 = vmatprep.subr.bf16.mxu0 0
    %1474 = vmatpush2.bf16.msra.mxu0 0
    %1475 = vmatprep.mubr.bf16.mxu0 0
    %1476 = vmatmul.mubr.bf16.gmra.mxu0 %v1435
    %v1477 = vpop.f32.mrf.mxu0
    %v1478 = vadd.f32 0.0, %v1477
    %v1479 = vpop.f32.mrf.mxu0
    %v1480 = vadd.f32 0.0, %v1479
    %v1481 = vpop.f32.mrf.mxu0
    %v1482 = vpop.f32.mrf.mxu0
    %1483 = vdwg.mxu0
    %1484 = vmatprep.subr.bf16.mxu0 %v786
    %1485 = vmatpush1.bf16.msra.mxu0 %v785
    %1486 = vmatprep.subr.bf16.mxu0 %v782
    %1487 = vmatpush1.bf16.msra.mxu0 %v781
    %1488 = vmatprep.subr.bf16.mxu0 %v778
    %1489 = vmatpush1.bf16.msra.mxu0 %v777
    %1490 = vmatprep.subr.bf16.mxu0 %v774
    %1491 = vmatpush1.bf16.msra.mxu0 %v773
    %1492 = vmatprep.subr.bf16.mxu0 %v770
    %1493 = vmatpush1.bf16.msra.mxu0 %v769
    %1494 = vmatprep.subr.bf16.mxu0 %v766
    %1495 = vmatpush1.bf16.msra.mxu0 %v765
    %1496 = vmatprep.subr.bf16.mxu0 %v762
    %1497 = vmatpush1.bf16.msra.mxu0 %v761
    %1498 = vmatprep.subr.bf16.mxu0 %v758
    %1499 = vmatpush1.bf16.msra.mxu0 %v757
    %1500 = vmatprep.subr.bf16.mxu0 0
    %1501 = vmatpush2.bf16.msra.mxu0 0
    %1502 = vmatprep.subr.bf16.mxu0 0
    %1503 = vmatpush2.bf16.msra.mxu0 0
    %1504 = vmatprep.subr.bf16.mxu0 0
    %1505 = vmatpush2.bf16.msra.mxu0 0
    %1506 = vmatprep.subr.bf16.mxu0 0
    %1507 = vmatpush2.bf16.msra.mxu0 0
    %1508 = vmatprep.subr.bf16.mxu0 0
    %1509 = vmatpush2.bf16.msra.mxu0 0
    %1510 = vmatprep.subr.bf16.mxu0 0
    %1511 = vmatpush2.bf16.msra.mxu0 0
    %1512 = vmatprep.subr.bf16.mxu0 0
    %1513 = vmatpush2.bf16.msra.mxu0 0
    %1514 = vmatprep.subr.bf16.mxu0 0
    %1515 = vmatpush2.bf16.msra.mxu0 0
    %1516 = vmatprep.mubr.bf16.mxu0 0
    %1517 = vmatmul.mubr.bf16.gmra.mxu0 %v1435
    %v1518 = vpop.f32.mrf.mxu0
    %v1519 = vadd.f32 0.0, %v1518
    %v1520 = vpop.f32.mrf.mxu0
    %v1521 = vadd.f32 0.0, %v1520
    %v1522 = vpop.f32.mrf.mxu0
    %v1523 = vpop.f32.mrf.mxu0
    %1524 = vdwg.mxu0
    %v1525 = vadd.f32 %v1439, %v1478
    %v1526 = vadd.f32 %v1440, %v1480
    %v1527 = vadd.f32 %v1441, %v1519
    %v1528 = vadd.f32 %v1442, %v1521
    %v1529 = vld [vmem:[#allocation3 + $0x160] sm:$0xff]
    %v1530 = vld [vmem:[#allocation3 + $0x168] sm:$0xff]
    %v1531 = vld [vmem:[#allocation3 + $0x170] sm:$0xff]
    %v1532 = vld [vmem:[#allocation3 + $0x178] sm:$0xff]
    %1533 = vmatprep.subr.bf16.mxu0 %v1034
    %1534 = vmatpush1.bf16.msra.mxu0 %v1033
    %1535 = vmatprep.subr.bf16.mxu0 %v1030
    %1536 = vmatpush1.bf16.msra.mxu0 %v1029
    %1537 = vmatprep.subr.bf16.mxu0 %v1026
    %1538 = vmatpush1.bf16.msra.mxu0 %v1025
    %1539 = vmatprep.subr.bf16.mxu0 %v1022
    %1540 = vmatpush1.bf16.msra.mxu0 %v1021
    %1541 = vmatprep.subr.bf16.mxu0 %v1018
    %1542 = vmatpush1.bf16.msra.mxu0 %v1017
    %1543 = vmatprep.subr.bf16.mxu0 %v1014
    %1544 = vmatpush1.bf16.msra.mxu0 %v1013
    %1545 = vmatprep.subr.bf16.mxu0 %v1010
    %1546 = vmatpush1.bf16.msra.mxu0 %v1009
    %1547 = vmatprep.subr.bf16.mxu0 %v1006
    %1548 = vmatpush1.bf16.msra.mxu0 %v1005
    %1549 = vmatprep.subr.bf16.mxu0 0
    %1550 = vmatpush2.bf16.msra.mxu0 0
    %1551 = vmatprep.subr.bf16.mxu0 0
    %1552 = vmatpush2.bf16.msra.mxu0 0
    %1553 = vmatprep.subr.bf16.mxu0 0
    %1554 = vmatpush2.bf16.msra.mxu0 0
    %1555 = vmatprep.subr.bf16.mxu0 0
    %1556 = vmatpush2.bf16.msra.mxu0 0
    %1557 = vmatprep.subr.bf16.mxu0 0
    %1558 = vmatpush2.bf16.msra.mxu0 0
    %1559 = vmatprep.subr.bf16.mxu0 0
    %1560 = vmatpush2.bf16.msra.mxu0 0
    %1561 = vmatprep.subr.bf16.mxu0 0
    %1562 = vmatpush2.bf16.msra.mxu0 0
    %1563 = vmatprep.subr.bf16.mxu0 0
    %1564 = vmatpush2.bf16.msra.mxu0 0
    %1565 = vmatprep.mubr.bf16.mxu0 0
    %1566 = vmatmul.mubr.bf16.gmra.mxu0 %v1436
    %v1567 = vpop.f32.mrf.mxu0
    %v1568 = vadd.f32 0.0, %v1567
    %v1569 = vpop.f32.mrf.mxu0
    %v1570 = vadd.f32 0.0, %v1569
    %v1571 = vpop.f32.mrf.mxu0
    %v1572 = vpop.f32.mrf.mxu0
    %1573 = vdwg.mxu0
    %1574 = vmatprep.subr.bf16.mxu0 %v1036
    %1575 = vmatpush1.bf16.msra.mxu0 %v1035
    %1576 = vmatprep.subr.bf16.mxu0 %v1032
    %1577 = vmatpush1.bf16.msra.mxu0 %v1031
    %1578 = vmatprep.subr.bf16.mxu0 %v1028
    %1579 = vmatpush1.bf16.msra.mxu0 %v1027
    %1580 = vmatprep.subr.bf16.mxu0 %v1024
    %1581 = vmatpush1.bf16.msra.mxu0 %v1023
    %1582 = vmatprep.subr.bf16.mxu0 %v1020
    %1583 = vmatpush1.bf16.msra.mxu0 %v1019
    %1584 = vmatprep.subr.bf16.mxu0 %v1016
    %1585 = vmatpush1.bf16.msra.mxu0 %v1015
    %1586 = vmatprep.subr.bf16.mxu0 %v1012
    %1587 = vmatpush1.bf16.msra.mxu0 %v1011
    %1588 = vmatprep.subr.bf16.mxu0 %v1008
    %1589 = vmatpush1.bf16.msra.mxu0 %v1007
    %1590 = vmatprep.subr.bf16.mxu0 0
    %1591 = vmatpush2.bf16.msra.mxu0 0
    %1592 = vmatprep.subr.bf16.mxu0 0
    %1593 = vmatpush2.bf16.msra.mxu0 0
    %1594 = vmatprep.subr.bf16.mxu0 0
    %1595 = vmatpush2.bf16.msra.mxu0 0
    %1596 = vmatprep.subr.bf16.mxu0 0
    %1597 = vmatpush2.bf16.msra.mxu0 0
    %1598 = vmatprep.subr.bf16.mxu0 0
    %1599 = vmatpush2.bf16.msra.mxu0 0
    %1600 = vmatprep.subr.bf16.mxu0 0
    %1601 = vmatpush2.bf16.msra.mxu0 0
    %1602 = vmatprep.subr.bf16.mxu0 0
    %1603 = vmatpush2.bf16.msra.mxu0 0
    %1604 = vmatprep.subr.bf16.mxu0 0
    %1605 = vmatpush2.bf16.msra.mxu0 0
    %1606 = vmatprep.mubr.bf16.mxu0 0
    %1607 = vmatmul.mubr.bf16.gmra.mxu0 %v1436
    %v1608 = vpop.f32.mrf.mxu0
    %v1609 = vadd.f32 0.0, %v1608
    %v1610 = vpop.f32.mrf.mxu0
    %v1611 = vadd.f32 0.0, %v1610
    %v1612 = vpop.f32.mrf.mxu0
    %v1613 = vpop.f32.mrf.mxu0
    %1614 = vdwg.mxu0
    %v1615 = vadd.f32 %v1529, %v1568
    %v1616 = vadd.f32 %v1530, %v1570
    %v1617 = vadd.f32 %v1531, %v1609
    %v1618 = vadd.f32 %v1532, %v1611
    %v1619 = vxor.u32 %v1525, 2147483648
    %v1620 = vmul.f32 %v1619, 1.442695
    %v1621 = vpow.pop %v1620
    %v1622 = vadd.f32 %v1621, 1.0
    %v1623 = vrcp.pop %v1622
    %v1624 = vmul.f32 1.0, %v1623
    %v1625 = vxor.u32 %v1526, 2147483648
    %v1626 = vmul.f32 %v1625, 1.442695
    %v1627 = vpow.pop %v1626
    %v1628 = vadd.f32 %v1627, 1.0
    %v1629 = vrcp.pop %v1628
    %v1630 = vmul.f32 1.0, %v1629
    %v1631 = vtanh.pop %v1527
    %v1632 = vxor.u32 %v1528, 2147483648
    %v1633 = vmul.f32 %v1632, 1.442695
    %v1634 = vpow.pop %v1633
    %v1635 = vadd.f32 %v1634, 1.0
    %v1636 = vrcp.pop %v1635
    %v1637 = vmul.f32 1.0, %v1636
    %v1638 = vmul.f32 %v1630, %v1408
    %v1639 = vmul.f32 %v1624, %v1631
    %v1640 = vadd.f32 %v1638, %v1639
    %v1641 = vtanh.pop %v1640
    %v1642 = vmul.f32 %v1637, %v1641
    %v1643 = vxor.u32 %v1615, 2147483648
    %v1644 = vmul.f32 %v1643, 1.442695
    %v1645 = vpow.pop %v1644
    %v1646 = vadd.f32 %v1645, 1.0
    %v1647 = vrcp.pop %v1646
    %v1648 = vmul.f32 1.0, %v1647
    %v1649 = vxor.u32 %v1616, 2147483648
    %v1650 = vmul.f32 %v1649, 1.442695
    %v1651 = vpow.pop %v1650
    %v1652 = vadd.f32 %v1651, 1.0
    %v1653 = vrcp.pop %v1652
    %v1654 = vmul.f32 1.0, %v1653
    %v1655 = vtanh.pop %v1617
    %v1656 = vxor.u32 %v1618, 2147483648
    %v1657 = vmul.f32 %v1656, 1.442695
    %v1658 = vpow.pop %v1657
    %v1659 = vadd.f32 %v1658, 1.0
    %v1660 = vrcp.pop %v1659
    %v1661 = vmul.f32 1.0, %v1660
    %v1662 = vmul.f32 %v1654, %v1432
    %v1663 = vmul.f32 %v1648, %v1655
    %v1664 = vadd.f32 %v1662, %v1663
    %v1665 = vtanh.pop %v1664
    %v1666 = vmul.f32 %v1661, %v1665
    %v1667 = vpack.c.bf16 %v1642, %v1642
    %v1668 = vpack.c.bf16 %v1666, %v1666
    %1669 = vst [vmem:[#allocation4 + $0x20] sm:$0xff] %v1642
    %1670 = vst [vmem:[#allocation4 + $0x58] sm:$0xff] %v1666
    %v1671 = vld [vmem:[#allocation3 + $0xc0] sm:$0xff]
    %v1672 = vld [vmem:[#allocation3 + $0xc8] sm:$0xff]
    %v1673 = vld [vmem:[#allocation3 + $0xd0] sm:$0xff]
    %v1674 = vld [vmem:[#allocation3 + $0xd8] sm:$0xff]
    %1675 = vmatprep.subr.bf16.mxu0 %v784
    %1676 = vmatpush1.bf16.msra.mxu0 %v783
    %1677 = vmatprep.subr.bf16.mxu0 %v780
    %1678 = vmatpush1.bf16.msra.mxu0 %v779
    %1679 = vmatprep.subr.bf16.mxu0 %v776
    %1680 = vmatpush1.bf16.msra.mxu0 %v775
    %1681 = vmatprep.subr.bf16.mxu0 %v772
    %1682 = vmatpush1.bf16.msra.mxu0 %v771
    %1683 = vmatprep.subr.bf16.mxu0 %v768
    %1684 = vmatpush1.bf16.msra.mxu0 %v767
    %1685 = vmatprep.subr.bf16.mxu0 %v764
    %1686 = vmatpush1.bf16.msra.mxu0 %v763
    %1687 = vmatprep.subr.bf16.mxu0 %v760
    %1688 = vmatpush1.bf16.msra.mxu0 %v759
    %1689 = vmatprep.subr.bf16.mxu0 %v756
    %1690 = vmatpush1.bf16.msra.mxu0 %v755
    %1691 = vmatprep.subr.bf16.mxu0 0
    %1692 = vmatpush2.bf16.msra.mxu0 0
    %1693 = vmatprep.subr.bf16.mxu0 0
    %1694 = vmatpush2.bf16.msra.mxu0 0
    %1695 = vmatprep.subr.bf16.mxu0 0
    %1696 = vmatpush2.bf16.msra.mxu0 0
    %1697 = vmatprep.subr.bf16.mxu0 0
    %1698 = vmatpush2.bf16.msra.mxu0 0
    %1699 = vmatprep.subr.bf16.mxu0 0
    %1700 = vmatpush2.bf16.msra.mxu0 0
    %1701 = vmatprep.subr.bf16.mxu0 0
    %1702 = vmatpush2.bf16.msra.mxu0 0
    %1703 = vmatprep.subr.bf16.mxu0 0
    %1704 = vmatpush2.bf16.msra.mxu0 0
    %1705 = vmatprep.subr.bf16.mxu0 0
    %1706 = vmatpush2.bf16.msra.mxu0 0
    %1707 = vmatprep.mubr.bf16.mxu0 0
    %1708 = vmatmul.mubr.bf16.gmra.mxu0 %v1667
    %v1709 = vpop.f32.mrf.mxu0
    %v1710 = vadd.f32 0.0, %v1709
    %v1711 = vpop.f32.mrf.mxu0
    %v1712 = vadd.f32 0.0, %v1711
    %v1713 = vpop.f32.mrf.mxu0
    %v1714 = vpop.f32.mrf.mxu0
    %1715 = vdwg.mxu0
    %1716 = vmatprep.subr.bf16.mxu0 %v786
    %1717 = vmatpush1.bf16.msra.mxu0 %v785
    %1718 = vmatprep.subr.bf16.mxu0 %v782
    %1719 = vmatpush1.bf16.msra.mxu0 %v781
    %1720 = vmatprep.subr.bf16.mxu0 %v778
    %1721 = vmatpush1.bf16.msra.mxu0 %v777
    %1722 = vmatprep.subr.bf16.mxu0 %v774
    %1723 = vmatpush1.bf16.msra.mxu0 %v773
    %1724 = vmatprep.subr.bf16.mxu0 %v770
    %1725 = vmatpush1.bf16.msra.mxu0 %v769
    %1726 = vmatprep.subr.bf16.mxu0 %v766
    %1727 = vmatpush1.bf16.msra.mxu0 %v765
    %1728 = vmatprep.subr.bf16.mxu0 %v762
    %1729 = vmatpush1.bf16.msra.mxu0 %v761
    %1730 = vmatprep.subr.bf16.mxu0 %v758
    %1731 = vmatpush1.bf16.msra.mxu0 %v757
    %1732 = vmatprep.subr.bf16.mxu0 0
    %1733 = vmatpush2.bf16.msra.mxu0 0
    %1734 = vmatprep.subr.bf16.mxu0 0
    %1735 = vmatpush2.bf16.msra.mxu0 0
    %1736 = vmatprep.subr.bf16.mxu0 0
    %1737 = vmatpush2.bf16.msra.mxu0 0
    %1738 = vmatprep.subr.bf16.mxu0 0
    %1739 = vmatpush2.bf16.msra.mxu0 0
    %1740 = vmatprep.subr.bf16.mxu0 0
    %1741 = vmatpush2.bf16.msra.mxu0 0
    %1742 = vmatprep.subr.bf16.mxu0 0
    %1743 = vmatpush2.bf16.msra.mxu0 0
    %1744 = vmatprep.subr.bf16.mxu0 0
    %1745 = vmatpush2.bf16.msra.mxu0 0
    %1746 = vmatprep.subr.bf16.mxu0 0
    %1747 = vmatpush2.bf16.msra.mxu0 0
    %1748 = vmatprep.mubr.bf16.mxu0 0
    %1749 = vmatmul.mubr.bf16.gmra.mxu0 %v1667
    %v1750 = vpop.f32.mrf.mxu0
    %v1751 = vadd.f32 0.0, %v1750
    %v1752 = vpop.f32.mrf.mxu0
    %v1753 = vadd.f32 0.0, %v1752
    %v1754 = vpop.f32.mrf.mxu0
    %v1755 = vpop.f32.mrf.mxu0
    %1756 = vdwg.mxu0
    %v1757 = vadd.f32 %v1671, %v1710
    %v1758 = vadd.f32 %v1672, %v1712
    %v1759 = vadd.f32 %v1673, %v1751
    %v1760 = vadd.f32 %v1674, %v1753
    %v1761 = vld [vmem:[#allocation3 + $0x120] sm:$0xff]
    %v1762 = vld [vmem:[#allocation3 + $0x128] sm:$0xff]
    %v1763 = vld [vmem:[#allocation3 + $0x130] sm:$0xff]
    %v1764 = vld [vmem:[#allocation3 + $0x138] sm:$0xff]
    %1765 = vmatprep.subr.bf16.mxu0 %v1034
    %1766 = vmatpush1.bf16.msra.mxu0 %v1033
    %1767 = vmatprep.subr.bf16.mxu0 %v1030
    %1768 = vmatpush1.bf16.msra.mxu0 %v1029
    %1769 = vmatprep.subr.bf16.mxu0 %v1026
    %1770 = vmatpush1.bf16.msra.mxu0 %v1025
    %1771 = vmatprep.subr.bf16.mxu0 %v1022
    %1772 = vmatpush1.bf16.msra.mxu0 %v1021
    %1773 = vmatprep.subr.bf16.mxu0 %v1018
    %1774 = vmatpush1.bf16.msra.mxu0 %v1017
    %1775 = vmatprep.subr.bf16.mxu0 %v1014
    %1776 = vmatpush1.bf16.msra.mxu0 %v1013
    %1777 = vmatprep.subr.bf16.mxu0 %v1010
    %1778 = vmatpush1.bf16.msra.mxu0 %v1009
    %1779 = vmatprep.subr.bf16.mxu0 %v1006
    %1780 = vmatpush1.bf16.msra.mxu0 %v1005
    %1781 = vmatprep.subr.bf16.mxu0 0
    %1782 = vmatpush2.bf16.msra.mxu0 0
    %1783 = vmatprep.subr.bf16.mxu0 0
    %1784 = vmatpush2.bf16.msra.mxu0 0
    %1785 = vmatprep.subr.bf16.mxu0 0
    %1786 = vmatpush2.bf16.msra.mxu0 0
    %1787 = vmatprep.subr.bf16.mxu0 0
    %1788 = vmatpush2.bf16.msra.mxu0 0
    %1789 = vmatprep.subr.bf16.mxu0 0
    %1790 = vmatpush2.bf16.msra.mxu0 0
    %1791 = vmatprep.subr.bf16.mxu0 0
    %1792 = vmatpush2.bf16.msra.mxu0 0
    %1793 = vmatprep.subr.bf16.mxu0 0
    %1794 = vmatpush2.bf16.msra.mxu0 0
    %1795 = vmatprep.subr.bf16.mxu0 0
    %1796 = vmatpush2.bf16.msra.mxu0 0
    %1797 = vmatprep.mubr.bf16.mxu0 0
    %1798 = vmatmul.mubr.bf16.gmra.mxu0 %v1668
    %v1799 = vpop.f32.mrf.mxu0
    %v1800 = vadd.f32 0.0, %v1799
    %v1801 = vpop.f32.mrf.mxu0
    %v1802 = vadd.f32 0.0, %v1801
    %v1803 = vpop.f32.mrf.mxu0
    %v1804 = vpop.f32.mrf.mxu0
    %1805 = vdwg.mxu0
    %1806 = vmatprep.subr.bf16.mxu0 %v1036
    %1807 = vmatpush1.bf16.msra.mxu0 %v1035
    %1808 = vmatprep.subr.bf16.mxu0 %v1032
    %1809 = vmatpush1.bf16.msra.mxu0 %v1031
    %1810 = vmatprep.subr.bf16.mxu0 %v1028
    %1811 = vmatpush1.bf16.msra.mxu0 %v1027
    %1812 = vmatprep.subr.bf16.mxu0 %v1024
    %1813 = vmatpush1.bf16.msra.mxu0 %v1023
    %1814 = vmatprep.subr.bf16.mxu0 %v1020
    %1815 = vmatpush1.bf16.msra.mxu0 %v1019
    %1816 = vmatprep.subr.bf16.mxu0 %v1016
    %1817 = vmatpush1.bf16.msra.mxu0 %v1015
    %1818 = vmatprep.subr.bf16.mxu0 %v1012
    %1819 = vmatpush1.bf16.msra.mxu0 %v1011
    %1820 = vmatprep.subr.bf16.mxu0 %v1008
    %1821 = vmatpush1.bf16.msra.mxu0 %v1007
    %1822 = vmatprep.subr.bf16.mxu0 0
    %1823 = vmatpush2.bf16.msra.mxu0 0
    %1824 = vmatprep.subr.bf16.mxu0 0
    %1825 = vmatpush2.bf16.msra.mxu0 0
    %1826 = vmatprep.subr.bf16.mxu0 0
    %1827 = vmatpush2.bf16.msra.mxu0 0
    %1828 = vmatprep.subr.bf16.mxu0 0
    %1829 = vmatpush2.bf16.msra.mxu0 0
    %1830 = vmatprep.subr.bf16.mxu0 0
    %1831 = vmatpush2.bf16.msra.mxu0 0
    %1832 = vmatprep.subr.bf16.mxu0 0
    %1833 = vmatpush2.bf16.msra.mxu0 0
    %1834 = vmatprep.subr.bf16.mxu0 0
    %1835 = vmatpush2.bf16.msra.mxu0 0
    %1836 = vmatprep.subr.bf16.mxu0 0
    %1837 = vmatpush2.bf16.msra.mxu0 0
    %1838 = vmatprep.mubr.bf16.mxu0 0
    %1839 = vmatmul.mubr.bf16.gmra.mxu0 %v1668
    %v1840 = vpop.f32.mrf.mxu0
    %v1841 = vadd.f32 0.0, %v1840
    %v1842 = vpop.f32.mrf.mxu0
    %v1843 = vadd.f32 0.0, %v1842
    %v1844 = vpop.f32.mrf.mxu0
    %v1845 = vpop.f32.mrf.mxu0
    %1846 = vdwg.mxu0
    %v1847 = vadd.f32 %v1761, %v1800
    %v1848 = vadd.f32 %v1762, %v1802
    %v1849 = vadd.f32 %v1763, %v1841
    %v1850 = vadd.f32 %v1764, %v1843
    %v1851 = vxor.u32 %v1757, 2147483648
    %v1852 = vmul.f32 %v1851, 1.442695
    %v1853 = vpow.pop %v1852
    %v1854 = vadd.f32 %v1853, 1.0
    %v1855 = vrcp.pop %v1854
    %v1856 = vmul.f32 1.0, %v1855
    %v1857 = vxor.u32 %v1758, 2147483648
    %v1858 = vmul.f32 %v1857, 1.442695
    %v1859 = vpow.pop %v1858
    %v1860 = vadd.f32 %v1859, 1.0
    %v1861 = vrcp.pop %v1860
    %v1862 = vmul.f32 1.0, %v1861
    %v1863 = vtanh.pop %v1759
    %v1864 = vxor.u32 %v1760, 2147483648
    %v1865 = vmul.f32 %v1864, 1.442695
    %v1866 = vpow.pop %v1865
    %v1867 = vadd.f32 %v1866, 1.0
    %v1868 = vrcp.pop %v1867
    %v1869 = vmul.f32 1.0, %v1868
    %v1870 = vmul.f32 %v1862, %v1640
    %v1871 = vmul.f32 %v1856, %v1863
    %v1872 = vadd.f32 %v1870, %v1871
    %v1873 = vtanh.pop %v1872
    %v1874 = vmul.f32 %v1869, %v1873
    %v1875 = vxor.u32 %v1847, 2147483648
    %v1876 = vmul.f32 %v1875, 1.442695
    %v1877 = vpow.pop %v1876
    %v1878 = vadd.f32 %v1877, 1.0
    %v1879 = vrcp.pop %v1878
    %v1880 = vmul.f32 1.0, %v1879
    %v1881 = vxor.u32 %v1848, 2147483648
    %v1882 = vmul.f32 %v1881, 1.442695
    %v1883 = vpow.pop %v1882
    %v1884 = vadd.f32 %v1883, 1.0
    %v1885 = vrcp.pop %v1884
    %v1886 = vmul.f32 1.0, %v1885
    %v1887 = vtanh.pop %v1849
    %v1888 = vxor.u32 %v1850, 2147483648
    %v1889 = vmul.f32 %v1888, 1.442695
    %v1890 = vpow.pop %v1889
    %v1891 = vadd.f32 %v1890, 1.0
    %v1892 = vrcp.pop %v1891
    %v1893 = vmul.f32 1.0, %v1892
    %v1894 = vmul.f32 %v1886, %v1664
    %v1895 = vmul.f32 %v1880, %v1887
    %v1896 = vadd.f32 %v1894, %v1895
    %v1897 = vtanh.pop %v1896
    %v1898 = vmul.f32 %v1893, %v1897
    %v1899 = vpack.c.bf16 %v1874, %v1874
    %v1900 = vpack.c.bf16 %v1898, %v1898
    %1901 = vst [vmem:[#allocation4 + $0x30] sm:$0xff] %v1874
    %1902 = vst [vmem:[#allocation4 + $0x48] sm:$0xff] %v1898
    %v1903 = vld [vmem:[#allocation3 + $0x100] sm:$0xff]
    %v1904 = vld [vmem:[#allocation3 + $0x108] sm:$0xff]
    %v1905 = vld [vmem:[#allocation3 + $0x110] sm:$0xff]
    %v1906 = vld [vmem:[#allocation3 + $0x118] sm:$0xff]
    %1907 = vmatprep.subr.bf16.mxu0 %v784
    %1908 = vmatpush1.bf16.msra.mxu0 %v783
    %1909 = vmatprep.subr.bf16.mxu0 %v780
    %1910 = vmatpush1.bf16.msra.mxu0 %v779
    %1911 = vmatprep.subr.bf16.mxu0 %v776
    %1912 = vmatpush1.bf16.msra.mxu0 %v775
    %1913 = vmatprep.subr.bf16.mxu0 %v772
    %1914 = vmatpush1.bf16.msra.mxu0 %v771
    %1915 = vmatprep.subr.bf16.mxu0 %v768
    %1916 = vmatpush1.bf16.msra.mxu0 %v767
    %1917 = vmatprep.subr.bf16.mxu0 %v764
    %1918 = vmatpush1.bf16.msra.mxu0 %v763
    %1919 = vmatprep.subr.bf16.mxu0 %v760
    %1920 = vmatpush1.bf16.msra.mxu0 %v759
    %1921 = vmatprep.subr.bf16.mxu0 %v756
    %1922 = vmatpush1.bf16.msra.mxu0 %v755
    %1923 = vmatprep.subr.bf16.mxu0 0
    %1924 = vmatpush2.bf16.msra.mxu0 0
    %1925 = vmatprep.subr.bf16.mxu0 0
    %1926 = vmatpush2.bf16.msra.mxu0 0
    %1927 = vmatprep.subr.bf16.mxu0 0
    %1928 = vmatpush2.bf16.msra.mxu0 0
    %1929 = vmatprep.subr.bf16.mxu0 0
    %1930 = vmatpush2.bf16.msra.mxu0 0
    %1931 = vmatprep.subr.bf16.mxu0 0
    %1932 = vmatpush2.bf16.msra.mxu0 0
    %1933 = vmatprep.subr.bf16.mxu0 0
    %1934 = vmatpush2.bf16.msra.mxu0 0
    %1935 = vmatprep.subr.bf16.mxu0 0
    %1936 = vmatpush2.bf16.msra.mxu0 0
    %1937 = vmatprep.subr.bf16.mxu0 0
    %1938 = vmatpush2.bf16.msra.mxu0 0
    %1939 = vmatprep.mubr.bf16.mxu0 0
    %1940 = vmatmul.mubr.bf16.gmra.mxu0 %v1899
    %v1941 = vpop.f32.mrf.mxu0
    %v1942 = vadd.f32 0.0, %v1941
    %v1943 = vpop.f32.mrf.mxu0
    %v1944 = vadd.f32 0.0, %v1943
    %v1945 = vpop.f32.mrf.mxu0
    %v1946 = vpop.f32.mrf.mxu0
    %1947 = vdwg.mxu0
    %1948 = vmatprep.subr.bf16.mxu0 %v786
    %1949 = vmatpush1.bf16.msra.mxu0 %v785
    %1950 = vmatprep.subr.bf16.mxu0 %v782
    %1951 = vmatpush1.bf16.msra.mxu0 %v781
    %1952 = vmatprep.subr.bf16.mxu0 %v778
    %1953 = vmatpush1.bf16.msra.mxu0 %v777
    %1954 = vmatprep.subr.bf16.mxu0 %v774
    %1955 = vmatpush1.bf16.msra.mxu0 %v773
    %1956 = vmatprep.subr.bf16.mxu0 %v770
    %1957 = vmatpush1.bf16.msra.mxu0 %v769
    %1958 = vmatprep.subr.bf16.mxu0 %v766
    %1959 = vmatpush1.bf16.msra.mxu0 %v765
    %1960 = vmatprep.subr.bf16.mxu0 %v762
    %1961 = vmatpush1.bf16.msra.mxu0 %v761
    %1962 = vmatprep.subr.bf16.mxu0 %v758
    %1963 = vmatpush1.bf16.msra.mxu0 %v757
    %1964 = vmatprep.subr.bf16.mxu0 0
    %1965 = vmatpush2.bf16.msra.mxu0 0
    %1966 = vmatprep.subr.bf16.mxu0 0
    %1967 = vmatpush2.bf16.msra.mxu0 0
    %1968 = vmatprep.subr.bf16.mxu0 0
    %1969 = vmatpush2.bf16.msra.mxu0 0
    %1970 = vmatprep.subr.bf16.mxu0 0
    %1971 = vmatpush2.bf16.msra.mxu0 0
    %1972 = vmatprep.subr.bf16.mxu0 0
    %1973 = vmatpush2.bf16.msra.mxu0 0
    %1974 = vmatprep.subr.bf16.mxu0 0
    %1975 = vmatpush2.bf16.msra.mxu0 0
    %1976 = vmatprep.subr.bf16.mxu0 0
    %1977 = vmatpush2.bf16.msra.mxu0 0
    %1978 = vmatprep.subr.bf16.mxu0 0
    %1979 = vmatpush2.bf16.msra.mxu0 0
    %1980 = vmatprep.mubr.bf16.mxu0 0
    %1981 = vmatmul.mubr.bf16.gmra.mxu0 %v1899
    %v1982 = vpop.f32.mrf.mxu0
    %v1983 = vadd.f32 0.0, %v1982
    %v1984 = vpop.f32.mrf.mxu0
    %v1985 = vadd.f32 0.0, %v1984
    %v1986 = vpop.f32.mrf.mxu0
    %v1987 = vpop.f32.mrf.mxu0
    %1988 = vdwg.mxu0
    %v1989 = vadd.f32 %v1903, %v1942
    %v1990 = vadd.f32 %v1904, %v1944
    %v1991 = vadd.f32 %v1905, %v1983
    %v1992 = vadd.f32 %v1906, %v1985
    %v1993 = vld [vmem:[#allocation3 + $0xe0] sm:$0xff]
    %v1994 = vld [vmem:[#allocation3 + $0xe8] sm:$0xff]
    %v1995 = vld [vmem:[#allocation3 + $0xf0] sm:$0xff]
    %v1996 = vld [vmem:[#allocation3 + $0xf8] sm:$0xff]
    %1997 = vmatprep.subr.bf16.mxu0 %v1034
    %1998 = vmatpush1.bf16.msra.mxu0 %v1033
    %1999 = vmatprep.subr.bf16.mxu0 %v1030
    %2000 = vmatpush1.bf16.msra.mxu0 %v1029
    %2001 = vmatprep.subr.bf16.mxu0 %v1026
    %2002 = vmatpush1.bf16.msra.mxu0 %v1025
    %2003 = vmatprep.subr.bf16.mxu0 %v1022
    %2004 = vmatpush1.bf16.msra.mxu0 %v1021
    %2005 = vmatprep.subr.bf16.mxu0 %v1018
    %2006 = vmatpush1.bf16.msra.mxu0 %v1017
    %2007 = vmatprep.subr.bf16.mxu0 %v1014
    %2008 = vmatpush1.bf16.msra.mxu0 %v1013
    %2009 = vmatprep.subr.bf16.mxu0 %v1010
    %2010 = vmatpush1.bf16.msra.mxu0 %v1009
    %2011 = vmatprep.subr.bf16.mxu0 %v1006
    %2012 = vmatpush1.bf16.msra.mxu0 %v1005
    %2013 = vmatprep.subr.bf16.mxu0 0
    %2014 = vmatpush2.bf16.msra.mxu0 0
    %2015 = vmatprep.subr.bf16.mxu0 0
    %2016 = vmatpush2.bf16.msra.mxu0 0
    %2017 = vmatprep.subr.bf16.mxu0 0
    %2018 = vmatpush2.bf16.msra.mxu0 0
    %2019 = vmatprep.subr.bf16.mxu0 0
    %2020 = vmatpush2.bf16.msra.mxu0 0
    %2021 = vmatprep.subr.bf16.mxu0 0
    %2022 = vmatpush2.bf16.msra.mxu0 0
    %2023 = vmatprep.subr.bf16.mxu0 0
    %2024 = vmatpush2.bf16.msra.mxu0 0
    %2025 = vmatprep.subr.bf16.mxu0 0
    %2026 = vmatpush2.bf16.msra.mxu0 0
    %2027 = vmatprep.subr.bf16.mxu0 0
    %2028 = vmatpush2.bf16.msra.mxu0 0
    %2029 = vmatprep.mubr.bf16.mxu0 0
    %2030 = vmatmul.mubr.bf16.gmra.mxu0 %v1900
    %v2031 = vpop.f32.mrf.mxu0
    %v2032 = vadd.f32 0.0, %v2031
    %v2033 = vpop.f32.mrf.mxu0
    %v2034 = vadd.f32 0.0, %v2033
    %v2035 = vpop.f32.mrf.mxu0
    %v2036 = vpop.f32.mrf.mxu0
    %2037 = vdwg.mxu0
    %2038 = vmatprep.subr.bf16.mxu0 %v1036
    %2039 = vmatpush1.bf16.msra.mxu0 %v1035
    %2040 = vmatprep.subr.bf16.mxu0 %v1032
    %2041 = vmatpush1.bf16.msra.mxu0 %v1031
    %2042 = vmatprep.subr.bf16.mxu0 %v1028
    %2043 = vmatpush1.bf16.msra.mxu0 %v1027
    %2044 = vmatprep.subr.bf16.mxu0 %v1024
    %2045 = vmatpush1.bf16.msra.mxu0 %v1023
    %2046 = vmatprep.subr.bf16.mxu0 %v1020
    %2047 = vmatpush1.bf16.msra.mxu0 %v1019
    %2048 = vmatprep.subr.bf16.mxu0 %v1016
    %2049 = vmatpush1.bf16.msra.mxu0 %v1015
    %2050 = vmatprep.subr.bf16.mxu0 %v1012
    %2051 = vmatpush1.bf16.msra.mxu0 %v1011
    %2052 = vmatprep.subr.bf16.mxu0 %v1008
    %2053 = vmatpush1.bf16.msra.mxu0 %v1007
    %2054 = vmatprep.subr.bf16.mxu0 0
    %2055 = vmatpush2.bf16.msra.mxu0 0
    %2056 = vmatprep.subr.bf16.mxu0 0
    %2057 = vmatpush2.bf16.msra.mxu0 0
    %2058 = vmatprep.subr.bf16.mxu0 0
    %2059 = vmatpush2.bf16.msra.mxu0 0
    %2060 = vmatprep.subr.bf16.mxu0 0
    %2061 = vmatpush2.bf16.msra.mxu0 0
    %2062 = vmatprep.subr.bf16.mxu0 0
    %2063 = vmatpush2.bf16.msra.mxu0 0
    %2064 = vmatprep.subr.bf16.mxu0 0
    %2065 = vmatpush2.bf16.msra.mxu0 0
    %2066 = vmatprep.subr.bf16.mxu0 0
    %2067 = vmatpush2.bf16.msra.mxu0 0
    %2068 = vmatprep.subr.bf16.mxu0 0
    %2069 = vmatpush2.bf16.msra.mxu0 0
    %2070 = vmatprep.mubr.bf16.mxu0 0
    %2071 = vmatmul.mubr.bf16.gmra.mxu0 %v1900
    %v2072 = vpop.f32.mrf.mxu0
    %v2073 = vadd.f32 0.0, %v2072
    %v2074 = vpop.f32.mrf.mxu0
    %v2075 = vadd.f32 0.0, %v2074
    %v2076 = vpop.f32.mrf.mxu0
    %v2077 = vpop.f32.mrf.mxu0
    %2078 = vdwg.mxu0
    %v2079 = vadd.f32 %v1993, %v2032
    %v2080 = vadd.f32 %v1994, %v2034
    %v2081 = vadd.f32 %v1995, %v2073
    %v2082 = vadd.f32 %v1996, %v2075
    %v2083 = vxor.u32 %v1989, 2147483648
    %v2084 = vmul.f32 %v2083, 1.442695
    %v2085 = vpow.pop %v2084
    %v2086 = vadd.f32 %v2085, 1.0
    %v2087 = vrcp.pop %v2086
    %v2088 = vmul.f32 1.0, %v2087
    %v2089 = vxor.u32 %v1990, 2147483648
    %v2090 = vmul.f32 %v2089, 1.442695
    %v2091 = vpow.pop %v2090
    %v2092 = vadd.f32 %v2091, 1.0
    %v2093 = vrcp.pop %v2092
    %v2094 = vmul.f32 1.0, %v2093
    %v2095 = vtanh.pop %v1991
    %v2096 = vxor.u32 %v1992, 2147483648
    %v2097 = vmul.f32 %v2096, 1.442695
    %v2098 = vpow.pop %v2097
    %v2099 = vadd.f32 %v2098, 1.0
    %v2100 = vrcp.pop %v2099
    %v2101 = vmul.f32 1.0, %v2100
    %v2102 = vmul.f32 %v2094, %v1872
    %v2103 = vmul.f32 %v2088, %v2095
    %v2104 = vadd.f32 %v2102, %v2103
    %v2105 = vtanh.pop %v2104
    %v2106 = vmul.f32 %v2101, %v2105
    %v2107 = vxor.u32 %v2079, 2147483648
    %v2108 = vmul.f32 %v2107, 1.442695
    %v2109 = vpow.pop %v2108
    %v2110 = vadd.f32 %v2109, 1.0
    %v2111 = vrcp.pop %v2110
    %v2112 = vmul.f32 1.0, %v2111
    %v2113 = vxor.u32 %v2080, 2147483648
    %v2114 = vmul.f32 %v2113, 1.442695
    %v2115 = vpow.pop %v2114
    %v2116 = vadd.f32 %v2115, 1.0
    %v2117 = vrcp.pop %v2116
    %v2118 = vmul.f32 1.0, %v2117
    %v2119 = vtanh.pop %v2081
    %v2120 = vxor.u32 %v2082, 2147483648
    %v2121 = vmul.f32 %v2120, 1.442695
    %v2122 = vpow.pop %v2121
    %v2123 = vadd.f32 %v2122, 1.0
    %v2124 = vrcp.pop %v2123
    %v2125 = vmul.f32 1.0, %v2124
    %v2126 = vmul.f32 %v2118, %v1896
    %v2127 = vmul.f32 %v2112, %v2119
    %v2128 = vadd.f32 %v2126, %v2127
    %v2129 = vtanh.pop %v2128
    %v2130 = vmul.f32 %v2125, %v2129
    %v2131 = vpack.c.bf16 %v2106, %v2106
    %v2132 = vpack.c.bf16 %v2130, %v2130
    %2133 = vst [vmem:[#allocation4 + $0x40] sm:$0xff] %v2106
    %2134 = vst [vmem:[#allocation4 + $0x38] sm:$0xff] %v2130
    %v2135 = vld [vmem:[#allocation3 + $0x140] sm:$0xff]
    %v2136 = vld [vmem:[#allocation3 + $0x148] sm:$0xff]
    %v2137 = vld [vmem:[#allocation3 + $0x150] sm:$0xff]
    %v2138 = vld [vmem:[#allocation3 + $0x158] sm:$0xff]
    %2139 = vmatprep.subr.bf16.mxu0 %v784
    %2140 = vmatpush1.bf16.msra.mxu0 %v783
    %2141 = vmatprep.subr.bf16.mxu0 %v780
    %2142 = vmatpush1.bf16.msra.mxu0 %v779
    %2143 = vmatprep.subr.bf16.mxu0 %v776
    %2144 = vmatpush1.bf16.msra.mxu0 %v775
    %2145 = vmatprep.subr.bf16.mxu0 %v772
    %2146 = vmatpush1.bf16.msra.mxu0 %v771
    %2147 = vmatprep.subr.bf16.mxu0 %v768
    %2148 = vmatpush1.bf16.msra.mxu0 %v767
    %2149 = vmatprep.subr.bf16.mxu0 %v764
    %2150 = vmatpush1.bf16.msra.mxu0 %v763
    %2151 = vmatprep.subr.bf16.mxu0 %v760
    %2152 = vmatpush1.bf16.msra.mxu0 %v759
    %2153 = vmatprep.subr.bf16.mxu0 %v756
    %2154 = vmatpush1.bf16.msra.mxu0 %v755
    %2155 = vmatprep.subr.bf16.mxu0 0
    %2156 = vmatpush2.bf16.msra.mxu0 0
    %2157 = vmatprep.subr.bf16.mxu0 0
    %2158 = vmatpush2.bf16.msra.mxu0 0
    %2159 = vmatprep.subr.bf16.mxu0 0
    %2160 = vmatpush2.bf16.msra.mxu0 0
    %2161 = vmatprep.subr.bf16.mxu0 0
    %2162 = vmatpush2.bf16.msra.mxu0 0
    %2163 = vmatprep.subr.bf16.mxu0 0
    %2164 = vmatpush2.bf16.msra.mxu0 0
    %2165 = vmatprep.subr.bf16.mxu0 0
    %2166 = vmatpush2.bf16.msra.mxu0 0
    %2167 = vmatprep.subr.bf16.mxu0 0
    %2168 = vmatpush2.bf16.msra.mxu0 0
    %2169 = vmatprep.subr.bf16.mxu0 0
    %2170 = vmatpush2.bf16.msra.mxu0 0
    %2171 = vmatprep.mubr.bf16.mxu0 0
    %2172 = vmatmul.mubr.bf16.gmra.mxu0 %v2131
    %v2173 = vpop.f32.mrf.mxu0
    %v2174 = vadd.f32 0.0, %v2173
    %v2175 = vpop.f32.mrf.mxu0
    %v2176 = vadd.f32 0.0, %v2175
    %v2177 = vpop.f32.mrf.mxu0
    %v2178 = vpop.f32.mrf.mxu0
    %2179 = vdwg.mxu0
    %2180 = vmatprep.subr.bf16.mxu0 %v786
    %2181 = vmatpush1.bf16.msra.mxu0 %v785
    %2182 = vmatprep.subr.bf16.mxu0 %v782
    %2183 = vmatpush1.bf16.msra.mxu0 %v781
    %2184 = vmatprep.subr.bf16.mxu0 %v778
    %2185 = vmatpush1.bf16.msra.mxu0 %v777
    %2186 = vmatprep.subr.bf16.mxu0 %v774
    %2187 = vmatpush1.bf16.msra.mxu0 %v773
    %2188 = vmatprep.subr.bf16.mxu0 %v770
    %2189 = vmatpush1.bf16.msra.mxu0 %v769
    %2190 = vmatprep.subr.bf16.mxu0 %v766
    %2191 = vmatpush1.bf16.msra.mxu0 %v765
    %2192 = vmatprep.subr.bf16.mxu0 %v762
    %2193 = vmatpush1.bf16.msra.mxu0 %v761
    %2194 = vmatprep.subr.bf16.mxu0 %v758
    %2195 = vmatpush1.bf16.msra.mxu0 %v757
    %2196 = vmatprep.subr.bf16.mxu0 0
    %2197 = vmatpush2.bf16.msra.mxu0 0
    %2198 = vmatprep.subr.bf16.mxu0 0
    %2199 = vmatpush2.bf16.msra.mxu0 0
    %2200 = vmatprep.subr.bf16.mxu0 0
    %2201 = vmatpush2.bf16.msra.mxu0 0
    %2202 = vmatprep.subr.bf16.mxu0 0
    %2203 = vmatpush2.bf16.msra.mxu0 0
    %2204 = vmatprep.subr.bf16.mxu0 0
    %2205 = vmatpush2.bf16.msra.mxu0 0
    %2206 = vmatprep.subr.bf16.mxu0 0
    %2207 = vmatpush2.bf16.msra.mxu0 0
    %2208 = vmatprep.subr.bf16.mxu0 0
    %2209 = vmatpush2.bf16.msra.mxu0 0
    %2210 = vmatprep.subr.bf16.mxu0 0
    %2211 = vmatpush2.bf16.msra.mxu0 0
    %2212 = vmatprep.mubr.bf16.mxu0 0
    %2213 = vmatmul.mubr.bf16.gmra.mxu0 %v2131
    %v2214 = vpop.f32.mrf.mxu0
    %v2215 = vadd.f32 0.0, %v2214
    %v2216 = vpop.f32.mrf.mxu0
    %v2217 = vadd.f32 0.0, %v2216
    %v2218 = vpop.f32.mrf.mxu0
    %v2219 = vpop.f32.mrf.mxu0
    %2220 = vdwg.mxu0
    %v2221 = vadd.f32 %v2135, %v2174
    %v2222 = vadd.f32 %v2136, %v2176
    %v2223 = vadd.f32 %v2137, %v2215
    %v2224 = vadd.f32 %v2138, %v2217
    %v2225 = vld [vmem:[#allocation3 + $0xa0] sm:$0xff]
    %v2226 = vld [vmem:[#allocation3 + $0xa8] sm:$0xff]
    %v2227 = vld [vmem:[#allocation3 + $0xb0] sm:$0xff]
    %v2228 = vld [vmem:[#allocation3 + $0xb8] sm:$0xff]
    %2229 = vmatprep.subr.bf16.mxu0 %v1034
    %2230 = vmatpush1.bf16.msra.mxu0 %v1033
    %2231 = vmatprep.subr.bf16.mxu0 %v1030
    %2232 = vmatpush1.bf16.msra.mxu0 %v1029
    %2233 = vmatprep.subr.bf16.mxu0 %v1026
    %2234 = vmatpush1.bf16.msra.mxu0 %v1025
    %2235 = vmatprep.subr.bf16.mxu0 %v1022
    %2236 = vmatpush1.bf16.msra.mxu0 %v1021
    %2237 = vmatprep.subr.bf16.mxu0 %v1018
    %2238 = vmatpush1.bf16.msra.mxu0 %v1017
    %2239 = vmatprep.subr.bf16.mxu0 %v1014
    %2240 = vmatpush1.bf16.msra.mxu0 %v1013
    %2241 = vmatprep.subr.bf16.mxu0 %v1010
    %2242 = vmatpush1.bf16.msra.mxu0 %v1009
    %2243 = vmatprep.subr.bf16.mxu0 %v1006
    %2244 = vmatpush1.bf16.msra.mxu0 %v1005
    %2245 = vmatprep.subr.bf16.mxu0 0
    %2246 = vmatpush2.bf16.msra.mxu0 0
    %2247 = vmatprep.subr.bf16.mxu0 0
    %2248 = vmatpush2.bf16.msra.mxu0 0
    %2249 = vmatprep.subr.bf16.mxu0 0
    %2250 = vmatpush2.bf16.msra.mxu0 0
    %2251 = vmatprep.subr.bf16.mxu0 0
    %2252 = vmatpush2.bf16.msra.mxu0 0
    %2253 = vmatprep.subr.bf16.mxu0 0
    %2254 = vmatpush2.bf16.msra.mxu0 0
    %2255 = vmatprep.subr.bf16.mxu0 0
    %2256 = vmatpush2.bf16.msra.mxu0 0
    %2257 = vmatprep.subr.bf16.mxu0 0
    %2258 = vmatpush2.bf16.msra.mxu0 0
    %2259 = vmatprep.subr.bf16.mxu0 0
    %2260 = vmatpush2.bf16.msra.mxu0 0
    %2261 = vmatprep.mubr.bf16.mxu0 0
    %2262 = vmatmul.mubr.bf16.gmra.mxu0 %v2132
    %v2263 = vpop.f32.mrf.mxu0
    %v2264 = vadd.f32 0.0, %v2263
    %v2265 = vpop.f32.mrf.mxu0
    %v2266 = vadd.f32 0.0, %v2265
    %v2267 = vpop.f32.mrf.mxu0
    %v2268 = vpop.f32.mrf.mxu0
    %2269 = vdwg.mxu0
    %2270 = vmatprep.subr.bf16.mxu0 %v1036
    %2271 = vmatpush1.bf16.msra.mxu0 %v1035
    %2272 = vmatprep.subr.bf16.mxu0 %v1032
    %2273 = vmatpush1.bf16.msra.mxu0 %v1031
    %2274 = vmatprep.subr.bf16.mxu0 %v1028
    %2275 = vmatpush1.bf16.msra.mxu0 %v1027
    %2276 = vmatprep.subr.bf16.mxu0 %v1024
    %2277 = vmatpush1.bf16.msra.mxu0 %v1023
    %2278 = vmatprep.subr.bf16.mxu0 %v1020
    %2279 = vmatpush1.bf16.msra.mxu0 %v1019
    %2280 = vmatprep.subr.bf16.mxu0 %v1016
    %2281 = vmatpush1.bf16.msra.mxu0 %v1015
    %2282 = vmatprep.subr.bf16.mxu0 %v1012
    %2283 = vmatpush1.bf16.msra.mxu0 %v1011
    %2284 = vmatprep.subr.bf16.mxu0 %v1008
    %2285 = vmatpush1.bf16.msra.mxu0 %v1007
    %2286 = vmatprep.subr.bf16.mxu0 0
    %2287 = vmatpush2.bf16.msra.mxu0 0
    %2288 = vmatprep.subr.bf16.mxu0 0
    %2289 = vmatpush2.bf16.msra.mxu0 0
    %2290 = vmatprep.subr.bf16.mxu0 0
    %2291 = vmatpush2.bf16.msra.mxu0 0
    %2292 = vmatprep.subr.bf16.mxu0 0
    %2293 = vmatpush2.bf16.msra.mxu0 0
    %2294 = vmatprep.subr.bf16.mxu0 0
    %2295 = vmatpush2.bf16.msra.mxu0 0
    %2296 = vmatprep.subr.bf16.mxu0 0
    %2297 = vmatpush2.bf16.msra.mxu0 0
    %2298 = vmatprep.subr.bf16.mxu0 0
    %2299 = vmatpush2.bf16.msra.mxu0 0
    %2300 = vmatprep.subr.bf16.mxu0 0
    %2301 = vmatpush2.bf16.msra.mxu0 0
    %2302 = vmatprep.mubr.bf16.mxu0 0
    %2303 = vmatmul.mubr.bf16.gmra.mxu0 %v2132
    %v2304 = vpop.f32.mrf.mxu0
    %v2305 = vadd.f32 0.0, %v2304
    %v2306 = vpop.f32.mrf.mxu0
    %v2307 = vadd.f32 0.0, %v2306
    %v2308 = vpop.f32.mrf.mxu0
    %v2309 = vpop.f32.mrf.mxu0
    %2310 = vdwg.mxu0
    %v2311 = vadd.f32 %v2225, %v2264
    %v2312 = vadd.f32 %v2226, %v2266
    %v2313 = vadd.f32 %v2227, %v2305
    %v2314 = vadd.f32 %v2228, %v2307
    %v2315 = vxor.u32 %v2221, 2147483648
    %v2316 = vmul.f32 %v2315, 1.442695
    %v2317 = vpow.pop %v2316
    %v2318 = vadd.f32 %v2317, 1.0
    %v2319 = vrcp.pop %v2318
    %v2320 = vmul.f32 1.0, %v2319
    %v2321 = vxor.u32 %v2222, 2147483648
    %v2322 = vmul.f32 %v2321, 1.442695
    %v2323 = vpow.pop %v2322
    %v2324 = vadd.f32 %v2323, 1.0
    %v2325 = vrcp.pop %v2324
    %v2326 = vmul.f32 1.0, %v2325
    %v2327 = vtanh.pop %v2223
    %v2328 = vxor.u32 %v2224, 2147483648
    %v2329 = vmul.f32 %v2328, 1.442695
    %v2330 = vpow.pop %v2329
    %v2331 = vadd.f32 %v2330, 1.0
    %v2332 = vrcp.pop %v2331
    %v2333 = vmul.f32 1.0, %v2332
    %v2334 = vmul.f32 %v2326, %v2104
    %v2335 = vmul.f32 %v2320, %v2327
    %v2336 = vadd.f32 %v2334, %v2335
    %v2337 = vtanh.pop %v2336
    %v2338 = vmul.f32 %v2333, %v2337
    %v2339 = vxor.u32 %v2311, 2147483648
    %v2340 = vmul.f32 %v2339, 1.442695
    %v2341 = vpow.pop %v2340
    %v2342 = vadd.f32 %v2341, 1.0
    %v2343 = vrcp.pop %v2342
    %v2344 = vmul.f32 1.0, %v2343
    %v2345 = vxor.u32 %v2312, 2147483648
    %v2346 = vmul.f32 %v2345, 1.442695
    %v2347 = vpow.pop %v2346
    %v2348 = vadd.f32 %v2347, 1.0
    %v2349 = vrcp.pop %v2348
    %v2350 = vmul.f32 1.0, %v2349
    %v2351 = vtanh.pop %v2313
    %v2352 = vxor.u32 %v2314, 2147483648
    %v2353 = vmul.f32 %v2352, 1.442695
    %v2354 = vpow.pop %v2353
    %v2355 = vadd.f32 %v2354, 1.0
    %v2356 = vrcp.pop %v2355
    %v2357 = vmul.f32 1.0, %v2356
    %v2358 = vmul.f32 %v2350, %v2128
    %v2359 = vmul.f32 %v2344, %v2351
    %v2360 = vadd.f32 %v2358, %v2359
    %v2361 = vtanh.pop %v2360
    %v2362 = vmul.f32 %v2357, %v2361
    %v2363 = vpack.c.bf16 %v2338, %v2338
    %v2364 = vpack.c.bf16 %v2362, %v2362
    %2365 = vst [vmem:[#allocation4 + $0x50] sm:$0xff] %v2338
    %2366 = vst [vmem:[#allocation4 + $0x28] sm:$0xff] %v2362
    %v2367 = vld [vmem:[#allocation3 + $0x180] sm:$0xff]
    %v2368 = vld [vmem:[#allocation3 + $0x188] sm:$0xff]
    %v2369 = vld [vmem:[#allocation3 + $0x190] sm:$0xff]
    %v2370 = vld [vmem:[#allocation3 + $0x198] sm:$0xff]
    %2371 = vmatprep.subr.bf16.mxu0 %v784
    %2372 = vmatpush1.bf16.msra.mxu0 %v783
    %2373 = vmatprep.subr.bf16.mxu0 %v780
    %2374 = vmatpush1.bf16.msra.mxu0 %v779
    %2375 = vmatprep.subr.bf16.mxu0 %v776
    %2376 = vmatpush1.bf16.msra.mxu0 %v775
    %2377 = vmatprep.subr.bf16.mxu0 %v772
    %2378 = vmatpush1.bf16.msra.mxu0 %v771
    %2379 = vmatprep.subr.bf16.mxu0 %v768
    %2380 = vmatpush1.bf16.msra.mxu0 %v767
    %2381 = vmatprep.subr.bf16.mxu0 %v764
    %2382 = vmatpush1.bf16.msra.mxu0 %v763
    %2383 = vmatprep.subr.bf16.mxu0 %v760
    %2384 = vmatpush1.bf16.msra.mxu0 %v759
    %2385 = vmatprep.subr.bf16.mxu0 %v756
    %2386 = vmatpush1.bf16.msra.mxu0 %v755
    %2387 = vmatprep.subr.bf16.mxu0 0
    %2388 = vmatpush2.bf16.msra.mxu0 0
    %2389 = vmatprep.subr.bf16.mxu0 0
    %2390 = vmatpush2.bf16.msra.mxu0 0
    %2391 = vmatprep.subr.bf16.mxu0 0
    %2392 = vmatpush2.bf16.msra.mxu0 0
    %2393 = vmatprep.subr.bf16.mxu0 0
    %2394 = vmatpush2.bf16.msra.mxu0 0
    %2395 = vmatprep.subr.bf16.mxu0 0
    %2396 = vmatpush2.bf16.msra.mxu0 0
    %2397 = vmatprep.subr.bf16.mxu0 0
    %2398 = vmatpush2.bf16.msra.mxu0 0
    %2399 = vmatprep.subr.bf16.mxu0 0
    %2400 = vmatpush2.bf16.msra.mxu0 0
    %2401 = vmatprep.subr.bf16.mxu0 0
    %2402 = vmatpush2.bf16.msra.mxu0 0
    %2403 = vmatprep.mubr.bf16.mxu0 0
    %2404 = vmatmul.mubr.bf16.gmra.mxu0 %v2363
    %v2405 = vpop.f32.mrf.mxu0
    %v2406 = vadd.f32 0.0, %v2405
    %v2407 = vpop.f32.mrf.mxu0
    %v2408 = vadd.f32 0.0, %v2407
    %v2409 = vpop.f32.mrf.mxu0
    %v2410 = vpop.f32.mrf.mxu0
    %2411 = vdwg.mxu0
    %2412 = vmatprep.subr.bf16.mxu0 %v786
    %2413 = vmatpush1.bf16.msra.mxu0 %v785
    %2414 = vmatprep.subr.bf16.mxu0 %v782
    %2415 = vmatpush1.bf16.msra.mxu0 %v781
    %2416 = vmatprep.subr.bf16.mxu0 %v778
    %2417 = vmatpush1.bf16.msra.mxu0 %v777
    %2418 = vmatprep.subr.bf16.mxu0 %v774
    %2419 = vmatpush1.bf16.msra.mxu0 %v773
    %2420 = vmatprep.subr.bf16.mxu0 %v770
    %2421 = vmatpush1.bf16.msra.mxu0 %v769
    %2422 = vmatprep.subr.bf16.mxu0 %v766
    %2423 = vmatpush1.bf16.msra.mxu0 %v765
    %2424 = vmatprep.subr.bf16.mxu0 %v762
    %2425 = vmatpush1.bf16.msra.mxu0 %v761
    %2426 = vmatprep.subr.bf16.mxu0 %v758
    %2427 = vmatpush1.bf16.msra.mxu0 %v757
    %2428 = vmatprep.subr.bf16.mxu0 0
    %2429 = vmatpush2.bf16.msra.mxu0 0
    %2430 = vmatprep.subr.bf16.mxu0 0
    %2431 = vmatpush2.bf16.msra.mxu0 0
    %2432 = vmatprep.subr.bf16.mxu0 0
    %2433 = vmatpush2.bf16.msra.mxu0 0
    %2434 = vmatprep.subr.bf16.mxu0 0
    %2435 = vmatpush2.bf16.msra.mxu0 0
    %2436 = vmatprep.subr.bf16.mxu0 0
    %2437 = vmatpush2.bf16.msra.mxu0 0
    %2438 = vmatprep.subr.bf16.mxu0 0
    %2439 = vmatpush2.bf16.msra.mxu0 0
    %2440 = vmatprep.subr.bf16.mxu0 0
    %2441 = vmatpush2.bf16.msra.mxu0 0
    %2442 = vmatprep.subr.bf16.mxu0 0
    %2443 = vmatpush2.bf16.msra.mxu0 0
    %2444 = vmatprep.mubr.bf16.mxu0 0
    %2445 = vmatmul.mubr.bf16.gmra.mxu0 %v2363
    %v2446 = vpop.f32.mrf.mxu0
    %v2447 = vadd.f32 0.0, %v2446
    %v2448 = vpop.f32.mrf.mxu0
    %v2449 = vadd.f32 0.0, %v2448
    %v2450 = vpop.f32.mrf.mxu0
    %v2451 = vpop.f32.mrf.mxu0
    %2452 = vdwg.mxu0
    %v2453 = vadd.f32 %v2367, %v2406
    %v2454 = vadd.f32 %v2368, %v2408
    %v2455 = vadd.f32 %v2369, %v2447
    %v2456 = vadd.f32 %v2370, %v2449
    %v2457 = vld [vmem:[#allocation3 + $0x60] sm:$0xff]
    %v2458 = vld [vmem:[#allocation3 + $0x68] sm:$0xff]
    %v2459 = vld [vmem:[#allocation3 + $0x70] sm:$0xff]
    %v2460 = vld [vmem:[#allocation3 + $0x78] sm:$0xff]
    %2461 = vmatprep.subr.bf16.mxu0 %v1034
    %2462 = vmatpush1.bf16.msra.mxu0 %v1033
    %2463 = vmatprep.subr.bf16.mxu0 %v1030
    %2464 = vmatpush1.bf16.msra.mxu0 %v1029
    %2465 = vmatprep.subr.bf16.mxu0 %v1026
    %2466 = vmatpush1.bf16.msra.mxu0 %v1025
    %2467 = vmatprep.subr.bf16.mxu0 %v1022
    %2468 = vmatpush1.bf16.msra.mxu0 %v1021
    %2469 = vmatprep.subr.bf16.mxu0 %v1018
    %2470 = vmatpush1.bf16.msra.mxu0 %v1017
    %2471 = vmatprep.subr.bf16.mxu0 %v1014
    %2472 = vmatpush1.bf16.msra.mxu0 %v1013
    %2473 = vmatprep.subr.bf16.mxu0 %v1010
    %2474 = vmatpush1.bf16.msra.mxu0 %v1009
    %2475 = vmatprep.subr.bf16.mxu0 %v1006
    %2476 = vmatpush1.bf16.msra.mxu0 %v1005
    %2477 = vmatprep.subr.bf16.mxu0 0
    %2478 = vmatpush2.bf16.msra.mxu0 0
    %2479 = vmatprep.subr.bf16.mxu0 0
    %2480 = vmatpush2.bf16.msra.mxu0 0
    %2481 = vmatprep.subr.bf16.mxu0 0
    %2482 = vmatpush2.bf16.msra.mxu0 0
    %2483 = vmatprep.subr.bf16.mxu0 0
    %2484 = vmatpush2.bf16.msra.mxu0 0
    %2485 = vmatprep.subr.bf16.mxu0 0
    %2486 = vmatpush2.bf16.msra.mxu0 0
    %2487 = vmatprep.subr.bf16.mxu0 0
    %2488 = vmatpush2.bf16.msra.mxu0 0
    %2489 = vmatprep.subr.bf16.mxu0 0
    %2490 = vmatpush2.bf16.msra.mxu0 0
    %2491 = vmatprep.subr.bf16.mxu0 0
    %2492 = vmatpush2.bf16.msra.mxu0 0
    %2493 = vmatprep.mubr.bf16.mxu0 0
    %2494 = vmatmul.mubr.bf16.gmra.mxu0 %v2364
    %v2495 = vpop.f32.mrf.mxu0
    %v2496 = vadd.f32 0.0, %v2495
    %v2497 = vpop.f32.mrf.mxu0
    %v2498 = vadd.f32 0.0, %v2497
    %v2499 = vpop.f32.mrf.mxu0
    %v2500 = vpop.f32.mrf.mxu0
    %2501 = vdwg.mxu0
    %2502 = vmatprep.subr.bf16.mxu0 %v1036
    %2503 = vmatpush1.bf16.msra.mxu0 %v1035
    %2504 = vmatprep.subr.bf16.mxu0 %v1032
    %2505 = vmatpush1.bf16.msra.mxu0 %v1031
    %2506 = vmatprep.subr.bf16.mxu0 %v1028
    %2507 = vmatpush1.bf16.msra.mxu0 %v1027
    %2508 = vmatprep.subr.bf16.mxu0 %v1024
    %2509 = vmatpush1.bf16.msra.mxu0 %v1023
    %2510 = vmatprep.subr.bf16.mxu0 %v1020
    %2511 = vmatpush1.bf16.msra.mxu0 %v1019
    %2512 = vmatprep.subr.bf16.mxu0 %v1016
    %2513 = vmatpush1.bf16.msra.mxu0 %v1015
    %2514 = vmatprep.subr.bf16.mxu0 %v1012
    %2515 = vmatpush1.bf16.msra.mxu0 %v1011
    %2516 = vmatprep.subr.bf16.mxu0 %v1008
    %2517 = vmatpush1.bf16.msra.mxu0 %v1007
    %2518 = vmatprep.subr.bf16.mxu0 0
    %2519 = vmatpush2.bf16.msra.mxu0 0
    %2520 = vmatprep.subr.bf16.mxu0 0
    %2521 = vmatpush2.bf16.msra.mxu0 0
    %2522 = vmatprep.subr.bf16.mxu0 0
    %2523 = vmatpush2.bf16.msra.mxu0 0
    %2524 = vmatprep.subr.bf16.mxu0 0
    %2525 = vmatpush2.bf16.msra.mxu0 0
    %2526 = vmatprep.subr.bf16.mxu0 0
    %2527 = vmatpush2.bf16.msra.mxu0 0
    %2528 = vmatprep.subr.bf16.mxu0 0
    %2529 = vmatpush2.bf16.msra.mxu0 0
    %2530 = vmatprep.subr.bf16.mxu0 0
    %2531 = vmatpush2.bf16.msra.mxu0 0
    %2532 = vmatprep.subr.bf16.mxu0 0
    %2533 = vmatpush2.bf16.msra.mxu0 0
    %2534 = vmatprep.mubr.bf16.mxu0 0
    %2535 = vmatmul.mubr.bf16.gmra.mxu0 %v2364
    %v2536 = vpop.f32.mrf.mxu0
    %v2537 = vadd.f32 0.0, %v2536
    %v2538 = vpop.f32.mrf.mxu0
    %v2539 = vadd.f32 0.0, %v2538
    %v2540 = vpop.f32.mrf.mxu0
    %v2541 = vpop.f32.mrf.mxu0
    %2542 = vdwg.mxu0
    %v2543 = vadd.f32 %v2457, %v2496
    %v2544 = vadd.f32 %v2458, %v2498
    %v2545 = vadd.f32 %v2459, %v2537
    %v2546 = vadd.f32 %v2460, %v2539
    %v2547 = vxor.u32 %v2453, 2147483648
    %v2548 = vmul.f32 %v2547, 1.442695
    %v2549 = vpow.pop %v2548
    %v2550 = vadd.f32 %v2549, 1.0
    %v2551 = vrcp.pop %v2550
    %v2552 = vmul.f32 1.0, %v2551
    %v2553 = vxor.u32 %v2454, 2147483648
    %v2554 = vmul.f32 %v2553, 1.442695
    %v2555 = vpow.pop %v2554
    %v2556 = vadd.f32 %v2555, 1.0
    %v2557 = vrcp.pop %v2556
    %v2558 = vmul.f32 1.0, %v2557
    %v2559 = vtanh.pop %v2455
    %v2560 = vxor.u32 %v2456, 2147483648
    %v2561 = vmul.f32 %v2560, 1.442695
    %v2562 = vpow.pop %v2561
    %v2563 = vadd.f32 %v2562, 1.0
    %v2564 = vrcp.pop %v2563
    %v2565 = vmul.f32 1.0, %v2564
    %v2566 = vmul.f32 %v2558, %v2336
    %v2567 = vmul.f32 %v2552, %v2559
    %v2568 = vadd.f32 %v2566, %v2567
    %v2569 = vtanh.pop %v2568
    %v2570 = vmul.f32 %v2565, %v2569
    %v2571 = vxor.u32 %v2543, 2147483648
    %v2572 = vmul.f32 %v2571, 1.442695
    %v2573 = vpow.pop %v2572
    %v2574 = vadd.f32 %v2573, 1.0
    %v2575 = vrcp.pop %v2574
    %v2576 = vmul.f32 1.0, %v2575
    %v2577 = vxor.u32 %v2544, 2147483648
    %v2578 = vmul.f32 %v2577, 1.442695
    %v2579 = vpow.pop %v2578
    %v2580 = vadd.f32 %v2579, 1.0
    %v2581 = vrcp.pop %v2580
    %v2582 = vmul.f32 1.0, %v2581
    %v2583 = vtanh.pop %v2545
    %v2584 = vxor.u32 %v2546, 2147483648
    %v2585 = vmul.f32 %v2584, 1.442695
    %v2586 = vpow.pop %v2585
    %v2587 = vadd.f32 %v2586, 1.0
    %v2588 = vrcp.pop %v2587
    %v2589 = vmul.f32 1.0, %v2588
    %v2590 = vmul.f32 %v2582, %v2360
    %v2591 = vmul.f32 %v2576, %v2583
    %v2592 = vadd.f32 %v2590, %v2591
    %v2593 = vtanh.pop %v2592
    %v2594 = vmul.f32 %v2589, %v2593
    %v2595 = vpack.c.bf16 %v2570, %v2570
    %v2596 = vpack.c.bf16 %v2594, %v2594
    %2597 = vst [vmem:[#allocation4 + $0x60] sm:$0xff] %v2570
    %2598 = vst [vmem:[#allocation4 + $0x18] sm:$0xff] %v2594
    %v2599 = vld [vmem:[#allocation3 + $0x1c0] sm:$0xff]
    %v2600 = vld [vmem:[#allocation3 + $0x1c8] sm:$0xff]
    %v2601 = vld [vmem:[#allocation3 + $0x1d0] sm:$0xff]
    %v2602 = vld [vmem:[#allocation3 + $0x1d8] sm:$0xff]
    %2603 = vmatprep.subr.bf16.mxu0 %v784
    %2604 = vmatpush1.bf16.msra.mxu0 %v783
    %2605 = vmatprep.subr.bf16.mxu0 %v780
    %2606 = vmatpush1.bf16.msra.mxu0 %v779
    %2607 = vmatprep.subr.bf16.mxu0 %v776
    %2608 = vmatpush1.bf16.msra.mxu0 %v775
    %2609 = vmatprep.subr.bf16.mxu0 %v772
    %2610 = vmatpush1.bf16.msra.mxu0 %v771
    %2611 = vmatprep.subr.bf16.mxu0 %v768
    %2612 = vmatpush1.bf16.msra.mxu0 %v767
    %2613 = vmatprep.subr.bf16.mxu0 %v764
    %2614 = vmatpush1.bf16.msra.mxu0 %v763
    %2615 = vmatprep.subr.bf16.mxu0 %v760
    %2616 = vmatpush1.bf16.msra.mxu0 %v759
    %2617 = vmatprep.subr.bf16.mxu0 %v756
    %2618 = vmatpush1.bf16.msra.mxu0 %v755
    %2619 = vmatprep.subr.bf16.mxu0 0
    %2620 = vmatpush2.bf16.msra.mxu0 0
    %2621 = vmatprep.subr.bf16.mxu0 0
    %2622 = vmatpush2.bf16.msra.mxu0 0
    %2623 = vmatprep.subr.bf16.mxu0 0
    %2624 = vmatpush2.bf16.msra.mxu0 0
    %2625 = vmatprep.subr.bf16.mxu0 0
    %2626 = vmatpush2.bf16.msra.mxu0 0
    %2627 = vmatprep.subr.bf16.mxu0 0
    %2628 = vmatpush2.bf16.msra.mxu0 0
    %2629 = vmatprep.subr.bf16.mxu0 0
    %2630 = vmatpush2.bf16.msra.mxu0 0
    %2631 = vmatprep.subr.bf16.mxu0 0
    %2632 = vmatpush2.bf16.msra.mxu0 0
    %2633 = vmatprep.subr.bf16.mxu0 0
    %2634 = vmatpush2.bf16.msra.mxu0 0
    %2635 = vmatprep.mubr.bf16.mxu0 0
    %2636 = vmatmul.mubr.bf16.gmra.mxu0 %v2595
    %v2637 = vpop.f32.mrf.mxu0
    %v2638 = vadd.f32 0.0, %v2637
    %v2639 = vpop.f32.mrf.mxu0
    %v2640 = vadd.f32 0.0, %v2639
    %v2641 = vpop.f32.mrf.mxu0
    %v2642 = vpop.f32.mrf.mxu0
    %2643 = vdwg.mxu0
    %2644 = vmatprep.subr.bf16.mxu0 %v786
    %2645 = vmatpush1.bf16.msra.mxu0 %v785
    %2646 = vmatprep.subr.bf16.mxu0 %v782
    %2647 = vmatpush1.bf16.msra.mxu0 %v781
    %2648 = vmatprep.subr.bf16.mxu0 %v778
    %2649 = vmatpush1.bf16.msra.mxu0 %v777
    %2650 = vmatprep.subr.bf16.mxu0 %v774
    %2651 = vmatpush1.bf16.msra.mxu0 %v773
    %2652 = vmatprep.subr.bf16.mxu0 %v770
    %2653 = vmatpush1.bf16.msra.mxu0 %v769
    %2654 = vmatprep.subr.bf16.mxu0 %v766
    %2655 = vmatpush1.bf16.msra.mxu0 %v765
    %2656 = vmatprep.subr.bf16.mxu0 %v762
    %2657 = vmatpush1.bf16.msra.mxu0 %v761
    %2658 = vmatprep.subr.bf16.mxu0 %v758
    %2659 = vmatpush1.bf16.msra.mxu0 %v757
    %2660 = vmatprep.subr.bf16.mxu0 0
    %2661 = vmatpush2.bf16.msra.mxu0 0
    %2662 = vmatprep.subr.bf16.mxu0 0
    %2663 = vmatpush2.bf16.msra.mxu0 0
    %2664 = vmatprep.subr.bf16.mxu0 0
    %2665 = vmatpush2.bf16.msra.mxu0 0
    %2666 = vmatprep.subr.bf16.mxu0 0
    %2667 = vmatpush2.bf16.msra.mxu0 0
    %2668 = vmatprep.subr.bf16.mxu0 0
    %2669 = vmatpush2.bf16.msra.mxu0 0
    %2670 = vmatprep.subr.bf16.mxu0 0
    %2671 = vmatpush2.bf16.msra.mxu0 0
    %2672 = vmatprep.subr.bf16.mxu0 0
    %2673 = vmatpush2.bf16.msra.mxu0 0
    %2674 = vmatprep.subr.bf16.mxu0 0
    %2675 = vmatpush2.bf16.msra.mxu0 0
    %2676 = vmatprep.mubr.bf16.mxu0 0
    %2677 = vmatmul.mubr.bf16.gmra.mxu0 %v2595
    %v2678 = vpop.f32.mrf.mxu0
    %v2679 = vadd.f32 0.0, %v2678
    %v2680 = vpop.f32.mrf.mxu0
    %v2681 = vadd.f32 0.0, %v2680
    %v2682 = vpop.f32.mrf.mxu0
    %v2683 = vpop.f32.mrf.mxu0
    %2684 = vdwg.mxu0
    %v2685 = vadd.f32 %v2599, %v2638
    %v2686 = vadd.f32 %v2600, %v2640
    %v2687 = vadd.f32 %v2601, %v2679
    %v2688 = vadd.f32 %v2602, %v2681
    %v2689 = vld [vmem:[#allocation3 + $0x20] sm:$0xff]
    %v2690 = vld [vmem:[#allocation3 + $0x28] sm:$0xff]
    %v2691 = vld [vmem:[#allocation3 + $0x30] sm:$0xff]
    %v2692 = vld [vmem:[#allocation3 + $0x38] sm:$0xff]
    %2693 = vmatprep.subr.bf16.mxu0 %v1034
    %2694 = vmatpush1.bf16.msra.mxu0 %v1033
    %2695 = vmatprep.subr.bf16.mxu0 %v1030
    %2696 = vmatpush1.bf16.msra.mxu0 %v1029
    %2697 = vmatprep.subr.bf16.mxu0 %v1026
    %2698 = vmatpush1.bf16.msra.mxu0 %v1025
    %2699 = vmatprep.subr.bf16.mxu0 %v1022
    %2700 = vmatpush1.bf16.msra.mxu0 %v1021
    %2701 = vmatprep.subr.bf16.mxu0 %v1018
    %2702 = vmatpush1.bf16.msra.mxu0 %v1017
    %2703 = vmatprep.subr.bf16.mxu0 %v1014
    %2704 = vmatpush1.bf16.msra.mxu0 %v1013
    %2705 = vmatprep.subr.bf16.mxu0 %v1010
    %2706 = vmatpush1.bf16.msra.mxu0 %v1009
    %2707 = vmatprep.subr.bf16.mxu0 %v1006
    %2708 = vmatpush1.bf16.msra.mxu0 %v1005
    %2709 = vmatprep.subr.bf16.mxu0 0
    %2710 = vmatpush2.bf16.msra.mxu0 0
    %2711 = vmatprep.subr.bf16.mxu0 0
    %2712 = vmatpush2.bf16.msra.mxu0 0
    %2713 = vmatprep.subr.bf16.mxu0 0
    %2714 = vmatpush2.bf16.msra.mxu0 0
    %2715 = vmatprep.subr.bf16.mxu0 0
    %2716 = vmatpush2.bf16.msra.mxu0 0
    %2717 = vmatprep.subr.bf16.mxu0 0
    %2718 = vmatpush2.bf16.msra.mxu0 0
    %2719 = vmatprep.subr.bf16.mxu0 0
    %2720 = vmatpush2.bf16.msra.mxu0 0
    %2721 = vmatprep.subr.bf16.mxu0 0
    %2722 = vmatpush2.bf16.msra.mxu0 0
    %2723 = vmatprep.subr.bf16.mxu0 0
    %2724 = vmatpush2.bf16.msra.mxu0 0
    %2725 = vmatprep.mubr.bf16.mxu0 0
    %2726 = vmatmul.mubr.bf16.gmra.mxu0 %v2596
    %v2727 = vpop.f32.mrf.mxu0
    %v2728 = vadd.f32 0.0, %v2727
    %v2729 = vpop.f32.mrf.mxu0
    %v2730 = vadd.f32 0.0, %v2729
    %v2731 = vpop.f32.mrf.mxu0
    %v2732 = vpop.f32.mrf.mxu0
    %2733 = vdwg.mxu0
    %2734 = vmatprep.subr.bf16.mxu0 %v1036
    %2735 = vmatpush1.bf16.msra.mxu0 %v1035
    %2736 = vmatprep.subr.bf16.mxu0 %v1032
    %2737 = vmatpush1.bf16.msra.mxu0 %v1031
    %2738 = vmatprep.subr.bf16.mxu0 %v1028
    %2739 = vmatpush1.bf16.msra.mxu0 %v1027
    %2740 = vmatprep.subr.bf16.mxu0 %v1024
    %2741 = vmatpush1.bf16.msra.mxu0 %v1023
    %2742 = vmatprep.subr.bf16.mxu0 %v1020
    %2743 = vmatpush1.bf16.msra.mxu0 %v1019
    %2744 = vmatprep.subr.bf16.mxu0 %v1016
    %2745 = vmatpush1.bf16.msra.mxu0 %v1015
    %2746 = vmatprep.subr.bf16.mxu0 %v1012
    %2747 = vmatpush1.bf16.msra.mxu0 %v1011
    %2748 = vmatprep.subr.bf16.mxu0 %v1008
    %2749 = vmatpush1.bf16.msra.mxu0 %v1007
    %2750 = vmatprep.subr.bf16.mxu0 0
    %2751 = vmatpush2.bf16.msra.mxu0 0
    %2752 = vmatprep.subr.bf16.mxu0 0
    %2753 = vmatpush2.bf16.msra.mxu0 0
    %2754 = vmatprep.subr.bf16.mxu0 0
    %2755 = vmatpush2.bf16.msra.mxu0 0
    %2756 = vmatprep.subr.bf16.mxu0 0
    %2757 = vmatpush2.bf16.msra.mxu0 0
    %2758 = vmatprep.subr.bf16.mxu0 0
    %2759 = vmatpush2.bf16.msra.mxu0 0
    %2760 = vmatprep.subr.bf16.mxu0 0
    %2761 = vmatpush2.bf16.msra.mxu0 0
    %2762 = vmatprep.subr.bf16.mxu0 0
    %2763 = vmatpush2.bf16.msra.mxu0 0
    %2764 = vmatprep.subr.bf16.mxu0 0
    %2765 = vmatpush2.bf16.msra.mxu0 0
    %2766 = vmatprep.mubr.bf16.mxu0 0
    %2767 = vmatmul.mubr.bf16.gmra.mxu0 %v2596
    %v2768 = vpop.f32.mrf.mxu0
    %v2769 = vadd.f32 0.0, %v2768
    %v2770 = vpop.f32.mrf.mxu0
    %v2771 = vadd.f32 0.0, %v2770
    %v2772 = vpop.f32.mrf.mxu0
    %v2773 = vpop.f32.mrf.mxu0
    %2774 = vdwg.mxu0
    %v2775 = vadd.f32 %v2689, %v2728
    %v2776 = vadd.f32 %v2690, %v2730
    %v2777 = vadd.f32 %v2691, %v2769
    %v2778 = vadd.f32 %v2692, %v2771
    %v2779 = vxor.u32 %v2685, 2147483648
    %v2780 = vmul.f32 %v2779, 1.442695
    %v2781 = vpow.pop %v2780
    %v2782 = vadd.f32 %v2781, 1.0
    %v2783 = vrcp.pop %v2782
    %v2784 = vmul.f32 1.0, %v2783
    %v2785 = vxor.u32 %v2686, 2147483648
    %v2786 = vmul.f32 %v2785, 1.442695
    %v2787 = vpow.pop %v2786
    %v2788 = vadd.f32 %v2787, 1.0
    %v2789 = vrcp.pop %v2788
    %v2790 = vmul.f32 1.0, %v2789
    %v2791 = vtanh.pop %v2687
    %v2792 = vxor.u32 %v2688, 2147483648
    %v2793 = vmul.f32 %v2792, 1.442695
    %v2794 = vpow.pop %v2793
    %v2795 = vadd.f32 %v2794, 1.0
    %v2796 = vrcp.pop %v2795
    %v2797 = vmul.f32 1.0, %v2796
    %v2798 = vmul.f32 %v2790, %v2568
    %v2799 = vmul.f32 %v2784, %v2791
    %v2800 = vadd.f32 %v2798, %v2799
    %v2801 = vtanh.pop %v2800
    %v2802 = vmul.f32 %v2797, %v2801
    %v2803 = vxor.u32 %v2775, 2147483648
    %v2804 = vmul.f32 %v2803, 1.442695
    %v2805 = vpow.pop %v2804
    %v2806 = vadd.f32 %v2805, 1.0
    %v2807 = vrcp.pop %v2806
    %v2808 = vmul.f32 1.0, %v2807
    %v2809 = vxor.u32 %v2776, 2147483648
    %v2810 = vmul.f32 %v2809, 1.442695
    %v2811 = vpow.pop %v2810
    %v2812 = vadd.f32 %v2811, 1.0
    %v2813 = vrcp.pop %v2812
    %v2814 = vmul.f32 1.0, %v2813
    %v2815 = vtanh.pop %v2777
    %v2816 = vxor.u32 %v2778, 2147483648
    %v2817 = vmul.f32 %v2816, 1.442695
    %v2818 = vpow.pop %v2817
    %v2819 = vadd.f32 %v2818, 1.0
    %v2820 = vrcp.pop %v2819
    %v2821 = vmul.f32 1.0, %v2820
    %v2822 = vmul.f32 %v2814, %v2592
    %v2823 = vmul.f32 %v2808, %v2815
    %v2824 = vadd.f32 %v2822, %v2823
    %v2825 = vtanh.pop %v2824
    %v2826 = vmul.f32 %v2821, %v2825
    %2827 = vst [vmem:[#allocation4 + $0x70] sm:$0xff] %v2802
    %2828 = vst [vmem:[#allocation4 + $0x8] sm:$0xff] %v2826
    %s2829 = smul.u32 4, 48
    %s2830 = smul.u32 %s2829, 8
    %s2831 = sshll.u32 %s2830, 4
    %2832 = dma.done [#allocation5], %s2831
    %v2833 = vld [vmem:[#allocation4] sm:$0xff]
    %v2834 = vld [vmem:[#allocation4 + $0x8] sm:$0xff]
    %v2835 = vld [vmem:[#allocation4 + $0x10] sm:$0xff]
    %v2836 = vld [vmem:[#allocation4 + $0x18] sm:$0xff]
    %v2837 = vld [vmem:[#allocation4 + $0x20] sm:$0xff]
    %v2838 = vld [vmem:[#allocation4 + $0x28] sm:$0xff]
    %v2839 = vld [vmem:[#allocation4 + $0x30] sm:$0xff]
    %v2840 = vld [vmem:[#allocation4 + $0x38] sm:$0xff]
    %v2841 = vld [vmem:[#allocation4 + $0x40] sm:$0xff]
    %v2842 = vld [vmem:[#allocation4 + $0x48] sm:$0xff]
    %v2843 = vld [vmem:[#allocation4 + $0x50] sm:$0xff]
    %v2844 = vld [vmem:[#allocation4 + $0x58] sm:$0xff]
    %v2845 = vld [vmem:[#allocation4 + $0x60] sm:$0xff]
    %v2846 = vld [vmem:[#allocation4 + $0x68] sm:$0xff]
    %v2847 = vld [vmem:[#allocation4 + $0x70] sm:$0xff]
    %v2848 = vld [vmem:[#allocation4 + $0x78] sm:$0xff]
    %v2849 = vpack.c.bf16 %v2835, %v2833
    %v2850 = vpack.c.bf16 %v2836, %v2834
    %v2851 = vpack.c.bf16 %v2839, %v2837
    %v2852 = vpack.c.bf16 %v2840, %v2838
    %v2853 = vpack.c.bf16 %v2843, %v2841
    %v2854 = vpack.c.bf16 %v2844, %v2842
    %v2855 = vpack.c.bf16 %v2847, %v2845
    %v2856 = vpack.c.bf16 %v2848, %v2846
    %v2857 = vld [vmem:[#allocation2] sm:$0xff]
    %v2858 = vld [vmem:[#allocation2 + $0x8] sm:$0xff]
    %v2859 = vld [vmem:[#allocation2 + $0x10] sm:$0xff]
    %v2860 = vld [vmem:[#allocation2 + $0x18] sm:$0xff]
    %v2861 = vld [vmem:[#allocation2 + $0x20] sm:$0xff]
    %v2862 = vld [vmem:[#allocation2 + $0x28] sm:$0xff]
    %v2863 = vld [vmem:[#allocation2 + $0x30] sm:$0xff]
    %v2864 = vld [vmem:[#allocation2 + $0x38] sm:$0xff]
    %v2865 = vld [vmem:[#allocation2 + $0x40] sm:$0xff]
    %v2866 = vld [vmem:[#allocation2 + $0x48] sm:$0xff]
    %v2867 = vld [vmem:[#allocation2 + $0x50] sm:$0xff]
    %v2868 = vld [vmem:[#allocation2 + $0x58] sm:$0xff]
    %v2869 = vld [vmem:[#allocation2 + $0x60] sm:$0xff]
    %v2870 = vld [vmem:[#allocation2 + $0x68] sm:$0xff]
    %v2871 = vld [vmem:[#allocation2 + $0x70] sm:$0xff]
    %v2872 = vld [vmem:[#allocation2 + $0x78] sm:$0xff]
    %v2873 = vld [vmem:[#allocation2 + $0x80] sm:$0xff]
    %v2874 = vld [vmem:[#allocation2 + $0x88] sm:$0xff]
    %v2875 = vld [vmem:[#allocation2 + $0x90] sm:$0xff]
    %v2876 = vld [vmem:[#allocation2 + $0x98] sm:$0xff]
    %v2877 = vld [vmem:[#allocation2 + $0xa0] sm:$0xff]
    %v2878 = vld [vmem:[#allocation2 + $0xa8] sm:$0xff]
    %v2879 = vld [vmem:[#allocation2 + $0xb0] sm:$0xff]
    %v2880 = vld [vmem:[#allocation2 + $0xb8] sm:$0xff]
    %v2881 = vld [vmem:[#allocation2 + $0xc0] sm:$0xff]
    %v2882 = vld [vmem:[#allocation2 + $0xc8] sm:$0xff]
    %v2883 = vld [vmem:[#allocation2 + $0xd0] sm:$0xff]
    %v2884 = vld [vmem:[#allocation2 + $0xd8] sm:$0xff]
    %v2885 = vld [vmem:[#allocation2 + $0xe0] sm:$0xff]
    %v2886 = vld [vmem:[#allocation2 + $0xe8] sm:$0xff]
    %v2887 = vld [vmem:[#allocation2 + $0xf0] sm:$0xff]
    %v2888 = vld [vmem:[#allocation2 + $0xf8] sm:$0xff]
    %v2889 = vld [vmem:[#allocation2 + $0x100] sm:$0xff]
    %v2890 = vld [vmem:[#allocation2 + $0x108] sm:$0xff]
    %v2891 = vld [vmem:[#allocation2 + $0x110] sm:$0xff]
    %v2892 = vld [vmem:[#allocation2 + $0x118] sm:$0xff]
    %v2893 = vld [vmem:[#allocation2 + $0x120] sm:$0xff]
    %v2894 = vld [vmem:[#allocation2 + $0x128] sm:$0xff]
    %v2895 = vld [vmem:[#allocation2 + $0x130] sm:$0xff]
    %v2896 = vld [vmem:[#allocation2 + $0x138] sm:$0xff]
    %v2897 = vld [vmem:[#allocation2 + $0x140] sm:$0xff]
    %v2898 = vld [vmem:[#allocation2 + $0x148] sm:$0xff]
    %v2899 = vld [vmem:[#allocation2 + $0x150] sm:$0xff]
    %v2900 = vld [vmem:[#allocation2 + $0x158] sm:$0xff]
    %v2901 = vld [vmem:[#allocation2 + $0x160] sm:$0xff]
    %v2902 = vld [vmem:[#allocation2 + $0x168] sm:$0xff]
    %v2903 = vld [vmem:[#allocation2 + $0x170] sm:$0xff]
    %v2904 = vld [vmem:[#allocation2 + $0x178] sm:$0xff]
    %v2905 = vld [vmem:[#allocation2 + $0x180] sm:$0xff]
    %v2906 = vld [vmem:[#allocation2 + $0x188] sm:$0xff]
    %v2907 = vld [vmem:[#allocation2 + $0x190] sm:$0xff]
    %v2908 = vld [vmem:[#allocation2 + $0x198] sm:$0xff]
    %v2909 = vld [vmem:[#allocation2 + $0x1a0] sm:$0xff]
    %v2910 = vld [vmem:[#allocation2 + $0x1a8] sm:$0xff]
    %v2911 = vld [vmem:[#allocation2 + $0x1b0] sm:$0xff]
    %v2912 = vld [vmem:[#allocation2 + $0x1b8] sm:$0xff]
    %v2913 = vld [vmem:[#allocation2 + $0x1c0] sm:$0xff]
    %v2914 = vld [vmem:[#allocation2 + $0x1c8] sm:$0xff]
    %v2915 = vld [vmem:[#allocation2 + $0x1d0] sm:$0xff]
    %v2916 = vld [vmem:[#allocation2 + $0x1d8] sm:$0xff]
    %v2917 = vld [vmem:[#allocation2 + $0x1e0] sm:$0xff]
    %v2918 = vld [vmem:[#allocation2 + $0x1e8] sm:$0xff]
    %v2919 = vld [vmem:[#allocation2 + $0x1f0] sm:$0xff]
    %v2920 = vld [vmem:[#allocation2 + $0x1f8] sm:$0xff]
    %v2921 = vld [vmem:[#allocation2 + $0x200] sm:$0xff]
    %v2922 = vld [vmem:[#allocation2 + $0x208] sm:$0xff]
    %v2923 = vld [vmem:[#allocation2 + $0x210] sm:$0xff]
    %v2924 = vld [vmem:[#allocation2 + $0x218] sm:$0xff]
    %v2925 = vld [vmem:[#allocation2 + $0x220] sm:$0xff]
    %v2926 = vld [vmem:[#allocation2 + $0x228] sm:$0xff]
    %v2927 = vld [vmem:[#allocation2 + $0x230] sm:$0xff]
    %v2928 = vld [vmem:[#allocation2 + $0x238] sm:$0xff]
    %v2929 = vld [vmem:[#allocation2 + $0x240] sm:$0xff]
    %v2930 = vld [vmem:[#allocation2 + $0x248] sm:$0xff]
    %v2931 = vld [vmem:[#allocation2 + $0x250] sm:$0xff]
    %v2932 = vld [vmem:[#allocation2 + $0x258] sm:$0xff]
    %v2933 = vld [vmem:[#allocation2 + $0x260] sm:$0xff]
    %v2934 = vld [vmem:[#allocation2 + $0x268] sm:$0xff]
    %v2935 = vld [vmem:[#allocation2 + $0x270] sm:$0xff]
    %v2936 = vld [vmem:[#allocation2 + $0x278] sm:$0xff]
    %v2937 = vld [vmem:[#allocation2 + $0x280] sm:$0xff]
    %v2938 = vld [vmem:[#allocation2 + $0x288] sm:$0xff]
    %v2939 = vld [vmem:[#allocation2 + $0x290] sm:$0xff]
    %v2940 = vld [vmem:[#allocation2 + $0x298] sm:$0xff]
    %v2941 = vld [vmem:[#allocation2 + $0x2a0] sm:$0xff]
    %v2942 = vld [vmem:[#allocation2 + $0x2a8] sm:$0xff]
    %v2943 = vld [vmem:[#allocation2 + $0x2b0] sm:$0xff]
    %v2944 = vld [vmem:[#allocation2 + $0x2b8] sm:$0xff]
    %v2945 = vld [vmem:[#allocation2 + $0x2c0] sm:$0xff]
    %v2946 = vld [vmem:[#allocation2 + $0x2c8] sm:$0xff]
    %v2947 = vld [vmem:[#allocation2 + $0x2d0] sm:$0xff]
    %v2948 = vld [vmem:[#allocation2 + $0x2d8] sm:$0xff]
    %v2949 = vld [vmem:[#allocation2 + $0x2e0] sm:$0xff]
    %v2950 = vld [vmem:[#allocation2 + $0x2e8] sm:$0xff]
    %v2951 = vld [vmem:[#allocation2 + $0x2f0] sm:$0xff]
    %v2952 = vld [vmem:[#allocation2 + $0x2f8] sm:$0xff]
    %v2953 = vld [vmem:[#allocation2 + $0x300] sm:$0xff]
    %v2954 = vld [vmem:[#allocation2 + $0x308] sm:$0xff]
    %v2955 = vld [vmem:[#allocation2 + $0x310] sm:$0xff]
    %v2956 = vld [vmem:[#allocation2 + $0x318] sm:$0xff]
    %v2957 = vld [vmem:[#allocation2 + $0x320] sm:$0xff]
    %v2958 = vld [vmem:[#allocation2 + $0x328] sm:$0xff]
    %v2959 = vld [vmem:[#allocation2 + $0x330] sm:$0xff]
    %v2960 = vld [vmem:[#allocation2 + $0x338] sm:$0xff]
    %v2961 = vld [vmem:[#allocation2 + $0x340] sm:$0xff]
    %v2962 = vld [vmem:[#allocation2 + $0x348] sm:$0xff]
    %v2963 = vld [vmem:[#allocation2 + $0x350] sm:$0xff]
    %v2964 = vld [vmem:[#allocation2 + $0x358] sm:$0xff]
    %v2965 = vld [vmem:[#allocation2 + $0x360] sm:$0xff]
    %v2966 = vld [vmem:[#allocation2 + $0x368] sm:$0xff]
    %v2967 = vld [vmem:[#allocation2 + $0x370] sm:$0xff]
    %v2968 = vld [vmem:[#allocation2 + $0x378] sm:$0xff]
    %v2969 = vld [vmem:[#allocation2 + $0x380] sm:$0xff]
    %v2970 = vld [vmem:[#allocation2 + $0x388] sm:$0xff]
    %v2971 = vld [vmem:[#allocation2 + $0x390] sm:$0xff]
    %v2972 = vld [vmem:[#allocation2 + $0x398] sm:$0xff]
    %v2973 = vld [vmem:[#allocation2 + $0x3a0] sm:$0xff]
    %v2974 = vld [vmem:[#allocation2 + $0x3a8] sm:$0xff]
    %v2975 = vld [vmem:[#allocation2 + $0x3b0] sm:$0xff]
    %v2976 = vld [vmem:[#allocation2 + $0x3b8] sm:$0xff]
    %v2977 = vld [vmem:[#allocation2 + $0x3c0] sm:$0xff]
    %v2978 = vld [vmem:[#allocation2 + $0x3c8] sm:$0xff]
    %v2979 = vld [vmem:[#allocation2 + $0x3d0] sm:$0xff]
    %v2980 = vld [vmem:[#allocation2 + $0x3d8] sm:$0xff]
    %v2981 = vld [vmem:[#allocation2 + $0x3e0] sm:$0xff]
    %v2982 = vld [vmem:[#allocation2 + $0x3e8] sm:$0xff]
    %v2983 = vld [vmem:[#allocation2 + $0x3f0] sm:$0xff]
    %v2984 = vld [vmem:[#allocation2 + $0x3f8] sm:$0xff]
    %s2985 = scalar_lea.vmem [#allocation8], 1
    %v2986 = vld [vmem:[%s2985] ss:$4 sm:$0xff]
    %v2988 = vlaneseq
    %v2989 = vshrl.u32 %v2988, 7
    %v2990 = vsub.s32 0, %v2989
    %v2991 = vrot.slane %v2986, %v2990
    %v2992 = vlaneseq
    %v2993 = vshrl.u32 %v2992, 7
    %v2994 = vsub.s32 1, %v2993
    %v2995 = vrot.slane %v2986, %v2994
    %v2996 = vlaneseq
    %v2997 = vshrl.u32 %v2996, 7
    %v2998 = vsub.s32 2, %v2997
    %v2999 = vrot.slane %v2986, %v2998
    %v3000 = vlaneseq
    %v3001 = vshrl.u32 %v3000, 7
    %v3002 = vsub.s32 3, %v3001
    %v3003 = vrot.slane %v2986, %v3002
    %v3004 = vlaneseq
    %v3005 = vshrl.u32 %v3004, 7
    %v3006 = vsub.s32 4, %v3005
    %v3007 = vrot.slane %v2986, %v3006
    %v3008 = vlaneseq
    %v3009 = vshrl.u32 %v3008, 7
    %v3010 = vsub.s32 5, %v3009
    %v3011 = vrot.slane %v2986, %v3010
    %v3012 = vlaneseq
    %v3013 = vshrl.u32 %v3012, 7
    %v3014 = vsub.s32 6, %v3013
    %v3015 = vrot.slane %v2986, %v3014
    %v3016 = vlaneseq
    %v3017 = vshrl.u32 %v3016, 7
    %v3018 = vsub.s32 7, %v3017
    %v3019 = vrot.slane %v2986, %v3018
    %v3156 = vunpack.c.l.b16 %v2857
    %v3157 = vunpack.c.h.b16 %v2857
    %v3158 = vunpack.c.l.b16 %v2858
    %v3159 = vunpack.c.h.b16 %v2858
    %v3160 = vunpack.c.l.b16 %v2859
    %v3161 = vunpack.c.h.b16 %v2859
    %v3162 = vunpack.c.l.b16 %v2860
    %v3163 = vunpack.c.h.b16 %v2860
    %v3164 = vunpack.c.l.b16 %v2861
    %v3165 = vunpack.c.h.b16 %v2861
    %v3166 = vunpack.c.l.b16 %v2862
    %v3167 = vunpack.c.h.b16 %v2862
    %v3168 = vunpack.c.l.b16 %v2863
    %v3169 = vunpack.c.h.b16 %v2863
    %v3170 = vunpack.c.l.b16 %v2864
    %v3171 = vunpack.c.h.b16 %v2864
    %v3172 = vunpack.c.l.b16 %v2865
    %v3173 = vunpack.c.h.b16 %v2865
    %v3174 = vunpack.c.l.b16 %v2866
    %v3175 = vunpack.c.h.b16 %v2866
    %v3176 = vunpack.c.l.b16 %v2867
    %v3177 = vunpack.c.h.b16 %v2867
    %v3178 = vunpack.c.l.b16 %v2868
    %v3179 = vunpack.c.h.b16 %v2868
    %v3180 = vunpack.c.l.b16 %v2869
    %v3181 = vunpack.c.h.b16 %v2869
    %v3182 = vunpack.c.l.b16 %v2870
    %v3183 = vunpack.c.h.b16 %v2870
    %v3184 = vunpack.c.l.b16 %v2871
    %v3185 = vunpack.c.h.b16 %v2871
    %v3186 = vunpack.c.l.b16 %v2872
    %v3187 = vunpack.c.h.b16 %v2872
    %v3188 = vunpack.c.l.b16 %v2873
    %v3189 = vunpack.c.h.b16 %v2873
    %v3190 = vunpack.c.l.b16 %v2874
    %v3191 = vunpack.c.h.b16 %v2874
    %v3192 = vunpack.c.l.b16 %v2875
    %v3193 = vunpack.c.h.b16 %v2875
    %v3194 = vunpack.c.l.b16 %v2876
    %v3195 = vunpack.c.h.b16 %v2876
    %v3196 = vunpack.c.l.b16 %v2877
    %v3197 = vunpack.c.h.b16 %v2877
    %v3198 = vunpack.c.l.b16 %v2878
    %v3199 = vunpack.c.h.b16 %v2878
    %v3200 = vunpack.c.l.b16 %v2879
    %v3201 = vunpack.c.h.b16 %v2879
    %v3202 = vunpack.c.l.b16 %v2880
    %v3203 = vunpack.c.h.b16 %v2880
    %v3204 = vunpack.c.l.b16 %v2881
    %v3205 = vunpack.c.h.b16 %v2881
    %v3206 = vunpack.c.l.b16 %v2882
    %v3207 = vunpack.c.h.b16 %v2882
    %v3208 = vunpack.c.l.b16 %v2883
    %v3209 = vunpack.c.h.b16 %v2883
    %v3210 = vunpack.c.l.b16 %v2884
    %v3211 = vunpack.c.h.b16 %v2884
    %v3212 = vunpack.c.l.b16 %v2885
    %v3213 = vunpack.c.h.b16 %v2885
    %v3214 = vunpack.c.l.b16 %v2886
    %v3215 = vunpack.c.h.b16 %v2886
    %v3216 = vunpack.c.l.b16 %v2887
    %v3217 = vunpack.c.h.b16 %v2887
    %v3218 = vunpack.c.l.b16 %v2888
    %v3219 = vunpack.c.h.b16 %v2888
    %v3220 = vunpack.c.l.b16 %v2889
    %v3221 = vunpack.c.h.b16 %v2889
    %v3222 = vunpack.c.l.b16 %v2890
    %v3223 = vunpack.c.h.b16 %v2890
    %v3224 = vunpack.c.l.b16 %v2891
    %v3225 = vunpack.c.h.b16 %v2891
    %v3226 = vunpack.c.l.b16 %v2892
    %v3227 = vunpack.c.h.b16 %v2892
    %v3228 = vunpack.c.l.b16 %v2893
    %v3229 = vunpack.c.h.b16 %v2893
    %v3230 = vunpack.c.l.b16 %v2894
    %v3231 = vunpack.c.h.b16 %v2894
    %v3232 = vunpack.c.l.b16 %v2895
    %v3233 = vunpack.c.h.b16 %v2895
    %v3234 = vunpack.c.l.b16 %v2896
    %v3235 = vunpack.c.h.b16 %v2896
    %v3236 = vunpack.c.l.b16 %v2897
    %v3237 = vunpack.c.h.b16 %v2897
    %v3238 = vunpack.c.l.b16 %v2898
    %v3239 = vunpack.c.h.b16 %v2898
    %v3240 = vunpack.c.l.b16 %v2899
    %v3241 = vunpack.c.h.b16 %v2899
    %v3242 = vunpack.c.l.b16 %v2900
    %v3243 = vunpack.c.h.b16 %v2900
    %v3244 = vunpack.c.l.b16 %v2901
    %v3245 = vunpack.c.h.b16 %v2901
    %v3246 = vunpack.c.l.b16 %v2902
    %v3247 = vunpack.c.h.b16 %v2902
    %v3248 = vunpack.c.l.b16 %v2903
    %v3249 = vunpack.c.h.b16 %v2903
    %v3250 = vunpack.c.l.b16 %v2904
    %v3251 = vunpack.c.h.b16 %v2904
    %v3252 = vunpack.c.l.b16 %v2905
    %v3253 = vunpack.c.h.b16 %v2905
    %v3254 = vunpack.c.l.b16 %v2906
    %v3255 = vunpack.c.h.b16 %v2906
    %v3256 = vunpack.c.l.b16 %v2907
    %v3257 = vunpack.c.h.b16 %v2907
    %v3258 = vunpack.c.l.b16 %v2908
    %v3259 = vunpack.c.h.b16 %v2908
    %v3260 = vunpack.c.l.b16 %v2909
    %v3261 = vunpack.c.h.b16 %v2909
    %v3262 = vunpack.c.l.b16 %v2910
    %v3263 = vunpack.c.h.b16 %v2910
    %v3264 = vunpack.c.l.b16 %v2911
    %v3265 = vunpack.c.h.b16 %v2911
    %v3266 = vunpack.c.l.b16 %v2912
    %v3267 = vunpack.c.h.b16 %v2912
    %v3268 = vunpack.c.l.b16 %v2913
    %v3269 = vunpack.c.h.b16 %v2913
    %v3270 = vunpack.c.l.b16 %v2914
    %v3271 = vunpack.c.h.b16 %v2914
    %v3272 = vunpack.c.l.b16 %v2915
    %v3273 = vunpack.c.h.b16 %v2915
    %v3274 = vunpack.c.l.b16 %v2916
    %v3275 = vunpack.c.h.b16 %v2916
    %v3276 = vunpack.c.l.b16 %v2917
    %v3277 = vunpack.c.h.b16 %v2917
    %v3278 = vunpack.c.l.b16 %v2918
    %v3279 = vunpack.c.h.b16 %v2918
    %v3280 = vunpack.c.l.b16 %v2919
    %v3281 = vunpack.c.h.b16 %v2919
    %v3282 = vunpack.c.l.b16 %v2920
    %v3283 = vunpack.c.h.b16 %v2920
    %v3284 = vunpack.c.l.b16 %v2921
    %v3285 = vunpack.c.h.b16 %v2921
    %v3286 = vunpack.c.l.b16 %v2922
    %v3287 = vunpack.c.h.b16 %v2922
    %v3288 = vunpack.c.l.b16 %v2923
    %v3289 = vunpack.c.h.b16 %v2923
    %v3290 = vunpack.c.l.b16 %v2924
    %v3291 = vunpack.c.h.b16 %v2924
    %v3292 = vunpack.c.l.b16 %v2925
    %v3293 = vunpack.c.h.b16 %v2925
    %v3294 = vunpack.c.l.b16 %v2926
    %v3295 = vunpack.c.h.b16 %v2926
    %v3296 = vunpack.c.l.b16 %v2927
    %v3297 = vunpack.c.h.b16 %v2927
    %v3298 = vunpack.c.l.b16 %v2928
    %v3299 = vunpack.c.h.b16 %v2928
    %v3300 = vunpack.c.l.b16 %v2929
    %v3301 = vunpack.c.h.b16 %v2929
    %v3302 = vunpack.c.l.b16 %v2930
    %v3303 = vunpack.c.h.b16 %v2930
    %v3304 = vunpack.c.l.b16 %v2931
    %v3305 = vunpack.c.h.b16 %v2931
    %v3306 = vunpack.c.l.b16 %v2932
    %v3307 = vunpack.c.h.b16 %v2932
    %v3308 = vunpack.c.l.b16 %v2933
    %v3309 = vunpack.c.h.b16 %v2933
    %v3310 = vunpack.c.l.b16 %v2934
    %v3311 = vunpack.c.h.b16 %v2934
    %v3312 = vunpack.c.l.b16 %v2935
    %v3313 = vunpack.c.h.b16 %v2935
    %v3314 = vunpack.c.l.b16 %v2936
    %v3315 = vunpack.c.h.b16 %v2936
    %v3316 = vunpack.c.l.b16 %v2937
    %v3317 = vunpack.c.h.b16 %v2937
    %v3318 = vunpack.c.l.b16 %v2938
    %v3319 = vunpack.c.h.b16 %v2938
    %v3320 = vunpack.c.l.b16 %v2939
    %v3321 = vunpack.c.h.b16 %v2939
    %v3322 = vunpack.c.l.b16 %v2940
    %v3323 = vunpack.c.h.b16 %v2940
    %v3324 = vunpack.c.l.b16 %v2941
    %v3325 = vunpack.c.h.b16 %v2941
    %v3326 = vunpack.c.l.b16 %v2942
    %v3327 = vunpack.c.h.b16 %v2942
    %v3328 = vunpack.c.l.b16 %v2943
    %v3329 = vunpack.c.h.b16 %v2943
    %v3330 = vunpack.c.l.b16 %v2944
    %v3331 = vunpack.c.h.b16 %v2944
    %v3332 = vunpack.c.l.b16 %v2945
    %v3333 = vunpack.c.h.b16 %v2945
    %v3334 = vunpack.c.l.b16 %v2946
    %v3335 = vunpack.c.h.b16 %v2946
    %v3336 = vunpack.c.l.b16 %v2947
    %v3337 = vunpack.c.h.b16 %v2947
    %v3338 = vunpack.c.l.b16 %v2948
    %v3339 = vunpack.c.h.b16 %v2948
    %v3340 = vunpack.c.l.b16 %v2949
    %v3341 = vunpack.c.h.b16 %v2949
    %v3342 = vunpack.c.l.b16 %v2950
    %v3343 = vunpack.c.h.b16 %v2950
    %v3344 = vunpack.c.l.b16 %v2951
    %v3345 = vunpack.c.h.b16 %v2951
    %v3346 = vunpack.c.l.b16 %v2952
    %v3347 = vunpack.c.h.b16 %v2952
    %v3348 = vunpack.c.l.b16 %v2953
    %v3349 = vunpack.c.h.b16 %v2953
    %v3350 = vunpack.c.l.b16 %v2954
    %v3351 = vunpack.c.h.b16 %v2954
    %v3352 = vunpack.c.l.b16 %v2955
    %v3353 = vunpack.c.h.b16 %v2955
    %v3354 = vunpack.c.l.b16 %v2956
    %v3355 = vunpack.c.h.b16 %v2956
    %v3356 = vunpack.c.l.b16 %v2957
    %v3357 = vunpack.c.h.b16 %v2957
    %v3358 = vunpack.c.l.b16 %v2958
    %v3359 = vunpack.c.h.b16 %v2958
    %v3360 = vunpack.c.l.b16 %v2959
    %v3361 = vunpack.c.h.b16 %v2959
    %v3362 = vunpack.c.l.b16 %v2960
    %v3363 = vunpack.c.h.b16 %v2960
    %v3364 = vunpack.c.l.b16 %v2961
    %v3365 = vunpack.c.h.b16 %v2961
    %v3366 = vunpack.c.l.b16 %v2962
    %v3367 = vunpack.c.h.b16 %v2962
    %v3368 = vunpack.c.l.b16 %v2963
    %v3369 = vunpack.c.h.b16 %v2963
    %v3370 = vunpack.c.l.b16 %v2964
    %v3371 = vunpack.c.h.b16 %v2964
    %v3372 = vunpack.c.l.b16 %v2965
    %v3373 = vunpack.c.h.b16 %v2965
    %v3374 = vunpack.c.l.b16 %v2966
    %v3375 = vunpack.c.h.b16 %v2966
    %v3376 = vunpack.c.l.b16 %v2967
    %v3377 = vunpack.c.h.b16 %v2967
    %v3378 = vunpack.c.l.b16 %v2968
    %v3379 = vunpack.c.h.b16 %v2968
    %v3380 = vunpack.c.l.b16 %v2969
    %v3381 = vunpack.c.h.b16 %v2969
    %v3382 = vunpack.c.l.b16 %v2970
    %v3383 = vunpack.c.h.b16 %v2970
    %v3384 = vunpack.c.l.b16 %v2971
    %v3385 = vunpack.c.h.b16 %v2971
    %v3386 = vunpack.c.l.b16 %v2972
    %v3387 = vunpack.c.h.b16 %v2972
    %v3388 = vunpack.c.l.b16 %v2973
    %v3389 = vunpack.c.h.b16 %v2973
    %v3390 = vunpack.c.l.b16 %v2974
    %v3391 = vunpack.c.h.b16 %v2974
    %v3392 = vunpack.c.l.b16 %v2975
    %v3393 = vunpack.c.h.b16 %v2975
    %v3394 = vunpack.c.l.b16 %v2976
    %v3395 = vunpack.c.h.b16 %v2976
    %v3396 = vunpack.c.l.b16 %v2977
    %v3397 = vunpack.c.h.b16 %v2977
    %v3398 = vunpack.c.l.b16 %v2978
    %v3399 = vunpack.c.h.b16 %v2978
    %v3400 = vunpack.c.l.b16 %v2979
    %v3401 = vunpack.c.h.b16 %v2979
    %v3402 = vunpack.c.l.b16 %v2980
    %v3403 = vunpack.c.h.b16 %v2980
    %v3404 = vunpack.c.l.b16 %v2981
    %v3405 = vunpack.c.h.b16 %v2981
    %v3406 = vunpack.c.l.b16 %v2982
    %v3407 = vunpack.c.h.b16 %v2982
    %v3408 = vunpack.c.l.b16 %v2983
    %v3409 = vunpack.c.h.b16 %v2983
    %v3410 = vunpack.c.l.b16 %v2984
    %v3411 = vunpack.c.h.b16 %v2984
    %v3412 = vpack.c.b16 %v3164, %v3156
    %v3413 = vpack.c.b16 %v3165, %v3157
    %v3414 = vpack.c.b16 %v3166, %v3158
    %v3415 = vpack.c.b16 %v3167, %v3159
    %v3416 = vpack.c.b16 %v3168, %v3160
    %v3417 = vpack.c.b16 %v3169, %v3161
    %v3418 = vpack.c.b16 %v3170, %v3162
    %v3419 = vpack.c.b16 %v3171, %v3163
    %v3420 = vpack.c.b16 %v3180, %v3172
    %v3421 = vpack.c.b16 %v3181, %v3173
    %v3422 = vpack.c.b16 %v3182, %v3174
    %v3423 = vpack.c.b16 %v3183, %v3175
    %v3424 = vpack.c.b16 %v3184, %v3176
    %v3425 = vpack.c.b16 %v3185, %v3177
    %v3426 = vpack.c.b16 %v3186, %v3178
    %v3427 = vpack.c.b16 %v3187, %v3179
    %v3428 = vpack.c.b16 %v3196, %v3188
    %v3429 = vpack.c.b16 %v3197, %v3189
    %v3430 = vpack.c.b16 %v3198, %v3190
    %v3431 = vpack.c.b16 %v3199, %v3191
    %v3432 = vpack.c.b16 %v3200, %v3192
    %v3433 = vpack.c.b16 %v3201, %v3193
    %v3434 = vpack.c.b16 %v3202, %v3194
    %v3435 = vpack.c.b16 %v3203, %v3195
    %v3436 = vpack.c.b16 %v3212, %v3204
    %v3437 = vpack.c.b16 %v3213, %v3205
    %v3438 = vpack.c.b16 %v3214, %v3206
    %v3439 = vpack.c.b16 %v3215, %v3207
    %v3440 = vpack.c.b16 %v3216, %v3208
    %v3441 = vpack.c.b16 %v3217, %v3209
    %v3442 = vpack.c.b16 %v3218, %v3210
    %v3443 = vpack.c.b16 %v3219, %v3211
    %v3444 = vpack.c.b16 %v3228, %v3220
    %v3445 = vpack.c.b16 %v3229, %v3221
    %v3446 = vpack.c.b16 %v3230, %v3222
    %v3447 = vpack.c.b16 %v3231, %v3223
    %v3448 = vpack.c.b16 %v3232, %v3224
    %v3449 = vpack.c.b16 %v3233, %v3225
    %v3450 = vpack.c.b16 %v3234, %v3226
    %v3451 = vpack.c.b16 %v3235, %v3227
    %v3452 = vpack.c.b16 %v3244, %v3236
    %v3453 = vpack.c.b16 %v3245, %v3237
    %v3454 = vpack.c.b16 %v3246, %v3238
    %v3455 = vpack.c.b16 %v3247, %v3239
    %v3456 = vpack.c.b16 %v3248, %v3240
    %v3457 = vpack.c.b16 %v3249, %v3241
    %v3458 = vpack.c.b16 %v3250, %v3242
    %v3459 = vpack.c.b16 %v3251, %v3243
    %v3460 = vpack.c.b16 %v3260, %v3252
    %v3461 = vpack.c.b16 %v3261, %v3253
    %v3462 = vpack.c.b16 %v3262, %v3254
    %v3463 = vpack.c.b16 %v3263, %v3255
    %v3464 = vpack.c.b16 %v3264, %v3256
    %v3465 = vpack.c.b16 %v3265, %v3257
    %v3466 = vpack.c.b16 %v3266, %v3258
    %v3467 = vpack.c.b16 %v3267, %v3259
    %v3468 = vpack.c.b16 %v3276, %v3268
    %v3469 = vpack.c.b16 %v3277, %v3269
    %v3470 = vpack.c.b16 %v3278, %v3270
    %v3471 = vpack.c.b16 %v3279, %v3271
    %v3472 = vpack.c.b16 %v3280, %v3272
    %v3473 = vpack.c.b16 %v3281, %v3273
    %v3474 = vpack.c.b16 %v3282, %v3274
    %v3475 = vpack.c.b16 %v3283, %v3275
    %v3476 = vpack.c.b16 %v3292, %v3284
    %v3477 = vpack.c.b16 %v3293, %v3285
    %v3478 = vpack.c.b16 %v3294, %v3286
    %v3479 = vpack.c.b16 %v3295, %v3287
    %v3480 = vpack.c.b16 %v3296, %v3288
    %v3481 = vpack.c.b16 %v3297, %v3289
    %v3482 = vpack.c.b16 %v3298, %v3290
    %v3483 = vpack.c.b16 %v3299, %v3291
    %v3484 = vpack.c.b16 %v3308, %v3300
    %v3485 = vpack.c.b16 %v3309, %v3301
    %v3486 = vpack.c.b16 %v3310, %v3302
    %v3487 = vpack.c.b16 %v3311, %v3303
    %v3488 = vpack.c.b16 %v3312, %v3304
    %v3489 = vpack.c.b16 %v3313, %v3305
    %v3490 = vpack.c.b16 %v3314, %v3306
    %v3491 = vpack.c.b16 %v3315, %v3307
    %v3492 = vpack.c.b16 %v3324, %v3316
    %v3493 = vpack.c.b16 %v3325, %v3317
    %v3494 = vpack.c.b16 %v3326, %v3318
    %v3495 = vpack.c.b16 %v3327, %v3319
    %v3496 = vpack.c.b16 %v3328, %v3320
    %v3497 = vpack.c.b16 %v3329, %v3321
    %v3498 = vpack.c.b16 %v3330, %v3322
    %v3499 = vpack.c.b16 %v3331, %v3323
    %v3500 = vpack.c.b16 %v3340, %v3332
    %v3501 = vpack.c.b16 %v3341, %v3333
    %v3502 = vpack.c.b16 %v3342, %v3334
    %v3503 = vpack.c.b16 %v3343, %v3335
    %v3504 = vpack.c.b16 %v3344, %v3336
    %v3505 = vpack.c.b16 %v3345, %v3337
    %v3506 = vpack.c.b16 %v3346, %v3338
    %v3507 = vpack.c.b16 %v3347, %v3339
    %v3508 = vpack.c.b16 %v3356, %v3348
    %v3509 = vpack.c.b16 %v3357, %v3349
    %v3510 = vpack.c.b16 %v3358, %v3350
    %v3511 = vpack.c.b16 %v3359, %v3351
    %v3512 = vpack.c.b16 %v3360, %v3352
    %v3513 = vpack.c.b16 %v3361, %v3353
    %v3514 = vpack.c.b16 %v3362, %v3354
    %v3515 = vpack.c.b16 %v3363, %v3355
    %v3516 = vpack.c.b16 %v3372, %v3364
    %v3517 = vpack.c.b16 %v3373, %v3365
    %v3518 = vpack.c.b16 %v3374, %v3366
    %v3519 = vpack.c.b16 %v3375, %v3367
    %v3520 = vpack.c.b16 %v3376, %v3368
    %v3521 = vpack.c.b16 %v3377, %v3369
    %v3522 = vpack.c.b16 %v3378, %v3370
    %v3523 = vpack.c.b16 %v3379, %v3371
    %v3524 = vpack.c.b16 %v3388, %v3380
    %v3525 = vpack.c.b16 %v3389, %v3381
    %v3526 = vpack.c.b16 %v3390, %v3382
    %v3527 = vpack.c.b16 %v3391, %v3383
    %v3528 = vpack.c.b16 %v3392, %v3384
    %v3529 = vpack.c.b16 %v3393, %v3385
    %v3530 = vpack.c.b16 %v3394, %v3386
    %v3531 = vpack.c.b16 %v3395, %v3387
    %v3532 = vpack.c.b16 %v3404, %v3396
    %v3533 = vpack.c.b16 %v3405, %v3397
    %v3534 = vpack.c.b16 %v3406, %v3398
    %v3535 = vpack.c.b16 %v3407, %v3399
    %v3536 = vpack.c.b16 %v3408, %v3400
    %v3537 = vpack.c.b16 %v3409, %v3401
    %v3538 = vpack.c.b16 %v3410, %v3402
    %v3539 = vpack.c.b16 %v3411, %v3403
    %3668 = vmatprep.subr.bf16.mxu0 %v3469
    %3669 = vmatpush1.bf16.msra.mxu0 %v3468
    %3670 = vmatprep.subr.bf16.mxu0 %v3461
    %3671 = vmatpush1.bf16.msra.mxu0 %v3460
    %3672 = vmatprep.subr.bf16.mxu0 %v3453
    %3673 = vmatpush1.bf16.msra.mxu0 %v3452
    %3674 = vmatprep.subr.bf16.mxu0 %v3445
    %3675 = vmatpush1.bf16.msra.mxu0 %v3444
    %3676 = vmatprep.subr.bf16.mxu0 %v3437
    %3677 = vmatpush1.bf16.msra.mxu0 %v3436
    %3678 = vmatprep.subr.bf16.mxu0 %v3429
    %3679 = vmatpush1.bf16.msra.mxu0 %v3428
    %3680 = vmatprep.subr.bf16.mxu0 %v3421
    %3681 = vmatpush1.bf16.msra.mxu0 %v3420
    %3682 = vmatprep.subr.bf16.mxu0 %v3413
    %3683 = vmatpush1.bf16.msra.mxu0 %v3412
    %3684 = vmatprep.subr.bf16.mxu0 %v3533
    %3685 = vmatpush2.bf16.msra.mxu0 %v3532
    %3686 = vmatprep.subr.bf16.mxu0 %v3525
    %3687 = vmatpush2.bf16.msra.mxu0 %v3524
    %3688 = vmatprep.subr.bf16.mxu0 %v3517
    %3689 = vmatpush2.bf16.msra.mxu0 %v3516
    %3690 = vmatprep.subr.bf16.mxu0 %v3509
    %3691 = vmatpush2.bf16.msra.mxu0 %v3508
    %3692 = vmatprep.subr.bf16.mxu0 %v3501
    %3693 = vmatpush2.bf16.msra.mxu0 %v3500
    %3694 = vmatprep.subr.bf16.mxu0 %v3493
    %3695 = vmatpush2.bf16.msra.mxu0 %v3492
    %3696 = vmatprep.subr.bf16.mxu0 %v3485
    %3697 = vmatpush2.bf16.msra.mxu0 %v3484
    %3698 = vmatprep.subr.bf16.mxu0 %v3477
    %3699 = vmatpush2.bf16.msra.mxu0 %v3476
    %3700 = vmatprep.mubr.bf16.mxu0 %v2850
    %3701 = vmatmul.mubr.bf16.gmra.mxu0 %v2849
    %v3702 = vpop.f32.mrf.mxu0
    %v3703 = vadd.f32 %v2991, %v3702
    %v3704 = vpop.f32.mrf.mxu0
    %v3705 = vadd.f32 %v2995, %v3704
    %v3706 = vpop.f32.mrf.mxu0
    %v3707 = vadd.f32 %v2991, %v3706
    %v3708 = vpop.f32.mrf.mxu0
    %v3709 = vadd.f32 %v2995, %v3708
    %3710 = vmatprep.mubr.bf16.mxu0 %v2852
    %3711 = vmatmul.mubr.bf16.gmra.mxu0 %v2851
    %v3712 = vpop.f32.mrf.mxu0
    %v3713 = vadd.f32 %v2991, %v3712
    %v3714 = vpop.f32.mrf.mxu0
    %v3715 = vadd.f32 %v2995, %v3714
    %v3716 = vpop.f32.mrf.mxu0
    %v3717 = vadd.f32 %v2991, %v3716
    %v3718 = vpop.f32.mrf.mxu0
    %v3719 = vadd.f32 %v2995, %v3718
    %3720 = vmatprep.mubr.bf16.mxu0 %v2854
    %3721 = vmatmul.mubr.bf16.gmra.mxu0 %v2853
    %v3722 = vpop.f32.mrf.mxu0
    %v3723 = vadd.f32 %v2991, %v3722
    %v3724 = vpop.f32.mrf.mxu0
    %v3725 = vadd.f32 %v2995, %v3724
    %v3726 = vpop.f32.mrf.mxu0
    %v3727 = vadd.f32 %v2991, %v3726
    %v3728 = vpop.f32.mrf.mxu0
    %v3729 = vadd.f32 %v2995, %v3728
    %3730 = vmatprep.mubr.bf16.mxu0 %v2856
    %3731 = vmatmul.mubr.bf16.gmra.mxu0 %v2855
    %v3732 = vpop.f32.mrf.mxu0
    %v3733 = vadd.f32 %v2991, %v3732
    %v3734 = vpop.f32.mrf.mxu0
    %v3735 = vadd.f32 %v2995, %v3734
    %v3736 = vpop.f32.mrf.mxu0
    %v3737 = vadd.f32 %v2991, %v3736
    %v3738 = vpop.f32.mrf.mxu0
    %v3739 = vadd.f32 %v2995, %v3738
    %3740 = vdwg.mxu0
    %3741 = vmatprep.subr.bf16.mxu0 %v3471
    %3742 = vmatpush1.bf16.msra.mxu0 %v3470
    %3743 = vmatprep.subr.bf16.mxu0 %v3463
    %3744 = vmatpush1.bf16.msra.mxu0 %v3462
    %3745 = vmatprep.subr.bf16.mxu0 %v3455
    %3746 = vmatpush1.bf16.msra.mxu0 %v3454
    %3747 = vmatprep.subr.bf16.mxu0 %v3447
    %3748 = vmatpush1.bf16.msra.mxu0 %v3446
    %3749 = vmatprep.subr.bf16.mxu0 %v3439
    %3750 = vmatpush1.bf16.msra.mxu0 %v3438
    %3751 = vmatprep.subr.bf16.mxu0 %v3431
    %3752 = vmatpush1.bf16.msra.mxu0 %v3430
    %3753 = vmatprep.subr.bf16.mxu0 %v3423
    %3754 = vmatpush1.bf16.msra.mxu0 %v3422
    %3755 = vmatprep.subr.bf16.mxu0 %v3415
    %3756 = vmatpush1.bf16.msra.mxu0 %v3414
    %3757 = vmatprep.subr.bf16.mxu0 %v3535
    %3758 = vmatpush2.bf16.msra.mxu0 %v3534
    %3759 = vmatprep.subr.bf16.mxu0 %v3527
    %3760 = vmatpush2.bf16.msra.mxu0 %v3526
    %3761 = vmatprep.subr.bf16.mxu0 %v3519
    %3762 = vmatpush2.bf16.msra.mxu0 %v3518
    %3763 = vmatprep.subr.bf16.mxu0 %v3511
    %3764 = vmatpush2.bf16.msra.mxu0 %v3510
    %3765 = vmatprep.subr.bf16.mxu0 %v3503
    %3766 = vmatpush2.bf16.msra.mxu0 %v3502
    %3767 = vmatprep.subr.bf16.mxu0 %v3495
    %3768 = vmatpush2.bf16.msra.mxu0 %v3494
    %3769 = vmatprep.subr.bf16.mxu0 %v3487
    %3770 = vmatpush2.bf16.msra.mxu0 %v3486
    %3771 = vmatprep.subr.bf16.mxu0 %v3479
    %3772 = vmatpush2.bf16.msra.mxu0 %v3478
    %3773 = vmatprep.mubr.bf16.mxu0 %v2850
    %3774 = vmatmul.mubr.bf16.gmra.mxu0 %v2849
    %v3775 = vpop.f32.mrf.mxu0
    %v3776 = vadd.f32 %v2999, %v3775
    %v3777 = vpop.f32.mrf.mxu0
    %v3778 = vadd.f32 %v3003, %v3777
    %v3779 = vpop.f32.mrf.mxu0
    %v3780 = vadd.f32 %v2999, %v3779
    %v3781 = vpop.f32.mrf.mxu0
    %v3782 = vadd.f32 %v3003, %v3781
    %3783 = vmatprep.mubr.bf16.mxu0 %v2852
    %3784 = vmatmul.mubr.bf16.gmra.mxu0 %v2851
    %v3785 = vpop.f32.mrf.mxu0
    %v3786 = vadd.f32 %v2999, %v3785
    %v3787 = vpop.f32.mrf.mxu0
    %v3788 = vadd.f32 %v3003, %v3787
    %v3789 = vpop.f32.mrf.mxu0
    %v3790 = vadd.f32 %v2999, %v3789
    %v3791 = vpop.f32.mrf.mxu0
    %v3792 = vadd.f32 %v3003, %v3791
    %3793 = vmatprep.mubr.bf16.mxu0 %v2854
    %3794 = vmatmul.mubr.bf16.gmra.mxu0 %v2853
    %v3795 = vpop.f32.mrf.mxu0
    %v3796 = vadd.f32 %v2999, %v3795
    %v3797 = vpop.f32.mrf.mxu0
    %v3798 = vadd.f32 %v3003, %v3797
    %v3799 = vpop.f32.mrf.mxu0
    %v3800 = vadd.f32 %v2999, %v3799
    %v3801 = vpop.f32.mrf.mxu0
    %v3802 = vadd.f32 %v3003, %v3801
    %3803 = vmatprep.mubr.bf16.mxu0 %v2856
    %3804 = vmatmul.mubr.bf16.gmra.mxu0 %v2855
    %v3805 = vpop.f32.mrf.mxu0
    %v3806 = vadd.f32 %v2999, %v3805
    %v3807 = vpop.f32.mrf.mxu0
    %v3808 = vadd.f32 %v3003, %v3807
    %v3809 = vpop.f32.mrf.mxu0
    %v3810 = vadd.f32 %v2999, %v3809
    %v3811 = vpop.f32.mrf.mxu0
    %v3812 = vadd.f32 %v3003, %v3811
    %3813 = vdwg.mxu0
    %3814 = vmatprep.subr.bf16.mxu0 %v3473
    %3815 = vmatpush1.bf16.msra.mxu0 %v3472
    %3816 = vmatprep.subr.bf16.mxu0 %v3465
    %3817 = vmatpush1.bf16.msra.mxu0 %v3464
    %3818 = vmatprep.subr.bf16.mxu0 %v3457
    %3819 = vmatpush1.bf16.msra.mxu0 %v3456
    %3820 = vmatprep.subr.bf16.mxu0 %v3449
    %3821 = vmatpush1.bf16.msra.mxu0 %v3448
    %3822 = vmatprep.subr.bf16.mxu0 %v3441
    %3823 = vmatpush1.bf16.msra.mxu0 %v3440
    %3824 = vmatprep.subr.bf16.mxu0 %v3433
    %3825 = vmatpush1.bf16.msra.mxu0 %v3432
    %3826 = vmatprep.subr.bf16.mxu0 %v3425
    %3827 = vmatpush1.bf16.msra.mxu0 %v3424
    %3828 = vmatprep.subr.bf16.mxu0 %v3417
    %3829 = vmatpush1.bf16.msra.mxu0 %v3416
    %3830 = vmatprep.subr.bf16.mxu0 %v3537
    %3831 = vmatpush2.bf16.msra.mxu0 %v3536
    %3832 = vmatprep.subr.bf16.mxu0 %v3529
    %3833 = vmatpush2.bf16.msra.mxu0 %v3528
    %3834 = vmatprep.subr.bf16.mxu0 %v3521
    %3835 = vmatpush2.bf16.msra.mxu0 %v3520
    %3836 = vmatprep.subr.bf16.mxu0 %v3513
    %3837 = vmatpush2.bf16.msra.mxu0 %v3512
    %3838 = vmatprep.subr.bf16.mxu0 %v3505
    %3839 = vmatpush2.bf16.msra.mxu0 %v3504
    %3840 = vmatprep.subr.bf16.mxu0 %v3497
    %3841 = vmatpush2.bf16.msra.mxu0 %v3496
    %3842 = vmatprep.subr.bf16.mxu0 %v3489
    %3843 = vmatpush2.bf16.msra.mxu0 %v3488
    %3844 = vmatprep.subr.bf16.mxu0 %v3481
    %3845 = vmatpush2.bf16.msra.mxu0 %v3480
    %3846 = vmatprep.mubr.bf16.mxu0 %v2850
    %3847 = vmatmul.mubr.bf16.gmra.mxu0 %v2849
    %v3848 = vpop.f32.mrf.mxu0
    %v3849 = vadd.f32 %v3007, %v3848
    %v3850 = vpop.f32.mrf.mxu0
    %v3851 = vadd.f32 %v3011, %v3850
    %v3852 = vpop.f32.mrf.mxu0
    %v3853 = vadd.f32 %v3007, %v3852
    %v3854 = vpop.f32.mrf.mxu0
    %v3855 = vadd.f32 %v3011, %v3854
    %3856 = vmatprep.mubr.bf16.mxu0 %v2852
    %3857 = vmatmul.mubr.bf16.gmra.mxu0 %v2851
    %v3858 = vpop.f32.mrf.mxu0
    %v3859 = vadd.f32 %v3007, %v3858
    %v3860 = vpop.f32.mrf.mxu0
    %v3861 = vadd.f32 %v3011, %v3860
    %v3862 = vpop.f32.mrf.mxu0
    %v3863 = vadd.f32 %v3007, %v3862
    %v3864 = vpop.f32.mrf.mxu0
    %v3865 = vadd.f32 %v3011, %v3864
    %3866 = vmatprep.mubr.bf16.mxu0 %v2854
    %3867 = vmatmul.mubr.bf16.gmra.mxu0 %v2853
    %v3868 = vpop.f32.mrf.mxu0
    %v3869 = vadd.f32 %v3007, %v3868
    %v3870 = vpop.f32.mrf.mxu0
    %v3871 = vadd.f32 %v3011, %v3870
    %v3872 = vpop.f32.mrf.mxu0
    %v3873 = vadd.f32 %v3007, %v3872
    %v3874 = vpop.f32.mrf.mxu0
    %v3875 = vadd.f32 %v3011, %v3874
    %3876 = vmatprep.mubr.bf16.mxu0 %v2856
    %3877 = vmatmul.mubr.bf16.gmra.mxu0 %v2855
    %v3878 = vpop.f32.mrf.mxu0
    %v3879 = vadd.f32 %v3007, %v3878
    %v3880 = vpop.f32.mrf.mxu0
    %v3881 = vadd.f32 %v3011, %v3880
    %v3882 = vpop.f32.mrf.mxu0
    %v3883 = vadd.f32 %v3007, %v3882
    %v3884 = vpop.f32.mrf.mxu0
    %v3885 = vadd.f32 %v3011, %v3884
    %3886 = vdwg.mxu0
    %3887 = vmatprep.subr.bf16.mxu0 %v3475
    %3888 = vmatpush1.bf16.msra.mxu0 %v3474
    %3889 = vmatprep.subr.bf16.mxu0 %v3467
    %3890 = vmatpush1.bf16.msra.mxu0 %v3466
    %3891 = vmatprep.subr.bf16.mxu0 %v3459
    %3892 = vmatpush1.bf16.msra.mxu0 %v3458
    %3893 = vmatprep.subr.bf16.mxu0 %v3451
    %3894 = vmatpush1.bf16.msra.mxu0 %v3450
    %3895 = vmatprep.subr.bf16.mxu0 %v3443
    %3896 = vmatpush1.bf16.msra.mxu0 %v3442
    %3897 = vmatprep.subr.bf16.mxu0 %v3435
    %3898 = vmatpush1.bf16.msra.mxu0 %v3434
    %3899 = vmatprep.subr.bf16.mxu0 %v3427
    %3900 = vmatpush1.bf16.msra.mxu0 %v3426
    %3901 = vmatprep.subr.bf16.mxu0 %v3419
    %3902 = vmatpush1.bf16.msra.mxu0 %v3418
    %3903 = vmatprep.subr.bf16.mxu0 %v3539
    %3904 = vmatpush2.bf16.msra.mxu0 %v3538
    %3905 = vmatprep.subr.bf16.mxu0 %v3531
    %3906 = vmatpush2.bf16.msra.mxu0 %v3530
    %3907 = vmatprep.subr.bf16.mxu0 %v3523
    %3908 = vmatpush2.bf16.msra.mxu0 %v3522
    %3909 = vmatprep.subr.bf16.mxu0 %v3515
    %3910 = vmatpush2.bf16.msra.mxu0 %v3514
    %3911 = vmatprep.subr.bf16.mxu0 %v3507
    %3912 = vmatpush2.bf16.msra.mxu0 %v3506
    %3913 = vmatprep.subr.bf16.mxu0 %v3499
    %3914 = vmatpush2.bf16.msra.mxu0 %v3498
    %3915 = vmatprep.subr.bf16.mxu0 %v3491
    %3916 = vmatpush2.bf16.msra.mxu0 %v3490
    %3917 = vmatprep.subr.bf16.mxu0 %v3483
    %3918 = vmatpush2.bf16.msra.mxu0 %v3482
    %3919 = vmatprep.mubr.bf16.mxu0 %v2850
    %3920 = vmatmul.mubr.bf16.gmra.mxu0 %v2849
    %v3921 = vpop.f32.mrf.mxu0
    %v3922 = vadd.f32 %v3015, %v3921
    %v3923 = vpop.f32.mrf.mxu0
    %v3924 = vadd.f32 %v3019, %v3923
    %v3925 = vpop.f32.mrf.mxu0
    %v3926 = vadd.f32 %v3015, %v3925
    %v3927 = vpop.f32.mrf.mxu0
    %v3928 = vadd.f32 %v3019, %v3927
    %3929 = vmatprep.mubr.bf16.mxu0 %v2852
    %3930 = vmatmul.mubr.bf16.gmra.mxu0 %v2851
    %v3931 = vpop.f32.mrf.mxu0
    %v3932 = vadd.f32 %v3015, %v3931
    %v3933 = vpop.f32.mrf.mxu0
    %v3934 = vadd.f32 %v3019, %v3933
    %v3935 = vpop.f32.mrf.mxu0
    %v3936 = vadd.f32 %v3015, %v3935
    %v3937 = vpop.f32.mrf.mxu0
    %v3938 = vadd.f32 %v3019, %v3937
    %3939 = vmatprep.mubr.bf16.mxu0 %v2854
    %3940 = vmatmul.mubr.bf16.gmra.mxu0 %v2853
    %v3941 = vpop.f32.mrf.mxu0
    %v3942 = vadd.f32 %v3015, %v3941
    %v3943 = vpop.f32.mrf.mxu0
    %v3944 = vadd.f32 %v3019, %v3943
    %v3945 = vpop.f32.mrf.mxu0
    %v3946 = vadd.f32 %v3015, %v3945
    %v3947 = vpop.f32.mrf.mxu0
    %v3948 = vadd.f32 %v3019, %v3947
    %3949 = vmatprep.mubr.bf16.mxu0 %v2856
    %3950 = vmatmul.mubr.bf16.gmra.mxu0 %v2855
    %v3951 = vpop.f32.mrf.mxu0
    %v3952 = vadd.f32 %v3015, %v3951
    %v3953 = vpop.f32.mrf.mxu0
    %v3954 = vadd.f32 %v3019, %v3953
    %v3955 = vpop.f32.mrf.mxu0
    %v3956 = vadd.f32 %v3015, %v3955
    %v3957 = vpop.f32.mrf.mxu0
    %v3958 = vadd.f32 %v3019, %v3957
    %3959 = vdwg.mxu0
    %3960 = vst [vmem:[#allocation3] sm:$0xff] %v3703
    %3961 = vst [vmem:[#allocation3 + $0x8] sm:$0xff] %v3705
    %3962 = vst [vmem:[#allocation3 + $0x10] sm:$0xff] %v3776
    %3963 = vst [vmem:[#allocation3 + $0x18] sm:$0xff] %v3778
    %3964 = vst [vmem:[#allocation3 + $0x20] sm:$0xff] %v3849
    %3965 = vst [vmem:[#allocation3 + $0x28] sm:$0xff] %v3851
    %3966 = vst [vmem:[#allocation3 + $0x30] sm:$0xff] %v3922
    %3967 = vst [vmem:[#allocation3 + $0x38] sm:$0xff] %v3924
    %3968 = vst [vmem:[#allocation3 + $0x40] sm:$0xff] %v3707
    %3969 = vst [vmem:[#allocation3 + $0x48] sm:$0xff] %v3709
    %3970 = vst [vmem:[#allocation3 + $0x50] sm:$0xff] %v3780
    %3971 = vst [vmem:[#allocation3 + $0x58] sm:$0xff] %v3782
    %3972 = vst [vmem:[#allocation3 + $0x60] sm:$0xff] %v3853
    %3973 = vst [vmem:[#allocation3 + $0x68] sm:$0xff] %v3855
    %3974 = vst [vmem:[#allocation3 + $0x70] sm:$0xff] %v3926
    %3975 = vst [vmem:[#allocation3 + $0x78] sm:$0xff] %v3928
    %3976 = vst [vmem:[#allocation3 + $0x80] sm:$0xff] %v3713
    %3977 = vst [vmem:[#allocation3 + $0x88] sm:$0xff] %v3715
    %3978 = vst [vmem:[#allocation3 + $0x90] sm:$0xff] %v3786
    %3979 = vst [vmem:[#allocation3 + $0x98] sm:$0xff] %v3788
    %3980 = vst [vmem:[#allocation3 + $0xa0] sm:$0xff] %v3859
    %3981 = vst [vmem:[#allocation3 + $0xa8] sm:$0xff] %v3861
    %3982 = vst [vmem:[#allocation3 + $0xb0] sm:$0xff] %v3932
    %3983 = vst [vmem:[#allocation3 + $0xb8] sm:$0xff] %v3934
    %3984 = vst [vmem:[#allocation3 + $0xc0] sm:$0xff] %v3717
    %3985 = vst [vmem:[#allocation3 + $0xc8] sm:$0xff] %v3719
    %3986 = vst [vmem:[#allocation3 + $0xd0] sm:$0xff] %v3790
    %3987 = vst [vmem:[#allocation3 + $0xd8] sm:$0xff] %v3792
    %3988 = vst [vmem:[#allocation3 + $0xe0] sm:$0xff] %v3863
    %3989 = vst [vmem:[#allocation3 + $0xe8] sm:$0xff] %v3865
    %3990 = vst [vmem:[#allocation3 + $0xf0] sm:$0xff] %v3936
    %3991 = vst [vmem:[#allocation3 + $0xf8] sm:$0xff] %v3938
    %3992 = vst [vmem:[#allocation3 + $0x100] sm:$0xff] %v3723
    %3993 = vst [vmem:[#allocation3 + $0x108] sm:$0xff] %v3725
    %3994 = vst [vmem:[#allocation3 + $0x110] sm:$0xff] %v3796
    %3995 = vst [vmem:[#allocation3 + $0x118] sm:$0xff] %v3798
    %3996 = vst [vmem:[#allocation3 + $0x120] sm:$0xff] %v3869
    %3997 = vst [vmem:[#allocation3 + $0x128] sm:$0xff] %v3871
    %3998 = vst [vmem:[#allocation3 + $0x130] sm:$0xff] %v3942
    %3999 = vst [vmem:[#allocation3 + $0x138] sm:$0xff] %v3944
    %4000 = vst [vmem:[#allocation3 + $0x140] sm:$0xff] %v3727
    %4001 = vst [vmem:[#allocation3 + $0x148] sm:$0xff] %v3729
    %4002 = vst [vmem:[#allocation3 + $0x150] sm:$0xff] %v3800
    %4003 = vst [vmem:[#allocation3 + $0x158] sm:$0xff] %v3802
    %4004 = vst [vmem:[#allocation3 + $0x160] sm:$0xff] %v3873
    %4005 = vst [vmem:[#allocation3 + $0x168] sm:$0xff] %v3875
    %4006 = vst [vmem:[#allocation3 + $0x170] sm:$0xff] %v3946
    %4007 = vst [vmem:[#allocation3 + $0x178] sm:$0xff] %v3948
    %4008 = vst [vmem:[#allocation3 + $0x180] sm:$0xff] %v3733
    %4009 = vst [vmem:[#allocation3 + $0x188] sm:$0xff] %v3735
    %4010 = vst [vmem:[#allocation3 + $0x190] sm:$0xff] %v3806
    %4011 = vst [vmem:[#allocation3 + $0x198] sm:$0xff] %v3808
    %4012 = vst [vmem:[#allocation3 + $0x1a0] sm:$0xff] %v3879
    %4013 = vst [vmem:[#allocation3 + $0x1a8] sm:$0xff] %v3881
    %4014 = vst [vmem:[#allocation3 + $0x1b0] sm:$0xff] %v3952
    %4015 = vst [vmem:[#allocation3 + $0x1b8] sm:$0xff] %v3954
    %4016 = vst [vmem:[#allocation3 + $0x1c0] sm:$0xff] %v3737
    %4017 = vst [vmem:[#allocation3 + $0x1c8] sm:$0xff] %v3739
    %4018 = vst [vmem:[#allocation3 + $0x1d0] sm:$0xff] %v3810
    %4019 = vst [vmem:[#allocation3 + $0x1d8] sm:$0xff] %v3812
    %4020 = vst [vmem:[#allocation3 + $0x1e0] sm:$0xff] %v3883
    %4021 = vst [vmem:[#allocation3 + $0x1e8] sm:$0xff] %v3885
    %4022 = vst [vmem:[#allocation3 + $0x1f0] sm:$0xff] %v3956
    %4023 = vst [vmem:[#allocation3 + $0x1f8] sm:$0xff] %v3958
    %v4024 = vld [vmem:[#allocation2 + $0x400] sm:$0xff]
    %v4025 = vld [vmem:[#allocation2 + $0x408] sm:$0xff]
    %v4026 = vld [vmem:[#allocation2 + $0x420] sm:$0xff]
    %v4027 = vld [vmem:[#allocation2 + $0x428] sm:$0xff]
    %v4028 = vld [vmem:[#allocation2 + $0x440] sm:$0xff]
    %v4029 = vld [vmem:[#allocation2 + $0x448] sm:$0xff]
    %v4030 = vld [vmem:[#allocation2 + $0x460] sm:$0xff]
    %v4031 = vld [vmem:[#allocation2 + $0x468] sm:$0xff]
    %v4032 = vld [vmem:[#allocation2 + $0x480] sm:$0xff]
    %v4033 = vld [vmem:[#allocation2 + $0x488] sm:$0xff]
    %v4034 = vld [vmem:[#allocation2 + $0x4a0] sm:$0xff]
    %v4035 = vld [vmem:[#allocation2 + $0x4a8] sm:$0xff]
    %v4036 = vld [vmem:[#allocation2 + $0x4c0] sm:$0xff]
    %v4037 = vld [vmem:[#allocation2 + $0x4c8] sm:$0xff]
    %v4038 = vld [vmem:[#allocation2 + $0x4e0] sm:$0xff]
    %v4039 = vld [vmem:[#allocation2 + $0x4e8] sm:$0xff]
    %v4040 = vld [vmem:[#allocation2 + $0x500] sm:$0xff]
    %v4041 = vld [vmem:[#allocation2 + $0x508] sm:$0xff]
    %v4042 = vld [vmem:[#allocation2 + $0x520] sm:$0xff]
    %v4043 = vld [vmem:[#allocation2 + $0x528] sm:$0xff]
    %v4044 = vld [vmem:[#allocation2 + $0x540] sm:$0xff]
    %v4045 = vld [vmem:[#allocation2 + $0x548] sm:$0xff]
    %v4046 = vld [vmem:[#allocation2 + $0x560] sm:$0xff]
    %v4047 = vld [vmem:[#allocation2 + $0x568] sm:$0xff]
    %v4048 = vld [vmem:[#allocation2 + $0x580] sm:$0xff]
    %v4049 = vld [vmem:[#allocation2 + $0x588] sm:$0xff]
    %v4050 = vld [vmem:[#allocation2 + $0x5a0] sm:$0xff]
    %v4051 = vld [vmem:[#allocation2 + $0x5a8] sm:$0xff]
    %v4052 = vld [vmem:[#allocation2 + $0x5c0] sm:$0xff]
    %v4053 = vld [vmem:[#allocation2 + $0x5c8] sm:$0xff]
    %v4054 = vld [vmem:[#allocation2 + $0x5e0] sm:$0xff]
    %v4055 = vld [vmem:[#allocation2 + $0x5e8] sm:$0xff]
    %v4056 = vld [vmem:[#allocation2 + $0x410] sm:$0xff]
    %v4057 = vld [vmem:[#allocation2 + $0x418] sm:$0xff]
    %v4058 = vld [vmem:[#allocation2 + $0x430] sm:$0xff]
    %v4059 = vld [vmem:[#allocation2 + $0x438] sm:$0xff]
    %v4060 = vld [vmem:[#allocation2 + $0x450] sm:$0xff]
    %v4061 = vld [vmem:[#allocation2 + $0x458] sm:$0xff]
    %v4062 = vld [vmem:[#allocation2 + $0x470] sm:$0xff]
    %v4063 = vld [vmem:[#allocation2 + $0x478] sm:$0xff]
    %v4064 = vld [vmem:[#allocation2 + $0x490] sm:$0xff]
    %v4065 = vld [vmem:[#allocation2 + $0x498] sm:$0xff]
    %v4066 = vld [vmem:[#allocation2 + $0x4b0] sm:$0xff]
    %v4067 = vld [vmem:[#allocation2 + $0x4b8] sm:$0xff]
    %v4068 = vld [vmem:[#allocation2 + $0x4d0] sm:$0xff]
    %v4069 = vld [vmem:[#allocation2 + $0x4d8] sm:$0xff]
    %v4070 = vld [vmem:[#allocation2 + $0x4f0] sm:$0xff]
    %v4071 = vld [vmem:[#allocation2 + $0x4f8] sm:$0xff]
    %v4072 = vld [vmem:[#allocation2 + $0x510] sm:$0xff]
    %v4073 = vld [vmem:[#allocation2 + $0x518] sm:$0xff]
    %v4074 = vld [vmem:[#allocation2 + $0x530] sm:$0xff]
    %v4075 = vld [vmem:[#allocation2 + $0x538] sm:$0xff]
    %v4076 = vld [vmem:[#allocation2 + $0x550] sm:$0xff]
    %v4077 = vld [vmem:[#allocation2 + $0x558] sm:$0xff]
    %v4078 = vld [vmem:[#allocation2 + $0x570] sm:$0xff]
    %v4079 = vld [vmem:[#allocation2 + $0x578] sm:$0xff]
    %v4080 = vld [vmem:[#allocation2 + $0x590] sm:$0xff]
    %v4081 = vld [vmem:[#allocation2 + $0x598] sm:$0xff]
    %v4082 = vld [vmem:[#allocation2 + $0x5b0] sm:$0xff]
    %v4083 = vld [vmem:[#allocation2 + $0x5b8] sm:$0xff]
    %v4084 = vld [vmem:[#allocation2 + $0x5d0] sm:$0xff]
    %v4085 = vld [vmem:[#allocation2 + $0x5d8] sm:$0xff]
    %v4086 = vld [vmem:[#allocation2 + $0x5f0] sm:$0xff]
    %v4087 = vld [vmem:[#allocation2 + $0x5f8] sm:$0xff]
    %v4088 = vld [vmem:[#allocation3] sm:$0xff]
    %v4089 = vld [vmem:[#allocation3 + $0x8] sm:$0xff]
    %v4090 = vld [vmem:[#allocation3 + $0x10] sm:$0xff]
    %v4091 = vld [vmem:[#allocation3 + $0x18] sm:$0xff]
    %v4124 = vunpack.c.l.b16 %v4024
    %v4125 = vunpack.c.h.b16 %v4024
    %v4126 = vunpack.c.l.b16 %v4025
    %v4127 = vunpack.c.h.b16 %v4025
    %v4128 = vunpack.c.l.b16 %v4026
    %v4129 = vunpack.c.h.b16 %v4026
    %v4130 = vunpack.c.l.b16 %v4027
    %v4131 = vunpack.c.h.b16 %v4027
    %v4132 = vunpack.c.l.b16 %v4028
    %v4133 = vunpack.c.h.b16 %v4028
    %v4134 = vunpack.c.l.b16 %v4029
    %v4135 = vunpack.c.h.b16 %v4029
    %v4136 = vunpack.c.l.b16 %v4030
    %v4137 = vunpack.c.h.b16 %v4030
    %v4138 = vunpack.c.l.b16 %v4031
    %v4139 = vunpack.c.h.b16 %v4031
    %v4140 = vunpack.c.l.b16 %v4032
    %v4141 = vunpack.c.h.b16 %v4032
    %v4142 = vunpack.c.l.b16 %v4033
    %v4143 = vunpack.c.h.b16 %v4033
    %v4144 = vunpack.c.l.b16 %v4034
    %v4145 = vunpack.c.h.b16 %v4034
    %v4146 = vunpack.c.l.b16 %v4035
    %v4147 = vunpack.c.h.b16 %v4035
    %v4148 = vunpack.c.l.b16 %v4036
    %v4149 = vunpack.c.h.b16 %v4036
    %v4150 = vunpack.c.l.b16 %v4037
    %v4151 = vunpack.c.h.b16 %v4037
    %v4152 = vunpack.c.l.b16 %v4038
    %v4153 = vunpack.c.h.b16 %v4038
    %v4154 = vunpack.c.l.b16 %v4039
    %v4155 = vunpack.c.h.b16 %v4039
    %v4156 = vunpack.c.l.b16 %v4040
    %v4157 = vunpack.c.h.b16 %v4040
    %v4158 = vunpack.c.l.b16 %v4041
    %v4159 = vunpack.c.h.b16 %v4041
    %v4160 = vunpack.c.l.b16 %v4042
    %v4161 = vunpack.c.h.b16 %v4042
    %v4162 = vunpack.c.l.b16 %v4043
    %v4163 = vunpack.c.h.b16 %v4043
    %v4164 = vunpack.c.l.b16 %v4044
    %v4165 = vunpack.c.h.b16 %v4044
    %v4166 = vunpack.c.l.b16 %v4045
    %v4167 = vunpack.c.h.b16 %v4045
    %v4168 = vunpack.c.l.b16 %v4046
    %v4169 = vunpack.c.h.b16 %v4046
    %v4170 = vunpack.c.l.b16 %v4047
    %v4171 = vunpack.c.h.b16 %v4047
    %v4172 = vunpack.c.l.b16 %v4048
    %v4173 = vunpack.c.h.b16 %v4048
    %v4174 = vunpack.c.l.b16 %v4049
    %v4175 = vunpack.c.h.b16 %v4049
    %v4176 = vunpack.c.l.b16 %v4050
    %v4177 = vunpack.c.h.b16 %v4050
    %v4178 = vunpack.c.l.b16 %v4051
    %v4179 = vunpack.c.h.b16 %v4051
    %v4180 = vunpack.c.l.b16 %v4052
    %v4181 = vunpack.c.h.b16 %v4052
    %v4182 = vunpack.c.l.b16 %v4053
    %v4183 = vunpack.c.h.b16 %v4053
    %v4184 = vunpack.c.l.b16 %v4054
    %v4185 = vunpack.c.h.b16 %v4054
    %v4186 = vunpack.c.l.b16 %v4055
    %v4187 = vunpack.c.h.b16 %v4055
    %v4188 = vpack.c.b16 %v4128, %v4124
    %v4189 = vpack.c.b16 %v4129, %v4125
    %v4190 = vpack.c.b16 %v4130, %v4126
    %v4191 = vpack.c.b16 %v4131, %v4127
    %v4192 = vpack.c.b16 %v4136, %v4132
    %v4193 = vpack.c.b16 %v4137, %v4133
    %v4194 = vpack.c.b16 %v4138, %v4134
    %v4195 = vpack.c.b16 %v4139, %v4135
    %v4196 = vpack.c.b16 %v4144, %v4140
    %v4197 = vpack.c.b16 %v4145, %v4141
    %v4198 = vpack.c.b16 %v4146, %v4142
    %v4199 = vpack.c.b16 %v4147, %v4143
    %v4200 = vpack.c.b16 %v4152, %v4148
    %v4201 = vpack.c.b16 %v4153, %v4149
    %v4202 = vpack.c.b16 %v4154, %v4150
    %v4203 = vpack.c.b16 %v4155, %v4151
    %v4204 = vpack.c.b16 %v4160, %v4156
    %v4205 = vpack.c.b16 %v4161, %v4157
    %v4206 = vpack.c.b16 %v4162, %v4158
    %v4207 = vpack.c.b16 %v4163, %v4159
    %v4208 = vpack.c.b16 %v4168, %v4164
    %v4209 = vpack.c.b16 %v4169, %v4165
    %v4210 = vpack.c.b16 %v4170, %v4166
    %v4211 = vpack.c.b16 %v4171, %v4167
    %v4212 = vpack.c.b16 %v4176, %v4172
    %v4213 = vpack.c.b16 %v4177, %v4173
    %v4214 = vpack.c.b16 %v4178, %v4174
    %v4215 = vpack.c.b16 %v4179, %v4175
    %v4216 = vpack.c.b16 %v4184, %v4180
    %v4217 = vpack.c.b16 %v4185, %v4181
    %v4218 = vpack.c.b16 %v4186, %v4182
    %v4219 = vpack.c.b16 %v4187, %v4183
    %4252 = vmatprep.subr.bf16.mxu0 %v4217
    %4253 = vmatpush1.bf16.msra.mxu0 %v4216
    %4254 = vmatprep.subr.bf16.mxu0 %v4213
    %4255 = vmatpush1.bf16.msra.mxu0 %v4212
    %4256 = vmatprep.subr.bf16.mxu0 %v4209
    %4257 = vmatpush1.bf16.msra.mxu0 %v4208
    %4258 = vmatprep.subr.bf16.mxu0 %v4205
    %4259 = vmatpush1.bf16.msra.mxu0 %v4204
    %4260 = vmatprep.subr.bf16.mxu0 %v4201
    %4261 = vmatpush1.bf16.msra.mxu0 %v4200
    %4262 = vmatprep.subr.bf16.mxu0 %v4197
    %4263 = vmatpush1.bf16.msra.mxu0 %v4196
    %4264 = vmatprep.subr.bf16.mxu0 %v4193
    %4265 = vmatpush1.bf16.msra.mxu0 %v4192
    %4266 = vmatprep.subr.bf16.mxu0 %v4189
    %4267 = vmatpush1.bf16.msra.mxu0 %v4188
    %4268 = vmatprep.subr.bf16.mxu0 0
    %4269 = vmatpush2.bf16.msra.mxu0 0
    %4270 = vmatprep.subr.bf16.mxu0 0
    %4271 = vmatpush2.bf16.msra.mxu0 0
    %4272 = vmatprep.subr.bf16.mxu0 0
    %4273 = vmatpush2.bf16.msra.mxu0 0
    %4274 = vmatprep.subr.bf16.mxu0 0
    %4275 = vmatpush2.bf16.msra.mxu0 0
    %4276 = vmatprep.subr.bf16.mxu0 0
    %4277 = vmatpush2.bf16.msra.mxu0 0
    %4278 = vmatprep.subr.bf16.mxu0 0
    %4279 = vmatpush2.bf16.msra.mxu0 0
    %4280 = vmatprep.subr.bf16.mxu0 0
    %4281 = vmatpush2.bf16.msra.mxu0 0
    %4282 = vmatprep.subr.bf16.mxu0 0
    %4283 = vmatpush2.bf16.msra.mxu0 0
    %4284 = vmatprep.mubr.bf16.mxu0 0
    %4285 = vmatmul.mubr.bf16.gmra.mxu0 0
    %v4286 = vpop.f32.mrf.mxu0
    %v4287 = vadd.f32 0.0, %v4286
    %v4288 = vpop.f32.mrf.mxu0
    %v4289 = vadd.f32 0.0, %v4288
    %v4290 = vpop.f32.mrf.mxu0
    %v4291 = vpop.f32.mrf.mxu0
    %4292 = vdwg.mxu0
    %4293 = vmatprep.subr.bf16.mxu0 %v4219
    %4294 = vmatpush1.bf16.msra.mxu0 %v4218
    %4295 = vmatprep.subr.bf16.mxu0 %v4215
    %4296 = vmatpush1.bf16.msra.mxu0 %v4214
    %4297 = vmatprep.subr.bf16.mxu0 %v4211
    %4298 = vmatpush1.bf16.msra.mxu0 %v4210
    %4299 = vmatprep.subr.bf16.mxu0 %v4207
    %4300 = vmatpush1.bf16.msra.mxu0 %v4206
    %4301 = vmatprep.subr.bf16.mxu0 %v4203
    %4302 = vmatpush1.bf16.msra.mxu0 %v4202
    %4303 = vmatprep.subr.bf16.mxu0 %v4199
    %4304 = vmatpush1.bf16.msra.mxu0 %v4198
    %4305 = vmatprep.subr.bf16.mxu0 %v4195
    %4306 = vmatpush1.bf16.msra.mxu0 %v4194
    %4307 = vmatprep.subr.bf16.mxu0 %v4191
    %4308 = vmatpush1.bf16.msra.mxu0 %v4190
    %4309 = vmatprep.subr.bf16.mxu0 0
    %4310 = vmatpush2.bf16.msra.mxu0 0
    %4311 = vmatprep.subr.bf16.mxu0 0
    %4312 = vmatpush2.bf16.msra.mxu0 0
    %4313 = vmatprep.subr.bf16.mxu0 0
    %4314 = vmatpush2.bf16.msra.mxu0 0
    %4315 = vmatprep.subr.bf16.mxu0 0
    %4316 = vmatpush2.bf16.msra.mxu0 0
    %4317 = vmatprep.subr.bf16.mxu0 0
    %4318 = vmatpush2.bf16.msra.mxu0 0
    %4319 = vmatprep.subr.bf16.mxu0 0
    %4320 = vmatpush2.bf16.msra.mxu0 0
    %4321 = vmatprep.subr.bf16.mxu0 0
    %4322 = vmatpush2.bf16.msra.mxu0 0
    %4323 = vmatprep.subr.bf16.mxu0 0
    %4324 = vmatpush2.bf16.msra.mxu0 0
    %4325 = vmatprep.mubr.bf16.mxu0 0
    %4326 = vmatmul.mubr.bf16.gmra.mxu0 0
    %v4327 = vpop.f32.mrf.mxu0
    %v4328 = vadd.f32 0.0, %v4327
    %v4329 = vpop.f32.mrf.mxu0
    %v4330 = vadd.f32 0.0, %v4329
    %v4331 = vpop.f32.mrf.mxu0
    %v4332 = vpop.f32.mrf.mxu0
    %4333 = vdwg.mxu0
    %v4334 = vadd.f32 %v4088, %v4287
    %v4335 = vadd.f32 %v4089, %v4289
    %v4336 = vadd.f32 %v4090, %v4328
    %v4337 = vadd.f32 %v4091, %v4330
    %v4338 = vld [vmem:[#allocation3 + $0x1e0] sm:$0xff]
    %v4339 = vld [vmem:[#allocation3 + $0x1e8] sm:$0xff]
    %v4340 = vld [vmem:[#allocation3 + $0x1f0] sm:$0xff]
    %v4341 = vld [vmem:[#allocation3 + $0x1f8] sm:$0xff]
    %v4374 = vunpack.c.l.b16 %v4056
    %v4375 = vunpack.c.h.b16 %v4056
    %v4376 = vunpack.c.l.b16 %v4057
    %v4377 = vunpack.c.h.b16 %v4057
    %v4378 = vunpack.c.l.b16 %v4058
    %v4379 = vunpack.c.h.b16 %v4058
    %v4380 = vunpack.c.l.b16 %v4059
    %v4381 = vunpack.c.h.b16 %v4059
    %v4382 = vunpack.c.l.b16 %v4060
    %v4383 = vunpack.c.h.b16 %v4060
    %v4384 = vunpack.c.l.b16 %v4061
    %v4385 = vunpack.c.h.b16 %v4061
    %v4386 = vunpack.c.l.b16 %v4062
    %v4387 = vunpack.c.h.b16 %v4062
    %v4388 = vunpack.c.l.b16 %v4063
    %v4389 = vunpack.c.h.b16 %v4063
    %v4390 = vunpack.c.l.b16 %v4064
    %v4391 = vunpack.c.h.b16 %v4064
    %v4392 = vunpack.c.l.b16 %v4065
    %v4393 = vunpack.c.h.b16 %v4065
    %v4394 = vunpack.c.l.b16 %v4066
    %v4395 = vunpack.c.h.b16 %v4066
    %v4396 = vunpack.c.l.b16 %v4067
    %v4397 = vunpack.c.h.b16 %v4067
    %v4398 = vunpack.c.l.b16 %v4068
    %v4399 = vunpack.c.h.b16 %v4068
    %v4400 = vunpack.c.l.b16 %v4069
    %v4401 = vunpack.c.h.b16 %v4069
    %v4402 = vunpack.c.l.b16 %v4070
    %v4403 = vunpack.c.h.b16 %v4070
    %v4404 = vunpack.c.l.b16 %v4071
    %v4405 = vunpack.c.h.b16 %v4071
    %v4406 = vunpack.c.l.b16 %v4072
    %v4407 = vunpack.c.h.b16 %v4072
    %v4408 = vunpack.c.l.b16 %v4073
    %v4409 = vunpack.c.h.b16 %v4073
    %v4410 = vunpack.c.l.b16 %v4074
    %v4411 = vunpack.c.h.b16 %v4074
    %v4412 = vunpack.c.l.b16 %v4075
    %v4413 = vunpack.c.h.b16 %v4075
    %v4414 = vunpack.c.l.b16 %v4076
    %v4415 = vunpack.c.h.b16 %v4076
    %v4416 = vunpack.c.l.b16 %v4077
    %v4417 = vunpack.c.h.b16 %v4077
    %v4418 = vunpack.c.l.b16 %v4078
    %v4419 = vunpack.c.h.b16 %v4078
    %v4420 = vunpack.c.l.b16 %v4079
    %v4421 = vunpack.c.h.b16 %v4079
    %v4422 = vunpack.c.l.b16 %v4080
    %v4423 = vunpack.c.h.b16 %v4080
    %v4424 = vunpack.c.l.b16 %v4081
    %v4425 = vunpack.c.h.b16 %v4081
    %v4426 = vunpack.c.l.b16 %v4082
    %v4427 = vunpack.c.h.b16 %v4082
    %v4428 = vunpack.c.l.b16 %v4083
    %v4429 = vunpack.c.h.b16 %v4083
    %v4430 = vunpack.c.l.b16 %v4084
    %v4431 = vunpack.c.h.b16 %v4084
    %v4432 = vunpack.c.l.b16 %v4085
    %v4433 = vunpack.c.h.b16 %v4085
    %v4434 = vunpack.c.l.b16 %v4086
    %v4435 = vunpack.c.h.b16 %v4086
    %v4436 = vunpack.c.l.b16 %v4087
    %v4437 = vunpack.c.h.b16 %v4087
    %v4438 = vpack.c.b16 %v4378, %v4374
    %v4439 = vpack.c.b16 %v4379, %v4375
    %v4440 = vpack.c.b16 %v4380, %v4376
    %v4441 = vpack.c.b16 %v4381, %v4377
    %v4442 = vpack.c.b16 %v4386, %v4382
    %v4443 = vpack.c.b16 %v4387, %v4383
    %v4444 = vpack.c.b16 %v4388, %v4384
    %v4445 = vpack.c.b16 %v4389, %v4385
    %v4446 = vpack.c.b16 %v4394, %v4390
    %v4447 = vpack.c.b16 %v4395, %v4391
    %v4448 = vpack.c.b16 %v4396, %v4392
    %v4449 = vpack.c.b16 %v4397, %v4393
    %v4450 = vpack.c.b16 %v4402, %v4398
    %v4451 = vpack.c.b16 %v4403, %v4399
    %v4452 = vpack.c.b16 %v4404, %v4400
    %v4453 = vpack.c.b16 %v4405, %v4401
    %v4454 = vpack.c.b16 %v4410, %v4406
    %v4455 = vpack.c.b16 %v4411, %v4407
    %v4456 = vpack.c.b16 %v4412, %v4408
    %v4457 = vpack.c.b16 %v4413, %v4409
    %v4458 = vpack.c.b16 %v4418, %v4414
    %v4459 = vpack.c.b16 %v4419, %v4415
    %v4460 = vpack.c.b16 %v4420, %v4416
    %v4461 = vpack.c.b16 %v4421, %v4417
    %v4462 = vpack.c.b16 %v4426, %v4422
    %v4463 = vpack.c.b16 %v4427, %v4423
    %v4464 = vpack.c.b16 %v4428, %v4424
    %v4465 = vpack.c.b16 %v4429, %v4425
    %v4466 = vpack.c.b16 %v4434, %v4430
    %v4467 = vpack.c.b16 %v4435, %v4431
    %v4468 = vpack.c.b16 %v4436, %v4432
    %v4469 = vpack.c.b16 %v4437, %v4433
    %4502 = vmatprep.subr.bf16.mxu0 %v4467
    %4503 = vmatpush1.bf16.msra.mxu0 %v4466
    %4504 = vmatprep.subr.bf16.mxu0 %v4463
    %4505 = vmatpush1.bf16.msra.mxu0 %v4462
    %4506 = vmatprep.subr.bf16.mxu0 %v4459
    %4507 = vmatpush1.bf16.msra.mxu0 %v4458
    %4508 = vmatprep.subr.bf16.mxu0 %v4455
    %4509 = vmatpush1.bf16.msra.mxu0 %v4454
    %4510 = vmatprep.subr.bf16.mxu0 %v4451
    %4511 = vmatpush1.bf16.msra.mxu0 %v4450
    %4512 = vmatprep.subr.bf16.mxu0 %v4447
    %4513 = vmatpush1.bf16.msra.mxu0 %v4446
    %4514 = vmatprep.subr.bf16.mxu0 %v4443
    %4515 = vmatpush1.bf16.msra.mxu0 %v4442
    %4516 = vmatprep.subr.bf16.mxu0 %v4439
    %4517 = vmatpush1.bf16.msra.mxu0 %v4438
    %4518 = vmatprep.subr.bf16.mxu0 0
    %4519 = vmatpush2.bf16.msra.mxu0 0
    %4520 = vmatprep.subr.bf16.mxu0 0
    %4521 = vmatpush2.bf16.msra.mxu0 0
    %4522 = vmatprep.subr.bf16.mxu0 0
    %4523 = vmatpush2.bf16.msra.mxu0 0
    %4524 = vmatprep.subr.bf16.mxu0 0
    %4525 = vmatpush2.bf16.msra.mxu0 0
    %4526 = vmatprep.subr.bf16.mxu0 0
    %4527 = vmatpush2.bf16.msra.mxu0 0
    %4528 = vmatprep.subr.bf16.mxu0 0
    %4529 = vmatpush2.bf16.msra.mxu0 0
    %4530 = vmatprep.subr.bf16.mxu0 0
    %4531 = vmatpush2.bf16.msra.mxu0 0
    %4532 = vmatprep.subr.bf16.mxu0 0
    %4533 = vmatpush2.bf16.msra.mxu0 0
    %4534 = vmatprep.mubr.bf16.mxu0 0
    %4535 = vmatmul.mubr.bf16.gmra.mxu0 0
    %v4536 = vpop.f32.mrf.mxu0
    %v4537 = vadd.f32 0.0, %v4536
    %v4538 = vpop.f32.mrf.mxu0
    %v4539 = vadd.f32 0.0, %v4538
    %v4540 = vpop.f32.mrf.mxu0
    %v4541 = vpop.f32.mrf.mxu0
    %4542 = vdwg.mxu0
    %4543 = vmatprep.subr.bf16.mxu0 %v4469
    %4544 = vmatpush1.bf16.msra.mxu0 %v4468
    %4545 = vmatprep.subr.bf16.mxu0 %v4465
    %4546 = vmatpush1.bf16.msra.mxu0 %v4464
    %4547 = vmatprep.subr.bf16.mxu0 %v4461
    %4548 = vmatpush1.bf16.msra.mxu0 %v4460
    %4549 = vmatprep.subr.bf16.mxu0 %v4457
    %4550 = vmatpush1.bf16.msra.mxu0 %v4456
    %4551 = vmatprep.subr.bf16.mxu0 %v4453
    %4552 = vmatpush1.bf16.msra.mxu0 %v4452
    %4553 = vmatprep.subr.bf16.mxu0 %v4449
    %4554 = vmatpush1.bf16.msra.mxu0 %v4448
    %4555 = vmatprep.subr.bf16.mxu0 %v4445
    %4556 = vmatpush1.bf16.msra.mxu0 %v4444
    %4557 = vmatprep.subr.bf16.mxu0 %v4441
    %4558 = vmatpush1.bf16.msra.mxu0 %v4440
    %4559 = vmatprep.subr.bf16.mxu0 0
    %4560 = vmatpush2.bf16.msra.mxu0 0
    %4561 = vmatprep.subr.bf16.mxu0 0
    %4562 = vmatpush2.bf16.msra.mxu0 0
    %4563 = vmatprep.subr.bf16.mxu0 0
    %4564 = vmatpush2.bf16.msra.mxu0 0
    %4565 = vmatprep.subr.bf16.mxu0 0
    %4566 = vmatpush2.bf16.msra.mxu0 0
    %4567 = vmatprep.subr.bf16.mxu0 0
    %4568 = vmatpush2.bf16.msra.mxu0 0
    %4569 = vmatprep.subr.bf16.mxu0 0
    %4570 = vmatpush2.bf16.msra.mxu0 0
    %4571 = vmatprep.subr.bf16.mxu0 0
    %4572 = vmatpush2.bf16.msra.mxu0 0
    %4573 = vmatprep.subr.bf16.mxu0 0
    %4574 = vmatpush2.bf16.msra.mxu0 0
    %4575 = vmatprep.mubr.bf16.mxu0 0
    %4576 = vmatmul.mubr.bf16.gmra.mxu0 0
    %v4577 = vpop.f32.mrf.mxu0
    %v4578 = vadd.f32 0.0, %v4577
    %v4579 = vpop.f32.mrf.mxu0
    %v4580 = vadd.f32 0.0, %v4579
    %v4581 = vpop.f32.mrf.mxu0
    %v4582 = vpop.f32.mrf.mxu0
    %4583 = vdwg.mxu0
    %v4584 = vadd.f32 %v4338, %v4537
    %v4585 = vadd.f32 %v4339, %v4539
    %v4586 = vadd.f32 %v4340, %v4578
    %v4587 = vadd.f32 %v4341, %v4580
    %v4588 = vxor.u32 %v4334, 2147483648
    %v4589 = vmul.f32 %v4588, 1.442695
    %v4590 = vpow.pop %v4589
    %v4591 = vadd.f32 %v4590, 1.0
    %v4592 = vrcp.pop %v4591
    %v4593 = vmul.f32 1.0, %v4592
    %v4594 = vxor.u32 %v4335, 2147483648
    %v4595 = vmul.f32 %v4594, 1.442695
    %v4596 = vpow.pop %v4595
    %v4597 = vadd.f32 %v4596, 1.0
    %v4598 = vrcp.pop %v4597
    %v4599 = vmul.f32 1.0, %v4598
    %v4600 = vtanh.pop %v4336
    %v4601 = vxor.u32 %v4337, 2147483648
    %v4602 = vmul.f32 %v4601, 1.442695
    %v4603 = vpow.pop %v4602
    %v4604 = vadd.f32 %v4603, 1.0
    %v4605 = vrcp.pop %v4604
    %v4606 = vmul.f32 1.0, %v4605
    %v4607 = vmul.f32 %v4599, 0.0
    %v4608 = vmul.f32 %v4593, %v4600
    %v4609 = vadd.f32 %v4607, %v4608
    %v4610 = vtanh.pop %v4609
    %v4611 = vmul.f32 %v4606, %v4610
    %v4612 = vxor.u32 %v4584, 2147483648
    %v4613 = vmul.f32 %v4612, 1.442695
    %v4614 = vpow.pop %v4613
    %v4615 = vadd.f32 %v4614, 1.0
    %v4616 = vrcp.pop %v4615
    %v4617 = vmul.f32 1.0, %v4616
    %v4618 = vxor.u32 %v4585, 2147483648
    %v4619 = vmul.f32 %v4618, 1.442695
    %v4620 = vpow.pop %v4619
    %v4621 = vadd.f32 %v4620, 1.0
    %v4622 = vrcp.pop %v4621
    %v4623 = vmul.f32 1.0, %v4622
    %v4624 = vtanh.pop %v4586
    %v4625 = vxor.u32 %v4587, 2147483648
    %v4626 = vmul.f32 %v4625, 1.442695
    %v4627 = vpow.pop %v4626
    %v4628 = vadd.f32 %v4627, 1.0
    %v4629 = vrcp.pop %v4628
    %v4630 = vmul.f32 1.0, %v4629
    %v4631 = vmul.f32 %v4623, 0.0
    %v4632 = vmul.f32 %v4617, %v4624
    %v4633 = vadd.f32 %v4631, %v4632
    %v4634 = vtanh.pop %v4633
    %v4635 = vmul.f32 %v4630, %v4634
    %v4636 = vpack.c.bf16 %v4611, %v4611
    %v4637 = vpack.c.bf16 %v4635, %v4635
    %4638 = vst [vmem:[#allocation4] sm:$0xff] %v4611
    %4639 = vst [vmem:[#allocation4 + $0x78] sm:$0xff] %v4635
    %v4640 = vld [vmem:[#allocation3 + $0x40] sm:$0xff]
    %v4641 = vld [vmem:[#allocation3 + $0x48] sm:$0xff]
    %v4642 = vld [vmem:[#allocation3 + $0x50] sm:$0xff]
    %v4643 = vld [vmem:[#allocation3 + $0x58] sm:$0xff]
    %4644 = vmatprep.subr.bf16.mxu0 %v4217
    %4645 = vmatpush1.bf16.msra.mxu0 %v4216
    %4646 = vmatprep.subr.bf16.mxu0 %v4213
    %4647 = vmatpush1.bf16.msra.mxu0 %v4212
    %4648 = vmatprep.subr.bf16.mxu0 %v4209
    %4649 = vmatpush1.bf16.msra.mxu0 %v4208
    %4650 = vmatprep.subr.bf16.mxu0 %v4205
    %4651 = vmatpush1.bf16.msra.mxu0 %v4204
    %4652 = vmatprep.subr.bf16.mxu0 %v4201
    %4653 = vmatpush1.bf16.msra.mxu0 %v4200
    %4654 = vmatprep.subr.bf16.mxu0 %v4197
    %4655 = vmatpush1.bf16.msra.mxu0 %v4196
    %4656 = vmatprep.subr.bf16.mxu0 %v4193
    %4657 = vmatpush1.bf16.msra.mxu0 %v4192
    %4658 = vmatprep.subr.bf16.mxu0 %v4189
    %4659 = vmatpush1.bf16.msra.mxu0 %v4188
    %4660 = vmatprep.subr.bf16.mxu0 0
    %4661 = vmatpush2.bf16.msra.mxu0 0
    %4662 = vmatprep.subr.bf16.mxu0 0
    %4663 = vmatpush2.bf16.msra.mxu0 0
    %4664 = vmatprep.subr.bf16.mxu0 0
    %4665 = vmatpush2.bf16.msra.mxu0 0
    %4666 = vmatprep.subr.bf16.mxu0 0
    %4667 = vmatpush2.bf16.msra.mxu0 0
    %4668 = vmatprep.subr.bf16.mxu0 0
    %4669 = vmatpush2.bf16.msra.mxu0 0
    %4670 = vmatprep.subr.bf16.mxu0 0
    %4671 = vmatpush2.bf16.msra.mxu0 0
    %4672 = vmatprep.subr.bf16.mxu0 0
    %4673 = vmatpush2.bf16.msra.mxu0 0
    %4674 = vmatprep.subr.bf16.mxu0 0
    %4675 = vmatpush2.bf16.msra.mxu0 0
    %4676 = vmatprep.mubr.bf16.mxu0 0
    %4677 = vmatmul.mubr.bf16.gmra.mxu0 %v4636
    %v4678 = vpop.f32.mrf.mxu0
    %v4679 = vadd.f32 0.0, %v4678
    %v4680 = vpop.f32.mrf.mxu0
    %v4681 = vadd.f32 0.0, %v4680
    %v4682 = vpop.f32.mrf.mxu0
    %v4683 = vpop.f32.mrf.mxu0
    %4684 = vdwg.mxu0
    %4685 = vmatprep.subr.bf16.mxu0 %v4219
    %4686 = vmatpush1.bf16.msra.mxu0 %v4218
    %4687 = vmatprep.subr.bf16.mxu0 %v4215
    %4688 = vmatpush1.bf16.msra.mxu0 %v4214
    %4689 = vmatprep.subr.bf16.mxu0 %v4211
    %4690 = vmatpush1.bf16.msra.mxu0 %v4210
    %4691 = vmatprep.subr.bf16.mxu0 %v4207
    %4692 = vmatpush1.bf16.msra.mxu0 %v4206
    %4693 = vmatprep.subr.bf16.mxu0 %v4203
    %4694 = vmatpush1.bf16.msra.mxu0 %v4202
    %4695 = vmatprep.subr.bf16.mxu0 %v4199
    %4696 = vmatpush1.bf16.msra.mxu0 %v4198
    %4697 = vmatprep.subr.bf16.mxu0 %v4195
    %4698 = vmatpush1.bf16.msra.mxu0 %v4194
    %4699 = vmatprep.subr.bf16.mxu0 %v4191
    %4700 = vmatpush1.bf16.msra.mxu0 %v4190
    %4701 = vmatprep.subr.bf16.mxu0 0
    %4702 = vmatpush2.bf16.msra.mxu0 0
    %4703 = vmatprep.subr.bf16.mxu0 0
    %4704 = vmatpush2.bf16.msra.mxu0 0
    %4705 = vmatprep.subr.bf16.mxu0 0
    %4706 = vmatpush2.bf16.msra.mxu0 0
    %4707 = vmatprep.subr.bf16.mxu0 0
    %4708 = vmatpush2.bf16.msra.mxu0 0
    %4709 = vmatprep.subr.bf16.mxu0 0
    %4710 = vmatpush2.bf16.msra.mxu0 0
    %4711 = vmatprep.subr.bf16.mxu0 0
    %4712 = vmatpush2.bf16.msra.mxu0 0
    %4713 = vmatprep.subr.bf16.mxu0 0
    %4714 = vmatpush2.bf16.msra.mxu0 0
    %4715 = vmatprep.subr.bf16.mxu0 0
    %4716 = vmatpush2.bf16.msra.mxu0 0
    %4717 = vmatprep.mubr.bf16.mxu0 0
    %4718 = vmatmul.mubr.bf16.gmra.mxu0 %v4636
    %v4719 = vpop.f32.mrf.mxu0
    %v4720 = vadd.f32 0.0, %v4719
    %v4721 = vpop.f32.mrf.mxu0
    %v4722 = vadd.f32 0.0, %v4721
    %v4723 = vpop.f32.mrf.mxu0
    %v4724 = vpop.f32.mrf.mxu0
    %4725 = vdwg.mxu0
    %v4726 = vadd.f32 %v4640, %v4679
    %v4727 = vadd.f32 %v4641, %v4681
    %v4728 = vadd.f32 %v4642, %v4720
    %v4729 = vadd.f32 %v4643, %v4722
    %v4730 = vld [vmem:[#allocation3 + $0x1a0] sm:$0xff]
    %v4731 = vld [vmem:[#allocation3 + $0x1a8] sm:$0xff]
    %v4732 = vld [vmem:[#allocation3 + $0x1b0] sm:$0xff]
    %v4733 = vld [vmem:[#allocation3 + $0x1b8] sm:$0xff]
    %4734 = vmatprep.subr.bf16.mxu0 %v4467
    %4735 = vmatpush1.bf16.msra.mxu0 %v4466
    %4736 = vmatprep.subr.bf16.mxu0 %v4463
    %4737 = vmatpush1.bf16.msra.mxu0 %v4462
    %4738 = vmatprep.subr.bf16.mxu0 %v4459
    %4739 = vmatpush1.bf16.msra.mxu0 %v4458
    %4740 = vmatprep.subr.bf16.mxu0 %v4455
    %4741 = vmatpush1.bf16.msra.mxu0 %v4454
    %4742 = vmatprep.subr.bf16.mxu0 %v4451
    %4743 = vmatpush1.bf16.msra.mxu0 %v4450
    %4744 = vmatprep.subr.bf16.mxu0 %v4447
    %4745 = vmatpush1.bf16.msra.mxu0 %v4446
    %4746 = vmatprep.subr.bf16.mxu0 %v4443
    %4747 = vmatpush1.bf16.msra.mxu0 %v4442
    %4748 = vmatprep.subr.bf16.mxu0 %v4439
    %4749 = vmatpush1.bf16.msra.mxu0 %v4438
    %4750 = vmatprep.subr.bf16.mxu0 0
    %4751 = vmatpush2.bf16.msra.mxu0 0
    %4752 = vmatprep.subr.bf16.mxu0 0
    %4753 = vmatpush2.bf16.msra.mxu0 0
    %4754 = vmatprep.subr.bf16.mxu0 0
    %4755 = vmatpush2.bf16.msra.mxu0 0
    %4756 = vmatprep.subr.bf16.mxu0 0
    %4757 = vmatpush2.bf16.msra.mxu0 0
    %4758 = vmatprep.subr.bf16.mxu0 0
    %4759 = vmatpush2.bf16.msra.mxu0 0
    %4760 = vmatprep.subr.bf16.mxu0 0
    %4761 = vmatpush2.bf16.msra.mxu0 0
    %4762 = vmatprep.subr.bf16.mxu0 0
    %4763 = vmatpush2.bf16.msra.mxu0 0
    %4764 = vmatprep.subr.bf16.mxu0 0
    %4765 = vmatpush2.bf16.msra.mxu0 0
    %4766 = vmatprep.mubr.bf16.mxu0 0
    %4767 = vmatmul.mubr.bf16.gmra.mxu0 %v4637
    %v4768 = vpop.f32.mrf.mxu0
    %v4769 = vadd.f32 0.0, %v4768
    %v4770 = vpop.f32.mrf.mxu0
    %v4771 = vadd.f32 0.0, %v4770
    %v4772 = vpop.f32.mrf.mxu0
    %v4773 = vpop.f32.mrf.mxu0
    %4774 = vdwg.mxu0
    %4775 = vmatprep.subr.bf16.mxu0 %v4469
    %4776 = vmatpush1.bf16.msra.mxu0 %v4468
    %4777 = vmatprep.subr.bf16.mxu0 %v4465
    %4778 = vmatpush1.bf16.msra.mxu0 %v4464
    %4779 = vmatprep.subr.bf16.mxu0 %v4461
    %4780 = vmatpush1.bf16.msra.mxu0 %v4460
    %4781 = vmatprep.subr.bf16.mxu0 %v4457
    %4782 = vmatpush1.bf16.msra.mxu0 %v4456
    %4783 = vmatprep.subr.bf16.mxu0 %v4453
    %4784 = vmatpush1.bf16.msra.mxu0 %v4452
    %4785 = vmatprep.subr.bf16.mxu0 %v4449
    %4786 = vmatpush1.bf16.msra.mxu0 %v4448
    %4787 = vmatprep.subr.bf16.mxu0 %v4445
    %4788 = vmatpush1.bf16.msra.mxu0 %v4444
    %4789 = vmatprep.subr.bf16.mxu0 %v4441
    %4790 = vmatpush1.bf16.msra.mxu0 %v4440
    %4791 = vmatprep.subr.bf16.mxu0 0
    %4792 = vmatpush2.bf16.msra.mxu0 0
    %4793 = vmatprep.subr.bf16.mxu0 0
    %4794 = vmatpush2.bf16.msra.mxu0 0
    %4795 = vmatprep.subr.bf16.mxu0 0
    %4796 = vmatpush2.bf16.msra.mxu0 0
    %4797 = vmatprep.subr.bf16.mxu0 0
    %4798 = vmatpush2.bf16.msra.mxu0 0
    %4799 = vmatprep.subr.bf16.mxu0 0
    %4800 = vmatpush2.bf16.msra.mxu0 0
    %4801 = vmatprep.subr.bf16.mxu0 0
    %4802 = vmatpush2.bf16.msra.mxu0 0
    %4803 = vmatprep.subr.bf16.mxu0 0
    %4804 = vmatpush2.bf16.msra.mxu0 0
    %4805 = vmatprep.subr.bf16.mxu0 0
    %4806 = vmatpush2.bf16.msra.mxu0 0
    %4807 = vmatprep.mubr.bf16.mxu0 0
    %4808 = vmatmul.mubr.bf16.gmra.mxu0 %v4637
    %v4809 = vpop.f32.mrf.mxu0
    %v4810 = vadd.f32 0.0, %v4809
    %v4811 = vpop.f32.mrf.mxu0
    %v4812 = vadd.f32 0.0, %v4811
    %v4813 = vpop.f32.mrf.mxu0
    %v4814 = vpop.f32.mrf.mxu0
    %4815 = vdwg.mxu0
    %v4816 = vadd.f32 %v4730, %v4769
    %v4817 = vadd.f32 %v4731, %v4771
    %v4818 = vadd.f32 %v4732, %v4810
    %v4819 = vadd.f32 %v4733, %v4812
    %v4820 = vxor.u32 %v4726, 2147483648
    %v4821 = vmul.f32 %v4820, 1.442695
    %v4822 = vpow.pop %v4821
    %v4823 = vadd.f32 %v4822, 1.0
    %v4824 = vrcp.pop %v4823
    %v4825 = vmul.f32 1.0, %v4824
    %v4826 = vxor.u32 %v4727, 2147483648
    %v4827 = vmul.f32 %v4826, 1.442695
    %v4828 = vpow.pop %v4827
    %v4829 = vadd.f32 %v4828, 1.0
    %v4830 = vrcp.pop %v4829
    %v4831 = vmul.f32 1.0, %v4830
    %v4832 = vtanh.pop %v4728
    %v4833 = vxor.u32 %v4729, 2147483648
    %v4834 = vmul.f32 %v4833, 1.442695
    %v4835 = vpow.pop %v4834
    %v4836 = vadd.f32 %v4835, 1.0
    %v4837 = vrcp.pop %v4836
    %v4838 = vmul.f32 1.0, %v4837
    %v4839 = vmul.f32 %v4831, %v4609
    %v4840 = vmul.f32 %v4825, %v4832
    %v4841 = vadd.f32 %v4839, %v4840
    %v4842 = vtanh.pop %v4841
    %v4843 = vmul.f32 %v4838, %v4842
    %v4844 = vxor.u32 %v4816, 2147483648
    %v4845 = vmul.f32 %v4844, 1.442695
    %v4846 = vpow.pop %v4845
    %v4847 = vadd.f32 %v4846, 1.0
    %v4848 = vrcp.pop %v4847
    %v4849 = vmul.f32 1.0, %v4848
    %v4850 = vxor.u32 %v4817, 2147483648
    %v4851 = vmul.f32 %v4850, 1.442695
    %v4852 = vpow.pop %v4851
    %v4853 = vadd.f32 %v4852, 1.0
    %v4854 = vrcp.pop %v4853
    %v4855 = vmul.f32 1.0, %v4854
    %v4856 = vtanh.pop %v4818
    %v4857 = vxor.u32 %v4819, 2147483648
    %v4858 = vmul.f32 %v4857, 1.442695
    %v4859 = vpow.pop %v4858
    %v4860 = vadd.f32 %v4859, 1.0
    %v4861 = vrcp.pop %v4860
    %v4862 = vmul.f32 1.0, %v4861
    %v4863 = vmul.f32 %v4855, %v4633
    %v4864 = vmul.f32 %v4849, %v4856
    %v4865 = vadd.f32 %v4863, %v4864
    %v4866 = vtanh.pop %v4865
    %v4867 = vmul.f32 %v4862, %v4866
    %v4868 = vpack.c.bf16 %v4843, %v4843
    %v4869 = vpack.c.bf16 %v4867, %v4867
    %4870 = vst [vmem:[#allocation4 + $0x10] sm:$0xff] %v4843
    %4871 = vst [vmem:[#allocation4 + $0x68] sm:$0xff] %v4867
    %v4872 = vld [vmem:[#allocation3 + $0x80] sm:$0xff]
    %v4873 = vld [vmem:[#allocation3 + $0x88] sm:$0xff]
    %v4874 = vld [vmem:[#allocation3 + $0x90] sm:$0xff]
    %v4875 = vld [vmem:[#allocation3 + $0x98] sm:$0xff]
    %4876 = vmatprep.subr.bf16.mxu0 %v4217
    %4877 = vmatpush1.bf16.msra.mxu0 %v4216
    %4878 = vmatprep.subr.bf16.mxu0 %v4213
    %4879 = vmatpush1.bf16.msra.mxu0 %v4212
    %4880 = vmatprep.subr.bf16.mxu0 %v4209
    %4881 = vmatpush1.bf16.msra.mxu0 %v4208
    %4882 = vmatprep.subr.bf16.mxu0 %v4205
    %4883 = vmatpush1.bf16.msra.mxu0 %v4204
    %4884 = vmatprep.subr.bf16.mxu0 %v4201
    %4885 = vmatpush1.bf16.msra.mxu0 %v4200
    %4886 = vmatprep.subr.bf16.mxu0 %v4197
    %4887 = vmatpush1.bf16.msra.mxu0 %v4196
    %4888 = vmatprep.subr.bf16.mxu0 %v4193
    %4889 = vmatpush1.bf16.msra.mxu0 %v4192
    %4890 = vmatprep.subr.bf16.mxu0 %v4189
    %4891 = vmatpush1.bf16.msra.mxu0 %v4188
    %4892 = vmatprep.subr.bf16.mxu0 0
    %4893 = vmatpush2.bf16.msra.mxu0 0
    %4894 = vmatprep.subr.bf16.mxu0 0
    %4895 = vmatpush2.bf16.msra.mxu0 0
    %4896 = vmatprep.subr.bf16.mxu0 0
    %4897 = vmatpush2.bf16.msra.mxu0 0
    %4898 = vmatprep.subr.bf16.mxu0 0
    %4899 = vmatpush2.bf16.msra.mxu0 0
    %4900 = vmatprep.subr.bf16.mxu0 0
    %4901 = vmatpush2.bf16.msra.mxu0 0
    %4902 = vmatprep.subr.bf16.mxu0 0
    %4903 = vmatpush2.bf16.msra.mxu0 0
    %4904 = vmatprep.subr.bf16.mxu0 0
    %4905 = vmatpush2.bf16.msra.mxu0 0
    %4906 = vmatprep.subr.bf16.mxu0 0
    %4907 = vmatpush2.bf16.msra.mxu0 0
    %4908 = vmatprep.mubr.bf16.mxu0 0
    %4909 = vmatmul.mubr.bf16.gmra.mxu0 %v4868
    %v4910 = vpop.f32.mrf.mxu0
    %v4911 = vadd.f32 0.0, %v4910
    %v4912 = vpop.f32.mrf.mxu0
    %v4913 = vadd.f32 0.0, %v4912
    %v4914 = vpop.f32.mrf.mxu0
    %v4915 = vpop.f32.mrf.mxu0
    %4916 = vdwg.mxu0
    %4917 = vmatprep.subr.bf16.mxu0 %v4219
    %4918 = vmatpush1.bf16.msra.mxu0 %v4218
    %4919 = vmatprep.subr.bf16.mxu0 %v4215
    %4920 = vmatpush1.bf16.msra.mxu0 %v4214
    %4921 = vmatprep.subr.bf16.mxu0 %v4211
    %4922 = vmatpush1.bf16.msra.mxu0 %v4210
    %4923 = vmatprep.subr.bf16.mxu0 %v4207
    %4924 = vmatpush1.bf16.msra.mxu0 %v4206
    %4925 = vmatprep.subr.bf16.mxu0 %v4203
    %4926 = vmatpush1.bf16.msra.mxu0 %v4202
    %4927 = vmatprep.subr.bf16.mxu0 %v4199
    %4928 = vmatpush1.bf16.msra.mxu0 %v4198
    %4929 = vmatprep.subr.bf16.mxu0 %v4195
    %4930 = vmatpush1.bf16.msra.mxu0 %v4194
    %4931 = vmatprep.subr.bf16.mxu0 %v4191
    %4932 = vmatpush1.bf16.msra.mxu0 %v4190
    %4933 = vmatprep.subr.bf16.mxu0 0
    %4934 = vmatpush2.bf16.msra.mxu0 0
    %4935 = vmatprep.subr.bf16.mxu0 0
    %4936 = vmatpush2.bf16.msra.mxu0 0
    %4937 = vmatprep.subr.bf16.mxu0 0
    %4938 = vmatpush2.bf16.msra.mxu0 0
    %4939 = vmatprep.subr.bf16.mxu0 0
    %4940 = vmatpush2.bf16.msra.mxu0 0
    %4941 = vmatprep.subr.bf16.mxu0 0
    %4942 = vmatpush2.bf16.msra.mxu0 0
    %4943 = vmatprep.subr.bf16.mxu0 0
    %4944 = vmatpush2.bf16.msra.mxu0 0
    %4945 = vmatprep.subr.bf16.mxu0 0
    %4946 = vmatpush2.bf16.msra.mxu0 0
    %4947 = vmatprep.subr.bf16.mxu0 0
    %4948 = vmatpush2.bf16.msra.mxu0 0
    %4949 = vmatprep.mubr.bf16.mxu0 0
    %4950 = vmatmul.mubr.bf16.gmra.mxu0 %v4868
    %v4951 = vpop.f32.mrf.mxu0
    %v4952 = vadd.f32 0.0, %v4951
    %v4953 = vpop.f32.mrf.mxu0
    %v4954 = vadd.f32 0.0, %v4953
    %v4955 = vpop.f32.mrf.mxu0
    %v4956 = vpop.f32.mrf.mxu0
    %4957 = vdwg.mxu0
    %v4958 = vadd.f32 %v4872, %v4911
    %v4959 = vadd.f32 %v4873, %v4913
    %v4960 = vadd.f32 %v4874, %v4952
    %v4961 = vadd.f32 %v4875, %v4954
    %v4962 = vld [vmem:[#allocation3 + $0x160] sm:$0xff]
    %v4963 = vld [vmem:[#allocation3 + $0x168] sm:$0xff]
    %v4964 = vld [vmem:[#allocation3 + $0x170] sm:$0xff]
    %v4965 = vld [vmem:[#allocation3 + $0x178] sm:$0xff]
    %4966 = vmatprep.subr.bf16.mxu0 %v4467
    %4967 = vmatpush1.bf16.msra.mxu0 %v4466
    %4968 = vmatprep.subr.bf16.mxu0 %v4463
    %4969 = vmatpush1.bf16.msra.mxu0 %v4462
    %4970 = vmatprep.subr.bf16.mxu0 %v4459
    %4971 = vmatpush1.bf16.msra.mxu0 %v4458
    %4972 = vmatprep.subr.bf16.mxu0 %v4455
    %4973 = vmatpush1.bf16.msra.mxu0 %v4454
    %4974 = vmatprep.subr.bf16.mxu0 %v4451
    %4975 = vmatpush1.bf16.msra.mxu0 %v4450
    %4976 = vmatprep.subr.bf16.mxu0 %v4447
    %4977 = vmatpush1.bf16.msra.mxu0 %v4446
    %4978 = vmatprep.subr.bf16.mxu0 %v4443
    %4979 = vmatpush1.bf16.msra.mxu0 %v4442
    %4980 = vmatprep.subr.bf16.mxu0 %v4439
    %4981 = vmatpush1.bf16.msra.mxu0 %v4438
    %4982 = vmatprep.subr.bf16.mxu0 0
    %4983 = vmatpush2.bf16.msra.mxu0 0
    %4984 = vmatprep.subr.bf16.mxu0 0
    %4985 = vmatpush2.bf16.msra.mxu0 0
    %4986 = vmatprep.subr.bf16.mxu0 0
    %4987 = vmatpush2.bf16.msra.mxu0 0
    %4988 = vmatprep.subr.bf16.mxu0 0
    %4989 = vmatpush2.bf16.msra.mxu0 0
    %4990 = vmatprep.subr.bf16.mxu0 0
    %4991 = vmatpush2.bf16.msra.mxu0 0
    %4992 = vmatprep.subr.bf16.mxu0 0
    %4993 = vmatpush2.bf16.msra.mxu0 0
    %4994 = vmatprep.subr.bf16.mxu0 0
    %4995 = vmatpush2.bf16.msra.mxu0 0
    %4996 = vmatprep.subr.bf16.mxu0 0
    %4997 = vmatpush2.bf16.msra.mxu0 0
    %4998 = vmatprep.mubr.bf16.mxu0 0
    %4999 = vmatmul.mubr.bf16.gmra.mxu0 %v4869
    %v5000 = vpop.f32.mrf.mxu0
    %v5001 = vadd.f32 0.0, %v5000
    %v5002 = vpop.f32.mrf.mxu0
    %v5003 = vadd.f32 0.0, %v5002
    %v5004 = vpop.f32.mrf.mxu0
    %v5005 = vpop.f32.mrf.mxu0
    %5006 = vdwg.mxu0
    %5007 = vmatprep.subr.bf16.mxu0 %v4469
    %5008 = vmatpush1.bf16.msra.mxu0 %v4468
    %5009 = vmatprep.subr.bf16.mxu0 %v4465
    %5010 = vmatpush1.bf16.msra.mxu0 %v4464
    %5011 = vmatprep.subr.bf16.mxu0 %v4461
    %5012 = vmatpush1.bf16.msra.mxu0 %v4460
    %5013 = vmatprep.subr.bf16.mxu0 %v4457
    %5014 = vmatpush1.bf16.msra.mxu0 %v4456
    %5015 = vmatprep.subr.bf16.mxu0 %v4453
    %5016 = vmatpush1.bf16.msra.mxu0 %v4452
    %5017 = vmatprep.subr.bf16.mxu0 %v4449
    %5018 = vmatpush1.bf16.msra.mxu0 %v4448
    %5019 = vmatprep.subr.bf16.mxu0 %v4445
    %5020 = vmatpush1.bf16.msra.mxu0 %v4444
    %5021 = vmatprep.subr.bf16.mxu0 %v4441
    %5022 = vmatpush1.bf16.msra.mxu0 %v4440
    %5023 = vmatprep.subr.bf16.mxu0 0
    %5024 = vmatpush2.bf16.msra.mxu0 0
    %5025 = vmatprep.subr.bf16.mxu0 0
    %5026 = vmatpush2.bf16.msra.mxu0 0
    %5027 = vmatprep.subr.bf16.mxu0 0
    %5028 = vmatpush2.bf16.msra.mxu0 0
    %5029 = vmatprep.subr.bf16.mxu0 0
    %5030 = vmatpush2.bf16.msra.mxu0 0
    %5031 = vmatprep.subr.bf16.mxu0 0
    %5032 = vmatpush2.bf16.msra.mxu0 0
    %5033 = vmatprep.subr.bf16.mxu0 0
    %5034 = vmatpush2.bf16.msra.mxu0 0
    %5035 = vmatprep.subr.bf16.mxu0 0
    %5036 = vmatpush2.bf16.msra.mxu0 0
    %5037 = vmatprep.subr.bf16.mxu0 0
    %5038 = vmatpush2.bf16.msra.mxu0 0
    %5039 = vmatprep.mubr.bf16.mxu0 0
    %5040 = vmatmul.mubr.bf16.gmra.mxu0 %v4869
    %v5041 = vpop.f32.mrf.mxu0
    %v5042 = vadd.f32 0.0, %v5041
    %v5043 = vpop.f32.mrf.mxu0
    %v5044 = vadd.f32 0.0, %v5043
    %v5045 = vpop.f32.mrf.mxu0
    %v5046 = vpop.f32.mrf.mxu0
    %5047 = vdwg.mxu0
    %v5048 = vadd.f32 %v4962, %v5001
    %v5049 = vadd.f32 %v4963, %v5003
    %v5050 = vadd.f32 %v4964, %v5042
    %v5051 = vadd.f32 %v4965, %v5044
    %v5052 = vxor.u32 %v4958, 2147483648
    %v5053 = vmul.f32 %v5052, 1.442695
    %v5054 = vpow.pop %v5053
    %v5055 = vadd.f32 %v5054, 1.0
    %v5056 = vrcp.pop %v5055
    %v5057 = vmul.f32 1.0, %v5056
    %v5058 = vxor.u32 %v4959, 2147483648
    %v5059 = vmul.f32 %v5058, 1.442695
    %v5060 = vpow.pop %v5059
    %v5061 = vadd.f32 %v5060, 1.0
    %v5062 = vrcp.pop %v5061
    %v5063 = vmul.f32 1.0, %v5062
    %v5064 = vtanh.pop %v4960
    %v5065 = vxor.u32 %v4961, 2147483648
    %v5066 = vmul.f32 %v5065, 1.442695
    %v5067 = vpow.pop %v5066
    %v5068 = vadd.f32 %v5067, 1.0
    %v5069 = vrcp.pop %v5068
    %v5070 = vmul.f32 1.0, %v5069
    %v5071 = vmul.f32 %v5063, %v4841
    %v5072 = vmul.f32 %v5057, %v5064
    %v5073 = vadd.f32 %v5071, %v5072
    %v5074 = vtanh.pop %v5073
    %v5075 = vmul.f32 %v5070, %v5074
    %v5076 = vxor.u32 %v5048, 2147483648
    %v5077 = vmul.f32 %v5076, 1.442695
    %v5078 = vpow.pop %v5077
    %v5079 = vadd.f32 %v5078, 1.0
    %v5080 = vrcp.pop %v5079
    %v5081 = vmul.f32 1.0, %v5080
    %v5082 = vxor.u32 %v5049, 2147483648
    %v5083 = vmul.f32 %v5082, 1.442695
    %v5084 = vpow.pop %v5083
    %v5085 = vadd.f32 %v5084, 1.0
    %v5086 = vrcp.pop %v5085
    %v5087 = vmul.f32 1.0, %v5086
    %v5088 = vtanh.pop %v5050
    %v5089 = vxor.u32 %v5051, 2147483648
    %v5090 = vmul.f32 %v5089, 1.442695
    %v5091 = vpow.pop %v5090
    %v5092 = vadd.f32 %v5091, 1.0
    %v5093 = vrcp.pop %v5092
    %v5094 = vmul.f32 1.0, %v5093
    %v5095 = vmul.f32 %v5087, %v4865
    %v5096 = vmul.f32 %v5081, %v5088
    %v5097 = vadd.f32 %v5095, %v5096
    %v5098 = vtanh.pop %v5097
    %v5099 = vmul.f32 %v5094, %v5098
    %v5100 = vpack.c.bf16 %v5075, %v5075
    %v5101 = vpack.c.bf16 %v5099, %v5099
    %5102 = vst [vmem:[#allocation4 + $0x20] sm:$0xff] %v5075
    %5103 = vst [vmem:[#allocation4 + $0x58] sm:$0xff] %v5099
    %v5104 = vld [vmem:[#allocation3 + $0xc0] sm:$0xff]
    %v5105 = vld [vmem:[#allocation3 + $0xc8] sm:$0xff]
    %v5106 = vld [vmem:[#allocation3 + $0xd0] sm:$0xff]
    %v5107 = vld [vmem:[#allocation3 + $0xd8] sm:$0xff]
    %5108 = vmatprep.subr.bf16.mxu0 %v4217
    %5109 = vmatpush1.bf16.msra.mxu0 %v4216
    %5110 = vmatprep.subr.bf16.mxu0 %v4213
    %5111 = vmatpush1.bf16.msra.mxu0 %v4212
    %5112 = vmatprep.subr.bf16.mxu0 %v4209
    %5113 = vmatpush1.bf16.msra.mxu0 %v4208
    %5114 = vmatprep.subr.bf16.mxu0 %v4205
    %5115 = vmatpush1.bf16.msra.mxu0 %v4204
    %5116 = vmatprep.subr.bf16.mxu0 %v4201
    %5117 = vmatpush1.bf16.msra.mxu0 %v4200
    %5118 = vmatprep.subr.bf16.mxu0 %v4197
    %5119 = vmatpush1.bf16.msra.mxu0 %v4196
    %5120 = vmatprep.subr.bf16.mxu0 %v4193
    %5121 = vmatpush1.bf16.msra.mxu0 %v4192
    %5122 = vmatprep.subr.bf16.mxu0 %v4189
    %5123 = vmatpush1.bf16.msra.mxu0 %v4188
    %5124 = vmatprep.subr.bf16.mxu0 0
    %5125 = vmatpush2.bf16.msra.mxu0 0
    %5126 = vmatprep.subr.bf16.mxu0 0
    %5127 = vmatpush2.bf16.msra.mxu0 0
    %5128 = vmatprep.subr.bf16.mxu0 0
    %5129 = vmatpush2.bf16.msra.mxu0 0
    %5130 = vmatprep.subr.bf16.mxu0 0
    %5131 = vmatpush2.bf16.msra.mxu0 0
    %5132 = vmatprep.subr.bf16.mxu0 0
    %5133 = vmatpush2.bf16.msra.mxu0 0
    %5134 = vmatprep.subr.bf16.mxu0 0
    %5135 = vmatpush2.bf16.msra.mxu0 0
    %5136 = vmatprep.subr.bf16.mxu0 0
    %5137 = vmatpush2.bf16.msra.mxu0 0
    %5138 = vmatprep.subr.bf16.mxu0 0
    %5139 = vmatpush2.bf16.msra.mxu0 0
    %5140 = vmatprep.mubr.bf16.mxu0 0
    %5141 = vmatmul.mubr.bf16.gmra.mxu0 %v5100
    %v5142 = vpop.f32.mrf.mxu0
    %v5143 = vadd.f32 0.0, %v5142
    %v5144 = vpop.f32.mrf.mxu0
    %v5145 = vadd.f32 0.0, %v5144
    %v5146 = vpop.f32.mrf.mxu0
    %v5147 = vpop.f32.mrf.mxu0
    %5148 = vdwg.mxu0
    %5149 = vmatprep.subr.bf16.mxu0 %v4219
    %5150 = vmatpush1.bf16.msra.mxu0 %v4218
    %5151 = vmatprep.subr.bf16.mxu0 %v4215
    %5152 = vmatpush1.bf16.msra.mxu0 %v4214
    %5153 = vmatprep.subr.bf16.mxu0 %v4211
    %5154 = vmatpush1.bf16.msra.mxu0 %v4210
    %5155 = vmatprep.subr.bf16.mxu0 %v4207
    %5156 = vmatpush1.bf16.msra.mxu0 %v4206
    %5157 = vmatprep.subr.bf16.mxu0 %v4203
    %5158 = vmatpush1.bf16.msra.mxu0 %v4202
    %5159 = vmatprep.subr.bf16.mxu0 %v4199
    %5160 = vmatpush1.bf16.msra.mxu0 %v4198
    %5161 = vmatprep.subr.bf16.mxu0 %v4195
    %5162 = vmatpush1.bf16.msra.mxu0 %v4194
    %5163 = vmatprep.subr.bf16.mxu0 %v4191
    %5164 = vmatpush1.bf16.msra.mxu0 %v4190
    %5165 = vmatprep.subr.bf16.mxu0 0
    %5166 = vmatpush2.bf16.msra.mxu0 0
    %5167 = vmatprep.subr.bf16.mxu0 0
    %5168 = vmatpush2.bf16.msra.mxu0 0
    %5169 = vmatprep.subr.bf16.mxu0 0
    %5170 = vmatpush2.bf16.msra.mxu0 0
    %5171 = vmatprep.subr.bf16.mxu0 0
    %5172 = vmatpush2.bf16.msra.mxu0 0
    %5173 = vmatprep.subr.bf16.mxu0 0
    %5174 = vmatpush2.bf16.msra.mxu0 0
    %5175 = vmatprep.subr.bf16.mxu0 0
    %5176 = vmatpush2.bf16.msra.mxu0 0
    %5177 = vmatprep.subr.bf16.mxu0 0
    %5178 = vmatpush2.bf16.msra.mxu0 0
    %5179 = vmatprep.subr.bf16.mxu0 0
    %5180 = vmatpush2.bf16.msra.mxu0 0
    %5181 = vmatprep.mubr.bf16.mxu0 0
    %5182 = vmatmul.mubr.bf16.gmra.mxu0 %v5100
    %v5183 = vpop.f32.mrf.mxu0
    %v5184 = vadd.f32 0.0, %v5183
    %v5185 = vpop.f32.mrf.mxu0
    %v5186 = vadd.f32 0.0, %v5185
    %v5187 = vpop.f32.mrf.mxu0
    %v5188 = vpop.f32.mrf.mxu0
    %5189 = vdwg.mxu0
    %v5190 = vadd.f32 %v5104, %v5143
    %v5191 = vadd.f32 %v5105, %v5145
    %v5192 = vadd.f32 %v5106, %v5184
    %v5193 = vadd.f32 %v5107, %v5186
    %v5194 = vld [vmem:[#allocation3 + $0x120] sm:$0xff]
    %v5195 = vld [vmem:[#allocation3 + $0x128] sm:$0xff]
    %v5196 = vld [vmem:[#allocation3 + $0x130] sm:$0xff]
    %v5197 = vld [vmem:[#allocation3 + $0x138] sm:$0xff]
    %5198 = vmatprep.subr.bf16.mxu0 %v4467
    %5199 = vmatpush1.bf16.msra.mxu0 %v4466
    %5200 = vmatprep.subr.bf16.mxu0 %v4463
    %5201 = vmatpush1.bf16.msra.mxu0 %v4462
    %5202 = vmatprep.subr.bf16.mxu0 %v4459
    %5203 = vmatpush1.bf16.msra.mxu0 %v4458
    %5204 = vmatprep.subr.bf16.mxu0 %v4455
    %5205 = vmatpush1.bf16.msra.mxu0 %v4454
    %5206 = vmatprep.subr.bf16.mxu0 %v4451
    %5207 = vmatpush1.bf16.msra.mxu0 %v4450
    %5208 = vmatprep.subr.bf16.mxu0 %v4447
    %5209 = vmatpush1.bf16.msra.mxu0 %v4446
    %5210 = vmatprep.subr.bf16.mxu0 %v4443
    %5211 = vmatpush1.bf16.msra.mxu0 %v4442
    %5212 = vmatprep.subr.bf16.mxu0 %v4439
    %5213 = vmatpush1.bf16.msra.mxu0 %v4438
    %5214 = vmatprep.subr.bf16.mxu0 0
    %5215 = vmatpush2.bf16.msra.mxu0 0
    %5216 = vmatprep.subr.bf16.mxu0 0
    %5217 = vmatpush2.bf16.msra.mxu0 0
    %5218 = vmatprep.subr.bf16.mxu0 0
    %5219 = vmatpush2.bf16.msra.mxu0 0
    %5220 = vmatprep.subr.bf16.mxu0 0
    %5221 = vmatpush2.bf16.msra.mxu0 0
    %5222 = vmatprep.subr.bf16.mxu0 0
    %5223 = vmatpush2.bf16.msra.mxu0 0
    %5224 = vmatprep.subr.bf16.mxu0 0
    %5225 = vmatpush2.bf16.msra.mxu0 0
    %5226 = vmatprep.subr.bf16.mxu0 0
    %5227 = vmatpush2.bf16.msra.mxu0 0
    %5228 = vmatprep.subr.bf16.mxu0 0
    %5229 = vmatpush2.bf16.msra.mxu0 0
    %5230 = vmatprep.mubr.bf16.mxu0 0
    %5231 = vmatmul.mubr.bf16.gmra.mxu0 %v5101
    %v5232 = vpop.f32.mrf.mxu0
    %v5233 = vadd.f32 0.0, %v5232
    %v5234 = vpop.f32.mrf.mxu0
    %v5235 = vadd.f32 0.0, %v5234
    %v5236 = vpop.f32.mrf.mxu0
    %v5237 = vpop.f32.mrf.mxu0
    %5238 = vdwg.mxu0
    %5239 = vmatprep.subr.bf16.mxu0 %v4469
    %5240 = vmatpush1.bf16.msra.mxu0 %v4468
    %5241 = vmatprep.subr.bf16.mxu0 %v4465
    %5242 = vmatpush1.bf16.msra.mxu0 %v4464
    %5243 = vmatprep.subr.bf16.mxu0 %v4461
    %5244 = vmatpush1.bf16.msra.mxu0 %v4460
    %5245 = vmatprep.subr.bf16.mxu0 %v4457
    %5246 = vmatpush1.bf16.msra.mxu0 %v4456
    %5247 = vmatprep.subr.bf16.mxu0 %v4453
    %5248 = vmatpush1.bf16.msra.mxu0 %v4452
    %5249 = vmatprep.subr.bf16.mxu0 %v4449
    %5250 = vmatpush1.bf16.msra.mxu0 %v4448
    %5251 = vmatprep.subr.bf16.mxu0 %v4445
    %5252 = vmatpush1.bf16.msra.mxu0 %v4444
    %5253 = vmatprep.subr.bf16.mxu0 %v4441
    %5254 = vmatpush1.bf16.msra.mxu0 %v4440
    %5255 = vmatprep.subr.bf16.mxu0 0
    %5256 = vmatpush2.bf16.msra.mxu0 0
    %5257 = vmatprep.subr.bf16.mxu0 0
    %5258 = vmatpush2.bf16.msra.mxu0 0
    %5259 = vmatprep.subr.bf16.mxu0 0
    %5260 = vmatpush2.bf16.msra.mxu0 0
    %5261 = vmatprep.subr.bf16.mxu0 0
    %5262 = vmatpush2.bf16.msra.mxu0 0
    %5263 = vmatprep.subr.bf16.mxu0 0
    %5264 = vmatpush2.bf16.msra.mxu0 0
    %5265 = vmatprep.subr.bf16.mxu0 0
    %5266 = vmatpush2.bf16.msra.mxu0 0
    %5267 = vmatprep.subr.bf16.mxu0 0
    %5268 = vmatpush2.bf16.msra.mxu0 0
    %5269 = vmatprep.subr.bf16.mxu0 0
    %5270 = vmatpush2.bf16.msra.mxu0 0
    %5271 = vmatprep.mubr.bf16.mxu0 0
    %5272 = vmatmul.mubr.bf16.gmra.mxu0 %v5101
    %v5273 = vpop.f32.mrf.mxu0
    %v5274 = vadd.f32 0.0, %v5273
    %v5275 = vpop.f32.mrf.mxu0
    %v5276 = vadd.f32 0.0, %v5275
    %v5277 = vpop.f32.mrf.mxu0
    %v5278 = vpop.f32.mrf.mxu0
    %5279 = vdwg.mxu0
    %v5280 = vadd.f32 %v5194, %v5233
    %v5281 = vadd.f32 %v5195, %v5235
    %v5282 = vadd.f32 %v5196, %v5274
    %v5283 = vadd.f32 %v5197, %v5276
    %v5284 = vxor.u32 %v5190, 2147483648
    %v5285 = vmul.f32 %v5284, 1.442695
    %v5286 = vpow.pop %v5285
    %v5287 = vadd.f32 %v5286, 1.0
    %v5288 = vrcp.pop %v5287
    %v5289 = vmul.f32 1.0, %v5288
    %v5290 = vxor.u32 %v5191, 2147483648
    %v5291 = vmul.f32 %v5290, 1.442695
    %v5292 = vpow.pop %v5291
    %v5293 = vadd.f32 %v5292, 1.0
    %v5294 = vrcp.pop %v5293
    %v5295 = vmul.f32 1.0, %v5294
    %v5296 = vtanh.pop %v5192
    %v5297 = vxor.u32 %v5193, 2147483648
    %v5298 = vmul.f32 %v5297, 1.442695
    %v5299 = vpow.pop %v5298
    %v5300 = vadd.f32 %v5299, 1.0
    %v5301 = vrcp.pop %v5300
    %v5302 = vmul.f32 1.0, %v5301
    %v5303 = vmul.f32 %v5295, %v5073
    %v5304 = vmul.f32 %v5289, %v5296
    %v5305 = vadd.f32 %v5303, %v5304
    %v5306 = vtanh.pop %v5305
    %v5307 = vmul.f32 %v5302, %v5306
    %v5308 = vxor.u32 %v5280, 2147483648
    %v5309 = vmul.f32 %v5308, 1.442695
    %v5310 = vpow.pop %v5309
    %v5311 = vadd.f32 %v5310, 1.0
    %v5312 = vrcp.pop %v5311
    %v5313 = vmul.f32 1.0, %v5312
    %v5314 = vxor.u32 %v5281, 2147483648
    %v5315 = vmul.f32 %v5314, 1.442695
    %v5316 = vpow.pop %v5315
    %v5317 = vadd.f32 %v5316, 1.0
    %v5318 = vrcp.pop %v5317
    %v5319 = vmul.f32 1.0, %v5318
    %v5320 = vtanh.pop %v5282
    %v5321 = vxor.u32 %v5283, 2147483648
    %v5322 = vmul.f32 %v5321, 1.442695
    %v5323 = vpow.pop %v5322
    %v5324 = vadd.f32 %v5323, 1.0
    %v5325 = vrcp.pop %v5324
    %v5326 = vmul.f32 1.0, %v5325
    %v5327 = vmul.f32 %v5319, %v5097
    %v5328 = vmul.f32 %v5313, %v5320
    %v5329 = vadd.f32 %v5327, %v5328
    %v5330 = vtanh.pop %v5329
    %v5331 = vmul.f32 %v5326, %v5330
    %v5332 = vpack.c.bf16 %v5307, %v5307
    %v5333 = vpack.c.bf16 %v5331, %v5331
    %5334 = vst [vmem:[#allocation4 + $0x30] sm:$0xff] %v5307
    %5335 = vst [vmem:[#allocation4 + $0x48] sm:$0xff] %v5331
    %v5336 = vld [vmem:[#allocation3 + $0x100] sm:$0xff]
    %v5337 = vld [vmem:[#allocation3 + $0x108] sm:$0xff]
    %v5338 = vld [vmem:[#allocation3 + $0x110] sm:$0xff]
    %v5339 = vld [vmem:[#allocation3 + $0x118] sm:$0xff]
    %5340 = vmatprep.subr.bf16.mxu0 %v4217
    %5341 = vmatpush1.bf16.msra.mxu0 %v4216
    %5342 = vmatprep.subr.bf16.mxu0 %v4213
    %5343 = vmatpush1.bf16.msra.mxu0 %v4212
    %5344 = vmatprep.subr.bf16.mxu0 %v4209
    %5345 = vmatpush1.bf16.msra.mxu0 %v4208
    %5346 = vmatprep.subr.bf16.mxu0 %v4205
    %5347 = vmatpush1.bf16.msra.mxu0 %v4204
    %5348 = vmatprep.subr.bf16.mxu0 %v4201
    %5349 = vmatpush1.bf16.msra.mxu0 %v4200
    %5350 = vmatprep.subr.bf16.mxu0 %v4197
    %5351 = vmatpush1.bf16.msra.mxu0 %v4196
    %5352 = vmatprep.subr.bf16.mxu0 %v4193
    %5353 = vmatpush1.bf16.msra.mxu0 %v4192
    %5354 = vmatprep.subr.bf16.mxu0 %v4189
    %5355 = vmatpush1.bf16.msra.mxu0 %v4188
    %5356 = vmatprep.subr.bf16.mxu0 0
    %5357 = vmatpush2.bf16.msra.mxu0 0
    %5358 = vmatprep.subr.bf16.mxu0 0
    %5359 = vmatpush2.bf16.msra.mxu0 0
    %5360 = vmatprep.subr.bf16.mxu0 0
    %5361 = vmatpush2.bf16.msra.mxu0 0
    %5362 = vmatprep.subr.bf16.mxu0 0
    %5363 = vmatpush2.bf16.msra.mxu0 0
    %5364 = vmatprep.subr.bf16.mxu0 0
    %5365 = vmatpush2.bf16.msra.mxu0 0
    %5366 = vmatprep.subr.bf16.mxu0 0
    %5367 = vmatpush2.bf16.msra.mxu0 0
    %5368 = vmatprep.subr.bf16.mxu0 0
    %5369 = vmatpush2.bf16.msra.mxu0 0
    %5370 = vmatprep.subr.bf16.mxu0 0
    %5371 = vmatpush2.bf16.msra.mxu0 0
    %5372 = vmatprep.mubr.bf16.mxu0 0
    %5373 = vmatmul.mubr.bf16.gmra.mxu0 %v5332
    %v5374 = vpop.f32.mrf.mxu0
    %v5375 = vadd.f32 0.0, %v5374
    %v5376 = vpop.f32.mrf.mxu0
    %v5377 = vadd.f32 0.0, %v5376
    %v5378 = vpop.f32.mrf.mxu0
    %v5379 = vpop.f32.mrf.mxu0
    %5380 = vdwg.mxu0
    %5381 = vmatprep.subr.bf16.mxu0 %v4219
    %5382 = vmatpush1.bf16.msra.mxu0 %v4218
    %5383 = vmatprep.subr.bf16.mxu0 %v4215
    %5384 = vmatpush1.bf16.msra.mxu0 %v4214
    %5385 = vmatprep.subr.bf16.mxu0 %v4211
    %5386 = vmatpush1.bf16.msra.mxu0 %v4210
    %5387 = vmatprep.subr.bf16.mxu0 %v4207
    %5388 = vmatpush1.bf16.msra.mxu0 %v4206
    %5389 = vmatprep.subr.bf16.mxu0 %v4203
    %5390 = vmatpush1.bf16.msra.mxu0 %v4202
    %5391 = vmatprep.subr.bf16.mxu0 %v4199
    %5392 = vmatpush1.bf16.msra.mxu0 %v4198
    %5393 = vmatprep.subr.bf16.mxu0 %v4195
    %5394 = vmatpush1.bf16.msra.mxu0 %v4194
    %5395 = vmatprep.subr.bf16.mxu0 %v4191
    %5396 = vmatpush1.bf16.msra.mxu0 %v4190
    %5397 = vmatprep.subr.bf16.mxu0 0
    %5398 = vmatpush2.bf16.msra.mxu0 0
    %5399 = vmatprep.subr.bf16.mxu0 0
    %5400 = vmatpush2.bf16.msra.mxu0 0
    %5401 = vmatprep.subr.bf16.mxu0 0
    %5402 = vmatpush2.bf16.msra.mxu0 0
    %5403 = vmatprep.subr.bf16.mxu0 0
    %5404 = vmatpush2.bf16.msra.mxu0 0
    %5405 = vmatprep.subr.bf16.mxu0 0
    %5406 = vmatpush2.bf16.msra.mxu0 0
    %5407 = vmatprep.subr.bf16.mxu0 0
    %5408 = vmatpush2.bf16.msra.mxu0 0
    %5409 = vmatprep.subr.bf16.mxu0 0
    %5410 = vmatpush2.bf16.msra.mxu0 0
    %5411 = vmatprep.subr.bf16.mxu0 0
    %5412 = vmatpush2.bf16.msra.mxu0 0
    %5413 = vmatprep.mubr.bf16.mxu0 0
    %5414 = vmatmul.mubr.bf16.gmra.mxu0 %v5332
    %v5415 = vpop.f32.mrf.mxu0
    %v5416 = vadd.f32 0.0, %v5415
    %v5417 = vpop.f32.mrf.mxu0
    %v5418 = vadd.f32 0.0, %v5417
    %v5419 = vpop.f32.mrf.mxu0
    %v5420 = vpop.f32.mrf.mxu0
    %5421 = vdwg.mxu0
    %v5422 = vadd.f32 %v5336, %v5375
    %v5423 = vadd.f32 %v5337, %v5377
    %v5424 = vadd.f32 %v5338, %v5416
    %v5425 = vadd.f32 %v5339, %v5418
    %v5426 = vld [vmem:[#allocation3 + $0xe0] sm:$0xff]
    %v5427 = vld [vmem:[#allocation3 + $0xe8] sm:$0xff]
    %v5428 = vld [vmem:[#allocation3 + $0xf0] sm:$0xff]
    %v5429 = vld [vmem:[#allocation3 + $0xf8] sm:$0xff]
    %5430 = vmatprep.subr.bf16.mxu0 %v4467
    %5431 = vmatpush1.bf16.msra.mxu0 %v4466
    %5432 = vmatprep.subr.bf16.mxu0 %v4463
    %5433 = vmatpush1.bf16.msra.mxu0 %v4462
    %5434 = vmatprep.subr.bf16.mxu0 %v4459
    %5435 = vmatpush1.bf16.msra.mxu0 %v4458
    %5436 = vmatprep.subr.bf16.mxu0 %v4455
    %5437 = vmatpush1.bf16.msra.mxu0 %v4454
    %5438 = vmatprep.subr.bf16.mxu0 %v4451
    %5439 = vmatpush1.bf16.msra.mxu0 %v4450
    %5440 = vmatprep.subr.bf16.mxu0 %v4447
    %5441 = vmatpush1.bf16.msra.mxu0 %v4446
    %5442 = vmatprep.subr.bf16.mxu0 %v4443
    %5443 = vmatpush1.bf16.msra.mxu0 %v4442
    %5444 = vmatprep.subr.bf16.mxu0 %v4439
    %5445 = vmatpush1.bf16.msra.mxu0 %v4438
    %5446 = vmatprep.subr.bf16.mxu0 0
    %5447 = vmatpush2.bf16.msra.mxu0 0
    %5448 = vmatprep.subr.bf16.mxu0 0
    %5449 = vmatpush2.bf16.msra.mxu0 0
    %5450 = vmatprep.subr.bf16.mxu0 0
    %5451 = vmatpush2.bf16.msra.mxu0 0
    %5452 = vmatprep.subr.bf16.mxu0 0
    %5453 = vmatpush2.bf16.msra.mxu0 0
    %5454 = vmatprep.subr.bf16.mxu0 0
    %5455 = vmatpush2.bf16.msra.mxu0 0
    %5456 = vmatprep.subr.bf16.mxu0 0
    %5457 = vmatpush2.bf16.msra.mxu0 0
    %5458 = vmatprep.subr.bf16.mxu0 0
    %5459 = vmatpush2.bf16.msra.mxu0 0
    %5460 = vmatprep.subr.bf16.mxu0 0
    %5461 = vmatpush2.bf16.msra.mxu0 0
    %5462 = vmatprep.mubr.bf16.mxu0 0
    %5463 = vmatmul.mubr.bf16.gmra.mxu0 %v5333
    %v5464 = vpop.f32.mrf.mxu0
    %v5465 = vadd.f32 0.0, %v5464
    %v5466 = vpop.f32.mrf.mxu0
    %v5467 = vadd.f32 0.0, %v5466
    %v5468 = vpop.f32.mrf.mxu0
    %v5469 = vpop.f32.mrf.mxu0
    %5470 = vdwg.mxu0
    %5471 = vmatprep.subr.bf16.mxu0 %v4469
    %5472 = vmatpush1.bf16.msra.mxu0 %v4468
    %5473 = vmatprep.subr.bf16.mxu0 %v4465
    %5474 = vmatpush1.bf16.msra.mxu0 %v4464
    %5475 = vmatprep.subr.bf16.mxu0 %v4461
    %5476 = vmatpush1.bf16.msra.mxu0 %v4460
    %5477 = vmatprep.subr.bf16.mxu0 %v4457
    %5478 = vmatpush1.bf16.msra.mxu0 %v4456
    %5479 = vmatprep.subr.bf16.mxu0 %v4453
    %5480 = vmatpush1.bf16.msra.mxu0 %v4452
    %5481 = vmatprep.subr.bf16.mxu0 %v4449
    %5482 = vmatpush1.bf16.msra.mxu0 %v4448
    %5483 = vmatprep.subr.bf16.mxu0 %v4445
    %5484 = vmatpush1.bf16.msra.mxu0 %v4444
    %5485 = vmatprep.subr.bf16.mxu0 %v4441
    %5486 = vmatpush1.bf16.msra.mxu0 %v4440
    %5487 = vmatprep.subr.bf16.mxu0 0
    %5488 = vmatpush2.bf16.msra.mxu0 0
    %5489 = vmatprep.subr.bf16.mxu0 0
    %5490 = vmatpush2.bf16.msra.mxu0 0
    %5491 = vmatprep.subr.bf16.mxu0 0
    %5492 = vmatpush2.bf16.msra.mxu0 0
    %5493 = vmatprep.subr.bf16.mxu0 0
    %5494 = vmatpush2.bf16.msra.mxu0 0
    %5495 = vmatprep.subr.bf16.mxu0 0
    %5496 = vmatpush2.bf16.msra.mxu0 0
    %5497 = vmatprep.subr.bf16.mxu0 0
    %5498 = vmatpush2.bf16.msra.mxu0 0
    %5499 = vmatprep.subr.bf16.mxu0 0
    %5500 = vmatpush2.bf16.msra.mxu0 0
    %5501 = vmatprep.subr.bf16.mxu0 0
    %5502 = vmatpush2.bf16.msra.mxu0 0
    %5503 = vmatprep.mubr.bf16.mxu0 0
    %5504 = vmatmul.mubr.bf16.gmra.mxu0 %v5333
    %v5505 = vpop.f32.mrf.mxu0
    %v5506 = vadd.f32 0.0, %v5505
    %v5507 = vpop.f32.mrf.mxu0
    %v5508 = vadd.f32 0.0, %v5507
    %v5509 = vpop.f32.mrf.mxu0
    %v5510 = vpop.f32.mrf.mxu0
    %5511 = vdwg.mxu0
    %v5512 = vadd.f32 %v5426, %v5465
    %v5513 = vadd.f32 %v5427, %v5467
    %v5514 = vadd.f32 %v5428, %v5506
    %v5515 = vadd.f32 %v5429, %v5508
    %v5516 = vxor.u32 %v5422, 2147483648
    %v5517 = vmul.f32 %v5516, 1.442695
    %v5518 = vpow.pop %v5517
    %v5519 = vadd.f32 %v5518, 1.0
    %v5520 = vrcp.pop %v5519
    %v5521 = vmul.f32 1.0, %v5520
    %v5522 = vxor.u32 %v5423, 2147483648
    %v5523 = vmul.f32 %v5522, 1.442695
    %v5524 = vpow.pop %v5523
    %v5525 = vadd.f32 %v5524, 1.0
    %v5526 = vrcp.pop %v5525
    %v5527 = vmul.f32 1.0, %v5526
    %v5528 = vtanh.pop %v5424
    %v5529 = vxor.u32 %v5425, 2147483648
    %v5530 = vmul.f32 %v5529, 1.442695
    %v5531 = vpow.pop %v5530
    %v5532 = vadd.f32 %v5531, 1.0
    %v5533 = vrcp.pop %v5532
    %v5534 = vmul.f32 1.0, %v5533
    %v5535 = vmul.f32 %v5527, %v5305
    %v5536 = vmul.f32 %v5521, %v5528
    %v5537 = vadd.f32 %v5535, %v5536
    %v5538 = vtanh.pop %v5537
    %v5539 = vmul.f32 %v5534, %v5538
    %v5540 = vxor.u32 %v5512, 2147483648
    %v5541 = vmul.f32 %v5540, 1.442695
    %v5542 = vpow.pop %v5541
    %v5543 = vadd.f32 %v5542, 1.0
    %v5544 = vrcp.pop %v5543
    %v5545 = vmul.f32 1.0, %v5544
    %v5546 = vxor.u32 %v5513, 2147483648
    %v5547 = vmul.f32 %v5546, 1.442695
    %v5548 = vpow.pop %v5547
    %v5549 = vadd.f32 %v5548, 1.0
    %v5550 = vrcp.pop %v5549
    %v5551 = vmul.f32 1.0, %v5550
    %v5552 = vtanh.pop %v5514
    %v5553 = vxor.u32 %v5515, 2147483648
    %v5554 = vmul.f32 %v5553, 1.442695
    %v5555 = vpow.pop %v5554
    %v5556 = vadd.f32 %v5555, 1.0
    %v5557 = vrcp.pop %v5556
    %v5558 = vmul.f32 1.0, %v5557
    %v5559 = vmul.f32 %v5551, %v5329
    %v5560 = vmul.f32 %v5545, %v5552
    %v5561 = vadd.f32 %v5559, %v5560
    %v5562 = vtanh.pop %v5561
    %v5563 = vmul.f32 %v5558, %v5562
    %v5564 = vpack.c.bf16 %v5539, %v5539
    %v5565 = vpack.c.bf16 %v5563, %v5563
    %5566 = vst [vmem:[#allocation4 + $0x40] sm:$0xff] %v5539
    %5567 = vst [vmem:[#allocation4 + $0x38] sm:$0xff] %v5563
    %v5568 = vld [vmem:[#allocation3 + $0x140] sm:$0xff]
    %v5569 = vld [vmem:[#allocation3 + $0x148] sm:$0xff]
    %v5570 = vld [vmem:[#allocation3 + $0x150] sm:$0xff]
    %v5571 = vld [vmem:[#allocation3 + $0x158] sm:$0xff]
    %5572 = vmatprep.subr.bf16.mxu0 %v4217
    %5573 = vmatpush1.bf16.msra.mxu0 %v4216
    %5574 = vmatprep.subr.bf16.mxu0 %v4213
    %5575 = vmatpush1.bf16.msra.mxu0 %v4212
    %5576 = vmatprep.subr.bf16.mxu0 %v4209
    %5577 = vmatpush1.bf16.msra.mxu0 %v4208
    %5578 = vmatprep.subr.bf16.mxu0 %v4205
    %5579 = vmatpush1.bf16.msra.mxu0 %v4204
    %5580 = vmatprep.subr.bf16.mxu0 %v4201
    %5581 = vmatpush1.bf16.msra.mxu0 %v4200
    %5582 = vmatprep.subr.bf16.mxu0 %v4197
    %5583 = vmatpush1.bf16.msra.mxu0 %v4196
    %5584 = vmatprep.subr.bf16.mxu0 %v4193
    %5585 = vmatpush1.bf16.msra.mxu0 %v4192
    %5586 = vmatprep.subr.bf16.mxu0 %v4189
    %5587 = vmatpush1.bf16.msra.mxu0 %v4188
    %5588 = vmatprep.subr.bf16.mxu0 0
    %5589 = vmatpush2.bf16.msra.mxu0 0
    %5590 = vmatprep.subr.bf16.mxu0 0
    %5591 = vmatpush2.bf16.msra.mxu0 0
    %5592 = vmatprep.subr.bf16.mxu0 0
    %5593 = vmatpush2.bf16.msra.mxu0 0
    %5594 = vmatprep.subr.bf16.mxu0 0
    %5595 = vmatpush2.bf16.msra.mxu0 0
    %5596 = vmatprep.subr.bf16.mxu0 0
    %5597 = vmatpush2.bf16.msra.mxu0 0
    %5598 = vmatprep.subr.bf16.mxu0 0
    %5599 = vmatpush2.bf16.msra.mxu0 0
    %5600 = vmatprep.subr.bf16.mxu0 0
    %5601 = vmatpush2.bf16.msra.mxu0 0
    %5602 = vmatprep.subr.bf16.mxu0 0
    %5603 = vmatpush2.bf16.msra.mxu0 0
    %5604 = vmatprep.mubr.bf16.mxu0 0
    %5605 = vmatmul.mubr.bf16.gmra.mxu0 %v5564
    %v5606 = vpop.f32.mrf.mxu0
    %v5607 = vadd.f32 0.0, %v5606
    %v5608 = vpop.f32.mrf.mxu0
    %v5609 = vadd.f32 0.0, %v5608
    %v5610 = vpop.f32.mrf.mxu0
    %v5611 = vpop.f32.mrf.mxu0
    %5612 = vdwg.mxu0
    %5613 = vmatprep.subr.bf16.mxu0 %v4219
    %5614 = vmatpush1.bf16.msra.mxu0 %v4218
    %5615 = vmatprep.subr.bf16.mxu0 %v4215
    %5616 = vmatpush1.bf16.msra.mxu0 %v4214
    %5617 = vmatprep.subr.bf16.mxu0 %v4211
    %5618 = vmatpush1.bf16.msra.mxu0 %v4210
    %5619 = vmatprep.subr.bf16.mxu0 %v4207
    %5620 = vmatpush1.bf16.msra.mxu0 %v4206
    %5621 = vmatprep.subr.bf16.mxu0 %v4203
    %5622 = vmatpush1.bf16.msra.mxu0 %v4202
    %5623 = vmatprep.subr.bf16.mxu0 %v4199
    %5624 = vmatpush1.bf16.msra.mxu0 %v4198
    %5625 = vmatprep.subr.bf16.mxu0 %v4195
    %5626 = vmatpush1.bf16.msra.mxu0 %v4194
    %5627 = vmatprep.subr.bf16.mxu0 %v4191
    %5628 = vmatpush1.bf16.msra.mxu0 %v4190
    %5629 = vmatprep.subr.bf16.mxu0 0
    %5630 = vmatpush2.bf16.msra.mxu0 0
    %5631 = vmatprep.subr.bf16.mxu0 0
    %5632 = vmatpush2.bf16.msra.mxu0 0
    %5633 = vmatprep.subr.bf16.mxu0 0
    %5634 = vmatpush2.bf16.msra.mxu0 0
    %5635 = vmatprep.subr.bf16.mxu0 0
    %5636 = vmatpush2.bf16.msra.mxu0 0
    %5637 = vmatprep.subr.bf16.mxu0 0
    %5638 = vmatpush2.bf16.msra.mxu0 0
    %5639 = vmatprep.subr.bf16.mxu0 0
    %5640 = vmatpush2.bf16.msra.mxu0 0
    %5641 = vmatprep.subr.bf16.mxu0 0
    %5642 = vmatpush2.bf16.msra.mxu0 0
    %5643 = vmatprep.subr.bf16.mxu0 0
    %5644 = vmatpush2.bf16.msra.mxu0 0
    %5645 = vmatprep.mubr.bf16.mxu0 0
    %5646 = vmatmul.mubr.bf16.gmra.mxu0 %v5564
    %v5647 = vpop.f32.mrf.mxu0
    %v5648 = vadd.f32 0.0, %v5647
    %v5649 = vpop.f32.mrf.mxu0
    %v5650 = vadd.f32 0.0, %v5649
    %v5651 = vpop.f32.mrf.mxu0
    %v5652 = vpop.f32.mrf.mxu0
    %5653 = vdwg.mxu0
    %v5654 = vadd.f32 %v5568, %v5607
    %v5655 = vadd.f32 %v5569, %v5609
    %v5656 = vadd.f32 %v5570, %v5648
    %v5657 = vadd.f32 %v5571, %v5650
    %v5658 = vld [vmem:[#allocation3 + $0xa0] sm:$0xff]
    %v5659 = vld [vmem:[#allocation3 + $0xa8] sm:$0xff]
    %v5660 = vld [vmem:[#allocation3 + $0xb0] sm:$0xff]
    %v5661 = vld [vmem:[#allocation3 + $0xb8] sm:$0xff]
    %5662 = vmatprep.subr.bf16.mxu0 %v4467
    %5663 = vmatpush1.bf16.msra.mxu0 %v4466
    %5664 = vmatprep.subr.bf16.mxu0 %v4463
    %5665 = vmatpush1.bf16.msra.mxu0 %v4462
    %5666 = vmatprep.subr.bf16.mxu0 %v4459
    %5667 = vmatpush1.bf16.msra.mxu0 %v4458
    %5668 = vmatprep.subr.bf16.mxu0 %v4455
    %5669 = vmatpush1.bf16.msra.mxu0 %v4454
    %5670 = vmatprep.subr.bf16.mxu0 %v4451
    %5671 = vmatpush1.bf16.msra.mxu0 %v4450
    %5672 = vmatprep.subr.bf16.mxu0 %v4447
    %5673 = vmatpush1.bf16.msra.mxu0 %v4446
    %5674 = vmatprep.subr.bf16.mxu0 %v4443
    %5675 = vmatpush1.bf16.msra.mxu0 %v4442
    %5676 = vmatprep.subr.bf16.mxu0 %v4439
    %5677 = vmatpush1.bf16.msra.mxu0 %v4438
    %5678 = vmatprep.subr.bf16.mxu0 0
    %5679 = vmatpush2.bf16.msra.mxu0 0
    %5680 = vmatprep.subr.bf16.mxu0 0
    %5681 = vmatpush2.bf16.msra.mxu0 0
    %5682 = vmatprep.subr.bf16.mxu0 0
    %5683 = vmatpush2.bf16.msra.mxu0 0
    %5684 = vmatprep.subr.bf16.mxu0 0
    %5685 = vmatpush2.bf16.msra.mxu0 0
    %5686 = vmatprep.subr.bf16.mxu0 0
    %5687 = vmatpush2.bf16.msra.mxu0 0
    %5688 = vmatprep.subr.bf16.mxu0 0
    %5689 = vmatpush2.bf16.msra.mxu0 0
    %5690 = vmatprep.subr.bf16.mxu0 0
    %5691 = vmatpush2.bf16.msra.mxu0 0
    %5692 = vmatprep.subr.bf16.mxu0 0
    %5693 = vmatpush2.bf16.msra.mxu0 0
    %5694 = vmatprep.mubr.bf16.mxu0 0
    %5695 = vmatmul.mubr.bf16.gmra.mxu0 %v5565
    %v5696 = vpop.f32.mrf.mxu0
    %v5697 = vadd.f32 0.0, %v5696
    %v5698 = vpop.f32.mrf.mxu0
    %v5699 = vadd.f32 0.0, %v5698
    %v5700 = vpop.f32.mrf.mxu0
    %v5701 = vpop.f32.mrf.mxu0
    %5702 = vdwg.mxu0
    %5703 = vmatprep.subr.bf16.mxu0 %v4469
    %5704 = vmatpush1.bf16.msra.mxu0 %v4468
    %5705 = vmatprep.subr.bf16.mxu0 %v4465
    %5706 = vmatpush1.bf16.msra.mxu0 %v4464
    %5707 = vmatprep.subr.bf16.mxu0 %v4461
    %5708 = vmatpush1.bf16.msra.mxu0 %v4460
    %5709 = vmatprep.subr.bf16.mxu0 %v4457
    %5710 = vmatpush1.bf16.msra.mxu0 %v4456
    %5711 = vmatprep.subr.bf16.mxu0 %v4453
    %5712 = vmatpush1.bf16.msra.mxu0 %v4452
    %5713 = vmatprep.subr.bf16.mxu0 %v4449
    %5714 = vmatpush1.bf16.msra.mxu0 %v4448
    %5715 = vmatprep.subr.bf16.mxu0 %v4445
    %5716 = vmatpush1.bf16.msra.mxu0 %v4444
    %5717 = vmatprep.subr.bf16.mxu0 %v4441
    %5718 = vmatpush1.bf16.msra.mxu0 %v4440
    %5719 = vmatprep.subr.bf16.mxu0 0
    %5720 = vmatpush2.bf16.msra.mxu0 0
    %5721 = vmatprep.subr.bf16.mxu0 0
    %5722 = vmatpush2.bf16.msra.mxu0 0
    %5723 = vmatprep.subr.bf16.mxu0 0
    %5724 = vmatpush2.bf16.msra.mxu0 0
    %5725 = vmatprep.subr.bf16.mxu0 0
    %5726 = vmatpush2.bf16.msra.mxu0 0
    %5727 = vmatprep.subr.bf16.mxu0 0
    %5728 = vmatpush2.bf16.msra.mxu0 0
    %5729 = vmatprep.subr.bf16.mxu0 0
    %5730 = vmatpush2.bf16.msra.mxu0 0
    %5731 = vmatprep.subr.bf16.mxu0 0
    %5732 = vmatpush2.bf16.msra.mxu0 0
    %5733 = vmatprep.subr.bf16.mxu0 0
    %5734 = vmatpush2.bf16.msra.mxu0 0
    %5735 = vmatprep.mubr.bf16.mxu0 0
    %5736 = vmatmul.mubr.bf16.gmra.mxu0 %v5565
    %v5737 = vpop.f32.mrf.mxu0
    %v5738 = vadd.f32 0.0, %v5737
    %v5739 = vpop.f32.mrf.mxu0
    %v5740 = vadd.f32 0.0, %v5739
    %v5741 = vpop.f32.mrf.mxu0
    %v5742 = vpop.f32.mrf.mxu0
    %5743 = vdwg.mxu0
    %v5744 = vadd.f32 %v5658, %v5697
    %v5745 = vadd.f32 %v5659, %v5699
    %v5746 = vadd.f32 %v5660, %v5738
    %v5747 = vadd.f32 %v5661, %v5740
    %v5748 = vxor.u32 %v5654, 2147483648
    %v5749 = vmul.f32 %v5748, 1.442695
    %v5750 = vpow.pop %v5749
    %v5751 = vadd.f32 %v5750, 1.0
    %v5752 = vrcp.pop %v5751
    %v5753 = vmul.f32 1.0, %v5752
    %v5754 = vxor.u32 %v5655, 2147483648
    %v5755 = vmul.f32 %v5754, 1.442695
    %v5756 = vpow.pop %v5755
    %v5757 = vadd.f32 %v5756, 1.0
    %v5758 = vrcp.pop %v5757
    %v5759 = vmul.f32 1.0, %v5758
    %v5760 = vtanh.pop %v5656
    %v5761 = vxor.u32 %v5657, 2147483648
    %v5762 = vmul.f32 %v5761, 1.442695
    %v5763 = vpow.pop %v5762
    %v5764 = vadd.f32 %v5763, 1.0
    %v5765 = vrcp.pop %v5764
    %v5766 = vmul.f32 1.0, %v5765
    %v5767 = vmul.f32 %v5759, %v5537
    %v5768 = vmul.f32 %v5753, %v5760
    %v5769 = vadd.f32 %v5767, %v5768
    %v5770 = vtanh.pop %v5769
    %v5771 = vmul.f32 %v5766, %v5770
    %v5772 = vxor.u32 %v5744, 2147483648
    %v5773 = vmul.f32 %v5772, 1.442695
    %v5774 = vpow.pop %v5773
    %v5775 = vadd.f32 %v5774, 1.0
    %v5776 = vrcp.pop %v5775
    %v5777 = vmul.f32 1.0, %v5776
    %v5778 = vxor.u32 %v5745, 2147483648
    %v5779 = vmul.f32 %v5778, 1.442695
    %v5780 = vpow.pop %v5779
    %v5781 = vadd.f32 %v5780, 1.0
    %v5782 = vrcp.pop %v5781
    %v5783 = vmul.f32 1.0, %v5782
    %v5784 = vtanh.pop %v5746
    %v5785 = vxor.u32 %v5747, 2147483648
    %v5786 = vmul.f32 %v5785, 1.442695
    %v5787 = vpow.pop %v5786
    %v5788 = vadd.f32 %v5787, 1.0
    %v5789 = vrcp.pop %v5788
    %v5790 = vmul.f32 1.0, %v5789
    %v5791 = vmul.f32 %v5783, %v5561
    %v5792 = vmul.f32 %v5777, %v5784
    %v5793 = vadd.f32 %v5791, %v5792
    %v5794 = vtanh.pop %v5793
    %v5795 = vmul.f32 %v5790, %v5794
    %v5796 = vpack.c.bf16 %v5771, %v5771
    %v5797 = vpack.c.bf16 %v5795, %v5795
    %5798 = vst [vmem:[#allocation4 + $0x50] sm:$0xff] %v5771
    %5799 = vst [vmem:[#allocation4 + $0x28] sm:$0xff] %v5795
    %v5800 = vld [vmem:[#allocation3 + $0x180] sm:$0xff]
    %v5801 = vld [vmem:[#allocation3 + $0x188] sm:$0xff]
    %v5802 = vld [vmem:[#allocation3 + $0x190] sm:$0xff]
    %v5803 = vld [vmem:[#allocation3 + $0x198] sm:$0xff]
    %5804 = vmatprep.subr.bf16.mxu0 %v4217
    %5805 = vmatpush1.bf16.msra.mxu0 %v4216
    %5806 = vmatprep.subr.bf16.mxu0 %v4213
    %5807 = vmatpush1.bf16.msra.mxu0 %v4212
    %5808 = vmatprep.subr.bf16.mxu0 %v4209
    %5809 = vmatpush1.bf16.msra.mxu0 %v4208
    %5810 = vmatprep.subr.bf16.mxu0 %v4205
    %5811 = vmatpush1.bf16.msra.mxu0 %v4204
    %5812 = vmatprep.subr.bf16.mxu0 %v4201
    %5813 = vmatpush1.bf16.msra.mxu0 %v4200
    %5814 = vmatprep.subr.bf16.mxu0 %v4197
    %5815 = vmatpush1.bf16.msra.mxu0 %v4196
    %5816 = vmatprep.subr.bf16.mxu0 %v4193
    %5817 = vmatpush1.bf16.msra.mxu0 %v4192
    %5818 = vmatprep.subr.bf16.mxu0 %v4189
    %5819 = vmatpush1.bf16.msra.mxu0 %v4188
    %5820 = vmatprep.subr.bf16.mxu0 0
    %5821 = vmatpush2.bf16.msra.mxu0 0
    %5822 = vmatprep.subr.bf16.mxu0 0
    %5823 = vmatpush2.bf16.msra.mxu0 0
    %5824 = vmatprep.subr.bf16.mxu0 0
    %5825 = vmatpush2.bf16.msra.mxu0 0
    %5826 = vmatprep.subr.bf16.mxu0 0
    %5827 = vmatpush2.bf16.msra.mxu0 0
    %5828 = vmatprep.subr.bf16.mxu0 0
    %5829 = vmatpush2.bf16.msra.mxu0 0
    %5830 = vmatprep.subr.bf16.mxu0 0
    %5831 = vmatpush2.bf16.msra.mxu0 0
    %5832 = vmatprep.subr.bf16.mxu0 0
    %5833 = vmatpush2.bf16.msra.mxu0 0
    %5834 = vmatprep.subr.bf16.mxu0 0
    %5835 = vmatpush2.bf16.msra.mxu0 0
    %5836 = vmatprep.mubr.bf16.mxu0 0
    %5837 = vmatmul.mubr.bf16.gmra.mxu0 %v5796
    %v5838 = vpop.f32.mrf.mxu0
    %v5839 = vadd.f32 0.0, %v5838
    %v5840 = vpop.f32.mrf.mxu0
    %v5841 = vadd.f32 0.0, %v5840
    %v5842 = vpop.f32.mrf.mxu0
    %v5843 = vpop.f32.mrf.mxu0
    %5844 = vdwg.mxu0
    %5845 = vmatprep.subr.bf16.mxu0 %v4219
    %5846 = vmatpush1.bf16.msra.mxu0 %v4218
    %5847 = vmatprep.subr.bf16.mxu0 %v4215
    %5848 = vmatpush1.bf16.msra.mxu0 %v4214
    %5849 = vmatprep.subr.bf16.mxu0 %v4211
    %5850 = vmatpush1.bf16.msra.mxu0 %v4210
    %5851 = vmatprep.subr.bf16.mxu0 %v4207
    %5852 = vmatpush1.bf16.msra.mxu0 %v4206
    %5853 = vmatprep.subr.bf16.mxu0 %v4203
    %5854 = vmatpush1.bf16.msra.mxu0 %v4202
    %5855 = vmatprep.subr.bf16.mxu0 %v4199
    %5856 = vmatpush1.bf16.msra.mxu0 %v4198
    %5857 = vmatprep.subr.bf16.mxu0 %v4195
    %5858 = vmatpush1.bf16.msra.mxu0 %v4194
    %5859 = vmatprep.subr.bf16.mxu0 %v4191
    %5860 = vmatpush1.bf16.msra.mxu0 %v4190
    %5861 = vmatprep.subr.bf16.mxu0 0
    %5862 = vmatpush2.bf16.msra.mxu0 0
    %5863 = vmatprep.subr.bf16.mxu0 0
    %5864 = vmatpush2.bf16.msra.mxu0 0
    %5865 = vmatprep.subr.bf16.mxu0 0
    %5866 = vmatpush2.bf16.msra.mxu0 0
    %5867 = vmatprep.subr.bf16.mxu0 0
    %5868 = vmatpush2.bf16.msra.mxu0 0
    %5869 = vmatprep.subr.bf16.mxu0 0
    %5870 = vmatpush2.bf16.msra.mxu0 0
    %5871 = vmatprep.subr.bf16.mxu0 0
    %5872 = vmatpush2.bf16.msra.mxu0 0
    %5873 = vmatprep.subr.bf16.mxu0 0
    %5874 = vmatpush2.bf16.msra.mxu0 0
    %5875 = vmatprep.subr.bf16.mxu0 0
    %5876 = vmatpush2.bf16.msra.mxu0 0
    %5877 = vmatprep.mubr.bf16.mxu0 0
    %5878 = vmatmul.mubr.bf16.gmra.mxu0 %v5796
    %v5879 = vpop.f32.mrf.mxu0
    %v5880 = vadd.f32 0.0, %v5879
    %v5881 = vpop.f32.mrf.mxu0
    %v5882 = vadd.f32 0.0, %v5881
    %v5883 = vpop.f32.mrf.mxu0
    %v5884 = vpop.f32.mrf.mxu0
    %5885 = vdwg.mxu0
    %v5886 = vadd.f32 %v5800, %v5839
    %v5887 = vadd.f32 %v5801, %v5841
    %v5888 = vadd.f32 %v5802, %v5880
    %v5889 = vadd.f32 %v5803, %v5882
    %v5890 = vld [vmem:[#allocation3 + $0x60] sm:$0xff]
    %v5891 = vld [vmem:[#allocation3 + $0x68] sm:$0xff]
    %v5892 = vld [vmem:[#allocation3 + $0x70] sm:$0xff]
    %v5893 = vld [vmem:[#allocation3 + $0x78] sm:$0xff]
    %5894 = vmatprep.subr.bf16.mxu0 %v4467
    %5895 = vmatpush1.bf16.msra.mxu0 %v4466
    %5896 = vmatprep.subr.bf16.mxu0 %v4463
    %5897 = vmatpush1.bf16.msra.mxu0 %v4462
    %5898 = vmatprep.subr.bf16.mxu0 %v4459
    %5899 = vmatpush1.bf16.msra.mxu0 %v4458
    %5900 = vmatprep.subr.bf16.mxu0 %v4455
    %5901 = vmatpush1.bf16.msra.mxu0 %v4454
    %5902 = vmatprep.subr.bf16.mxu0 %v4451
    %5903 = vmatpush1.bf16.msra.mxu0 %v4450
    %5904 = vmatprep.subr.bf16.mxu0 %v4447
    %5905 = vmatpush1.bf16.msra.mxu0 %v4446
    %5906 = vmatprep.subr.bf16.mxu0 %v4443
    %5907 = vmatpush1.bf16.msra.mxu0 %v4442
    %5908 = vmatprep.subr.bf16.mxu0 %v4439
    %5909 = vmatpush1.bf16.msra.mxu0 %v4438
    %5910 = vmatprep.subr.bf16.mxu0 0
    %5911 = vmatpush2.bf16.msra.mxu0 0
    %5912 = vmatprep.subr.bf16.mxu0 0
    %5913 = vmatpush2.bf16.msra.mxu0 0
    %5914 = vmatprep.subr.bf16.mxu0 0
    %5915 = vmatpush2.bf16.msra.mxu0 0
    %5916 = vmatprep.subr.bf16.mxu0 0
    %5917 = vmatpush2.bf16.msra.mxu0 0
    %5918 = vmatprep.subr.bf16.mxu0 0
    %5919 = vmatpush2.bf16.msra.mxu0 0
    %5920 = vmatprep.subr.bf16.mxu0 0
    %5921 = vmatpush2.bf16.msra.mxu0 0
    %5922 = vmatprep.subr.bf16.mxu0 0
    %5923 = vmatpush2.bf16.msra.mxu0 0
    %5924 = vmatprep.subr.bf16.mxu0 0
    %5925 = vmatpush2.bf16.msra.mxu0 0
    %5926 = vmatprep.mubr.bf16.mxu0 0
    %5927 = vmatmul.mubr.bf16.gmra.mxu0 %v5797
    %v5928 = vpop.f32.mrf.mxu0
    %v5929 = vadd.f32 0.0, %v5928
    %v5930 = vpop.f32.mrf.mxu0
    %v5931 = vadd.f32 0.0, %v5930
    %v5932 = vpop.f32.mrf.mxu0
    %v5933 = vpop.f32.mrf.mxu0
    %5934 = vdwg.mxu0
    %5935 = vmatprep.subr.bf16.mxu0 %v4469
    %5936 = vmatpush1.bf16.msra.mxu0 %v4468
    %5937 = vmatprep.subr.bf16.mxu0 %v4465
    %5938 = vmatpush1.bf16.msra.mxu0 %v4464
    %5939 = vmatprep.subr.bf16.mxu0 %v4461
    %5940 = vmatpush1.bf16.msra.mxu0 %v4460
    %5941 = vmatprep.subr.bf16.mxu0 %v4457
    %5942 = vmatpush1.bf16.msra.mxu0 %v4456
    %5943 = vmatprep.subr.bf16.mxu0 %v4453
    %5944 = vmatpush1.bf16.msra.mxu0 %v4452
    %5945 = vmatprep.subr.bf16.mxu0 %v4449
    %5946 = vmatpush1.bf16.msra.mxu0 %v4448
    %5947 = vmatprep.subr.bf16.mxu0 %v4445
    %5948 = vmatpush1.bf16.msra.mxu0 %v4444
    %5949 = vmatprep.subr.bf16.mxu0 %v4441
    %5950 = vmatpush1.bf16.msra.mxu0 %v4440
    %5951 = vmatprep.subr.bf16.mxu0 0
    %5952 = vmatpush2.bf16.msra.mxu0 0
    %5953 = vmatprep.subr.bf16.mxu0 0
    %5954 = vmatpush2.bf16.msra.mxu0 0
    %5955 = vmatprep.subr.bf16.mxu0 0
    %5956 = vmatpush2.bf16.msra.mxu0 0
    %5957 = vmatprep.subr.bf16.mxu0 0
    %5958 = vmatpush2.bf16.msra.mxu0 0
    %5959 = vmatprep.subr.bf16.mxu0 0
    %5960 = vmatpush2.bf16.msra.mxu0 0
    %5961 = vmatprep.subr.bf16.mxu0 0
    %5962 = vmatpush2.bf16.msra.mxu0 0
    %5963 = vmatprep.subr.bf16.mxu0 0
    %5964 = vmatpush2.bf16.msra.mxu0 0
    %5965 = vmatprep.subr.bf16.mxu0 0
    %5966 = vmatpush2.bf16.msra.mxu0 0
    %5967 = vmatprep.mubr.bf16.mxu0 0
    %5968 = vmatmul.mubr.bf16.gmra.mxu0 %v5797
    %v5969 = vpop.f32.mrf.mxu0
    %v5970 = vadd.f32 0.0, %v5969
    %v5971 = vpop.f32.mrf.mxu0
    %v5972 = vadd.f32 0.0, %v5971
    %v5973 = vpop.f32.mrf.mxu0
    %v5974 = vpop.f32.mrf.mxu0
    %5975 = vdwg.mxu0
    %v5976 = vadd.f32 %v5890, %v5929
    %v5977 = vadd.f32 %v5891, %v5931
    %v5978 = vadd.f32 %v5892, %v5970
    %v5979 = vadd.f32 %v5893, %v5972
    %v5980 = vxor.u32 %v5886, 2147483648
    %v5981 = vmul.f32 %v5980, 1.442695
    %v5982 = vpow.pop %v5981
    %v5983 = vadd.f32 %v5982, 1.0
    %v5984 = vrcp.pop %v5983
    %v5985 = vmul.f32 1.0, %v5984
    %v5986 = vxor.u32 %v5887, 2147483648
    %v5987 = vmul.f32 %v5986, 1.442695
    %v5988 = vpow.pop %v5987
    %v5989 = vadd.f32 %v5988, 1.0
    %v5990 = vrcp.pop %v5989
    %v5991 = vmul.f32 1.0, %v5990
    %v5992 = vtanh.pop %v5888
    %v5993 = vxor.u32 %v5889, 2147483648
    %v5994 = vmul.f32 %v5993, 1.442695
    %v5995 = vpow.pop %v5994
    %v5996 = vadd.f32 %v5995, 1.0
    %v5997 = vrcp.pop %v5996
    %v5998 = vmul.f32 1.0, %v5997
    %v5999 = vmul.f32 %v5991, %v5769
    %v6000 = vmul.f32 %v5985, %v5992
    %v6001 = vadd.f32 %v5999, %v6000
    %v6002 = vtanh.pop %v6001
    %v6003 = vmul.f32 %v5998, %v6002
    %v6004 = vxor.u32 %v5976, 2147483648
    %v6005 = vmul.f32 %v6004, 1.442695
    %v6006 = vpow.pop %v6005
    %v6007 = vadd.f32 %v6006, 1.0
    %v6008 = vrcp.pop %v6007
    %v6009 = vmul.f32 1.0, %v6008
    %v6010 = vxor.u32 %v5977, 2147483648
    %v6011 = vmul.f32 %v6010, 1.442695
    %v6012 = vpow.pop %v6011
    %v6013 = vadd.f32 %v6012, 1.0
    %v6014 = vrcp.pop %v6013
    %v6015 = vmul.f32 1.0, %v6014
    %v6016 = vtanh.pop %v5978
    %v6017 = vxor.u32 %v5979, 2147483648
    %v6018 = vmul.f32 %v6017, 1.442695
    %v6019 = vpow.pop %v6018
    %v6020 = vadd.f32 %v6019, 1.0
    %v6021 = vrcp.pop %v6020
    %v6022 = vmul.f32 1.0, %v6021
    %v6023 = vmul.f32 %v6015, %v5793
    %v6024 = vmul.f32 %v6009, %v6016
    %v6025 = vadd.f32 %v6023, %v6024
    %v6026 = vtanh.pop %v6025
    %v6027 = vmul.f32 %v6022, %v6026
    %v6028 = vpack.c.bf16 %v6003, %v6003
    %v6029 = vpack.c.bf16 %v6027, %v6027
    %6030 = vst [vmem:[#allocation4 + $0x60] sm:$0xff] %v6003
    %6031 = vst [vmem:[#allocation4 + $0x18] sm:$0xff] %v6027
    %v6032 = vld [vmem:[#allocation3 + $0x1c0] sm:$0xff]
    %v6033 = vld [vmem:[#allocation3 + $0x1c8] sm:$0xff]
    %v6034 = vld [vmem:[#allocation3 + $0x1d0] sm:$0xff]
    %v6035 = vld [vmem:[#allocation3 + $0x1d8] sm:$0xff]
    %6036 = vmatprep.subr.bf16.mxu0 %v4217
    %6037 = vmatpush1.bf16.msra.mxu0 %v4216
    %6038 = vmatprep.subr.bf16.mxu0 %v4213
    %6039 = vmatpush1.bf16.msra.mxu0 %v4212
    %6040 = vmatprep.subr.bf16.mxu0 %v4209
    %6041 = vmatpush1.bf16.msra.mxu0 %v4208
    %6042 = vmatprep.subr.bf16.mxu0 %v4205
    %6043 = vmatpush1.bf16.msra.mxu0 %v4204
    %6044 = vmatprep.subr.bf16.mxu0 %v4201
    %6045 = vmatpush1.bf16.msra.mxu0 %v4200
    %6046 = vmatprep.subr.bf16.mxu0 %v4197
    %6047 = vmatpush1.bf16.msra.mxu0 %v4196
    %6048 = vmatprep.subr.bf16.mxu0 %v4193
    %6049 = vmatpush1.bf16.msra.mxu0 %v4192
    %6050 = vmatprep.subr.bf16.mxu0 %v4189
    %6051 = vmatpush1.bf16.msra.mxu0 %v4188
    %6052 = vmatprep.subr.bf16.mxu0 0
    %6053 = vmatpush2.bf16.msra.mxu0 0
    %6054 = vmatprep.subr.bf16.mxu0 0
    %6055 = vmatpush2.bf16.msra.mxu0 0
    %6056 = vmatprep.subr.bf16.mxu0 0
    %6057 = vmatpush2.bf16.msra.mxu0 0
    %6058 = vmatprep.subr.bf16.mxu0 0
    %6059 = vmatpush2.bf16.msra.mxu0 0
    %6060 = vmatprep.subr.bf16.mxu0 0
    %6061 = vmatpush2.bf16.msra.mxu0 0
    %6062 = vmatprep.subr.bf16.mxu0 0
    %6063 = vmatpush2.bf16.msra.mxu0 0
    %6064 = vmatprep.subr.bf16.mxu0 0
    %6065 = vmatpush2.bf16.msra.mxu0 0
    %6066 = vmatprep.subr.bf16.mxu0 0
    %6067 = vmatpush2.bf16.msra.mxu0 0
    %6068 = vmatprep.mubr.bf16.mxu0 0
    %6069 = vmatmul.mubr.bf16.gmra.mxu0 %v6028
    %v6070 = vpop.f32.mrf.mxu0
    %v6071 = vadd.f32 0.0, %v6070
    %v6072 = vpop.f32.mrf.mxu0
    %v6073 = vadd.f32 0.0, %v6072
    %v6074 = vpop.f32.mrf.mxu0
    %v6075 = vpop.f32.mrf.mxu0
    %6076 = vdwg.mxu0
    %6077 = vmatprep.subr.bf16.mxu0 %v4219
    %6078 = vmatpush1.bf16.msra.mxu0 %v4218
    %6079 = vmatprep.subr.bf16.mxu0 %v4215
    %6080 = vmatpush1.bf16.msra.mxu0 %v4214
    %6081 = vmatprep.subr.bf16.mxu0 %v4211
    %6082 = vmatpush1.bf16.msra.mxu0 %v4210
    %6083 = vmatprep.subr.bf16.mxu0 %v4207
    %6084 = vmatpush1.bf16.msra.mxu0 %v4206
    %6085 = vmatprep.subr.bf16.mxu0 %v4203
    %6086 = vmatpush1.bf16.msra.mxu0 %v4202
    %6087 = vmatprep.subr.bf16.mxu0 %v4199
    %6088 = vmatpush1.bf16.msra.mxu0 %v4198
    %6089 = vmatprep.subr.bf16.mxu0 %v4195
    %6090 = vmatpush1.bf16.msra.mxu0 %v4194
    %6091 = vmatprep.subr.bf16.mxu0 %v4191
    %6092 = vmatpush1.bf16.msra.mxu0 %v4190
    %6093 = vmatprep.subr.bf16.mxu0 0
    %6094 = vmatpush2.bf16.msra.mxu0 0
    %6095 = vmatprep.subr.bf16.mxu0 0
    %6096 = vmatpush2.bf16.msra.mxu0 0
    %6097 = vmatprep.subr.bf16.mxu0 0
    %6098 = vmatpush2.bf16.msra.mxu0 0
    %6099 = vmatprep.subr.bf16.mxu0 0
    %6100 = vmatpush2.bf16.msra.mxu0 0
    %6101 = vmatprep.subr.bf16.mxu0 0
    %6102 = vmatpush2.bf16.msra.mxu0 0
    %6103 = vmatprep.subr.bf16.mxu0 0
    %6104 = vmatpush2.bf16.msra.mxu0 0
    %6105 = vmatprep.subr.bf16.mxu0 0
    %6106 = vmatpush2.bf16.msra.mxu0 0
    %6107 = vmatprep.subr.bf16.mxu0 0
    %6108 = vmatpush2.bf16.msra.mxu0 0
    %6109 = vmatprep.mubr.bf16.mxu0 0
    %6110 = vmatmul.mubr.bf16.gmra.mxu0 %v6028
    %v6111 = vpop.f32.mrf.mxu0
    %v6112 = vadd.f32 0.0, %v6111
    %v6113 = vpop.f32.mrf.mxu0
    %v6114 = vadd.f32 0.0, %v6113
    %v6115 = vpop.f32.mrf.mxu0
    %v6116 = vpop.f32.mrf.mxu0
    %6117 = vdwg.mxu0
    %v6118 = vadd.f32 %v6032, %v6071
    %v6119 = vadd.f32 %v6033, %v6073
    %v6120 = vadd.f32 %v6034, %v6112
    %v6121 = vadd.f32 %v6035, %v6114
    %v6122 = vld [vmem:[#allocation3 + $0x20] sm:$0xff]
    %v6123 = vld [vmem:[#allocation3 + $0x28] sm:$0xff]
    %v6124 = vld [vmem:[#allocation3 + $0x30] sm:$0xff]
    %v6125 = vld [vmem:[#allocation3 + $0x38] sm:$0xff]
    %6126 = vmatprep.subr.bf16.mxu0 %v4467
    %6127 = vmatpush1.bf16.msra.mxu0 %v4466
    %6128 = vmatprep.subr.bf16.mxu0 %v4463
    %6129 = vmatpush1.bf16.msra.mxu0 %v4462
    %6130 = vmatprep.subr.bf16.mxu0 %v4459
    %6131 = vmatpush1.bf16.msra.mxu0 %v4458
    %6132 = vmatprep.subr.bf16.mxu0 %v4455
    %6133 = vmatpush1.bf16.msra.mxu0 %v4454
    %6134 = vmatprep.subr.bf16.mxu0 %v4451
    %6135 = vmatpush1.bf16.msra.mxu0 %v4450
    %6136 = vmatprep.subr.bf16.mxu0 %v4447
    %6137 = vmatpush1.bf16.msra.mxu0 %v4446
    %6138 = vmatprep.subr.bf16.mxu0 %v4443
    %6139 = vmatpush1.bf16.msra.mxu0 %v4442
    %6140 = vmatprep.subr.bf16.mxu0 %v4439
    %6141 = vmatpush1.bf16.msra.mxu0 %v4438
    %6142 = vmatprep.subr.bf16.mxu0 0
    %6143 = vmatpush2.bf16.msra.mxu0 0
    %6144 = vmatprep.subr.bf16.mxu0 0
    %6145 = vmatpush2.bf16.msra.mxu0 0
    %6146 = vmatprep.subr.bf16.mxu0 0
    %6147 = vmatpush2.bf16.msra.mxu0 0
    %6148 = vmatprep.subr.bf16.mxu0 0
    %6149 = vmatpush2.bf16.msra.mxu0 0
    %6150 = vmatprep.subr.bf16.mxu0 0
    %6151 = vmatpush2.bf16.msra.mxu0 0
    %6152 = vmatprep.subr.bf16.mxu0 0
    %6153 = vmatpush2.bf16.msra.mxu0 0
    %6154 = vmatprep.subr.bf16.mxu0 0
    %6155 = vmatpush2.bf16.msra.mxu0 0
    %6156 = vmatprep.subr.bf16.mxu0 0
    %6157 = vmatpush2.bf16.msra.mxu0 0
    %6158 = vmatprep.mubr.bf16.mxu0 0
    %6159 = vmatmul.mubr.bf16.gmra.mxu0 %v6029
    %v6160 = vpop.f32.mrf.mxu0
    %v6161 = vadd.f32 0.0, %v6160
    %v6162 = vpop.f32.mrf.mxu0
    %v6163 = vadd.f32 0.0, %v6162
    %v6164 = vpop.f32.mrf.mxu0
    %v6165 = vpop.f32.mrf.mxu0
    %6166 = vdwg.mxu0
    %6167 = vmatprep.subr.bf16.mxu0 %v4469
    %6168 = vmatpush1.bf16.msra.mxu0 %v4468
    %6169 = vmatprep.subr.bf16.mxu0 %v4465
    %6170 = vmatpush1.bf16.msra.mxu0 %v4464
    %6171 = vmatprep.subr.bf16.mxu0 %v4461
    %6172 = vmatpush1.bf16.msra.mxu0 %v4460
    %6173 = vmatprep.subr.bf16.mxu0 %v4457
    %6174 = vmatpush1.bf16.msra.mxu0 %v4456
    %6175 = vmatprep.subr.bf16.mxu0 %v4453
    %6176 = vmatpush1.bf16.msra.mxu0 %v4452
    %6177 = vmatprep.subr.bf16.mxu0 %v4449
    %6178 = vmatpush1.bf16.msra.mxu0 %v4448
    %6179 = vmatprep.subr.bf16.mxu0 %v4445
    %6180 = vmatpush1.bf16.msra.mxu0 %v4444
    %6181 = vmatprep.subr.bf16.mxu0 %v4441
    %6182 = vmatpush1.bf16.msra.mxu0 %v4440
    %6183 = vmatprep.subr.bf16.mxu0 0
    %6184 = vmatpush2.bf16.msra.mxu0 0
    %6185 = vmatprep.subr.bf16.mxu0 0
    %6186 = vmatpush2.bf16.msra.mxu0 0
    %6187 = vmatprep.subr.bf16.mxu0 0
    %6188 = vmatpush2.bf16.msra.mxu0 0
    %6189 = vmatprep.subr.bf16.mxu0 0
    %6190 = vmatpush2.bf16.msra.mxu0 0
    %6191 = vmatprep.subr.bf16.mxu0 0
    %6192 = vmatpush2.bf16.msra.mxu0 0
    %6193 = vmatprep.subr.bf16.mxu0 0
    %6194 = vmatpush2.bf16.msra.mxu0 0
    %6195 = vmatprep.subr.bf16.mxu0 0
    %6196 = vmatpush2.bf16.msra.mxu0 0
    %6197 = vmatprep.subr.bf16.mxu0 0
    %6198 = vmatpush2.bf16.msra.mxu0 0
    %6199 = vmatprep.mubr.bf16.mxu0 0
    %6200 = vmatmul.mubr.bf16.gmra.mxu0 %v6029
    %v6201 = vpop.f32.mrf.mxu0
    %v6202 = vadd.f32 0.0, %v6201
    %v6203 = vpop.f32.mrf.mxu0
    %v6204 = vadd.f32 0.0, %v6203
    %v6205 = vpop.f32.mrf.mxu0
    %v6206 = vpop.f32.mrf.mxu0
    %6207 = vdwg.mxu0
    %v6208 = vadd.f32 %v6122, %v6161
    %v6209 = vadd.f32 %v6123, %v6163
    %v6210 = vadd.f32 %v6124, %v6202
    %v6211 = vadd.f32 %v6125, %v6204
    %v6212 = vxor.u32 %v6118, 2147483648
    %v6213 = vmul.f32 %v6212, 1.442695
    %v6214 = vpow.pop %v6213
    %v6215 = vadd.f32 %v6214, 1.0
    %v6216 = vrcp.pop %v6215
    %v6217 = vmul.f32 1.0, %v6216
    %v6218 = vxor.u32 %v6119, 2147483648
    %v6219 = vmul.f32 %v6218, 1.442695
    %v6220 = vpow.pop %v6219
    %v6221 = vadd.f32 %v6220, 1.0
    %v6222 = vrcp.pop %v6221
    %v6223 = vmul.f32 1.0, %v6222
    %v6224 = vtanh.pop %v6120
    %v6225 = vxor.u32 %v6121, 2147483648
    %v6226 = vmul.f32 %v6225, 1.442695
    %v6227 = vpow.pop %v6226
    %v6228 = vadd.f32 %v6227, 1.0
    %v6229 = vrcp.pop %v6228
    %v6230 = vmul.f32 1.0, %v6229
    %v6231 = vmul.f32 %v6223, %v6001
    %v6232 = vmul.f32 %v6217, %v6224
    %v6233 = vadd.f32 %v6231, %v6232
    %v6234 = vtanh.pop %v6233
    %v6235 = vmul.f32 %v6230, %v6234
    %v6236 = vxor.u32 %v6208, 2147483648
    %v6237 = vmul.f32 %v6236, 1.442695
    %v6238 = vpow.pop %v6237
    %v6239 = vadd.f32 %v6238, 1.0
    %v6240 = vrcp.pop %v6239
    %v6241 = vmul.f32 1.0, %v6240
    %v6242 = vxor.u32 %v6209, 2147483648
    %v6243 = vmul.f32 %v6242, 1.442695
    %v6244 = vpow.pop %v6243
    %v6245 = vadd.f32 %v6244, 1.0
    %v6246 = vrcp.pop %v6245
    %v6247 = vmul.f32 1.0, %v6246
    %v6248 = vtanh.pop %v6210
    %v6249 = vxor.u32 %v6211, 2147483648
    %v6250 = vmul.f32 %v6249, 1.442695
    %v6251 = vpow.pop %v6250
    %v6252 = vadd.f32 %v6251, 1.0
    %v6253 = vrcp.pop %v6252
    %v6254 = vmul.f32 1.0, %v6253
    %v6255 = vmul.f32 %v6247, %v6025
    %v6256 = vmul.f32 %v6241, %v6248
    %v6257 = vadd.f32 %v6255, %v6256
    %v6258 = vtanh.pop %v6257
    %v6259 = vmul.f32 %v6254, %v6258
    %6260 = vst [vmem:[#allocation4 + $0x70] sm:$0xff] %v6235
    %6261 = vst [vmem:[#allocation4 + $0x8] sm:$0xff] %v6259
    %v6262 = vld [vmem:[#allocation4 + $0x70] sm:$0xff]
    %v6263 = vld [vmem:[#allocation4 + $0x78] sm:$0xff]
    %v6264 = vpack.c.bf16 %v6262, %v6262
    %v6265 = vpack.c.bf16 %v6263, %v6263
    %v6266 = vld [vmem:[%s4] sm:$0xf]
    %v6267 = vld [vmem:[%s4 + $0x4] sm:$0xf]
    %v6268 = vld [vmem:[%s4 + $0x8] sm:$0xf]
    %v6269 = vld [vmem:[%s4 + $0xc] sm:$0xf]
    %v6270 = vld [vmem:[%s4 + $0x10] sm:$0xf]
    %v6271 = vld [vmem:[%s4 + $0x14] sm:$0xf]
    %v6272 = vld [vmem:[%s4 + $0x18] sm:$0xf]
    %v6273 = vld [vmem:[%s4 + $0x1c] sm:$0xf]
    %v6274 = vld [vmem:[%s4 + $0x20] sm:$0xf]
    %v6275 = vld [vmem:[%s4 + $0x24] sm:$0xf]
    %v6276 = vld [vmem:[%s4 + $0x28] sm:$0xf]
    %v6277 = vld [vmem:[%s4 + $0x2c] sm:$0xf]
    %v6278 = vld [vmem:[%s4 + $0x30] sm:$0xf]
    %v6279 = vld [vmem:[%s4 + $0x34] sm:$0xf]
    %v6280 = vld [vmem:[%s4 + $0x38] sm:$0xf]
    %v6281 = vld [vmem:[%s4 + $0x3c] sm:$0xf]
    %v6282 = vld [vmem:[%s4 + $0x40] sm:$0xf]
    %v6283 = vld [vmem:[%s4 + $0x44] sm:$0xf]
    %v6284 = vld [vmem:[%s4 + $0x48] sm:$0xf]
    %v6285 = vld [vmem:[%s4 + $0x4c] sm:$0xf]
    %v6286 = vld [vmem:[%s4 + $0x50] sm:$0xf]
    %v6287 = vld [vmem:[%s4 + $0x54] sm:$0xf]
    %v6288 = vld [vmem:[%s4 + $0x58] sm:$0xf]
    %v6289 = vld [vmem:[%s4 + $0x5c] sm:$0xf]
    %v6290 = vld [vmem:[%s4 + $0x60] sm:$0xf]
    %v6291 = vld [vmem:[%s4 + $0x64] sm:$0xf]
    %v6292 = vld [vmem:[%s4 + $0x68] sm:$0xf]
    %v6293 = vld [vmem:[%s4 + $0x6c] sm:$0xf]
    %v6294 = vld [vmem:[%s4 + $0x70] sm:$0xf]
    %v6295 = vld [vmem:[%s4 + $0x74] sm:$0xf]
    %v6296 = vld [vmem:[%s4 + $0x78] sm:$0xf]
    %v6297 = vld [vmem:[%s4 + $0x7c] sm:$0xf]
    %v6298 = vld [vmem:[#allocation8 + $0x2] sm:$0x1]
    %v6299 = vlaneseq
    %v6300 = vshrl.u32 %v6299, 7
    %v6301 = vsub.s32 0, %v6300
    %v6302 = vrot.slane %v6298, %v6301
    %v6335 = vunpack.c.l.b16 %v6266
    %v6336 = vunpack.c.l.b16 %v6267
    %v6337 = vunpack.c.l.b16 %v6268
    %v6338 = vunpack.c.l.b16 %v6269
    %v6339 = vunpack.c.l.b16 %v6270
    %v6340 = vunpack.c.l.b16 %v6271
    %v6341 = vunpack.c.l.b16 %v6272
    %v6342 = vunpack.c.l.b16 %v6273
    %v6343 = vunpack.c.l.b16 %v6274
    %v6344 = vunpack.c.l.b16 %v6275
    %v6345 = vunpack.c.l.b16 %v6276
    %v6346 = vunpack.c.l.b16 %v6277
    %v6347 = vunpack.c.l.b16 %v6278
    %v6348 = vunpack.c.l.b16 %v6279
    %v6349 = vunpack.c.l.b16 %v6280
    %v6350 = vunpack.c.l.b16 %v6281
    %v6351 = vunpack.c.l.b16 %v6282
    %v6352 = vunpack.c.l.b16 %v6283
    %v6353 = vunpack.c.l.b16 %v6284
    %v6354 = vunpack.c.l.b16 %v6285
    %v6355 = vunpack.c.l.b16 %v6286
    %v6356 = vunpack.c.l.b16 %v6287
    %v6357 = vunpack.c.l.b16 %v6288
    %v6358 = vunpack.c.l.b16 %v6289
    %v6359 = vunpack.c.l.b16 %v6290
    %v6360 = vunpack.c.l.b16 %v6291
    %v6361 = vunpack.c.l.b16 %v6292
    %v6362 = vunpack.c.l.b16 %v6293
    %v6363 = vunpack.c.l.b16 %v6294
    %v6364 = vunpack.c.l.b16 %v6295
    %v6365 = vunpack.c.l.b16 %v6296
    %v6366 = vunpack.c.l.b16 %v6297
    %v6367 = vpack.c.b16 %v6336, %v6335
    %v6368 = vpack.c.b16 %v6338, %v6337
    %v6369 = vpack.c.b16 %v6340, %v6339
    %v6370 = vpack.c.b16 %v6342, %v6341
    %v6371 = vpack.c.b16 %v6344, %v6343
    %v6372 = vpack.c.b16 %v6346, %v6345
    %v6373 = vpack.c.b16 %v6348, %v6347
    %v6374 = vpack.c.b16 %v6350, %v6349
    %v6375 = vpack.c.b16 %v6352, %v6351
    %v6376 = vpack.c.b16 %v6354, %v6353
    %v6377 = vpack.c.b16 %v6356, %v6355
    %v6378 = vpack.c.b16 %v6358, %v6357
    %v6379 = vpack.c.b16 %v6360, %v6359
    %v6380 = vpack.c.b16 %v6362, %v6361
    %v6381 = vpack.c.b16 %v6364, %v6363
    %v6382 = vpack.c.b16 %v6366, %v6365
    %6399 = vmatprep.subr.bf16.mxu0 0
    %6400 = vmatpush1.bf16.msra.mxu0 %v6374
    %6401 = vmatprep.subr.bf16.mxu0 0
    %6402 = vmatpush1.bf16.msra.mxu0 %v6373
    %6403 = vmatprep.subr.bf16.mxu0 0
    %6404 = vmatpush1.bf16.msra.mxu0 %v6372
    %6405 = vmatprep.subr.bf16.mxu0 0
    %6406 = vmatpush1.bf16.msra.mxu0 %v6371
    %6407 = vmatprep.subr.bf16.mxu0 0
    %6408 = vmatpush1.bf16.msra.mxu0 %v6370
    %6409 = vmatprep.subr.bf16.mxu0 0
    %6410 = vmatpush1.bf16.msra.mxu0 %v6369
    %6411 = vmatprep.subr.bf16.mxu0 0
    %6412 = vmatpush1.bf16.msra.mxu0 %v6368
    %6413 = vmatprep.subr.bf16.mxu0 0
    %6414 = vmatpush1.bf16.msra.mxu0 %v6367
    %6415 = vmatprep.subr.bf16.mxu0 0
    %6416 = vmatpush2.bf16.msra.mxu0 %v6382
    %6417 = vmatprep.subr.bf16.mxu0 0
    %6418 = vmatpush2.bf16.msra.mxu0 %v6381
    %6419 = vmatprep.subr.bf16.mxu0 0
    %6420 = vmatpush2.bf16.msra.mxu0 %v6380
    %6421 = vmatprep.subr.bf16.mxu0 0
    %6422 = vmatpush2.bf16.msra.mxu0 %v6379
    %6423 = vmatprep.subr.bf16.mxu0 0
    %6424 = vmatpush2.bf16.msra.mxu0 %v6378
    %6425 = vmatprep.subr.bf16.mxu0 0
    %6426 = vmatpush2.bf16.msra.mxu0 %v6377
    %6427 = vmatprep.subr.bf16.mxu0 0
    %6428 = vmatpush2.bf16.msra.mxu0 %v6376
    %6429 = vmatprep.subr.bf16.mxu0 0
    %6430 = vmatpush2.bf16.msra.mxu0 %v6375
    %6431 = vmatprep.mubr.bf16.mxu0 %v6265
    %6432 = vmatmul.mubr.bf16.gmra.mxu0 %v6264
    %v6433 = vpop.f32.mrf.mxu0
    %v6434 = vadd.f32 %v6302, %v6433
    %v6435 = vpop.f32.mrf.mxu0
    %v6436 = vpop.f32.mrf.mxu0
    %v6437 = vpop.f32.mrf.mxu0
    %6438 = vdwg.mxu0
    %6439 = vst [vmem:[%s5] sm:$0xff] %v6434
    // Predicated region
    $region30: #{model_forward.1} parent=1 // pred_check
      _
    $region31: #{model_forward.1} parent=1 // pred_check_branch
      %6441 = sbr.rel (0) target = $region33
    $region32: #{model_forward.1} parent=1 // pred_region
      _
    $region33: #{model_forward.1} parent=1 // pred_fallthru
      _
    // Predicated region
    $region34: #{model_forward.1} parent=1 // pred_check
      _
    $region35: #{model_forward.1} parent=1 // pred_check_branch
      %6443 = sbr.rel (0) target = $region37
    $region36: #{model_forward.1} parent=1 // pred_region
      _
    $region37: #{model_forward.1} parent=1 // pred_fallthru
      _
    %6444 = vsyncpa [#allocation7], 1
    %6445 = vsyncpa [#allocation9], 1
  %6446 = vsyncmov [#allocation5]
  %s6447 = vpop.sfrf %6446
  %p6448 = scmp.eq.s32.totalorder %s6447, 0
  %p6449 = pneg %p6448
  %6451 = shalt.err (%p6449)

</llo_original>
